<compile_context>
chip_gen: v6e
topology: v6e:2x2x1
jax: 0.10.0
libtpu: 0.0.40
codegen_flags: <defaults>
</compile_context>

<pallas_src>
import functools

import jax
import jax.numpy as jnp
from jax import lax
from jax.experimental import pallas as pl
from jax.experimental.pallas import tpu as pltpu


_MASK_VALUE = -1e9     # finite "-inf" for additive masking (HF convention)
_NEG_INIT = -1e30      # running-max init (finite -> no inf-inf NaN in online softmax)


def _round_up(n, m):
    return ((n + m - 1) // m) * m


def _pick_tile(n, candidates):
    """Largest candidate tile that divides n (n is always padded to 128 upstream)."""
    for c in candidates:
        if n % c == 0:
            return c
    return n


def _compiler_params(semantics, vmem_limit_bytes=None):
    kwargs = dict(dimension_semantics=semantics)
    if vmem_limit_bytes is not None:
        # Raise the scoped-VMEM limit when running big (e.g. BART-large) tiles.
        kwargs["vmem_limit_bytes"] = vmem_limit_bytes
    return pltpu.CompilerParams(**kwargs)


# ---------------------------------------------------------------------------
# Kernel 1: fused QKV projection.
#   [q|k|v] = x @ [Wq*scale | Wk | Wv] + [bq*scale | bk | bv]
#   x is read from HBM once per row tile; MXU operands in bf16, f32 accumulate;
#   q/k/v emitted in bf16 (halves downstream HBM traffic).
# ---------------------------------------------------------------------------
def _qkv_proj_kernel(x_ref, w_ref, b_ref, q_ref, k_ref, v_ref):
    x = x_ref[...].astype(w_ref.dtype)                       # bf16 MXU operand
    y = jnp.dot(x, w_ref[...], preferred_element_type=jnp.float32)
    y = y + b_ref[...].astype(jnp.float32)
    e = q_ref.shape[-1]
    q_ref[...] = y[:, :e].astype(q_ref.dtype)
    k_ref[...] = y[:, e:2 * e].astype(k_ref.dtype)
    v_ref[...] = y[:, 2 * e:].astype(v_ref.dtype)


def qkv_projection(x2d, w_qkv_t, b_qkv, *, out_dtype=jnp.bfloat16,
                   vmem_limit_bytes=None):
    # x2d: [N, E] (N multiple of 128), w_qkv_t: [E, 3E] bf16, b_qkv: [1, 3E] f32
    n, e_in = x2d.shape
    e3 = w_qkv_t.shape[1]
    e = e3 // 3
    tm = _pick_tile(n, (512, 256, 128))
    # TODO(synk): for very large E, add a K-dim grid axis with an f32 accumulator
    # instead of holding the full [E, 3E] weight block resident.
    return pl.pallas_call(
        _qkv_proj_kernel,
        out_shape=tuple(jax.ShapeDtypeStruct((n, e), out_dtype) for _ in range(3)),
        grid=(n // tm,),
        in_specs=[
            pl.BlockSpec((tm, e_in), lambda i: (i, 0)),
            pl.BlockSpec((e_in, e3), lambda i: (0, 0)),
            pl.BlockSpec((1, e3), lambda i: (0, 0)),
        ],
        out_specs=tuple(pl.BlockSpec((tm, e), lambda i: (i, 0)) for _ in range(3)),
        compiler_params=_compiler_params(("parallel",), vmem_limit_bytes),
    )(x2d, w_qkv_t, b_qkv)


# ---------------------------------------------------------------------------
# Kernel 2: flash-style attention (KV tiled, online softmax), fused out_proj.
#   grid = (batch, q-tile, kv-tile); per-head m/l/acc f32 scratch persists
#   across the kv axis; output written once at the last kv step as a
#   lane-dense [tq, E] slab already multiplied by W_o (+ b_o).
# ---------------------------------------------------------------------------
def _make_flash_kernel(num_heads, tq, tk, seq_pad, kv_len, causal, has_mask):
    def kernel(q_ref, k_ref, v_ref, *rest):
        if has_mask:
            mask_ref, wo_ref, bo_ref, o_ref, m_sc, l_sc, acc_sc = rest
        else:
            mask_ref = None
            wo_ref, bo_ref, o_ref, m_sc, l_sc, acc_sc = rest

        qi = pl.program_id(1)
        ki = pl.program_id(2)
        nk = pl.num_programs(2)
        e = q_ref.shape[-1]
        dh = e // num_heads

        @pl.when(ki == 0)
        def _init():
            m_sc[...] = jnp.full(m_sc.shape, _NEG_INIT, m_sc.dtype)
            l_sc[...] = jnp.zeros(l_sc.shape, l_sc.dtype)
            acc_sc[...] = jnp.zeros(acc_sc.shape, acc_sc.dtype)

        def _compute():
            q = q_ref[0]                                   # [tq, E] bf16
            k = k_ref[0]                                   # [tk, E] bf16
            v = v_ref[0]                                   # [tk, E] bf16

            add_mask = None
            if has_mask:
                add_mask = mask_ref[0, 0].astype(jnp.float32)        # [tq, tk]
            elif causal or (kv_len < seq_pad):
                # In-kernel additive mask (no HBM mask DMA).
                row = qi * tq + lax.broadcasted_iota(jnp.int32, (tq, tk), 0)
                col = ki * tk + lax.broadcasted_iota(jnp.int32, (tq, tk), 1)
                valid = col < kv_len
                if causal:
                    valid = jnp.logical_and(valid, col <= row)
                add_mask = jnp.where(valid, 0.0, _MASK_VALUE).astype(jnp.float32)

            for h in range(num_heads):
                lo = h * dh
                qh = q[:, lo:lo + dh]                      # [tq, Dh]
                kh = k[:, lo:lo + dh]                      # [tk, Dh]
                vh = v[:, lo:lo + dh]                      # [tk, Dh]
                # scores: contract last dims (no explicit k.T / XLU transpose)
                s = lax.dot_general(qh, kh, (((1,), (1,)), ((), ())),
                                    preferred_element_type=jnp.float32)  # [tq, tk]
                if add_mask is not None:
                    s = s + add_mask
                m_prev = m_sc[h]                           # [tq, 1]
                m_new = jnp.maximum(m_prev, jnp.max(s, axis=-1, keepdims=True))
                alpha = jnp.exp(m_prev - m_new)
                p = jnp.exp(s - m_new)
                l_sc[h] = alpha * l_sc[h] + jnp.sum(p, axis=-1, keepdims=True)
                acc_sc[h] = alpha * acc_sc[h] + jnp.dot(
                    p.astype(v.dtype), vh, preferred_element_type=jnp.float32)
                m_sc[h] = m_new

        if causal and not has_mask:
            # Skip kv tiles strictly above the causal diagonal for this q tile.
            pl.when(ki * tk <= qi * tq + (tq - 1))(_compute)
        else:
            _compute()

        @pl.when(ki == nk - 1)
        def _finalize():
            wo = wo_ref[...]                               # [E, E] bf16
            out = bo_ref[...].astype(jnp.float32)          # [1, E] -> broadcasts
            for h in range(num_heads):
                lo = h * dh
                ah = (acc_sc[h] * pl.reciprocal(l_sc[h], approx=True)).astype(wo.dtype)
                # fused output projection: no [tq,E] concat, no HBM round trip
                out = out + jnp.dot(ah, wo[lo:lo + dh, :],
                                    preferred_element_type=jnp.float32)
            o_ref[0] = out.astype(o_ref.dtype)

    return kernel


def attention_flash(q, k, v, mask, wo, bo, *, num_heads, causal, kv_len,
                    out_dtype, vmem_limit_bytes=None):
    b, seq_pad, e = q.shape
    dh = e // num_heads
    tq = _pick_tile(seq_pad, (256, 128))
    tk = _pick_tile(seq_pad, (512, 256, 128))
    has_mask = mask is not None
    kernel = _make_flash_kernel(num_heads, tq, tk, seq_pad, kv_len, causal, has_mask)

    in_specs = [
        pl.BlockSpec((1, tq, e), lambda bi, qi, ki: (bi, qi, 0)),
        pl.BlockSpec((1, tk, e), lambda bi, qi, ki: (bi, ki, 0)),
        pl.BlockSpec((1, tk, e), lambda bi, qi, ki: (bi, ki, 0)),
    ]
    args = [q, k, v]
    if has_mask:
        in_specs.append(pl.BlockSpec((1, 1, tq, tk),
                                     lambda bi, qi, ki: (bi, 0, qi, ki)))
        args.append(mask)
    in_specs += [
        pl.BlockSpec((e, e), lambda bi, qi, ki: (0, 0)),
        pl.BlockSpec((1, e), lambda bi, qi, ki: (0, 0)),
    ]
    args += [wo, bo]

    return pl.pallas_call(
        kernel,
        out_shape=jax.ShapeDtypeStruct((b, seq_pad, e), out_dtype),
        grid=(b, seq_pad // tq, seq_pad // tk),
        in_specs=in_specs,
        out_specs=pl.BlockSpec((1, tq, e), lambda bi, qi, ki: (bi, qi, 0)),
        scratch_shapes=[
            pltpu.VMEM((num_heads, tq, 1), jnp.float32),     # running max  m
            pltpu.VMEM((num_heads, tq, 1), jnp.float32),     # running sum  l
            pltpu.VMEM((num_heads, tq, dh), jnp.float32),    # accumulator
        ],
        compiler_params=_compiler_params(("parallel", "parallel", "arbitrary"),
                                         vmem_limit_bytes),
    )(*args)


# ---------------------------------------------------------------------------
# Kernel 3: full-S attention with attention-weights output (output_attentions
# path).  Weights emitted in bf16 (HBM-bound output); exact reciprocal is used
# for the stored probabilities.  Out_proj fused in the epilogue as well.
# ---------------------------------------------------------------------------
def _make_weights_kernel(num_heads, tq, kv_len, causal, has_mask):
    def kernel(q_ref, k_ref, v_ref, *rest):
        if has_mask:
            mask_ref, wo_ref, bo_ref, o_ref, w_ref = rest
        else:
            mask_ref = None
            wo_ref, bo_ref, o_ref, w_ref = rest

        qi = pl.program_id(1)
        e = q_ref.shape[-1]
        dh = e // num_heads
        s_len = k_ref.shape[1]

        q = q_ref[0]                                       # [tq, E]
        k = k_ref[0]                                       # [S,  E]
        v = v_ref[0]                                       # [S,  E]

        if has_mask:
            add_mask = mask_ref[0, 0].astype(jnp.float32)
        elif causal or (kv_len < s_len):
            row = qi * tq + lax.broadcasted_iota(jnp.int32, (tq, s_len), 0)
            col = lax.broadcasted_iota(jnp.int32, (tq, s_len), 1)
            valid = col < kv_len
            if causal:
                valid = jnp.logical_and(valid, col <= row)
            add_mask = jnp.where(valid, 0.0, _MASK_VALUE).astype(jnp.float32)
        else:
            add_mask = None

        wo = wo_ref[...]                                   # [E, E] bf16
        out = bo_ref[...].astype(jnp.float32)              # [1, E] -> broadcasts
        for h in range(num_heads):
            lo = h * dh
            qh = q[:, lo:lo + dh]
            kh = k[:, lo:lo + dh]
            vh = v[:, lo:lo + dh]
            s = lax.dot_general(qh, kh, (((1,), (1,)), ((), ())),
                                preferred_element_type=jnp.float32)   # [tq, S]
            if add_mask is not None:
                s = s + add_mask
            s = s - jnp.max(s, axis=-1, keepdims=True)
            p = jnp.exp(s)
            # exact reciprocal for the returned probabilities (rows sum to 1)
            p = p * pl.reciprocal(jnp.sum(p, axis=-1, keepdims=True), approx=False)
            w_ref[0, h] = p.astype(w_ref.dtype)
            oh = jnp.dot(p.astype(v.dtype), vh,
                         preferred_element_type=jnp.float32)          # [tq, Dh]
            out = out + jnp.dot(oh.astype(wo.dtype), wo[lo:lo + dh, :],
                                preferred_element_type=jnp.float32)
        o_ref[0] = out.astype(o_ref.dtype)

    return kernel


def attention_with_weights(q, k, v, mask, wo, bo, *, num_heads, causal, kv_len,
                           out_dtype, weights_dtype=jnp.bfloat16,
                           vmem_limit_bytes=None):
    b, seq_pad, e = q.shape
    tq = _pick_tile(seq_pad, (256, 128))
    has_mask = mask is not None
    kernel = _make_weights_kernel(num_heads, tq, kv_len, causal, has_mask)

    in_specs = [
        pl.BlockSpec((1, tq, e), lambda bi, qi: (bi, qi, 0)),
        pl.BlockSpec((1, seq_pad, e), lambda bi, qi: (bi, 0, 0)),
        pl.BlockSpec((1, seq_pad, e), lambda bi, qi: (bi, 0, 0)),
    ]
    args = [q, k, v]
    if has_mask:
        in_specs.append(pl.BlockSpec((1, 1, tq, seq_pad),
                                     lambda bi, qi: (bi, 0, qi, 0)))
        args.append(mask)
    in_specs += [
        pl.BlockSpec((e, e), lambda bi, qi: (0, 0)),
        pl.BlockSpec((1, e), lambda bi, qi: (0, 0)),
    ]
    args += [wo, bo]

    return pl.pallas_call(
        kernel,
        out_shape=(
            jax.ShapeDtypeStruct((b, seq_pad, e), out_dtype),
            jax.ShapeDtypeStruct((b, num_heads, seq_pad, seq_pad), weights_dtype),
        ),
        grid=(b, seq_pad // tq),
        in_specs=in_specs,
        out_specs=(
            pl.BlockSpec((1, tq, e), lambda bi, qi: (bi, qi, 0)),
            pl.BlockSpec((1, num_heads, tq, seq_pad), lambda bi, qi: (bi, 0, qi, 0)),
        ),
        compiler_params=_compiler_params(("parallel", "parallel"),
                                         vmem_limit_bytes),
    )(*args)


# ---------------------------------------------------------------------------
# Parameter prep + forward (self-attention path)
# ---------------------------------------------------------------------------
def prepare_params(params, num_heads, *, mxu_dtype=jnp.bfloat16):
    """Concat QKV weights, fold 1/sqrt(Dh) into Q, cast MXU weights to bf16."""
    embed_dim = params["q_w_t"].shape[0]
    head_dim = embed_dim // num_heads
    scaling = head_dim ** (-0.5)
    qkv_w = jnp.concatenate(
        [params["q_w_t"] * scaling, params["k_w_t"], params["v_w_t"]], axis=1)
    qkv_b = jnp.concatenate(
        [params["q_b"] * scaling, params["k_b"], params["v_b"]], axis=1)
    return {
        "qkv_w_t": qkv_w.astype(mxu_dtype),
        "qkv_b": qkv_b.astype(jnp.float32),
        "o_w_t": params["o_w_t"].astype(mxu_dtype),
        "o_b": params["o_b"].astype(jnp.float32),
    }


def mass_attention_forward(prepared, hidden_states, attention_mask=None, *,
                           num_heads, causal=False, output_attentions=False):
    bsz, tgt_len, embed_dim = hidden_states.shape
    out_dtype = hidden_states.dtype

    # Pad the sequence to a multiple of 128 so every tile is (8,128)-friendly and
    # pipelined (padded keys are masked via kv_len / the padded explicit mask).
    seq_pad = max(_round_up(tgt_len, 128), 128)
    pad = seq_pad - tgt_len
    x = hidden_states if pad == 0 else jnp.pad(
        hidden_states, ((0, 0), (0, pad), (0, 0)))

    x2d = x.reshape(bsz * seq_pad, embed_dim)
    q2d, k2d, v2d = qkv_projection(x2d, prepared["qkv_w_t"], prepared["qkv_b"])
    q = q2d.reshape(bsz, seq_pad, embed_dim)
    k = k2d.reshape(bsz, seq_pad, embed_dim)
    v = v2d.reshape(bsz, seq_pad, embed_dim)

    mask = None
    if attention_mask is not None:
        mask = attention_mask.astype(jnp.float32)
        if pad:
            mask = jnp.pad(mask, ((0, 0), (0, 0), (0, pad), (0, pad)),
                           constant_values=_MASK_VALUE)

    if output_attentions:
        out, w = attention_with_weights(
            q, k, v, mask, prepared["o_w_t"], prepared["o_b"],
            num_heads=num_heads, causal=causal, kv_len=tgt_len,
            out_dtype=out_dtype)
        if pad:
            out = out[:, :tgt_len]
            w = w[:, :, :tgt_len, :tgt_len]
        return out, w

    out = attention_flash(
        q, k, v, mask, prepared["o_w_t"], prepared["o_b"],
        num_heads=num_heads, causal=causal, kv_len=tgt_len, out_dtype=out_dtype)
    if pad:
        out = out[:, :tgt_len]
    # TODO(synk): past_key_value for is_decoder=True would be (k, v) reshaped to
    # [B, H, S, Dh]; cache-concat / cross-attention paths not covered here.
    return out, None


# ---------------------------------------------------------------------------
# Pure-JAX f32 reference for verification
# ---------------------------------------------------------------------------
def mass_attention_reference(params, hidden_states, attention_mask, num_heads):
    bsz, t, e = hidden_states.shape
    dh = e // num_heads
    scaling = dh ** (-0.5)
    q = hidden_states @ params["q_w_t"] + params["q_b"][0]
    k = hidden_states @ params["k_w_t"] + params["k_b"][0]
    v = hidden_states @ params["v_w_t"] + params["v_b"][0]
    q = jnp.transpose(q.reshape(bsz, t, num_heads, dh), (0, 2, 1, 3)) * scaling
    k = jnp.transpose(k.reshape(bsz, t, num_heads, dh), (0, 2, 1, 3))
    v = jnp.transpose(v.reshape(bsz, t, num_heads, dh), (0, 2, 1, 3))
    s = jnp.einsum("bhtd,bhsd->bhts", q, k) + attention_mask
    p = jax.nn.softmax(s, axis=-1)
    o = jnp.einsum("bhts,bhsd->bhtd", p, v)
    o = jnp.transpose(o, (0, 2, 1, 3)).reshape(bsz, t, e)
    o = o @ params["o_w_t"] + params["o_b"][0]
    return o, p


if __name__ == "__main__":
    # Small but exercises: row-tiled QKV projection, flash grid (B, T/tq, S/tk),
    # weights-path grid, in-kernel causal mask, explicit-mask path, and padding.
    B, T, E, H = 2, 384, 64, 4

    key = jax.random.PRNGKey(0)
    ks = jax.random.split(key, 10)
    init = lambda k, shape, scale=0.05: (scale * jax.random.normal(k, shape)).astype(jnp.float32)

    params = {
        "q_w_t": init(ks[0], (E, E)), "q_b": init(ks[1], (1, E)),
        "k_w_t": init(ks[2], (E, E)), "k_b": init(ks[3], (1, E)),
        "v_w_t": init(ks[4], (E, E)), "v_b": init(ks[5], (1, E)),
        "o_w_t": init(ks[6], (E, E)), "o_b": init(ks[7], (1, E)),
    }

    hidden_states = jax.random.normal(ks[8], (B, T, E), dtype=jnp.float32)
    # Explicit causal additive mask [B, 1, T, S] like the PyTorch decoder path.
    tril = jnp.tril(jnp.ones((T, T), dtype=jnp.float32))
    attention_mask = jnp.where(tril == 1.0, 0.0, _MASK_VALUE).astype(jnp.float32)
    attention_mask = jnp.broadcast_to(attention_mask[None, None], (B, 1, T, T))

    prepared = prepare_params(params, H)
    ref_out, ref_w = mass_attention_reference(params, hidden_states, attention_mask, H)

    tol = dict(atol=3e-2, rtol=3e-2)   # bf16 MXU operands / bf16 weights output

    # 1) Fast path: flash (KV-tiled), in-kernel causal mask, no weights output.
    fwd_fast = jax.jit(functools.partial(
        mass_attention_forward, num_heads=H, causal=True, output_attentions=False))
    out_fast, none_w = fwd_fast(prepared, hidden_states)
    jax.block_until_ready(out_fast)
    assert none_w is None
    assert jnp.allclose(out_fast, ref_out, **tol), "flash (causal in-kernel) mismatch"

    # 2) Fast path with an explicit additive mask (same causal mask, DMA'd in tiles).
    fwd_fast_m = jax.jit(functools.partial(
        mass_attention_forward, num_heads=H, output_attentions=False))
    out_fast_m, _ = fwd_fast_m(prepared, hidden_states, attention_mask)
    jax.block_until_ready(out_fast_m)
    assert jnp.allclose(out_fast_m, ref_out, **tol), "flash (explicit mask) mismatch"

    # 3) output_attentions=True path: full-S kernel, bf16 weights emitted.
    fwd_w = jax.jit(functools.partial(
        mass_attention_forward, num_heads=H, output_attentions=True))
    out_w, attn_w = fwd_w(prepared, hidden_states, attention_mask)
    jax.block_until_ready(out_w)
    jax.block_until_ready(attn_w)
    assert jnp.allclose(out_w, ref_out, **tol), "weights-path output mismatch"
    assert jnp.allclose(attn_w.astype(jnp.float32), ref_w, **tol), "attn weights mismatch"

    # 4) Non-multiple-of-128 sequence length exercises the padding path.
    T2 = 200
    hs2 = jax.random.normal(ks[9], (B, T2, E), dtype=jnp.float32)
    tril2 = jnp.tril(jnp.ones((T2, T2), dtype=jnp.float32))
    mask2 = jnp.where(tril2 == 1.0, 0.0, _MASK_VALUE).astype(jnp.float32)
    mask2 = jnp.broadcast_to(mask2[None, None], (B, 1, T2, T2))
    out2, _ = fwd_fast(prepared, hs2)
    jax.block_until_ready(out2)
    ref_out2, _ = mass_attention_reference(params, hs2, mask2, H)
    assert jnp.allclose(out2, ref_out2, **tol), "padded-sequence flash mismatch"

    print("KERNEL_OK")
</pallas_src>

<mosaic_0001>
module attributes {stable_mosaic.version = 11 : i64} {
  func.func @_qkv_proj_kernel(%arg0: i32, %arg1: memref<256x64xf32, #tpu.memory_space<vmem>>, %arg2: memref<64x192xbf16, #tpu.memory_space<vmem>>, %arg3: memref<1x192xf32, #tpu.memory_space<vmem>>, %arg4: memref<256x64xbf16, #tpu.memory_space<vmem>>, %arg5: memref<256x64xbf16, #tpu.memory_space<vmem>>, %arg6: memref<256x64xbf16, #tpu.memory_space<vmem>>) attributes {dimension_semantics = [#tpu.dimension_semantics<parallel>], iteration_bounds = array<i64: 3>, scalar_prefetch = 0 : i64, scratch_operands = 0 : i64, tpu.core_type = #tpu.core_type<tc>, window_params = [{transform_indices = @transform_0, window_bounds = array<i64: 256, 64>}, {pipeline_mode = #tpu.pipeline_mode<synchronous>, transform_indices = @transform_1, window_bounds = array<i64: 64, 192>}, {pipeline_mode = #tpu.pipeline_mode<synchronous>, transform_indices = @transform_2, window_bounds = array<i64: 1, 192>}, {transform_indices = @transform_3, window_bounds = array<i64: 256, 64>}, {transform_indices = @transform_4, window_bounds = array<i64: 256, 64>}, {transform_indices = @transform_5, window_bounds = array<i64: 256, 64>}]} {
    %c0 = arith.constant 0 : index
    %c0_0 = arith.constant 0 : index
    %0 = vector.load %arg1[%c0, %c0_0] : memref<256x64xf32, #tpu.memory_space<vmem>>, vector<256x64xf32>
    %1 = arith.truncf %0 : vector<256x64xf32> to vector<256x64xbf16>
    %c0_1 = arith.constant 0 : index
    %c0_2 = arith.constant 0 : index
    %2 = vector.load %arg2[%c0_1, %c0_2] : memref<64x192xbf16, #tpu.memory_space<vmem>>, vector<64x192xbf16>
    %cst = arith.constant dense<0.000000e+00> : vector<256x192xf32>
    %3 = tpu.matmul %1, %2, %cst {dimension_numbers = #tpu.dot_dimension_numbers<[1], [0], [0], [1], [0, 0, 1, 1], [], []>} : vector<256x64xbf16>, vector<64x192xbf16>, vector<256x192xf32> -> vector<256x192xf32>
    %c0_3 = arith.constant 0 : index
    %c0_4 = arith.constant 0 : index
    %4 = vector.load %arg3[%c0_3, %c0_4] : memref<1x192xf32, #tpu.memory_space<vmem>>, vector<1x192xf32>
    %5 = vector.broadcast %4 : vector<1x192xf32> to vector<256x192xf32>
    %6 = arith.addf %3, %5 : vector<256x192xf32>
    %7 = vector.extract_strided_slice %6 {offsets = [0, 0], sizes = [256, 64], strides = [1, 1]} : vector<256x192xf32> to vector<256x64xf32>
    %8 = arith.truncf %7 : vector<256x64xf32> to vector<256x64xbf16>
    %c0_5 = arith.constant 0 : index
    %c0_6 = arith.constant 0 : index
    %9 = vector.load %arg4[%c0_5, %c0_6] : memref<256x64xbf16, #tpu.memory_space<vmem>>, vector<256x64xbf16>
    tpu.vector_store %arg4[%c0_5, %c0_6], %8 {strides = array<i32>} : memref<256x64xbf16, #tpu.memory_space<vmem>>, vector<256x64xbf16>,
    %10 = vector.extract_strided_slice %6 {offsets = [0, 64], sizes = [256, 64], strides = [1, 1]} : vector<256x192xf32> to vector<256x64xf32>
    %11 = arith.truncf %10 : vector<256x64xf32> to vector<256x64xbf16>
    %c0_7 = arith.constant 0 : index
    %c0_8 = arith.constant 0 : index
    %12 = vector.load %arg5[%c0_7, %c0_8] : memref<256x64xbf16, #tpu.memory_space<vmem>>, vector<256x64xbf16>
    tpu.vector_store %arg5[%c0_7, %c0_8], %11 {strides = array<i32>} : memref<256x64xbf16, #tpu.memory_space<vmem>>, vector<256x64xbf16>,
    %13 = vector.extract_strided_slice %6 {offsets = [0, 128], sizes = [256, 64], strides = [1, 1]} : vector<256x192xf32> to vector<256x64xf32>
    %14 = arith.truncf %13 : vector<256x64xf32> to vector<256x64xbf16>
    %c0_9 = arith.constant 0 : index
    %c0_10 = arith.constant 0 : index
    %15 = vector.load %arg6[%c0_9, %c0_10] : memref<256x64xbf16, #tpu.memory_space<vmem>>, vector<256x64xbf16>
    tpu.vector_store %arg6[%c0_9, %c0_10], %14 {strides = array<i32>} : memref<256x64xbf16, #tpu.memory_space<vmem>>, vector<256x64xbf16>,
    return
  }
  func.func @transform_0(%arg0: i32) -> (i32, i32) {
    %c0_i32 = arith.constant 0 : i32
    %c0_i32_0 = arith.constant 0 : i32
    return %arg0, %c0_i32 : i32, i32
  }
  func.func @transform_1(%arg0: i32) -> (i32, i32) {
    %c0_i32 = arith.constant 0 : i32
    %c0_i32_0 = arith.constant 0 : i32
    %c0_i32_1 = arith.constant 0 : i32
    return %c0_i32, %c0_i32_0 : i32, i32
  }
  func.func @transform_2(%arg0: i32) -> (i32, i32) {
    %c0_i32 = arith.constant 0 : i32
    %c0_i32_0 = arith.constant 0 : i32
    %c0_i32_1 = arith.constant 0 : i32
    return %c0_i32, %c0_i32_0 : i32, i32
  }
  func.func @transform_3(%arg0: i32) -> (i32, i32) {
    %c0_i32 = arith.constant 0 : i32
    %c0_i32_0 = arith.constant 0 : i32
    return %arg0, %c0_i32 : i32, i32
  }
  func.func @transform_4(%arg0: i32) -> (i32, i32) {
    %c0_i32 = arith.constant 0 : i32
    %c0_i32_0 = arith.constant 0 : i32
    return %arg0, %c0_i32 : i32, i32
  }
  func.func @transform_5(%arg0: i32) -> (i32, i32) {
    %c0_i32 = arith.constant 0 : i32
    %c0_i32_0 = arith.constant 0 : i32
    return %arg0, %c0_i32 : i32, i32
  }
}

module attributes {stable_mosaic.version = 11 : i64} {
  func.func @kernel(%arg0: i32, %arg1: i32, %arg2: i32, %arg3: memref<1x128x64xbf16, #tpu.memory_space<vmem>>, %arg4: memref<1x128x64xbf16, #tpu.memory_space<vmem>>, %arg5: memref<1x128x64xbf16, #tpu.memory_space<vmem>>, %arg6: memref<64x64xbf16, #tpu.memory_space<vmem>>, %arg7: memref<1x64xf32, #tpu.memory_space<vmem>>, %arg8: memref<1x128x64xf32, #tpu.memory_space<vmem>>, %arg9: memref<4x128x1xf32, #tpu.memory_space<vmem>>, %arg10: memref<4x128x1xf32, #tpu.memory_space<vmem>>, %arg11: memref<4x128x16xf32, #tpu.memory_space<vmem>>) attributes {dimension_semantics = [#tpu.dimension_semantics<parallel>, #tpu.dimension_semantics<parallel>, #tpu.dimension_semantics<arbitrary>], iteration_bounds = array<i64: 2, 3, 3>, scalar_prefetch = 0 : i64, scratch_operands = 3 : i64, tpu.core_type = #tpu.core_type<tc>, window_params = [{transform_indices = @transform_0, window_bounds = array<i64: 1, 128, 64>}, {transform_indices = @transform_1, window_bounds = array<i64: 1, 128, 64>}, {transform_indices = @transform_2, window_bounds = array<i64: 1, 128, 64>}, {pipeline_mode = #tpu.pipeline_mode<synchronous>, transform_indices = @transform_3, window_bounds = array<i64: 64, 64>}, {pipeline_mode = #tpu.pipeline_mode<synchronous>, transform_indices = @transform_4, window_bounds = array<i64: 1, 64>}, {transform_indices = @transform_5, window_bounds = array<i64: 1, 128, 64>}]} {
    %c0_i32 = arith.constant 0 : i32
    %0 = arith.cmpi eq, %arg2, %c0_i32 : i32
    %1 = arith.extui %0 : i1 to i32
    %c0_i32_0 = arith.constant 0 : i32
    %2 = arith.cmpi ne, %1, %c0_i32_0 : i32
    scf.if %2 {
      %cst = arith.constant -1.000000e+30 : f32
      %12 = vector.broadcast %cst : f32 to vector<4x128x1xf32>
      %c0 = arith.constant 0 : index
      %c0_4 = arith.constant 0 : index
      %c0_5 = arith.constant 0 : index
      %13 = vector.load %arg9[%c0, %c0_4, %c0_5] : memref<4x128x1xf32, #tpu.memory_space<vmem>>, vector<4x128x1xf32>
      tpu.vector_store %arg9[%c0, %c0_4, %c0_5], %12 {strides = array<i32>} : memref<4x128x1xf32, #tpu.memory_space<vmem>>, vector<4x128x1xf32>,
      %cst_6 = arith.constant 0.000000e+00 : f32
      %14 = vector.broadcast %cst_6 : f32 to vector<4x128x1xf32>
      %c0_7 = arith.constant 0 : index
      %c0_8 = arith.constant 0 : index
      %c0_9 = arith.constant 0 : index
      %15 = vector.load %arg10[%c0_7, %c0_8, %c0_9] : memref<4x128x1xf32, #tpu.memory_space<vmem>>, vector<4x128x1xf32>
      tpu.vector_store %arg10[%c0_7, %c0_8, %c0_9], %14 {strides = array<i32>} : memref<4x128x1xf32, #tpu.memory_space<vmem>>, vector<4x128x1xf32>,
      %cst_10 = arith.constant 0.000000e+00 : f32
      %16 = vector.broadcast %cst_10 : f32 to vector<4x128x16xf32>
      %c0_11 = arith.constant 0 : index
      %c0_12 = arith.constant 0 : index
      %c0_13 = arith.constant 0 : index
      %17 = vector.load %arg11[%c0_11, %c0_12, %c0_13] : memref<4x128x16xf32, #tpu.memory_space<vmem>>, vector<4x128x16xf32>
      tpu.vector_store %arg11[%c0_11, %c0_12, %c0_13], %16 {strides = array<i32>} : memref<4x128x16xf32, #tpu.memory_space<vmem>>, vector<4x128x16xf32>,
    } else {
    }
    %c128_i32 = arith.constant 128 : i32
    %3 = arith.muli %arg2, %c128_i32 : i32
    %c128_i32_1 = arith.constant 128 : i32
    %4 = arith.muli %arg1, %c128_i32_1 : i32
    %c127_i32 = arith.constant 127 : i32
    %5 = arith.addi %4, %c127_i32 : i32
    %6 = arith.cmpi sle, %3, %5 : i32
    %7 = arith.extui %6 : i1 to i32
    %c0_i32_2 = arith.constant 0 : i32
    %8 = arith.cmpi ne, %7, %c0_i32_2 : i32
    scf.if %8 {
      %c0 = arith.constant 0 : index
      %c0_4 = arith.constant 0 : index
      %c0_5 = arith.constant 0 : index
      %12 = vector.load %arg3[%c0, %c0_4, %c0_5] : memref<1x128x64xbf16, #tpu.memory_space<vmem>>, vector<1x128x64xbf16>
      %13 = vector.shape_cast %12 : vector<1x128x64xbf16> to vector<128x64xbf16>
      %c0_6 = arith.constant 0 : index
      %c0_7 = arith.constant 0 : index
      %c0_8 = arith.constant 0 : index
      %14 = vector.load %arg4[%c0_6, %c0_7, %c0_8] : memref<1x128x64xbf16, #tpu.memory_space<vmem>>, vector<1x128x64xbf16>
      %15 = vector.shape_cast %14 : vector<1x128x64xbf16> to vector<128x64xbf16>
      %c0_9 = arith.constant 0 : index
      %c0_10 = arith.constant 0 : index
      %c0_11 = arith.constant 0 : index
      %16 = vector.load %arg5[%c0_9, %c0_10, %c0_11] : memref<1x128x64xbf16, #tpu.memory_space<vmem>>, vector<1x128x64xbf16>
      %17 = vector.shape_cast %16 : vector<1x128x64xbf16> to vector<128x64xbf16>
      %c128_i32_12 = arith.constant 128 : i32
      %18 = arith.muli %arg1, %c128_i32_12 : i32
      %19 = tpu.iota {dimensions = array<i32: 0>} : vector<128x128xi32>
      %20 = vector.broadcast %18 : i32 to vector<128x128xi32>
      %21 = arith.addi %20, %19 : vector<128x128xi32>
      %c128_i32_13 = arith.constant 128 : i32
      %22 = arith.muli %arg2, %c128_i32_13 : i32
      %23 = tpu.iota {dimensions = array<i32: 1>} : vector<128x128xi32>
      %24 = vector.broadcast %22 : i32 to vector<128x128xi32>
      %25 = arith.addi %24, %23 : vector<128x128xi32>
      %c384_i32 = arith.constant 384 : i32
      %26 = vector.broadcast %c384_i32 : i32 to vector<128x128xi32>
      %27 = arith.cmpi slt, %25, %26 : vector<128x128xi32>
      %28 = arith.cmpi sle, %25, %21 : vector<128x128xi32>
      %29 = arith.andi %27, %28 : vector<128x128xi1>
      %cst = arith.constant 0.000000e+00 : f32
      %cst_14 = arith.constant -1.000000e+09 : f32
      %30 = vector.broadcast %cst : f32 to vector<128x128xf32>
      %31 = vector.broadcast %cst_14 : f32 to vector<128x128xf32>
      %32 = arith.select %29, %30, %31 : vector<128x128xi1>, vector<128x128xf32>
      %33 = vector.extract_strided_slice %13 {offsets = [0, 0], sizes = [128, 16], strides = [1, 1]} : vector<128x64xbf16> to vector<128x16xbf16>
      %34 = vector.extract_strided_slice %15 {offsets = [0, 0], sizes = [128, 16], strides = [1, 1]} : vector<128x64xbf16> to vector<128x16xbf16>
      %35 = vector.extract_strided_slice %17 {offsets = [0, 0], sizes = [128, 16], strides = [1, 1]} : vector<128x64xbf16> to vector<128x16xbf16>
      %cst_15 = arith.constant dense<0.000000e+00> : vector<128x128xf32>
      %36 = tpu.matmul %33, %34, %cst_15 {dimension_numbers = #tpu.dot_dimension_numbers<[1], [1], [0], [0], [0, 0, 1, 0], [], []>} : vector<128x16xbf16>, vector<128x16xbf16>, vector<128x128xf32> -> vector<128x128xf32>
      %37 = arith.addf %36, %32 : vector<128x128xf32>
      %c0_16 = arith.constant 0 : index
      %c0_17 = arith.constant 0 : index
      %c0_18 = arith.constant 0 : index
      %38 = vector.load %arg9[%c0_16, %c0_17, %c0_18] : memref<4x128x1xf32, #tpu.memory_space<vmem>>, vector<1x128x1xf32>
      %39 = vector.shape_cast %38 : vector<1x128x1xf32> to vector<128x1xf32>
      %cst_19 = arith.constant dense<0xFF800000> : vector<128xf32>
      %40 = vector.multi_reduction <maximumf>, %37, %cst_19 [1] : vector<128x128xf32> to vector<128xf32>
      %41 = vector.shape_cast %40 : vector<128xf32> to vector<128x1xf32>
      %42 = arith.maximumf %39, %41 : vector<128x1xf32>
      %43 = arith.subf %39, %42 : vector<128x1xf32>
      %44 = math.exp %43 : vector<128x1xf32>
      %45 = vector.broadcast %42 : vector<128x1xf32> to vector<128x128xf32>
      %46 = arith.subf %37, %45 : vector<128x128xf32>
      %47 = math.exp %46 : vector<128x128xf32>
      %c0_20 = arith.constant 0 : index
      %c0_21 = arith.constant 0 : index
      %c0_22 = arith.constant 0 : index
      %48 = vector.load %arg10[%c0_20, %c0_21, %c0_22] : memref<4x128x1xf32, #tpu.memory_space<vmem>>, vector<1x128x1xf32>
      %49 = vector.shape_cast %48 : vector<1x128x1xf32> to vector<128x1xf32>
      %50 = arith.mulf %44, %49 : vector<128x1xf32>
      %cst_23 = arith.constant dense<0.000000e+00> : vector<128xf32>
      %51 = vector.multi_reduction <add>, %47, %cst_23 [1] : vector<128x128xf32> to vector<128xf32>
      %52 = vector.shape_cast %51 : vector<128xf32> to vector<128x1xf32>
      %53 = arith.addf %50, %52 : vector<128x1xf32>
      %c0_24 = arith.constant 0 : index
      %c0_25 = arith.constant 0 : index
      %c0_26 = arith.constant 0 : index
      %54 = vector.load %arg10[%c0_24, %c0_25, %c0_26] : memref<4x128x1xf32, #tpu.memory_space<vmem>>, vector<1x128x1xf32>
      %55 = vector.shape_cast %54 : vector<1x128x1xf32> to vector<128x1xf32>
      %56 = vector.shape_cast %53 : vector<128x1xf32> to vector<1x128x1xf32>
      tpu.vector_store %arg10[%c0_24, %c0_25, %c0_26], %56 {strides = array<i32>} : memref<4x128x1xf32, #tpu.memory_space<vmem>>, vector<1x128x1xf32>,
      %c0_27 = arith.constant 0 : index
      %c0_28 = arith.constant 0 : index
      %c0_29 = arith.constant 0 : index
      %57 = vector.load %arg11[%c0_27, %c0_28, %c0_29] : memref<4x128x16xf32, #tpu.memory_space<vmem>>, vector<1x128x16xf32>
      %58 = vector.shape_cast %57 : vector<1x128x16xf32> to vector<128x16xf32>
      %59 = vector.broadcast %44 : vector<128x1xf32> to vector<128x16xf32>
      %60 = arith.mulf %59, %58 : vector<128x16xf32>
      %61 = arith.truncf %47 : vector<128x128xf32> to vector<128x128xbf16>
      %cst_30 = arith.constant dense<0.000000e+00> : vector<128x16xf32>
      %62 = tpu.matmul %61, %35, %cst_30 {dimension_numbers = #tpu.dot_dimension_numbers<[1], [0], [0], [1], [0, 0, 1, 1], [], []>} : vector<128x128xbf16>, vector<128x16xbf16>, vector<128x16xf32> -> vector<128x16xf32>
      %63 = arith.addf %60, %62 : vector<128x16xf32>
      %c0_31 = arith.constant 0 : index
      %c0_32 = arith.constant 0 : index
      %c0_33 = arith.constant 0 : index
      %64 = vector.load %arg11[%c0_31, %c0_32, %c0_33] : memref<4x128x16xf32, #tpu.memory_space<vmem>>, vector<1x128x16xf32>
      %65 = vector.shape_cast %64 : vector<1x128x16xf32> to vector<128x16xf32>
      %66 = vector.shape_cast %63 : vector<128x16xf32> to vector<1x128x16xf32>
      tpu.vector_store %arg11[%c0_31, %c0_32, %c0_33], %66 {strides = array<i32>} : memref<4x128x16xf32, #tpu.memory_space<vmem>>, vector<1x128x16xf32>,
      %c0_34 = arith.constant 0 : index
      %c0_35 = arith.constant 0 : index
      %c0_36 = arith.constant 0 : index
      %67 = vector.load %arg9[%c0_34, %c0_35, %c0_36] : memref<4x128x1xf32, #tpu.memory_space<vmem>>, vector<1x128x1xf32>
      %68 = vector.shape_cast %67 : vector<1x128x1xf32> to vector<128x1xf32>
      %69 = vector.shape_cast %42 : vector<128x1xf32> to vector<1x128x1xf32>
      tpu.vector_store %arg9[%c0_34, %c0_35, %c0_36], %69 {strides = array<i32>} : memref<4x128x1xf32, #tpu.memory_space<vmem>>, vector<1x128x1xf32>,
      %70 = vector.extract_strided_slice %13 {offsets = [0, 16], sizes = [128, 16], strides = [1, 1]} : vector<128x64xbf16> to vector<128x16xbf16>
      %71 = vector.extract_strided_slice %15 {offsets = [0, 16], sizes = [128, 16], strides = [1, 1]} : vector<128x64xbf16> to vector<128x16xbf16>
      %72 = vector.extract_strided_slice %17 {offsets = [0, 16], sizes = [128, 16], strides = [1, 1]} : vector<128x64xbf16> to vector<128x16xbf16>
      %cst_37 = arith.constant dense<0.000000e+00> : vector<128x128xf32>
      %73 = tpu.matmul %70, %71, %cst_37 {dimension_numbers = #tpu.dot_dimension_numbers<[1], [1], [0], [0], [0, 0, 1, 0], [], []>} : vector<128x16xbf16>, vector<128x16xbf16>, vector<128x128xf32> -> vector<128x128xf32>
      %74 = arith.addf %73, %32 : vector<128x128xf32>
      %c1 = arith.constant 1 : index
      %c0_38 = arith.constant 0 : index
      %c0_39 = arith.constant 0 : index
      %75 = vector.load %arg9[%c1, %c0_38, %c0_39] : memref<4x128x1xf32, #tpu.memory_space<vmem>>, vector<1x128x1xf32>
      %76 = vector.shape_cast %75 : vector<1x128x1xf32> to vector<128x1xf32>
      %cst_40 = arith.constant dense<0xFF800000> : vector<128xf32>
      %77 = vector.multi_reduction <maximumf>, %74, %cst_40 [1] : vector<128x128xf32> to vector<128xf32>
      %78 = vector.shape_cast %77 : vector<128xf32> to vector<128x1xf32>
      %79 = arith.maximumf %76, %78 : vector<128x1xf32>
      %80 = arith.subf %76, %79 : vector<128x1xf32>
      %81 = math.exp %80 : vector<128x1xf32>
      %82 = vector.broadcast %79 : vector<128x1xf32> to vector<128x128xf32>
      %83 = arith.subf %74, %82 : vector<128x128xf32>
      %84 = math.exp %83 : vector<128x128xf32>
      %c1_41 = arith.constant 1 : index
      %c0_42 = arith.constant 0 : index
      %c0_43 = arith.constant 0 : index
      %85 = vector.load %arg10[%c1_41, %c0_42, %c0_43] : memref<4x128x1xf32, #tpu.memory_space<vmem>>, vector<1x128x1xf32>
      %86 = vector.shape_cast %85 : vector<1x128x1xf32> to vector<128x1xf32>
      %87 = arith.mulf %81, %86 : vector<128x1xf32>
      %cst_44 = arith.constant dense<0.000000e+00> : vector<128xf32>
      %88 = vector.multi_reduction <add>, %84, %cst_44 [1] : vector<128x128xf32> to vector<128xf32>
      %89 = vector.shape_cast %88 : vector<128xf32> to vector<128x1xf32>
      %90 = arith.addf %87, %89 : vector<128x1xf32>
      %c1_45 = arith.constant 1 : index
      %c0_46 = arith.constant 0 : index
      %c0_47 = arith.constant 0 : index
      %91 = vector.load %arg10[%c1_45, %c0_46, %c0_47] : memref<4x128x1xf32, #tpu.memory_space<vmem>>, vector<1x128x1xf32>
      %92 = vector.shape_cast %91 : vector<1x128x1xf32> to vector<128x1xf32>
      %93 = vector.shape_cast %90 : vector<128x1xf32> to vector<1x128x1xf32>
      tpu.vector_store %arg10[%c1_45, %c0_46, %c0_47], %93 {strides = array<i32>} : memref<4x128x1xf32, #tpu.memory_space<vmem>>, vector<1x128x1xf32>,
      %c1_48 = arith.constant 1 : index
      %c0_49 = arith.constant 0 : index
      %c0_50 = arith.constant 0 : index
      %94 = vector.load %arg11[%c1_48, %c0_49, %c0_50] : memref<4x128x16xf32, #tpu.memory_space<vmem>>, vector<1x128x16xf32>
      %95 = vector.shape_cast %94 : vector<1x128x16xf32> to vector<128x16xf32>
      %96 = vector.broadcast %81 : vector<128x1xf32> to vector<128x16xf32>
      %97 = arith.mulf %96, %95 : vector<128x16xf32>
      %98 = arith.truncf %84 : vector<128x128xf32> to vector<128x128xbf16>
      %cst_51 = arith.constant dense<0.000000e+00> : vector<128x16xf32>
      %99 = tpu.matmul %98, %72, %cst_51 {dimension_numbers = #tpu.dot_dimension_numbers<[1], [0], [0], [1], [0, 0, 1, 1], [], []>} : vector<128x128xbf16>, vector<128x16xbf16>, vector<128x16xf32> -> vector<128x16xf32>
      %100 = arith.addf %97, %99 : vector<128x16xf32>
      %c1_52 = arith.constant 1 : index
      %c0_53 = arith.constant 0 : index
      %c0_54 = arith.constant 0 : index
      %101 = vector.load %arg11[%c1_52, %c0_53, %c0_54] : memref<4x128x16xf32, #tpu.memory_space<vmem>>, vector<1x128x16xf32>
      %102 = vector.shape_cast %101 : vector<1x128x16xf32> to vector<128x16xf32>
      %103 = vector.shape_cast %100 : vector<128x16xf32> to vector<1x128x16xf32>
      tpu.vector_store %arg11[%c1_52, %c0_53, %c0_54], %103 {strides = array<i32>} : memref<4x128x16xf32, #tpu.memory_space<vmem>>, vector<1x128x16xf32>,
      %c1_55 = arith.constant 1 : index
      %c0_56 = arith.constant 0 : index
      %c0_57 = arith.constant 0 : index
      %104 = vector.load %arg9[%c1_55, %c0_56, %c0_57] : memref<4x128x1xf32, #tpu.memory_space<vmem>>, vector<1x128x1xf32>
      %105 = vector.shape_cast %104 : vector<1x128x1xf32> to vector<128x1xf32>
      %106 = vector.shape_cast %79 : vector<128x1xf32> to vector<1x128x1xf32>
      tpu.vector_store %arg9[%c1_55, %c0_56, %c0_57], %106 {strides = array<i32>} : memref<4x128x1xf32, #tpu.memory_space<vmem>>, vector<1x128x1xf32>,
      %107 = vector.extract_strided_slice %13 {offsets = [0, 32], sizes = [128, 16], strides = [1, 1]} : vector<128x64xbf16> to vector<128x16xbf16>
      %108 = vector.extract_strided_slice %15 {offsets = [0, 32], sizes = [128, 16], strides = [1, 1]} : vector<128x64xbf16> to vector<128x16xbf16>
      %109 = vector.extract_strided_slice %17 {offsets = [0, 32], sizes = [128, 16], strides = [1, 1]} : vector<128x64xbf16> to vector<128x16xbf16>
      %cst_58 = arith.constant dense<0.000000e+00> : vector<128x128xf32>
      %110 = tpu.matmul %107, %108, %cst_58 {dimension_numbers = #tpu.dot_dimension_numbers<[1], [1], [0], [0], [0, 0, 1, 0], [], []>} : vector<128x16xbf16>, vector<128x16xbf16>, vector<128x128xf32> -> vector<128x128xf32>
      %111 = arith.addf %110, %32 : vector<128x128xf32>
      %c2 = arith.constant 2 : index
      %c0_59 = arith.constant 0 : index
      %c0_60 = arith.constant 0 : index
      %112 = vector.load %arg9[%c2, %c0_59, %c0_60] : memref<4x128x1xf32, #tpu.memory_space<vmem>>, vector<1x128x1xf32>
      %113 = vector.shape_cast %112 : vector<1x128x1xf32> to vector<128x1xf32>
      %cst_61 = arith.constant dense<0xFF800000> : vector<128xf32>
      %114 = vector.multi_reduction <maximumf>, %111, %cst_61 [1] : vector<128x128xf32> to vector<128xf32>
      %115 = vector.shape_cast %114 : vector<128xf32> to vector<128x1xf32>
      %116 = arith.maximumf %113, %115 : vector<128x1xf32>
      %117 = arith.subf %113, %116 : vector<128x1xf32>
      %118 = math.exp %117 : vector<128x1xf32>
      %119 = vector.broadcast %116 : vector<128x1xf32> to vector<128x128xf32>
      %120 = arith.subf %111, %119 : vector<128x128xf32>
      %121 = math.exp %120 : vector<128x128xf32>
      %c2_62 = arith.constant 2 : index
      %c0_63 = arith.constant 0 : index
      %c0_64 = arith.constant 0 : index
      %122 = vector.load %arg10[%c2_62, %c0_63, %c0_64] : memref<4x128x1xf32, #tpu.memory_space<vmem>>, vector<1x128x1xf32>
      %123 = vector.shape_cast %122 : vector<1x128x1xf32> to vector<128x1xf32>
      %124 = arith.mulf %118, %123 : vector<128x1xf32>
      %cst_65 = arith.constant dense<0.000000e+00> : vector<128xf32>
      %125 = vector.multi_reduction <add>, %121, %cst_65 [1] : vector<128x128xf32> to vector<128xf32>
      %126 = vector.shape_cast %125 : vector<128xf32> to vector<128x1xf32>
      %127 = arith.addf %124, %126 : vector<128x1xf32>
      %c2_66 = arith.constant 2 : index
      %c0_67 = arith.constant 0 : index
      %c0_68 = arith.constant 0 : index
      %128 = vector.load %arg10[%c2_66, %c0_67, %c0_68] : memref<4x128x1xf32, #tpu.memory_space<vmem>>, vector<1x128x1xf32>
      %129 = vector.shape_cast %128 : vector<1x128x1xf32> to vector<128x1xf32>
      %130 = vector.shape_cast %127 : vector<128x1xf32> to vector<1x128x1xf32>
      tpu.vector_store %arg10[%c2_66, %c0_67, %c0_68], %130 {strides = array<i32>} : memref<4x128x1xf32, #tpu.memory_space<vmem>>, vector<1x128x1xf32>,
      %c2_69 = arith.constant 2 : index
      %c0_70 = arith.constant 0 : index
      %c0_71 = arith.constant 0 : index
      %131 = vector.load %arg11[%c2_69, %c0_70, %c0_71] : memref<4x128x16xf32, #tpu.memory_space<vmem>>, vector<1x128x16xf32>
      %132 = vector.shape_cast %131 : vector<1x128x16xf32> to vector<128x16xf32>
      %133 = vector.broadcast %118 : vector<128x1xf32> to vector<128x16xf32>
      %134 = arith.mulf %133, %132 : vector<128x16xf32>
      %135 = arith.truncf %121 : vector<128x128xf32> to vector<128x128xbf16>
      %cst_72 = arith.constant dense<0.000000e+00> : vector<128x16xf32>
      %136 = tpu.matmul %135, %109, %cst_72 {dimension_numbers = #tpu.dot_dimension_numbers<[1], [0], [0], [1], [0, 0, 1, 1], [], []>} : vector<128x128xbf16>, vector<128x16xbf16>, vector<128x16xf32> -> vector<128x16xf32>
      %137 = arith.addf %134, %136 : vector<128x16xf32>
      %c2_73 = arith.constant 2 : index
      %c0_74 = arith.constant 0 : index
      %c0_75 = arith.constant 0 : index
      %138 = vector.load %arg11[%c2_73, %c0_74, %c0_75] : memref<4x128x16xf32, #tpu.memory_space<vmem>>, vector<1x128x16xf32>
      %139 = vector.shape_cast %138 : vector<1x128x16xf32> to vector<128x16xf32>
      %140 = vector.shape_cast %137 : vector<128x16xf32> to vector<1x128x16xf32>
      tpu.vector_store %arg11[%c2_73, %c0_74, %c0_75], %140 {strides = array<i32>} : memref<4x128x16xf32, #tpu.memory_space<vmem>>, vector<1x128x16xf32>,
      %c2_76 = arith.constant 2 : index
      %c0_77 = arith.constant 0 : index
      %c0_78 = arith.constant 0 : index
      %141 = vector.load %arg9[%c2_76, %c0_77, %c0_78] : memref<4x128x1xf32, #tpu.memory_space<vmem>>, vector<1x128x1xf32>
      %142 = vector.shape_cast %141 : vector<1x128x1xf32> to vector<128x1xf32>
      %143 = vector.shape_cast %116 : vector<128x1xf32> to vector<1x128x1xf32>
      tpu.vector_store %arg9[%c2_76, %c0_77, %c0_78], %143 {strides = array<i32>} : memref<4x128x1xf32, #tpu.memory_space<vmem>>, vector<1x128x1xf32>,
      %144 = vector.extract_strided_slice %13 {offsets = [0, 48], sizes = [128, 16], strides = [1, 1]} : vector<128x64xbf16> to vector<128x16xbf16>
      %145 = vector.extract_strided_slice %15 {offsets = [0, 48], sizes = [128, 16], strides = [1, 1]} : vector<128x64xbf16> to vector<128x16xbf16>
      %146 = vector.extract_strided_slice %17 {offsets = [0, 48], sizes = [128, 16], strides = [1, 1]} : vector<128x64xbf16> to vector<128x16xbf16>
      %cst_79 = arith.constant dense<0.000000e+00> : vector<128x128xf32>
      %147 = tpu.matmul %144, %145, %cst_79 {dimension_numbers = #tpu.dot_dimension_numbers<[1], [1], [0], [0], [0, 0, 1, 0], [], []>} : vector<128x16xbf16>, vector<128x16xbf16>, vector<128x128xf32> -> vector<128x128xf32>
      %148 = arith.addf %147, %32 : vector<128x128xf32>
      %c3 = arith.constant 3 : index
      %c0_80 = arith.constant 0 : index
      %c0_81 = arith.constant 0 : index
      %149 = vector.load %arg9[%c3, %c0_80, %c0_81] : memref<4x128x1xf32, #tpu.memory_space<vmem>>, vector<1x128x1xf32>
      %150 = vector.shape_cast %149 : vector<1x128x1xf32> to vector<128x1xf32>
      %cst_82 = arith.constant dense<0xFF800000> : vector<128xf32>
      %151 = vector.multi_reduction <maximumf>, %148, %cst_82 [1] : vector<128x128xf32> to vector<128xf32>
      %152 = vector.shape_cast %151 : vector<128xf32> to vector<128x1xf32>
      %153 = arith.maximumf %150, %152 : vector<128x1xf32>
      %154 = arith.subf %150, %153 : vector<128x1xf32>
      %155 = math.exp %154 : vector<128x1xf32>
      %156 = vector.broadcast %153 : vector<128x1xf32> to vector<128x128xf32>
      %157 = arith.subf %148, %156 : vector<128x128xf32>
      %158 = math.exp %157 : vector<128x128xf32>
      %c3_83 = arith.constant 3 : index
      %c0_84 = arith.constant 0 : index
      %c0_85 = arith.constant 0 : index
      %159 = vector.load %arg10[%c3_83, %c0_84, %c0_85] : memref<4x128x1xf32, #tpu.memory_space<vmem>>, vector<1x128x1xf32>
      %160 = vector.shape_cast %159 : vector<1x128x1xf32> to vector<128x1xf32>
      %161 = arith.mulf %155, %160 : vector<128x1xf32>
      %cst_86 = arith.constant dense<0.000000e+00> : vector<128xf32>
      %162 = vector.multi_reduction <add>, %158, %cst_86 [1] : vector<128x128xf32> to vector<128xf32>
      %163 = vector.shape_cast %162 : vector<128xf32> to vector<128x1xf32>
      %164 = arith.addf %161, %163 : vector<128x1xf32>
      %c3_87 = arith.constant 3 : index
      %c0_88 = arith.constant 0 : index
      %c0_89 = arith.constant 0 : index
      %165 = vector.load %arg10[%c3_87, %c0_88, %c0_89] : memref<4x128x1xf32, #tpu.memory_space<vmem>>, vector<1x128x1xf32>
      %166 = vector.shape_cast %165 : vector<1x128x1xf32> to vector<128x1xf32>
      %167 = vector.shape_cast %164 : vector<128x1xf32> to vector<1x128x1xf32>
      tpu.vector_store %arg10[%c3_87, %c0_88, %c0_89], %167 {strides = array<i32>} : memref<4x128x1xf32, #tpu.memory_space<vmem>>, vector<1x128x1xf32>,
      %c3_90 = arith.constant 3 : index
      %c0_91 = arith.constant 0 : index
      %c0_92 = arith.constant 0 : index
      %168 = vector.load %arg11[%c3_90, %c0_91, %c0_92] : memref<4x128x16xf32, #tpu.memory_space<vmem>>, vector<1x128x16xf32>
      %169 = vector.shape_cast %168 : vector<1x128x16xf32> to vector<128x16xf32>
      %170 = vector.broadcast %155 : vector<128x1xf32> to vector<128x16xf32>
      %171 = arith.mulf %170, %169 : vector<128x16xf32>
      %172 = arith.truncf %158 : vector<128x128xf32> to vector<128x128xbf16>
      %cst_93 = arith.constant dense<0.000000e+00> : vector<128x16xf32>
      %173 = tpu.matmul %172, %146, %cst_93 {dimension_numbers = #tpu.dot_dimension_numbers<[1], [0], [0], [1], [0, 0, 1, 1], [], []>} : vector<128x128xbf16>, vector<128x16xbf16>, vector<128x16xf32> -> vector<128x16xf32>
      %174 = arith.addf %171, %173 : vector<128x16xf32>
      %c3_94 = arith.constant 3 : index
      %c0_95 = arith.constant 0 : index
      %c0_96 = arith.constant 0 : index
      %175 = vector.load %arg11[%c3_94, %c0_95, %c0_96] : memref<4x128x16xf32, #tpu.memory_space<vmem>>, vector<1x128x16xf32>
      %176 = vector.shape_cast %175 : vector<1x128x16xf32> to vector<128x16xf32>
      %177 = vector.shape_cast %174 : vector<128x16xf32> to vector<1x128x16xf32>
      tpu.vector_store %arg11[%c3_94, %c0_95, %c0_96], %177 {strides = array<i32>} : memref<4x128x16xf32, #tpu.memory_space<vmem>>, vector<1x128x16xf32>,
      %c3_97 = arith.constant 3 : index
      %c0_98 = arith.constant 0 : index
      %c0_99 = arith.constant 0 : index
      %178 = vector.load %arg9[%c3_97, %c0_98, %c0_99] : memref<4x128x1xf32, #tpu.memory_space<vmem>>, vector<1x128x1xf32>
      %179 = vector.shape_cast %178 : vector<1x128x1xf32> to vector<128x1xf32>
      %180 = vector.shape_cast %153 : vector<128x1xf32> to vector<1x128x1xf32>
      tpu.vector_store %arg9[%c3_97, %c0_98, %c0_99], %180 {strides = array<i32>} : memref<4x128x1xf32, #tpu.memory_space<vmem>>, vector<1x128x1xf32>,
    } else {
    }
    %c2_i32 = arith.constant 2 : i32
    %9 = arith.cmpi eq, %arg2, %c2_i32 : i32
    %10 = arith.extui %9 : i1 to i32
    %c0_i32_3 = arith.constant 0 : i32
    %11 = arith.cmpi ne, %10, %c0_i32_3 : i32
    scf.if %11 {
      %c0 = arith.constant 0 : index
      %c0_4 = arith.constant 0 : index
      %12 = vector.load %arg6[%c0, %c0_4] : memref<64x64xbf16, #tpu.memory_space<vmem>>, vector<64x64xbf16>
      %c0_5 = arith.constant 0 : index
      %c0_6 = arith.constant 0 : index
      %13 = vector.load %arg7[%c0_5, %c0_6] : memref<1x64xf32, #tpu.memory_space<vmem>>, vector<1x64xf32>
      %c0_7 = arith.constant 0 : index
      %c0_8 = arith.constant 0 : index
      %c0_9 = arith.constant 0 : index
      %14 = vector.load %arg11[%c0_7, %c0_8, %c0_9] : memref<4x128x16xf32, #tpu.memory_space<vmem>>, vector<1x128x16xf32>
      %15 = vector.shape_cast %14 : vector<1x128x16xf32> to vector<128x16xf32>
      %c0_10 = arith.constant 0 : index
      %c0_11 = arith.constant 0 : index
      %c0_12 = arith.constant 0 : index
      %16 = vector.load %arg10[%c0_10, %c0_11, %c0_12] : memref<4x128x1xf32, #tpu.memory_space<vmem>>, vector<1x128x1xf32>
      %17 = vector.shape_cast %16 : vector<1x128x1xf32> to vector<128x1xf32>
      %18 = tpu.reciprocal %17 {approx = true} : vector<128x1xf32> -> vector<128x1xf32>
      %19 = vector.broadcast %18 : vector<128x1xf32> to vector<128x16xf32>
      %20 = arith.mulf %15, %19 : vector<128x16xf32>
      %21 = arith.truncf %20 : vector<128x16xf32> to vector<128x16xbf16>
      %22 = vector.extract_strided_slice %12 {offsets = [0, 0], sizes = [16, 64], strides = [1, 1]} : vector<64x64xbf16> to vector<16x64xbf16>
      %cst = arith.constant dense<0.000000e+00> : vector<128x64xf32>
      %23 = tpu.matmul %21, %22, %cst {dimension_numbers = #tpu.dot_dimension_numbers<[1], [0], [0], [1], [0, 0, 1, 1], [], []>} : vector<128x16xbf16>, vector<16x64xbf16>, vector<128x64xf32> -> vector<128x64xf32>
      %24 = vector.broadcast %13 : vector<1x64xf32> to vector<128x64xf32>
      %25 = arith.addf %24, %23 : vector<128x64xf32>
      %c1 = arith.constant 1 : index
      %c0_13 = arith.constant 0 : index
      %c0_14 = arith.constant 0 : index
      %26 = vector.load %arg11[%c1, %c0_13, %c0_14] : memref<4x128x16xf32, #tpu.memory_space<vmem>>, vector<1x128x16xf32>
      %27 = vector.shape_cast %26 : vector<1x128x16xf32> to vector<128x16xf32>
      %c1_15 = arith.constant 1 : index
      %c0_16 = arith.constant 0 : index
      %c0_17 = arith.constant 0 : index
      %28 = vector.load %arg10[%c1_15, %c0_16, %c0_17] : memref<4x128x1xf32, #tpu.memory_space<vmem>>, vector<1x128x1xf32>
      %29 = vector.shape_cast %28 : vector<1x128x1xf32> to vector<128x1xf32>
      %30 = tpu.reciprocal %29 {approx = true} : vector<128x1xf32> -> vector<128x1xf32>
      %31 = vector.broadcast %30 : vector<128x1xf32> to vector<128x16xf32>
      %32 = arith.mulf %27, %31 : vector<128x16xf32>
      %33 = arith.truncf %32 : vector<128x16xf32> to vector<128x16xbf16>
      %34 = vector.extract_strided_slice %12 {offsets = [16, 0], sizes = [16, 64], strides = [1, 1]} : vector<64x64xbf16> to vector<16x64xbf16>
      %cst_18 = arith.constant dense<0.000000e+00> : vector<128x64xf32>
      %35 = tpu.matmul %33, %34, %cst_18 {dimension_numbers = #tpu.dot_dimension_numbers<[1], [0], [0], [1], [0, 0, 1, 1], [], []>} : vector<128x16xbf16>, vector<16x64xbf16>, vector<128x64xf32> -> vector<128x64xf32>
      %36 = arith.addf %25, %35 : vector<128x64xf32>
      %c2 = arith.constant 2 : index
      %c0_19 = arith.constant 0 : index
      %c0_20 = arith.constant 0 : index
      %37 = vector.load %arg11[%c2, %c0_19, %c0_20] : memref<4x128x16xf32, #tpu.memory_space<vmem>>, vector<1x128x16xf32>
      %38 = vector.shape_cast %37 : vector<1x128x16xf32> to vector<128x16xf32>
      %c2_21 = arith.constant 2 : index
      %c0_22 = arith.constant 0 : index
      %c0_23 = arith.constant 0 : index
      %39 = vector.load %arg10[%c2_21, %c0_22, %c0_23] : memref<4x128x1xf32, #tpu.memory_space<vmem>>, vector<1x128x1xf32>
      %40 = vector.shape_cast %39 : vector<1x128x1xf32> to vector<128x1xf32>
      %41 = tpu.reciprocal %40 {approx = true} : vector<128x1xf32> -> vector<128x1xf32>
      %42 = vector.broadcast %41 : vector<128x1xf32> to vector<128x16xf32>
      %43 = arith.mulf %38, %42 : vector<128x16xf32>
      %44 = arith.truncf %43 : vector<128x16xf32> to vector<128x16xbf16>
      %45 = vector.extract_strided_slice %12 {offsets = [32, 0], sizes = [16, 64], strides = [1, 1]} : vector<64x64xbf16> to vector<16x64xbf16>
      %cst_24 = arith.constant dense<0.000000e+00> : vector<128x64xf32>
      %46 = tpu.matmul %44, %45, %cst_24 {dimension_numbers = #tpu.dot_dimension_numbers<[1], [0], [0], [1], [0, 0, 1, 1], [], []>} : vector<128x16xbf16>, vector<16x64xbf16>, vector<128x64xf32> -> vector<128x64xf32>
      %47 = arith.addf %36, %46 : vector<128x64xf32>
      %c3 = arith.constant 3 : index
      %c0_25 = arith.constant 0 : index
      %c0_26 = arith.constant 0 : index
      %48 = vector.load %arg11[%c3, %c0_25, %c0_26] : memref<4x128x16xf32, #tpu.memory_space<vmem>>, vector<1x128x16xf32>
      %49 = vector.shape_cast %48 : vector<1x128x16xf32> to vector<128x16xf32>
      %c3_27 = arith.constant 3 : index
      %c0_28 = arith.constant 0 : index
      %c0_29 = arith.constant 0 : index
      %50 = vector.load %arg10[%c3_27, %c0_28, %c0_29] : memref<4x128x1xf32, #tpu.memory_space<vmem>>, vector<1x128x1xf32>
      %51 = vector.shape_cast %50 : vector<1x128x1xf32> to vector<128x1xf32>
      %52 = tpu.reciprocal %51 {approx = true} : vector<128x1xf32> -> vector<128x1xf32>
      %53 = vector.broadcast %52 : vector<128x1xf32> to vector<128x16xf32>
      %54 = arith.mulf %49, %53 : vector<128x16xf32>
      %55 = arith.truncf %54 : vector<128x16xf32> to vector<128x16xbf16>
      %56 = vector.extract_strided_slice %12 {offsets = [48, 0], sizes = [16, 64], strides = [1, 1]} : vector<64x64xbf16> to vector<16x64xbf16>
      %cst_30 = arith.constant dense<0.000000e+00> : vector<128x64xf32>
      %57 = tpu.matmul %55, %56, %cst_30 {dimension_numbers = #tpu.dot_dimension_numbers<[1], [0], [0], [1], [0, 0, 1, 1], [], []>} : vector<128x16xbf16>, vector<16x64xbf16>, vector<128x64xf32> -> vector<128x64xf32>
      %58 = arith.addf %47, %57 : vector<128x64xf32>
      %c0_31 = arith.constant 0 : index
      %c0_32 = arith.constant 0 : index
      %c0_33 = arith.constant 0 : index
      %59 = vector.load %arg8[%c0_31, %c0_32, %c0_33] : memref<1x128x64xf32, #tpu.memory_space<vmem>>, vector<1x128x64xf32>
      %60 = vector.shape_cast %59 : vector<1x128x64xf32> to vector<128x64xf32>
      %61 = vector.shape_cast %58 : vector<128x64xf32> to vector<1x128x64xf32>
      tpu.vector_store %arg8[%c0_31, %c0_32, %c0_33], %61 {strides = array<i32>} : memref<1x128x64xf32, #tpu.memory_space<vmem>>, vector<1x128x64xf32>,
    } else {
    }
    return
  }
  func.func @transform_0(%arg0: i32, %arg1: i32, %arg2: i32) -> (i32, i32, i32) {
    %c0_i32 = arith.constant 0 : i32
    %c0_i32_0 = arith.constant 0 : i32
    return %arg0, %arg1, %c0_i32 : i32, i32, i32
  }
  func.func @transform_1(%arg0: i32, %arg1: i32, %arg2: i32) -> (i32, i32, i32) {
    %c0_i32 = arith.constant 0 : i32
    %c0_i32_0 = arith.constant 0 : i32
    return %arg0, %arg2, %c0_i32 : i32, i32, i32
  }
  func.func @transform_2(%arg0: i32, %arg1: i32, %arg2: i32) -> (i32, i32, i32) {
    %c0_i32 = arith.constant 0 : i32
    %c0_i32_0 = arith.constant 0 : i32
    return %arg0, %arg2, %c0_i32 : i32, i32, i32
  }
  func.func @transform_3(%arg0: i32, %arg1: i32, %arg2: i32) -> (i32, i32) {
    %c0_i32 = arith.constant 0 : i32
    %c0_i32_0 = arith.constant 0 : i32
    %c0_i32_1 = arith.constant 0 : i32
    return %c0_i32, %c0_i32_0 : i32, i32
  }
  func.func @transform_4(%arg0: i32, %arg1: i32, %arg2: i32) -> (i32, i32) {
    %c0_i32 = arith.constant 0 : i32
    %c0_i32_0 = arith.constant 0 : i32
    %c0_i32_1 = arith.constant 0 : i32
    return %c0_i32, %c0_i32_0 : i32, i32
  }
  func.func @transform_5(%arg0: i32, %arg1: i32, %arg2: i32) -> (i32, i32, i32) {
    %c0_i32 = arith.constant 0 : i32
    %c0_i32_0 = arith.constant 0 : i32
    return %arg0, %arg1, %c0_i32 : i32, i32, i32
  }
}

</mosaic_0001>

<llo_original>
// kernel: mass_attention_forward.2
$region0: #{mass_attention_forward.2}
  #allocation0 [shape = 'u32[]', space=smem, size = 0x4, offset = 0x4, fixed_abs, tag = 'smem constant byte address 0x4 - core index']
  #allocation1 [shape = 'u32[144,128]{1,0:T(1,128)}', space=vmem, size = 0x12000, scoped, tag = 'internal scratch']
  %s0 = inlined_call_operand.vmem [shape: f32[768,64], index: 0, kind: input, shape index: {}]
  %s1 = inlined_call_operand.vmem [shape: bf16[64,192], index: 1, kind: input, shape index: {}]
  %s2 = inlined_call_operand.vmem [shape: f32[1,192], index: 2, kind: input, shape index: {}]
  %s3 = inlined_call_operand.vmem [shape: bf16[768,64], index: 3, kind: output, shape index: {0}]
  %s4 = inlined_call_operand.vmem [shape: bf16[768,64], index: 4, kind: output, shape index: {1}]
  %s5 = inlined_call_operand.vmem [shape: bf16[768,64], index: 5, kind: output, shape index: {2}]
  %6 = xla_tuple %s3, %s4, %s5
  %s7 = sld [smem:[#allocation0]]
  $region61: #{mass_attention_forward.2} parent=0
    _
  %s9 = ssub.s32 1, %s7
  %s10 = scalar_select 0, %s9, %s7
  loop: start=0, step=1, limit=5
  $region2: #{mass_attention_forward.2} parent=0 // loop_pre_header
    _
  $region3: #{mass_attention_forward.2} parent=0 // loop_header
    %s12 = sphi 0, %s16
    %p13 = scmp.ge.s32.totalorder %s12, 5
    %s22 = sphi 0, %s24
    %s25 = sphi 0, %s22
    %s26 = sphi 0, %s25
    %s42 = sphi 0, %s26
    %s46 = sphi 0, %s46
    %s48 = sphi 0, %s46
    %s49 = sphi 0, %s48
    %s63 = sphi 0, %s49
    %s67 = sphi 0, %s67
    %s69 = sphi 0, %s67
    %s70 = sphi 0, %s69
    %s84 = sphi 0, %s70
    %s90 = sphi 0, %s92
    %s93 = sphi 0, %s90
    %s94 = sphi 0, %s93
    %s110 = sphi 0, %s94
    %s116 = sphi 0, %s118
    %s119 = sphi 0, %s116
    %s120 = sphi 0, %s119
    %s136 = sphi 0, %s120
    %s142 = sphi 0, %s144
    %s145 = sphi 0, %s142
    %s146 = sphi 0, %s145
    %s162 = sphi 0, %s146
  $region4: #{mass_attention_forward.2} parent=0 // loop_header_branch
    %15 = sbr.rel (%p13) target = $region8
  $region5: #{mass_attention_forward.2} parent=0 // loop_body
    %s17 = ssub.s32 %s12, 1
    %s18 = ssub.s32 %s12, 2
    %s19 = sadd.s32 %s12, 1
    %s20 = ssub.s32 %s12, %s19
    %p21 = scmp.eq.s32.totalorder %s20, 0
    %s23 = sadd.s32 %s22, 1
    %s24 = scalar_select %p21, %s22, %s23
    %p27 = pneg %p21
    %p28 = scmp.eq.s32.totalorder %s12, 2
    %p29 = por %p27, %p28
    %p30 = scmp.ne.s32.totalorder %s22, %s25
    %p31 = scmp.eq.s32.totalorder %s12, 0
    %p32 = por %p30, %p31
    %p33 = scmp.ne.s32.totalorder %s22, %s25
    %p34 = scmp.eq.s32.totalorder %s17, 2
    %p35 = por %p33, %p34
    %p36 = scmp.ne.s32.totalorder %s25, %s26
    %p37 = scmp.eq.s32.totalorder %s17, 0
    %p38 = por %p36, %p37
    %p39 = scmp.ne.s32.totalorder %s25, %s26
    %p40 = scmp.eq.s32.totalorder %s18, 2
    %p41 = por %p39, %p40
    %p43 = scmp.ne.s32.totalorder %s26, %s42
    %p44 = scmp.eq.s32.totalorder %s18, 0
    %p45 = por %p43, %p44
    %s47 = sadd.s32 %s46, 1
    %p50 = scmp.eq.s32.totalorder %s12, 2
    %p51 = scmp.ne.s32.totalorder %s46, %s48
    %p52 = scmp.eq.s32.totalorder %s12, 0
    %p53 = por %p51, %p52
    %p54 = scmp.ne.s32.totalorder %s46, %s48
    %p55 = scmp.eq.s32.totalorder %s17, 2
    %p56 = por %p54, %p55
    %p57 = scmp.ne.s32.totalorder %s48, %s49
    %p58 = scmp.eq.s32.totalorder %s17, 0
    %p59 = por %p57, %p58
    %p60 = scmp.ne.s32.totalorder %s48, %s49
    %p61 = scmp.eq.s32.totalorder %s18, 2
    %p62 = por %p60, %p61
    %p64 = scmp.ne.s32.totalorder %s49, %s63
    %p65 = scmp.eq.s32.totalorder %s18, 0
    %p66 = por %p64, %p65
    %s68 = sadd.s32 %s67, 1
    %p71 = scmp.eq.s32.totalorder %s12, 2
    %p72 = scmp.ne.s32.totalorder %s67, %s69
    %p73 = scmp.eq.s32.totalorder %s12, 0
    %p74 = por %p72, %p73
    %p75 = scmp.ne.s32.totalorder %s67, %s69
    %p76 = scmp.eq.s32.totalorder %s17, 2
    %p77 = por %p75, %p76
    %p78 = scmp.ne.s32.totalorder %s69, %s70
    %p79 = scmp.eq.s32.totalorder %s17, 0
    %p80 = por %p78, %p79
    %p81 = scmp.ne.s32.totalorder %s69, %s70
    %p82 = scmp.eq.s32.totalorder %s18, 2
    %p83 = por %p81, %p82
    %p85 = scmp.ne.s32.totalorder %s70, %s84
    %p86 = scmp.eq.s32.totalorder %s18, 0
    %p87 = por %p85, %p86
    %s88 = ssub.s32 %s12, %s19
    %p89 = scmp.eq.s32.totalorder %s88, 0
    %s91 = sadd.s32 %s90, 1
    %s92 = scalar_select %p89, %s90, %s91
    %p95 = pneg %p89
    %p96 = scmp.eq.s32.totalorder %s12, 2
    %p97 = por %p95, %p96
    %p98 = scmp.ne.s32.totalorder %s90, %s93
    %p99 = scmp.eq.s32.totalorder %s12, 0
    %p100 = por %p98, %p99
    %p101 = scmp.ne.s32.totalorder %s90, %s93
    %p102 = scmp.eq.s32.totalorder %s17, 2
    %p103 = por %p101, %p102
    %p104 = scmp.ne.s32.totalorder %s93, %s94
    %p105 = scmp.eq.s32.totalorder %s17, 0
    %p106 = por %p104, %p105
    %p107 = scmp.ne.s32.totalorder %s93, %s94
    %p108 = scmp.eq.s32.totalorder %s18, 2
    %p109 = por %p107, %p108
    %p111 = scmp.ne.s32.totalorder %s94, %s110
    %p112 = scmp.eq.s32.totalorder %s18, 0
    %p113 = por %p111, %p112
    %s114 = ssub.s32 %s12, %s19
    %p115 = scmp.eq.s32.totalorder %s114, 0
    %s117 = sadd.s32 %s116, 1
    %s118 = scalar_select %p115, %s116, %s117
    %p121 = pneg %p115
    %p122 = scmp.eq.s32.totalorder %s12, 2
    %p123 = por %p121, %p122
    %p124 = scmp.ne.s32.totalorder %s116, %s119
    %p125 = scmp.eq.s32.totalorder %s12, 0
    %p126 = por %p124, %p125
    %p127 = scmp.ne.s32.totalorder %s116, %s119
    %p128 = scmp.eq.s32.totalorder %s17, 2
    %p129 = por %p127, %p128
    %p130 = scmp.ne.s32.totalorder %s119, %s120
    %p131 = scmp.eq.s32.totalorder %s17, 0
    %p132 = por %p130, %p131
    %p133 = scmp.ne.s32.totalorder %s119, %s120
    %p134 = scmp.eq.s32.totalorder %s18, 2
    %p135 = por %p133, %p134
    %p137 = scmp.ne.s32.totalorder %s120, %s136
    %p138 = scmp.eq.s32.totalorder %s18, 0
    %p139 = por %p137, %p138
    %s140 = ssub.s32 %s12, %s19
    %p141 = scmp.eq.s32.totalorder %s140, 0
    %s143 = sadd.s32 %s142, 1
    %s144 = scalar_select %p141, %s142, %s143
    %p147 = pneg %p141
    %p148 = scmp.eq.s32.totalorder %s12, 2
    %p149 = por %p147, %p148
    %p150 = scmp.ne.s32.totalorder %s142, %s145
    %p151 = scmp.eq.s32.totalorder %s12, 0
    %p152 = por %p150, %p151
    %p153 = scmp.ne.s32.totalorder %s142, %s145
    %p154 = scmp.eq.s32.totalorder %s17, 2
    %p155 = por %p153, %p154
    %p156 = scmp.ne.s32.totalorder %s145, %s146
    %p157 = scmp.eq.s32.totalorder %s17, 0
    %p158 = por %p156, %p157
    %p159 = scmp.ne.s32.totalorder %s145, %s146
    %p160 = scmp.eq.s32.totalorder %s18, 2
    %p161 = por %p159, %p160
    %p163 = scmp.ne.s32.totalorder %s146, %s162
    %p164 = scmp.eq.s32.totalorder %s18, 0
    %p165 = por %p163, %p164
    %p166 = scmp.le.s32.totalorder 1, %s12
    %p167 = scmp.lt.s32.totalorder %s12, 4
    %p168 = pnand %p166, %p167
    %p169 = pneg %p168
    // Predicated region
    $region9: #{mass_attention_forward.2} parent=5 // pred_check
      _
    $region10: #{mass_attention_forward.2} parent=5 // pred_check_branch
      %171 = sbr.rel (%p168) target = $region12
    $region11: #{mass_attention_forward.2} parent=5 // pred_region
      %s172 = ssub.s32 %s12, 1
      // Predicated region
      $region13: #{mass_attention_forward.2} parent=11 // pred_check
        %p173 = pneg %p59
      $region14: #{mass_attention_forward.2} parent=11 // pred_check_branch
        %175 = sbr.rel (%p173) target = $region16
      $region15: #{mass_attention_forward.2} parent=11 // pred_region
        _
      $region16: #{mass_attention_forward.2} parent=11 // pred_fallthru
        _
      // Predicated region
      $region17: #{mass_attention_forward.2} parent=11 // pred_check
        %p176 = pneg %p80
      $region18: #{mass_attention_forward.2} parent=11 // pred_check_branch
        %178 = sbr.rel (%p176) target = $region20
      $region19: #{mass_attention_forward.2} parent=11 // pred_region
        _
      $region20: #{mass_attention_forward.2} parent=11 // pred_fallthru
        _
    $region12: #{mass_attention_forward.2} parent=5 // pred_fallthru
      _
    %p179 = scmp.lt.s32.totalorder %s12, 3
    // Predicated region
    $region21: #{mass_attention_forward.2} parent=5 // pred_check
      %p180 = pneg %p179
    $region22: #{mass_attention_forward.2} parent=5 // pred_check_branch
      %182 = sbr.rel (%p180) target = $region24
    $region23: #{mass_attention_forward.2} parent=5 // pred_region
      // Predicated region
      $region25: #{mass_attention_forward.2} parent=23 // pred_check
        %p183 = pneg %p32
      $region26: #{mass_attention_forward.2} parent=23 // pred_check_branch
        %185 = sbr.rel (%p183) target = $region28
      $region27: #{mass_attention_forward.2} parent=23 // pred_region
        %s186 = smul.u32 32, %s12
        %p187 = scmp.lt.s32.totalorder %s186, 95
        %s188 = scalar_select %p187, %s186, 95
        %s189 = smul.addr %s188, 8
        %s190 = scalar_lea.vmem %s0, %s189
        %s191 = smul.u32 32, %s12
      $region28: #{mass_attention_forward.2} parent=23 // pred_fallthru
        _
    $region24: #{mass_attention_forward.2} parent=5 // pred_fallthru
      _
    %p192 = scmp.le.s32.totalorder 1, %s12
    %p193 = scmp.lt.s32.totalorder %s12, 4
    %p194 = pnand %p192, %p193
    %p195 = pneg %p194
    // Predicated region
    $region29: #{mass_attention_forward.2} parent=5 // pred_check
      _
    $region30: #{mass_attention_forward.2} parent=5 // pred_check_branch
      %197 = sbr.rel (%p194) target = $region32
    $region31: #{mass_attention_forward.2} parent=5 // pred_region
      %s198 = ssub.s32 %s12, 1
      %s199 = smul.u32 32, %s17
      %p200 = scmp.lt.s32.totalorder %s199, 95
      %s201 = scalar_select %p200, %s199, 95
      %s202 = smul.addr %s201, 8
      %s203 = scalar_lea.vmem %s0, %s202
      %p204 = pneg %p38
      %p205 = pneg %p35
      %p206 = pneg %p59
      %p207 = pneg %p56
      %p208 = pneg %p80
      %p209 = pneg %p77
      %p210 = pneg %p106
      %p211 = pneg %p103
      %s212 = smul.u32 32, %s17
      %p213 = scmp.lt.s32.totalorder %s212, 95
      %s214 = scalar_select %p213, %s212, 95
      %s215 = smul.addr %s214, 4
      %s216 = scalar_lea.vmem %s3, %s215
      %p217 = pneg %p132
      %p218 = pneg %p129
      %s219 = smul.u32 32, %s17
      %p220 = scmp.lt.s32.totalorder %s219, 95
      %s221 = scalar_select %p220, %s219, 95
      %s222 = smul.addr %s221, 4
      %s223 = scalar_lea.vmem %s4, %s222
      %p224 = pneg %p158
      %p225 = pneg %p155
      %s226 = smul.u32 32, %s17
      %p227 = scmp.lt.s32.totalorder %s226, 95
      %s228 = scalar_select %p227, %s226, 95
      %s229 = smul.addr %s228, 4
      %s230 = scalar_lea.vmem %s5, %s229
      %s231 = smul.u32 32, %s17
      %p232 = scmp.lt.s32.totalorder %s231, 95
      %s233 = scalar_select %p232, %s231, 95
      %s234 = smul.addr %s233, 8
      %s235 = scalar_lea.vmem %s0, %s234
      %s236 = smul.u32 32, %s17
      %s237 = smul.u32 32, %s17
      %p238 = scmp.lt.s32.totalorder %s237, 95
      %s239 = scalar_select %p238, %s237, 95
      %s240 = smul.addr %s239, 4
      %s241 = scalar_lea.vmem %s3, %s240
      %s242 = smul.u32 32, %s17
      %s243 = smul.u32 32, %s17
      %p244 = scmp.lt.s32.totalorder %s243, 95
      %s245 = scalar_select %p244, %s243, 95
      %s246 = smul.addr %s245, 4
      %s247 = scalar_lea.vmem %s4, %s246
      %s248 = smul.u32 32, %s17
      %s249 = smul.u32 32, %s17
      %p250 = scmp.lt.s32.totalorder %s249, 95
      %s251 = scalar_select %p250, %s249, 95
      %s252 = smul.addr %s251, 4
      %s253 = scalar_lea.vmem %s5, %s252
      %s254 = smul.u32 32, %s17
      %v256 = vld [vmem:[%s235] sm:$0xff]
      %v257 = vld [vmem:[%s235 + $0x8] sm:$0xff]
      %v258 = vld [vmem:[%s235 + $0x10] sm:$0xff]
      %v259 = vld [vmem:[%s235 + $0x18] sm:$0xff]
      %v260 = vld [vmem:[%s235 + $0x20] sm:$0xff]
      %v261 = vld [vmem:[%s235 + $0x28] sm:$0xff]
      %v262 = vld [vmem:[%s235 + $0x30] sm:$0xff]
      %v263 = vld [vmem:[%s235 + $0x38] sm:$0xff]
      %v264 = vld [vmem:[%s235 + $0x40] sm:$0xff]
      %v265 = vld [vmem:[%s235 + $0x48] sm:$0xff]
      %v266 = vld [vmem:[%s235 + $0x50] sm:$0xff]
      %v267 = vld [vmem:[%s235 + $0x58] sm:$0xff]
      %v268 = vld [vmem:[%s235 + $0x60] sm:$0xff]
      %v269 = vld [vmem:[%s235 + $0x68] sm:$0xff]
      %v270 = vld [vmem:[%s235 + $0x70] sm:$0xff]
      %v271 = vld [vmem:[%s235 + $0x78] sm:$0xff]
      %v272 = vld [vmem:[%s235 + $0x80] sm:$0xff]
      %v273 = vld [vmem:[%s235 + $0x88] sm:$0xff]
      %v274 = vld [vmem:[%s235 + $0x90] sm:$0xff]
      %v275 = vld [vmem:[%s235 + $0x98] sm:$0xff]
      %v276 = vld [vmem:[%s235 + $0xa0] sm:$0xff]
      %v277 = vld [vmem:[%s235 + $0xa8] sm:$0xff]
      %v278 = vld [vmem:[%s235 + $0xb0] sm:$0xff]
      %v279 = vld [vmem:[%s235 + $0xb8] sm:$0xff]
      %v280 = vld [vmem:[%s235 + $0xc0] sm:$0xff]
      %v281 = vld [vmem:[%s235 + $0xc8] sm:$0xff]
      %v282 = vld [vmem:[%s235 + $0xd0] sm:$0xff]
      %v283 = vld [vmem:[%s235 + $0xd8] sm:$0xff]
      %v284 = vld [vmem:[%s235 + $0xe0] sm:$0xff]
      %v285 = vld [vmem:[%s235 + $0xe8] sm:$0xff]
      %v286 = vld [vmem:[%s235 + $0xf0] sm:$0xff]
      %v287 = vld [vmem:[%s235 + $0xf8] sm:$0xff]
      %v288 = vpack.c.bf16 %v257, %v256
      %v289 = vpack.c.bf16 %v259, %v258
      %v290 = vpack.c.bf16 %v261, %v260
      %v291 = vpack.c.bf16 %v263, %v262
      %v292 = vpack.c.bf16 %v265, %v264
      %v293 = vpack.c.bf16 %v267, %v266
      %v294 = vpack.c.bf16 %v269, %v268
      %v295 = vpack.c.bf16 %v271, %v270
      %v296 = vpack.c.bf16 %v273, %v272
      %v297 = vpack.c.bf16 %v275, %v274
      %v298 = vpack.c.bf16 %v277, %v276
      %v299 = vpack.c.bf16 %v279, %v278
      %v300 = vpack.c.bf16 %v281, %v280
      %v301 = vpack.c.bf16 %v283, %v282
      %v302 = vpack.c.bf16 %v285, %v284
      %v303 = vpack.c.bf16 %v287, %v286
      %v304 = vld [vmem:[%s1] sm:$0xff]
      %v305 = vld [vmem:[%s1 + $0x8] sm:$0xff]
      %v306 = vld [vmem:[%s1 + $0x10] sm:$0xff]
      %v307 = vld [vmem:[%s1 + $0x18] sm:$0xff]
      %v308 = vld [vmem:[%s1 + $0x20] sm:$0xff]
      %v309 = vld [vmem:[%s1 + $0x28] sm:$0xff]
      %v310 = vld [vmem:[%s1 + $0x30] sm:$0xff]
      %v311 = vld [vmem:[%s1 + $0x38] sm:$0xff]
      %v312 = vld [vmem:[%s2] sm:$0x3]
      %v314 = vlaneseq
      %v315 = vshrl.u32 %v314, 7
      %v316 = vsub.s32 0, %v315
      %v317 = vrot.slane %v312, %v316
      %v318 = vlaneseq
      %v319 = vshrl.u32 %v318, 7
      %v320 = vsub.s32 1, %v319
      %v321 = vrot.slane %v312, %v320
      %v332 = vunpack.c.l.b16 %v304
      %v333 = vunpack.c.h.b16 %v304
      %v334 = vunpack.c.l.b16 %v305
      %v335 = vunpack.c.h.b16 %v305
      %v336 = vunpack.c.l.b16 %v306
      %v337 = vunpack.c.h.b16 %v306
      %v338 = vunpack.c.l.b16 %v307
      %v339 = vunpack.c.h.b16 %v307
      %v340 = vunpack.c.l.b16 %v308
      %v341 = vunpack.c.h.b16 %v308
      %v342 = vunpack.c.l.b16 %v309
      %v343 = vunpack.c.h.b16 %v309
      %v344 = vunpack.c.l.b16 %v310
      %v345 = vunpack.c.h.b16 %v310
      %v346 = vunpack.c.l.b16 %v311
      %v347 = vunpack.c.h.b16 %v311
      %v348 = vpack.c.b16 %v334, %v332
      %v349 = vpack.c.b16 %v335, %v333
      %v350 = vpack.c.b16 %v338, %v336
      %v351 = vpack.c.b16 %v339, %v337
      %v352 = vpack.c.b16 %v342, %v340
      %v353 = vpack.c.b16 %v343, %v341
      %v354 = vpack.c.b16 %v346, %v344
      %v355 = vpack.c.b16 %v347, %v345
      %vm364 = vcmask 523264
      %v366 = vsel %vm364, %v288, 0
      %v369 = vsel %vm364, %v289, 0
      %v372 = vsel %vm364, %v290, 0
      %v375 = vsel %vm364, %v291, 0
      %v378 = vsel %vm364, %v292, 0
      %v381 = vsel %vm364, %v293, 0
      %v384 = vsel %vm364, %v294, 0
      %v387 = vsel %vm364, %v295, 0
      %v390 = vsel %vm364, %v296, 0
      %v393 = vsel %vm364, %v297, 0
      %v396 = vsel %vm364, %v298, 0
      %v399 = vsel %vm364, %v299, 0
      %v402 = vsel %vm364, %v300, 0
      %v405 = vsel %vm364, %v301, 0
      %v408 = vsel %vm364, %v302, 0
      %v411 = vsel %vm364, %v303, 0
      %413 = vmatprep.subr.bf16.mxu0 0
      %414 = vmatpush1.bf16.msra.mxu0 0
      %415 = vmatprep.subr.bf16.mxu0 0
      %416 = vmatpush1.bf16.msra.mxu0 0
      %417 = vmatprep.subr.bf16.mxu0 0
      %418 = vmatpush1.bf16.msra.mxu0 0
      %419 = vmatprep.subr.bf16.mxu0 0
      %420 = vmatpush1.bf16.msra.mxu0 0
      %421 = vmatprep.subr.bf16.mxu0 %v355
      %422 = vmatpush1.bf16.msra.mxu0 %v354
      %423 = vmatprep.subr.bf16.mxu0 %v353
      %424 = vmatpush1.bf16.msra.mxu0 %v352
      %425 = vmatprep.subr.bf16.mxu0 %v351
      %426 = vmatpush1.bf16.msra.mxu0 %v350
      %427 = vmatprep.subr.bf16.mxu0 %v349
      %428 = vmatpush1.bf16.msra.mxu0 %v348
      %429 = vmatprep.subr.bf16.mxu0 0
      %430 = vmatpush2.bf16.msra.mxu0 0
      %431 = vmatprep.subr.bf16.mxu0 0
      %432 = vmatpush2.bf16.msra.mxu0 0
      %433 = vmatprep.subr.bf16.mxu0 0
      %434 = vmatpush2.bf16.msra.mxu0 0
      %435 = vmatprep.subr.bf16.mxu0 0
      %436 = vmatpush2.bf16.msra.mxu0 0
      %437 = vmatprep.subr.bf16.mxu0 0
      %438 = vmatpush2.bf16.msra.mxu0 0
      %439 = vmatprep.subr.bf16.mxu0 0
      %440 = vmatpush2.bf16.msra.mxu0 0
      %441 = vmatprep.subr.bf16.mxu0 0
      %442 = vmatpush2.bf16.msra.mxu0 0
      %443 = vmatprep.subr.bf16.mxu0 0
      %444 = vmatpush2.bf16.msra.mxu0 0
      %445 = vmatprep.mubr.bf16.mxu0 0
      %446 = vmatmul.mubr.bf16.gmra.mxu0 %v366
      %v447 = vpop.f32.mrf.mxu0
      %v448 = vadd.f32 %v317, %v447
      %v449 = vpop.f32.mrf.mxu0
      %v450 = vadd.f32 %v321, %v449
      %v451 = vpop.f32.mrf.mxu0
      %v452 = vadd.f32 %v317, %v451
      %v453 = vpop.f32.mrf.mxu0
      %v454 = vadd.f32 %v321, %v453
      %455 = vmatprep.mubr.bf16.mxu0 0
      %456 = vmatmul.mubr.bf16.gmra.mxu0 %v369
      %v457 = vpop.f32.mrf.mxu0
      %v458 = vadd.f32 %v317, %v457
      %v459 = vpop.f32.mrf.mxu0
      %v460 = vadd.f32 %v321, %v459
      %v461 = vpop.f32.mrf.mxu0
      %v462 = vadd.f32 %v317, %v461
      %v463 = vpop.f32.mrf.mxu0
      %v464 = vadd.f32 %v321, %v463
      %465 = vmatprep.mubr.bf16.mxu0 0
      %466 = vmatmul.mubr.bf16.gmra.mxu0 %v372
      %v467 = vpop.f32.mrf.mxu0
      %v468 = vadd.f32 %v317, %v467
      %v469 = vpop.f32.mrf.mxu0
      %v470 = vadd.f32 %v321, %v469
      %v471 = vpop.f32.mrf.mxu0
      %v472 = vadd.f32 %v317, %v471
      %v473 = vpop.f32.mrf.mxu0
      %v474 = vadd.f32 %v321, %v473
      %475 = vmatprep.mubr.bf16.mxu0 0
      %476 = vmatmul.mubr.bf16.gmra.mxu0 %v375
      %v477 = vpop.f32.mrf.mxu0
      %v478 = vadd.f32 %v317, %v477
      %v479 = vpop.f32.mrf.mxu0
      %v480 = vadd.f32 %v321, %v479
      %v481 = vpop.f32.mrf.mxu0
      %v482 = vadd.f32 %v317, %v481
      %v483 = vpop.f32.mrf.mxu0
      %v484 = vadd.f32 %v321, %v483
      %485 = vmatprep.mubr.bf16.mxu0 0
      %486 = vmatmul.mubr.bf16.gmra.mxu0 %v378
      %v487 = vpop.f32.mrf.mxu0
      %v488 = vadd.f32 %v317, %v487
      %v489 = vpop.f32.mrf.mxu0
      %v490 = vadd.f32 %v321, %v489
      %v491 = vpop.f32.mrf.mxu0
      %v492 = vadd.f32 %v317, %v491
      %v493 = vpop.f32.mrf.mxu0
      %v494 = vadd.f32 %v321, %v493
      %495 = vmatprep.mubr.bf16.mxu0 0
      %496 = vmatmul.mubr.bf16.gmra.mxu0 %v381
      %v497 = vpop.f32.mrf.mxu0
      %v498 = vadd.f32 %v317, %v497
      %v499 = vpop.f32.mrf.mxu0
      %v500 = vadd.f32 %v321, %v499
      %v501 = vpop.f32.mrf.mxu0
      %v502 = vadd.f32 %v317, %v501
      %v503 = vpop.f32.mrf.mxu0
      %v504 = vadd.f32 %v321, %v503
      %505 = vmatprep.mubr.bf16.mxu0 0
      %506 = vmatmul.mubr.bf16.gmra.mxu0 %v384
      %v507 = vpop.f32.mrf.mxu0
      %v508 = vadd.f32 %v317, %v507
      %v509 = vpop.f32.mrf.mxu0
      %v510 = vadd.f32 %v321, %v509
      %v511 = vpop.f32.mrf.mxu0
      %v512 = vadd.f32 %v317, %v511
      %v513 = vpop.f32.mrf.mxu0
      %v514 = vadd.f32 %v321, %v513
      %515 = vmatprep.mubr.bf16.mxu0 0
      %516 = vmatmul.mubr.bf16.gmra.mxu0 %v387
      %v517 = vpop.f32.mrf.mxu0
      %v518 = vadd.f32 %v317, %v517
      %v519 = vpop.f32.mrf.mxu0
      %v520 = vadd.f32 %v321, %v519
      %v521 = vpop.f32.mrf.mxu0
      %v522 = vadd.f32 %v317, %v521
      %v523 = vpop.f32.mrf.mxu0
      %v524 = vadd.f32 %v321, %v523
      %525 = vmatprep.mubr.bf16.mxu0 0
      %526 = vmatmul.mubr.bf16.gmra.mxu0 %v390
      %v527 = vpop.f32.mrf.mxu0
      %v528 = vadd.f32 %v317, %v527
      %v529 = vpop.f32.mrf.mxu0
      %v530 = vadd.f32 %v321, %v529
      %v531 = vpop.f32.mrf.mxu0
      %v532 = vadd.f32 %v317, %v531
      %v533 = vpop.f32.mrf.mxu0
      %v534 = vadd.f32 %v321, %v533
      %535 = vmatprep.mubr.bf16.mxu0 0
      %536 = vmatmul.mubr.bf16.gmra.mxu0 %v393
      %v537 = vpop.f32.mrf.mxu0
      %v538 = vadd.f32 %v317, %v537
      %v539 = vpop.f32.mrf.mxu0
      %v540 = vadd.f32 %v321, %v539
      %v541 = vpop.f32.mrf.mxu0
      %v542 = vadd.f32 %v317, %v541
      %v543 = vpop.f32.mrf.mxu0
      %v544 = vadd.f32 %v321, %v543
      %545 = vmatprep.mubr.bf16.mxu0 0
      %546 = vmatmul.mubr.bf16.gmra.mxu0 %v396
      %v547 = vpop.f32.mrf.mxu0
      %v548 = vadd.f32 %v317, %v547
      %v549 = vpop.f32.mrf.mxu0
      %v550 = vadd.f32 %v321, %v549
      %v551 = vpop.f32.mrf.mxu0
      %v552 = vadd.f32 %v317, %v551
      %v553 = vpop.f32.mrf.mxu0
      %v554 = vadd.f32 %v321, %v553
      %555 = vmatprep.mubr.bf16.mxu0 0
      %556 = vmatmul.mubr.bf16.gmra.mxu0 %v399
      %v557 = vpop.f32.mrf.mxu0
      %v558 = vadd.f32 %v317, %v557
      %v559 = vpop.f32.mrf.mxu0
      %v560 = vadd.f32 %v321, %v559
      %v561 = vpop.f32.mrf.mxu0
      %v562 = vadd.f32 %v317, %v561
      %v563 = vpop.f32.mrf.mxu0
      %v564 = vadd.f32 %v321, %v563
      %565 = vmatprep.mubr.bf16.mxu0 0
      %566 = vmatmul.mubr.bf16.gmra.mxu0 %v402
      %v567 = vpop.f32.mrf.mxu0
      %v568 = vadd.f32 %v317, %v567
      %v569 = vpop.f32.mrf.mxu0
      %v570 = vadd.f32 %v321, %v569
      %v571 = vpop.f32.mrf.mxu0
      %v572 = vadd.f32 %v317, %v571
      %v573 = vpop.f32.mrf.mxu0
      %v574 = vadd.f32 %v321, %v573
      %575 = vmatprep.mubr.bf16.mxu0 0
      %576 = vmatmul.mubr.bf16.gmra.mxu0 %v405
      %v577 = vpop.f32.mrf.mxu0
      %v578 = vadd.f32 %v317, %v577
      %v579 = vpop.f32.mrf.mxu0
      %v580 = vadd.f32 %v321, %v579
      %v581 = vpop.f32.mrf.mxu0
      %v582 = vadd.f32 %v317, %v581
      %v583 = vpop.f32.mrf.mxu0
      %v584 = vadd.f32 %v321, %v583
      %585 = vmatprep.mubr.bf16.mxu0 0
      %586 = vmatmul.mubr.bf16.gmra.mxu0 %v408
      %v587 = vpop.f32.mrf.mxu0
      %v588 = vadd.f32 %v317, %v587
      %v589 = vpop.f32.mrf.mxu0
      %v590 = vadd.f32 %v321, %v589
      %v591 = vpop.f32.mrf.mxu0
      %v592 = vadd.f32 %v317, %v591
      %v593 = vpop.f32.mrf.mxu0
      %v594 = vadd.f32 %v321, %v593
      %595 = vmatprep.mubr.bf16.mxu0 0
      %596 = vmatmul.mubr.bf16.gmra.mxu0 %v411
      %v597 = vpop.f32.mrf.mxu0
      %v598 = vadd.f32 %v317, %v597
      %v599 = vpop.f32.mrf.mxu0
      %v600 = vadd.f32 %v321, %v599
      %v601 = vpop.f32.mrf.mxu0
      %v602 = vadd.f32 %v317, %v601
      %v603 = vpop.f32.mrf.mxu0
      %v604 = vadd.f32 %v321, %v603
      %605 = vdwg.mxu0
      %v606 = vpack.c.bf16 %v452, %v448
      %v607 = vpack.c.bf16 %v462, %v458
      %v608 = vpack.c.bf16 %v472, %v468
      %v609 = vpack.c.bf16 %v482, %v478
      %v610 = vpack.c.bf16 %v492, %v488
      %v611 = vpack.c.bf16 %v502, %v498
      %v612 = vpack.c.bf16 %v512, %v508
      %v613 = vpack.c.bf16 %v522, %v518
      %v614 = vpack.c.bf16 %v532, %v528
      %v615 = vpack.c.bf16 %v542, %v538
      %v616 = vpack.c.bf16 %v552, %v548
      %v617 = vpack.c.bf16 %v562, %v558
      %v618 = vpack.c.bf16 %v572, %v568
      %v619 = vpack.c.bf16 %v582, %v578
      %v620 = vpack.c.bf16 %v592, %v588
      %v621 = vpack.c.bf16 %v602, %v598
      %v638 = vunpack.c.l.b16 %v606
      %v639 = vunpack.c.h.b16 %v606
      %v640 = vunpack.c.l.b16 %v607
      %v641 = vunpack.c.h.b16 %v607
      %v642 = vunpack.c.l.b16 %v608
      %v643 = vunpack.c.h.b16 %v608
      %v644 = vunpack.c.l.b16 %v609
      %v645 = vunpack.c.h.b16 %v609
      %v646 = vunpack.c.l.b16 %v610
      %v647 = vunpack.c.h.b16 %v610
      %v648 = vunpack.c.l.b16 %v611
      %v649 = vunpack.c.h.b16 %v611
      %v650 = vunpack.c.l.b16 %v612
      %v651 = vunpack.c.h.b16 %v612
      %v652 = vunpack.c.l.b16 %v613
      %v653 = vunpack.c.h.b16 %v613
      %v654 = vunpack.c.l.b16 %v614
      %v655 = vunpack.c.h.b16 %v614
      %v656 = vunpack.c.l.b16 %v615
      %v657 = vunpack.c.h.b16 %v615
      %v658 = vunpack.c.l.b16 %v616
      %v659 = vunpack.c.h.b16 %v616
      %v660 = vunpack.c.l.b16 %v617
      %v661 = vunpack.c.h.b16 %v617
      %v662 = vunpack.c.l.b16 %v618
      %v663 = vunpack.c.h.b16 %v618
      %v664 = vunpack.c.l.b16 %v619
      %v665 = vunpack.c.h.b16 %v619
      %v666 = vunpack.c.l.b16 %v620
      %v667 = vunpack.c.h.b16 %v620
      %v668 = vunpack.c.l.b16 %v621
      %v669 = vunpack.c.h.b16 %v621
      %v670 = vpack.c.b16 %v638, %v638
      %v671 = vpack.c.b16 %v639, %v639
      %v672 = vpack.c.b16 %v640, %v640
      %v673 = vpack.c.b16 %v641, %v641
      %v674 = vpack.c.b16 %v642, %v642
      %v675 = vpack.c.b16 %v643, %v643
      %v676 = vpack.c.b16 %v644, %v644
      %v677 = vpack.c.b16 %v645, %v645
      %v678 = vpack.c.b16 %v646, %v646
      %v679 = vpack.c.b16 %v647, %v647
      %v680 = vpack.c.b16 %v648, %v648
      %v681 = vpack.c.b16 %v649, %v649
      %v682 = vpack.c.b16 %v650, %v650
      %v683 = vpack.c.b16 %v651, %v651
      %v684 = vpack.c.b16 %v652, %v652
      %v685 = vpack.c.b16 %v653, %v653
      %v686 = vpack.c.b16 %v654, %v654
      %v687 = vpack.c.b16 %v655, %v655
      %v688 = vpack.c.b16 %v656, %v656
      %v689 = vpack.c.b16 %v657, %v657
      %v690 = vpack.c.b16 %v658, %v658
      %v691 = vpack.c.b16 %v659, %v659
      %v692 = vpack.c.b16 %v660, %v660
      %v693 = vpack.c.b16 %v661, %v661
      %v694 = vpack.c.b16 %v662, %v662
      %v695 = vpack.c.b16 %v663, %v663
      %v696 = vpack.c.b16 %v664, %v664
      %v697 = vpack.c.b16 %v665, %v665
      %v698 = vpack.c.b16 %v666, %v666
      %v699 = vpack.c.b16 %v667, %v667
      %v700 = vpack.c.b16 %v668, %v668
      %v701 = vpack.c.b16 %v669, %v669
      %vm734 = vcmask 519168
      %735 = vst.msk [vmem:[%s241] sm:$0xf] %vm734, %v670
      %736 = vst.msk [vmem:[%s241 + $0x4] sm:$0xf] %vm734, %v671
      %737 = vst.msk [vmem:[%s241 + $0x8] sm:$0xf] %vm734, %v672
      %738 = vst.msk [vmem:[%s241 + $0xc] sm:$0xf] %vm734, %v673
      %739 = vst.msk [vmem:[%s241 + $0x10] sm:$0xf] %vm734, %v674
      %740 = vst.msk [vmem:[%s241 + $0x14] sm:$0xf] %vm734, %v675
      %741 = vst.msk [vmem:[%s241 + $0x18] sm:$0xf] %vm734, %v676
      %742 = vst.msk [vmem:[%s241 + $0x1c] sm:$0xf] %vm734, %v677
      %743 = vst.msk [vmem:[%s241 + $0x20] sm:$0xf] %vm734, %v678
      %744 = vst.msk [vmem:[%s241 + $0x24] sm:$0xf] %vm734, %v679
      %745 = vst.msk [vmem:[%s241 + $0x28] sm:$0xf] %vm734, %v680
      %746 = vst.msk [vmem:[%s241 + $0x2c] sm:$0xf] %vm734, %v681
      %747 = vst.msk [vmem:[%s241 + $0x30] sm:$0xf] %vm734, %v682
      %748 = vst.msk [vmem:[%s241 + $0x34] sm:$0xf] %vm734, %v683
      %749 = vst.msk [vmem:[%s241 + $0x38] sm:$0xf] %vm734, %v684
      %750 = vst.msk [vmem:[%s241 + $0x3c] sm:$0xf] %vm734, %v685
      %751 = vst.msk [vmem:[%s241 + $0x40] sm:$0xf] %vm734, %v686
      %752 = vst.msk [vmem:[%s241 + $0x44] sm:$0xf] %vm734, %v687
      %753 = vst.msk [vmem:[%s241 + $0x48] sm:$0xf] %vm734, %v688
      %754 = vst.msk [vmem:[%s241 + $0x4c] sm:$0xf] %vm734, %v689
      %755 = vst.msk [vmem:[%s241 + $0x50] sm:$0xf] %vm734, %v690
      %756 = vst.msk [vmem:[%s241 + $0x54] sm:$0xf] %vm734, %v691
      %757 = vst.msk [vmem:[%s241 + $0x58] sm:$0xf] %vm734, %v692
      %758 = vst.msk [vmem:[%s241 + $0x5c] sm:$0xf] %vm734, %v693
      %759 = vst.msk [vmem:[%s241 + $0x60] sm:$0xf] %vm734, %v694
      %760 = vst.msk [vmem:[%s241 + $0x64] sm:$0xf] %vm734, %v695
      %761 = vst.msk [vmem:[%s241 + $0x68] sm:$0xf] %vm734, %v696
      %762 = vst.msk [vmem:[%s241 + $0x6c] sm:$0xf] %vm734, %v697
      %763 = vst.msk [vmem:[%s241 + $0x70] sm:$0xf] %vm734, %v698
      %764 = vst.msk [vmem:[%s241 + $0x74] sm:$0xf] %vm734, %v699
      %765 = vst.msk [vmem:[%s241 + $0x78] sm:$0xf] %vm734, %v700
      %766 = vst.msk [vmem:[%s241 + $0x7c] sm:$0xf] %vm734, %v701
      %767 = vrot.lane.b32.xlu0 %v670, 64
      %v768 = vpop.permute.xlu0 %767
      %769 = vrot.lane.b32.xlu0 %v671, 64
      %v770 = vpop.permute.xlu0 %769
      %771 = vrot.lane.b32.xlu0 %v672, 64
      %v772 = vpop.permute.xlu0 %771
      %773 = vrot.lane.b32.xlu0 %v673, 64
      %v774 = vpop.permute.xlu0 %773
      %775 = vrot.lane.b32.xlu0 %v674, 64
      %v776 = vpop.permute.xlu0 %775
      %777 = vrot.lane.b32.xlu0 %v675, 64
      %v778 = vpop.permute.xlu0 %777
      %779 = vrot.lane.b32.xlu0 %v676, 64
      %v780 = vpop.permute.xlu0 %779
      %781 = vrot.lane.b32.xlu0 %v677, 64
      %v782 = vpop.permute.xlu0 %781
      %783 = vrot.lane.b32.xlu0 %v678, 64
      %v784 = vpop.permute.xlu0 %783
      %785 = vrot.lane.b32.xlu0 %v679, 64
      %v786 = vpop.permute.xlu0 %785
      %787 = vrot.lane.b32.xlu0 %v680, 64
      %v788 = vpop.permute.xlu0 %787
      %789 = vrot.lane.b32.xlu0 %v681, 64
      %v790 = vpop.permute.xlu0 %789
      %791 = vrot.lane.b32.xlu0 %v682, 64
      %v792 = vpop.permute.xlu0 %791
      %793 = vrot.lane.b32.xlu0 %v683, 64
      %v794 = vpop.permute.xlu0 %793
      %795 = vrot.lane.b32.xlu0 %v684, 64
      %v796 = vpop.permute.xlu0 %795
      %797 = vrot.lane.b32.xlu0 %v685, 64
      %v798 = vpop.permute.xlu0 %797
      %799 = vrot.lane.b32.xlu0 %v686, 64
      %v800 = vpop.permute.xlu0 %799
      %801 = vrot.lane.b32.xlu0 %v687, 64
      %v802 = vpop.permute.xlu0 %801
      %803 = vrot.lane.b32.xlu0 %v688, 64
      %v804 = vpop.permute.xlu0 %803
      %805 = vrot.lane.b32.xlu0 %v689, 64
      %v806 = vpop.permute.xlu0 %805
      %807 = vrot.lane.b32.xlu0 %v690, 64
      %v808 = vpop.permute.xlu0 %807
      %809 = vrot.lane.b32.xlu0 %v691, 64
      %v810 = vpop.permute.xlu0 %809
      %811 = vrot.lane.b32.xlu0 %v692, 64
      %v812 = vpop.permute.xlu0 %811
      %813 = vrot.lane.b32.xlu0 %v693, 64
      %v814 = vpop.permute.xlu0 %813
      %815 = vrot.lane.b32.xlu0 %v694, 64
      %v816 = vpop.permute.xlu0 %815
      %817 = vrot.lane.b32.xlu0 %v695, 64
      %v818 = vpop.permute.xlu0 %817
      %819 = vrot.lane.b32.xlu0 %v696, 64
      %v820 = vpop.permute.xlu0 %819
      %821 = vrot.lane.b32.xlu0 %v697, 64
      %v822 = vpop.permute.xlu0 %821
      %823 = vrot.lane.b32.xlu0 %v698, 64
      %v824 = vpop.permute.xlu0 %823
      %825 = vrot.lane.b32.xlu0 %v699, 64
      %v826 = vpop.permute.xlu0 %825
      %827 = vrot.lane.b32.xlu0 %v700, 64
      %v828 = vpop.permute.xlu0 %827
      %829 = vrot.lane.b32.xlu0 %v701, 64
      %v830 = vpop.permute.xlu0 %829
      %863 = vst.msk [vmem:[%s247] sm:$0xf] %vm734, %v768
      %864 = vst.msk [vmem:[%s247 + $0x4] sm:$0xf] %vm734, %v770
      %865 = vst.msk [vmem:[%s247 + $0x8] sm:$0xf] %vm734, %v772
      %866 = vst.msk [vmem:[%s247 + $0xc] sm:$0xf] %vm734, %v774
      %867 = vst.msk [vmem:[%s247 + $0x10] sm:$0xf] %vm734, %v776
      %868 = vst.msk [vmem:[%s247 + $0x14] sm:$0xf] %vm734, %v778
      %869 = vst.msk [vmem:[%s247 + $0x18] sm:$0xf] %vm734, %v780
      %870 = vst.msk [vmem:[%s247 + $0x1c] sm:$0xf] %vm734, %v782
      %871 = vst.msk [vmem:[%s247 + $0x20] sm:$0xf] %vm734, %v784
      %872 = vst.msk [vmem:[%s247 + $0x24] sm:$0xf] %vm734, %v786
      %873 = vst.msk [vmem:[%s247 + $0x28] sm:$0xf] %vm734, %v788
      %874 = vst.msk [vmem:[%s247 + $0x2c] sm:$0xf] %vm734, %v790
      %875 = vst.msk [vmem:[%s247 + $0x30] sm:$0xf] %vm734, %v792
      %876 = vst.msk [vmem:[%s247 + $0x34] sm:$0xf] %vm734, %v794
      %877 = vst.msk [vmem:[%s247 + $0x38] sm:$0xf] %vm734, %v796
      %878 = vst.msk [vmem:[%s247 + $0x3c] sm:$0xf] %vm734, %v798
      %879 = vst.msk [vmem:[%s247 + $0x40] sm:$0xf] %vm734, %v800
      %880 = vst.msk [vmem:[%s247 + $0x44] sm:$0xf] %vm734, %v802
      %881 = vst.msk [vmem:[%s247 + $0x48] sm:$0xf] %vm734, %v804
      %882 = vst.msk [vmem:[%s247 + $0x4c] sm:$0xf] %vm734, %v806
      %883 = vst.msk [vmem:[%s247 + $0x50] sm:$0xf] %vm734, %v808
      %884 = vst.msk [vmem:[%s247 + $0x54] sm:$0xf] %vm734, %v810
      %885 = vst.msk [vmem:[%s247 + $0x58] sm:$0xf] %vm734, %v812
      %886 = vst.msk [vmem:[%s247 + $0x5c] sm:$0xf] %vm734, %v814
      %887 = vst.msk [vmem:[%s247 + $0x60] sm:$0xf] %vm734, %v816
      %888 = vst.msk [vmem:[%s247 + $0x64] sm:$0xf] %vm734, %v818
      %889 = vst.msk [vmem:[%s247 + $0x68] sm:$0xf] %vm734, %v820
      %890 = vst.msk [vmem:[%s247 + $0x6c] sm:$0xf] %vm734, %v822
      %891 = vst.msk [vmem:[%s247 + $0x70] sm:$0xf] %vm734, %v824
      %892 = vst.msk [vmem:[%s247 + $0x74] sm:$0xf] %vm734, %v826
      %893 = vst.msk [vmem:[%s247 + $0x78] sm:$0xf] %vm734, %v828
      %894 = vst.msk [vmem:[%s247 + $0x7c] sm:$0xf] %vm734, %v830
      %v895 = vpack.c.bf16 %v454, %v450
      %v896 = vpack.c.bf16 %v464, %v460
      %v897 = vpack.c.bf16 %v474, %v470
      %v898 = vpack.c.bf16 %v484, %v480
      %v899 = vpack.c.bf16 %v494, %v490
      %v900 = vpack.c.bf16 %v504, %v500
      %v901 = vpack.c.bf16 %v514, %v510
      %v902 = vpack.c.bf16 %v524, %v520
      %v903 = vpack.c.bf16 %v534, %v530
      %v904 = vpack.c.bf16 %v544, %v540
      %v905 = vpack.c.bf16 %v554, %v550
      %v906 = vpack.c.bf16 %v564, %v560
      %v907 = vpack.c.bf16 %v574, %v570
      %v908 = vpack.c.bf16 %v584, %v580
      %v909 = vpack.c.bf16 %v594, %v590
      %v910 = vpack.c.bf16 %v604, %v600
      %v927 = vunpack.c.l.b16 %v895
      %v928 = vunpack.c.h.b16 %v895
      %v929 = vunpack.c.l.b16 %v896
      %v930 = vunpack.c.h.b16 %v896
      %v931 = vunpack.c.l.b16 %v897
      %v932 = vunpack.c.h.b16 %v897
      %v933 = vunpack.c.l.b16 %v898
      %v934 = vunpack.c.h.b16 %v898
      %v935 = vunpack.c.l.b16 %v899
      %v936 = vunpack.c.h.b16 %v899
      %v937 = vunpack.c.l.b16 %v900
      %v938 = vunpack.c.h.b16 %v900
      %v939 = vunpack.c.l.b16 %v901
      %v940 = vunpack.c.h.b16 %v901
      %v941 = vunpack.c.l.b16 %v902
      %v942 = vunpack.c.h.b16 %v902
      %v943 = vunpack.c.l.b16 %v903
      %v944 = vunpack.c.h.b16 %v903
      %v945 = vunpack.c.l.b16 %v904
      %v946 = vunpack.c.h.b16 %v904
      %v947 = vunpack.c.l.b16 %v905
      %v948 = vunpack.c.h.b16 %v905
      %v949 = vunpack.c.l.b16 %v906
      %v950 = vunpack.c.h.b16 %v906
      %v951 = vunpack.c.l.b16 %v907
      %v952 = vunpack.c.h.b16 %v907
      %v953 = vunpack.c.l.b16 %v908
      %v954 = vunpack.c.h.b16 %v908
      %v955 = vunpack.c.l.b16 %v909
      %v956 = vunpack.c.h.b16 %v909
      %v957 = vunpack.c.l.b16 %v910
      %v958 = vunpack.c.h.b16 %v910
      %v959 = vpack.c.b16 %v927, %v927
      %v960 = vpack.c.b16 %v928, %v928
      %v961 = vpack.c.b16 %v929, %v929
      %v962 = vpack.c.b16 %v930, %v930
      %v963 = vpack.c.b16 %v931, %v931
      %v964 = vpack.c.b16 %v932, %v932
      %v965 = vpack.c.b16 %v933, %v933
      %v966 = vpack.c.b16 %v934, %v934
      %v967 = vpack.c.b16 %v935, %v935
      %v968 = vpack.c.b16 %v936, %v936
      %v969 = vpack.c.b16 %v937, %v937
      %v970 = vpack.c.b16 %v938, %v938
      %v971 = vpack.c.b16 %v939, %v939
      %v972 = vpack.c.b16 %v940, %v940
      %v973 = vpack.c.b16 %v941, %v941
      %v974 = vpack.c.b16 %v942, %v942
      %v975 = vpack.c.b16 %v943, %v943
      %v976 = vpack.c.b16 %v944, %v944
      %v977 = vpack.c.b16 %v945, %v945
      %v978 = vpack.c.b16 %v946, %v946
      %v979 = vpack.c.b16 %v947, %v947
      %v980 = vpack.c.b16 %v948, %v948
      %v981 = vpack.c.b16 %v949, %v949
      %v982 = vpack.c.b16 %v950, %v950
      %v983 = vpack.c.b16 %v951, %v951
      %v984 = vpack.c.b16 %v952, %v952
      %v985 = vpack.c.b16 %v953, %v953
      %v986 = vpack.c.b16 %v954, %v954
      %v987 = vpack.c.b16 %v955, %v955
      %v988 = vpack.c.b16 %v956, %v956
      %v989 = vpack.c.b16 %v957, %v957
      %v990 = vpack.c.b16 %v958, %v958
      %1023 = vst.msk [vmem:[%s253] sm:$0xf] %vm734, %v959
      %1024 = vst.msk [vmem:[%s253 + $0x4] sm:$0xf] %vm734, %v960
      %1025 = vst.msk [vmem:[%s253 + $0x8] sm:$0xf] %vm734, %v961
      %1026 = vst.msk [vmem:[%s253 + $0xc] sm:$0xf] %vm734, %v962
      %1027 = vst.msk [vmem:[%s253 + $0x10] sm:$0xf] %vm734, %v963
      %1028 = vst.msk [vmem:[%s253 + $0x14] sm:$0xf] %vm734, %v964
      %1029 = vst.msk [vmem:[%s253 + $0x18] sm:$0xf] %vm734, %v965
      %1030 = vst.msk [vmem:[%s253 + $0x1c] sm:$0xf] %vm734, %v966
      %1031 = vst.msk [vmem:[%s253 + $0x20] sm:$0xf] %vm734, %v967
      %1032 = vst.msk [vmem:[%s253 + $0x24] sm:$0xf] %vm734, %v968
      %1033 = vst.msk [vmem:[%s253 + $0x28] sm:$0xf] %vm734, %v969
      %1034 = vst.msk [vmem:[%s253 + $0x2c] sm:$0xf] %vm734, %v970
      %1035 = vst.msk [vmem:[%s253 + $0x30] sm:$0xf] %vm734, %v971
      %1036 = vst.msk [vmem:[%s253 + $0x34] sm:$0xf] %vm734, %v972
      %1037 = vst.msk [vmem:[%s253 + $0x38] sm:$0xf] %vm734, %v973
      %1038 = vst.msk [vmem:[%s253 + $0x3c] sm:$0xf] %vm734, %v974
      %1039 = vst.msk [vmem:[%s253 + $0x40] sm:$0xf] %vm734, %v975
      %1040 = vst.msk [vmem:[%s253 + $0x44] sm:$0xf] %vm734, %v976
      %1041 = vst.msk [vmem:[%s253 + $0x48] sm:$0xf] %vm734, %v977
      %1042 = vst.msk [vmem:[%s253 + $0x4c] sm:$0xf] %vm734, %v978
      %1043 = vst.msk [vmem:[%s253 + $0x50] sm:$0xf] %vm734, %v979
      %1044 = vst.msk [vmem:[%s253 + $0x54] sm:$0xf] %vm734, %v980
      %1045 = vst.msk [vmem:[%s253 + $0x58] sm:$0xf] %vm734, %v981
      %1046 = vst.msk [vmem:[%s253 + $0x5c] sm:$0xf] %vm734, %v982
      %1047 = vst.msk [vmem:[%s253 + $0x60] sm:$0xf] %vm734, %v983
      %1048 = vst.msk [vmem:[%s253 + $0x64] sm:$0xf] %vm734, %v984
      %1049 = vst.msk [vmem:[%s253 + $0x68] sm:$0xf] %vm734, %v985
      %1050 = vst.msk [vmem:[%s253 + $0x6c] sm:$0xf] %vm734, %v986
      %1051 = vst.msk [vmem:[%s253 + $0x70] sm:$0xf] %vm734, %v987
      %1052 = vst.msk [vmem:[%s253 + $0x74] sm:$0xf] %vm734, %v988
      %1053 = vst.msk [vmem:[%s253 + $0x78] sm:$0xf] %vm734, %v989
      %1054 = vst.msk [vmem:[%s253 + $0x7c] sm:$0xf] %vm734, %v990
      %s1055 = smul.u32 32, %s17
      %p1056 = scmp.lt.s32.totalorder %s1055, 95
      %s1057 = scalar_select %p1056, %s1055, 95
      %s1058 = smul.addr %s1057, 4
      %s1059 = scalar_lea.vmem %s3, %s1058
      %s1060 = smul.u32 32, %s17
      %p1061 = scmp.lt.s32.totalorder %s1060, 95
      %s1062 = scalar_select %p1061, %s1060, 95
      %s1063 = smul.addr %s1062, 4
      %s1064 = scalar_lea.vmem %s4, %s1063
      %s1065 = smul.u32 32, %s17
      %p1066 = scmp.lt.s32.totalorder %s1065, 95
      %s1067 = scalar_select %p1066, %s1065, 95
      %s1068 = smul.addr %s1067, 4
      %s1069 = scalar_lea.vmem %s5, %s1068
      // Predicated region
      $region33: #{mass_attention_forward.2} parent=31 // pred_check
        %p1070 = pneg %p103
      $region34: #{mass_attention_forward.2} parent=31 // pred_check_branch
        %1072 = sbr.rel (%p1070) target = $region36
      $region35: #{mass_attention_forward.2} parent=31 // pred_region
        %s1073 = smul.u32 32, %s17
      $region36: #{mass_attention_forward.2} parent=31 // pred_fallthru
        _
      // Predicated region
      $region37: #{mass_attention_forward.2} parent=31 // pred_check
        %p1074 = pneg %p129
      $region38: #{mass_attention_forward.2} parent=31 // pred_check_branch
        %1076 = sbr.rel (%p1074) target = $region40
      $region39: #{mass_attention_forward.2} parent=31 // pred_region
        %s1077 = smul.u32 32, %s17
      $region40: #{mass_attention_forward.2} parent=31 // pred_fallthru
        _
      // Predicated region
      $region41: #{mass_attention_forward.2} parent=31 // pred_check
        %p1078 = pneg %p155
      $region42: #{mass_attention_forward.2} parent=31 // pred_check_branch
        %1080 = sbr.rel (%p1078) target = $region44
      $region43: #{mass_attention_forward.2} parent=31 // pred_region
        %s1081 = smul.u32 32, %s17
      $region44: #{mass_attention_forward.2} parent=31 // pred_fallthru
        _
    $region32: #{mass_attention_forward.2} parent=5 // pred_fallthru
      _
    %p1082 = scmp.le.s32.totalorder 2, %s12
    // Predicated region
    $region45: #{mass_attention_forward.2} parent=5 // pred_check
      %p1083 = pneg %p1082
    $region46: #{mass_attention_forward.2} parent=5 // pred_check_branch
      %1085 = sbr.rel (%p1083) target = $region48
    $region47: #{mass_attention_forward.2} parent=5 // pred_region
      %s1086 = ssub.s32 %s12, 2
      // Predicated region
      $region49: #{mass_attention_forward.2} parent=47 // pred_check
        %p1087 = pneg %p109
      $region50: #{mass_attention_forward.2} parent=47 // pred_check_branch
        %1089 = sbr.rel (%p1087) target = $region52
      $region51: #{mass_attention_forward.2} parent=47 // pred_region
        %s1090 = smul.u32 32, %s18
        %p1091 = scmp.lt.s32.totalorder %s1090, 95
        %s1092 = scalar_select %p1091, %s1090, 95
        %s1093 = smul.addr %s1092, 4
        %s1094 = scalar_lea.vmem %s3, %s1093
      $region52: #{mass_attention_forward.2} parent=47 // pred_fallthru
        _
      // Predicated region
      $region53: #{mass_attention_forward.2} parent=47 // pred_check
        %p1095 = pneg %p135
      $region54: #{mass_attention_forward.2} parent=47 // pred_check_branch
        %1097 = sbr.rel (%p1095) target = $region56
      $region55: #{mass_attention_forward.2} parent=47 // pred_region
        %s1098 = smul.u32 32, %s18
        %p1099 = scmp.lt.s32.totalorder %s1098, 95
        %s1100 = scalar_select %p1099, %s1098, 95
        %s1101 = smul.addr %s1100, 4
        %s1102 = scalar_lea.vmem %s4, %s1101
      $region56: #{mass_attention_forward.2} parent=47 // pred_fallthru
        _
      // Predicated region
      $region57: #{mass_attention_forward.2} parent=47 // pred_check
        %p1103 = pneg %p161
      $region58: #{mass_attention_forward.2} parent=47 // pred_check_branch
        %1105 = sbr.rel (%p1103) target = $region60
      $region59: #{mass_attention_forward.2} parent=47 // pred_region
        %s1106 = smul.u32 32, %s18
        %p1107 = scmp.lt.s32.totalorder %s1106, 95
        %s1108 = scalar_select %p1107, %s1106, 95
        %s1109 = smul.addr %s1108, 4
        %s1110 = scalar_lea.vmem %s5, %s1109
      $region60: #{mass_attention_forward.2} parent=47 // pred_fallthru
        _
    $region48: #{mass_attention_forward.2} parent=5 // pred_fallthru
      _
  $region6: #{mass_attention_forward.2} parent=0 // loop_footer
    %s16 = sadd.s32 1, %s12
  $region7: #{mass_attention_forward.2} parent=0 // loop_footer_branch
    %11 = sbr.rel target = $region3
  $region8: #{mass_attention_forward.2} parent=0 // loop_exit
    _

// kernel: mass_attention_forward.3
$region0: #{mass_attention_forward.3}
  #allocation0 [shape = 'u32[]', space=smem, size = 0x4, offset = 0x4, fixed_abs, tag = 'smem constant byte address 0x4 - core index']
  #allocation1 [shape = 'u32[144,128]{1,0:T(1,128)}', space=vmem, size = 0x12000, scoped, tag = 'internal scratch']
  #allocation2 [shape = 'f32[4,128,1]{2,1,0:T(8,128)}', space=vmem, size = 0x40000, scoped, tag = 'scratch operand']
  #allocation3 [shape = 'f32[4,128,1]{2,1,0:T(8,128)}', space=vmem, size = 0x40000, scoped, tag = 'scratch operand']
  #allocation4 [shape = 'f32[4,128,16]{2,1,0:T(8,128)}', space=vmem, size = 0x40000, scoped, tag = 'scratch operand']
  %s0 = inlined_call_operand.vmem [shape: bf16[2,384,64], index: 0, kind: input, shape index: {}]
  %s1 = inlined_call_operand.vmem [shape: bf16[2,384,64], index: 1, kind: input, shape index: {}]
  %s2 = inlined_call_operand.vmem [shape: bf16[2,384,64], index: 2, kind: input, shape index: {}]
  %s3 = inlined_call_operand.vmem [shape: bf16[64,64], index: 3, kind: input, shape index: {}]
  %s4 = inlined_call_operand.vmem [shape: f32[1,64], index: 4, kind: input, shape index: {}]
  %s5 = inlined_call_operand.vmem [shape: f32[2,384,64], index: 5, kind: output, shape index: {}]
  %s6 = sld [smem:[#allocation0]]
  $region65: #{mass_attention_forward.3} parent=0
    _
  %s8 = ssub.s32 1, %s6
  %s9 = scalar_select 0, %s8, %s6
  loop: start=0, step=1, limit=20
  $region2: #{mass_attention_forward.3} parent=0 // loop_pre_header
    _
  $region3: #{mass_attention_forward.3} parent=0 // loop_header
    %s11 = sphi 0, %s15
    %p12 = scmp.ge.s32.totalorder %s11, 20
    %s18 = sphi 0, %s37
    %s19 = sphi 0, %s33
    %s20 = sphi 0, %s29
    %s21 = sphi 0, %s18
    %s22 = sphi 0, %s19
    %s23 = sphi 0, %s20
    %s24 = sphi 0, %s21
    %s25 = sphi 0, %s22
    %s26 = sphi 0, %s23
    %s42 = sphi 0, %s44
    %s45 = sphi 0, %s42
    %s46 = sphi 0, %s45
    %s62 = sphi 0, %s46
    %s70 = sphi 0, %s72
    %s73 = sphi 0, %s70
    %s74 = sphi 0, %s73
    %s90 = sphi 0, %s74
    %s98 = sphi 0, %s100
    %s101 = sphi 0, %s98
    %s102 = sphi 0, %s101
    %s118 = sphi 0, %s102
    %s122 = sphi 0, %s122
    %s124 = sphi 0, %s122
    %s125 = sphi 0, %s124
    %s139 = sphi 0, %s125
    %s143 = sphi 0, %s143
    %s145 = sphi 0, %s143
    %s146 = sphi 0, %s145
    %s160 = sphi 0, %s146
    %s168 = sphi 0, %s170
    %s171 = sphi 0, %s168
    %s172 = sphi 0, %s171
    %s188 = sphi 0, %s172
  $region4: #{mass_attention_forward.3} parent=0 // loop_header_branch
    %14 = sbr.rel (%p12) target = $region8
  $region5: #{mass_attention_forward.3} parent=0 // loop_body
    %s16 = ssub.s32 %s11, 1
    %s17 = ssub.s32 %s11, 2
    %s27 = sadd.s32 1, %s20
    %p28 = scmp.ge.s32.totalorder %s27, 3
    %s29 = scalar_select %p28, 0, %s27
    %s30 = sadd.s32 1, %s19
    %s31 = scalar_select %p28, %s30, %s19
    %p32 = scmp.ge.s32.totalorder %s31, 3
    %s33 = scalar_select %p32, 0, %s31
    %s34 = sadd.s32 1, %s18
    %s35 = scalar_select %p32, %s34, %s18
    %p36 = scmp.ge.s32.totalorder %s35, 2
    %s37 = scalar_select %p36, 0, %s35
    %s38 = ssub.s32 %s18, %s37
    %s39 = ssub.s32 %s19, %s33
    %s40 = sor.u32 %s38, %s39
    %p41 = scmp.eq.s32.totalorder %s40, 0
    %s43 = sadd.s32 %s42, 1
    %s44 = scalar_select %p41, %s42, %s43
    %p47 = pneg %p41
    %p48 = scmp.eq.s32.totalorder %s11, 17
    %p49 = por %p47, %p48
    %p50 = scmp.ne.s32.totalorder %s42, %s45
    %p51 = scmp.eq.s32.totalorder %s11, 0
    %p52 = por %p50, %p51
    %p53 = scmp.ne.s32.totalorder %s42, %s45
    %p54 = scmp.eq.s32.totalorder %s16, 17
    %p55 = por %p53, %p54
    %p56 = scmp.ne.s32.totalorder %s45, %s46
    %p57 = scmp.eq.s32.totalorder %s16, 0
    %p58 = por %p56, %p57
    %p59 = scmp.ne.s32.totalorder %s45, %s46
    %p60 = scmp.eq.s32.totalorder %s17, 17
    %p61 = por %p59, %p60
    %p63 = scmp.ne.s32.totalorder %s46, %s62
    %p64 = scmp.eq.s32.totalorder %s17, 0
    %p65 = por %p63, %p64
    %s66 = ssub.s32 %s18, %s37
    %s67 = ssub.s32 %s20, %s29
    %s68 = sor.u32 %s66, %s67
    %p69 = scmp.eq.s32.totalorder %s68, 0
    %s71 = sadd.s32 %s70, 1
    %s72 = scalar_select %p69, %s70, %s71
    %p75 = pneg %p69
    %p76 = scmp.eq.s32.totalorder %s11, 17
    %p77 = por %p75, %p76
    %p78 = scmp.ne.s32.totalorder %s70, %s73
    %p79 = scmp.eq.s32.totalorder %s11, 0
    %p80 = por %p78, %p79
    %p81 = scmp.ne.s32.totalorder %s70, %s73
    %p82 = scmp.eq.s32.totalorder %s16, 17
    %p83 = por %p81, %p82
    %p84 = scmp.ne.s32.totalorder %s73, %s74
    %p85 = scmp.eq.s32.totalorder %s16, 0
    %p86 = por %p84, %p85
    %p87 = scmp.ne.s32.totalorder %s73, %s74
    %p88 = scmp.eq.s32.totalorder %s17, 17
    %p89 = por %p87, %p88
    %p91 = scmp.ne.s32.totalorder %s74, %s90
    %p92 = scmp.eq.s32.totalorder %s17, 0
    %p93 = por %p91, %p92
    %s94 = ssub.s32 %s18, %s37
    %s95 = ssub.s32 %s20, %s29
    %s96 = sor.u32 %s94, %s95
    %p97 = scmp.eq.s32.totalorder %s96, 0
    %s99 = sadd.s32 %s98, 1
    %s100 = scalar_select %p97, %s98, %s99
    %p103 = pneg %p97
    %p104 = scmp.eq.s32.totalorder %s11, 17
    %p105 = por %p103, %p104
    %p106 = scmp.ne.s32.totalorder %s98, %s101
    %p107 = scmp.eq.s32.totalorder %s11, 0
    %p108 = por %p106, %p107
    %p109 = scmp.ne.s32.totalorder %s98, %s101
    %p110 = scmp.eq.s32.totalorder %s16, 17
    %p111 = por %p109, %p110
    %p112 = scmp.ne.s32.totalorder %s101, %s102
    %p113 = scmp.eq.s32.totalorder %s16, 0
    %p114 = por %p112, %p113
    %p115 = scmp.ne.s32.totalorder %s101, %s102
    %p116 = scmp.eq.s32.totalorder %s17, 17
    %p117 = por %p115, %p116
    %p119 = scmp.ne.s32.totalorder %s102, %s118
    %p120 = scmp.eq.s32.totalorder %s17, 0
    %p121 = por %p119, %p120
    %s123 = sadd.s32 %s122, 1
    %p126 = scmp.eq.s32.totalorder %s11, 17
    %p127 = scmp.ne.s32.totalorder %s122, %s124
    %p128 = scmp.eq.s32.totalorder %s11, 0
    %p129 = por %p127, %p128
    %p130 = scmp.ne.s32.totalorder %s122, %s124
    %p131 = scmp.eq.s32.totalorder %s16, 17
    %p132 = por %p130, %p131
    %p133 = scmp.ne.s32.totalorder %s124, %s125
    %p134 = scmp.eq.s32.totalorder %s16, 0
    %p135 = por %p133, %p134
    %p136 = scmp.ne.s32.totalorder %s124, %s125
    %p137 = scmp.eq.s32.totalorder %s17, 17
    %p138 = por %p136, %p137
    %p140 = scmp.ne.s32.totalorder %s125, %s139
    %p141 = scmp.eq.s32.totalorder %s17, 0
    %p142 = por %p140, %p141
    %s144 = sadd.s32 %s143, 1
    %p147 = scmp.eq.s32.totalorder %s11, 17
    %p148 = scmp.ne.s32.totalorder %s143, %s145
    %p149 = scmp.eq.s32.totalorder %s11, 0
    %p150 = por %p148, %p149
    %p151 = scmp.ne.s32.totalorder %s143, %s145
    %p152 = scmp.eq.s32.totalorder %s16, 17
    %p153 = por %p151, %p152
    %p154 = scmp.ne.s32.totalorder %s145, %s146
    %p155 = scmp.eq.s32.totalorder %s16, 0
    %p156 = por %p154, %p155
    %p157 = scmp.ne.s32.totalorder %s145, %s146
    %p158 = scmp.eq.s32.totalorder %s17, 17
    %p159 = por %p157, %p158
    %p161 = scmp.ne.s32.totalorder %s146, %s160
    %p162 = scmp.eq.s32.totalorder %s17, 0
    %p163 = por %p161, %p162
    %s164 = ssub.s32 %s18, %s37
    %s165 = ssub.s32 %s19, %s33
    %s166 = sor.u32 %s164, %s165
    %p167 = scmp.eq.s32.totalorder %s166, 0
    %s169 = sadd.s32 %s168, 1
    %s170 = scalar_select %p167, %s168, %s169
    %p173 = pneg %p167
    %p174 = scmp.eq.s32.totalorder %s11, 17
    %p175 = por %p173, %p174
    %p176 = scmp.ne.s32.totalorder %s168, %s171
    %p177 = scmp.eq.s32.totalorder %s11, 0
    %p178 = por %p176, %p177
    %p179 = scmp.ne.s32.totalorder %s168, %s171
    %p180 = scmp.eq.s32.totalorder %s16, 17
    %p181 = por %p179, %p180
    %p182 = scmp.ne.s32.totalorder %s171, %s172
    %p183 = scmp.eq.s32.totalorder %s16, 0
    %p184 = por %p182, %p183
    %p185 = scmp.ne.s32.totalorder %s171, %s172
    %p186 = scmp.eq.s32.totalorder %s17, 17
    %p187 = por %p185, %p186
    %p189 = scmp.ne.s32.totalorder %s172, %s188
    %p190 = scmp.eq.s32.totalorder %s17, 0
    %p191 = por %p189, %p190
    %p192 = scmp.le.s32.totalorder 1, %s11
    %p193 = scmp.lt.s32.totalorder %s11, 19
    %p194 = pnand %p192, %p193
    %p195 = pneg %p194
    // Predicated region
    $region9: #{mass_attention_forward.3} parent=5 // pred_check
      _
    $region10: #{mass_attention_forward.3} parent=5 // pred_check_branch
      %197 = sbr.rel (%p194) target = $region12
    $region11: #{mass_attention_forward.3} parent=5 // pred_region
      %s198 = ssub.s32 %s11, 1
      // Predicated region
      $region13: #{mass_attention_forward.3} parent=11 // pred_check
        %p199 = pneg %p135
      $region14: #{mass_attention_forward.3} parent=11 // pred_check_branch
        %201 = sbr.rel (%p199) target = $region16
      $region15: #{mass_attention_forward.3} parent=11 // pred_region
        _
      $region16: #{mass_attention_forward.3} parent=11 // pred_fallthru
        _
      // Predicated region
      $region17: #{mass_attention_forward.3} parent=11 // pred_check
        %p202 = pneg %p156
      $region18: #{mass_attention_forward.3} parent=11 // pred_check_branch
        %204 = sbr.rel (%p202) target = $region20
      $region19: #{mass_attention_forward.3} parent=11 // pred_region
        _
      $region20: #{mass_attention_forward.3} parent=11 // pred_fallthru
        _
    $region12: #{mass_attention_forward.3} parent=5 // pred_fallthru
      _
    %p205 = scmp.lt.s32.totalorder %s11, 18
    // Predicated region
    $region21: #{mass_attention_forward.3} parent=5 // pred_check
      %p206 = pneg %p205
    $region22: #{mass_attention_forward.3} parent=5 // pred_check_branch
      %208 = sbr.rel (%p206) target = $region24
    $region23: #{mass_attention_forward.3} parent=5 // pred_region
      // Predicated region
      $region25: #{mass_attention_forward.3} parent=23 // pred_check
        %p209 = pneg %p52
      $region26: #{mass_attention_forward.3} parent=23 // pred_check_branch
        %211 = sbr.rel (%p209) target = $region28
      $region27: #{mass_attention_forward.3} parent=23 // pred_region
        %s212 = smul.u32 16, %s19
        %p213 = scmp.lt.s32.totalorder %s18, 1
        %s214 = scalar_select %p213, %s18, 1
        %p215 = scmp.lt.s32.totalorder %s212, 47
        %s216 = scalar_select %p215, %s212, 47
        %s217 = smul.addr %s214, 48
        %s218 = sadd.s32 %s216, %s217
        %s219 = smul.addr %s218, 4
        %s220 = scalar_lea.vmem %s0, %s219
        %s221 = smul.u32 16, %s19
      $region28: #{mass_attention_forward.3} parent=23 // pred_fallthru
        _
      // Predicated region
      $region29: #{mass_attention_forward.3} parent=23 // pred_check
        %p222 = pneg %p80
      $region30: #{mass_attention_forward.3} parent=23 // pred_check_branch
        %224 = sbr.rel (%p222) target = $region32
      $region31: #{mass_attention_forward.3} parent=23 // pred_region
        %s225 = smul.u32 16, %s20
        %p226 = scmp.lt.s32.totalorder %s18, 1
        %s227 = scalar_select %p226, %s18, 1
        %p228 = scmp.lt.s32.totalorder %s225, 47
        %s229 = scalar_select %p228, %s225, 47
        %s230 = smul.addr %s227, 48
        %s231 = sadd.s32 %s229, %s230
        %s232 = smul.addr %s231, 4
        %s233 = scalar_lea.vmem %s1, %s232
        %s234 = smul.u32 16, %s20
      $region32: #{mass_attention_forward.3} parent=23 // pred_fallthru
        _
      // Predicated region
      $region33: #{mass_attention_forward.3} parent=23 // pred_check
        %p235 = pneg %p108
      $region34: #{mass_attention_forward.3} parent=23 // pred_check_branch
        %237 = sbr.rel (%p235) target = $region36
      $region35: #{mass_attention_forward.3} parent=23 // pred_region
        %s238 = smul.u32 16, %s20
        %p239 = scmp.lt.s32.totalorder %s18, 1
        %s240 = scalar_select %p239, %s18, 1
        %p241 = scmp.lt.s32.totalorder %s238, 47
        %s242 = scalar_select %p241, %s238, 47
        %s243 = smul.addr %s240, 48
        %s244 = sadd.s32 %s242, %s243
        %s245 = smul.addr %s244, 4
        %s246 = scalar_lea.vmem %s2, %s245
        %s247 = smul.u32 16, %s20
      $region36: #{mass_attention_forward.3} parent=23 // pred_fallthru
        _
    $region24: #{mass_attention_forward.3} parent=5 // pred_fallthru
      _
    %p248 = scmp.le.s32.totalorder 1, %s11
    %p249 = scmp.lt.s32.totalorder %s11, 19
    %p250 = pnand %p248, %p249
    %p251 = pneg %p250
    // Predicated region
    $region37: #{mass_attention_forward.3} parent=5 // pred_check
      _
    $region38: #{mass_attention_forward.3} parent=5 // pred_check_branch
      %253 = sbr.rel (%p250) target = $region40
    $region39: #{mass_attention_forward.3} parent=5 // pred_region
      %s254 = ssub.s32 %s11, 1
      %s255 = smul.u32 16, %s22
      %p256 = scmp.lt.s32.totalorder %s21, 1
      %s257 = scalar_select %p256, %s21, 1
      %p258 = scmp.lt.s32.totalorder %s255, 47
      %s259 = scalar_select %p258, %s255, 47
      %s260 = smul.addr %s257, 48
      %s261 = sadd.s32 %s259, %s260
      %s262 = smul.addr %s261, 4
      %s263 = scalar_lea.vmem %s0, %s262
      %p264 = pneg %p58
      %p265 = pneg %p55
      %s266 = smul.u32 16, %s23
      %p267 = scmp.lt.s32.totalorder %s21, 1
      %s268 = scalar_select %p267, %s21, 1
      %p269 = scmp.lt.s32.totalorder %s266, 47
      %s270 = scalar_select %p269, %s266, 47
      %s271 = smul.addr %s268, 48
      %s272 = sadd.s32 %s270, %s271
      %s273 = smul.addr %s272, 4
      %s274 = scalar_lea.vmem %s1, %s273
      %p275 = pneg %p86
      %p276 = pneg %p83
      %s277 = smul.u32 16, %s23
      %p278 = scmp.lt.s32.totalorder %s21, 1
      %s279 = scalar_select %p278, %s21, 1
      %p280 = scmp.lt.s32.totalorder %s277, 47
      %s281 = scalar_select %p280, %s277, 47
      %s282 = smul.addr %s279, 48
      %s283 = sadd.s32 %s281, %s282
      %s284 = smul.addr %s283, 4
      %s285 = scalar_lea.vmem %s2, %s284
      %p286 = pneg %p114
      %p287 = pneg %p111
      %p288 = pneg %p135
      %p289 = pneg %p132
      %p290 = pneg %p156
      %p291 = pneg %p153
      %p292 = pneg %p184
      %p293 = pneg %p181
      %s294 = smul.u32 16, %s22
      %p295 = scmp.lt.s32.totalorder %s21, 1
      %s296 = scalar_select %p295, %s21, 1
      %p297 = scmp.lt.s32.totalorder %s294, 47
      %s298 = scalar_select %p297, %s294, 47
      %s299 = smul.addr %s296, 48
      %s300 = sadd.s32 %s298, %s299
      %s301 = smul.addr %s300, 8
      %s302 = scalar_lea.vmem %s5, %s301
      %s303 = smul.u32 16, %s22
      %p304 = scmp.lt.s32.totalorder %s21, 1
      %s305 = scalar_select %p304, %s21, 1
      %p306 = scmp.lt.s32.totalorder %s303, 47
      %s307 = scalar_select %p306, %s303, 47
      %s308 = smul.addr %s305, 48
      %s309 = sadd.s32 %s307, %s308
      %s310 = smul.addr %s309, 4
      %s311 = scalar_lea.vmem %s0, %s310
      %s312 = smul.u32 16, %s22
      %s313 = smul.u32 16, %s23
      %p314 = scmp.lt.s32.totalorder %s21, 1
      %s315 = scalar_select %p314, %s21, 1
      %p316 = scmp.lt.s32.totalorder %s313, 47
      %s317 = scalar_select %p316, %s313, 47
      %s318 = smul.addr %s315, 48
      %s319 = sadd.s32 %s317, %s318
      %s320 = smul.addr %s319, 4
      %s321 = scalar_lea.vmem %s1, %s320
      %s322 = smul.u32 16, %s23
      %s323 = smul.u32 16, %s23
      %p324 = scmp.lt.s32.totalorder %s21, 1
      %s325 = scalar_select %p324, %s21, 1
      %p326 = scmp.lt.s32.totalorder %s323, 47
      %s327 = scalar_select %p326, %s323, 47
      %s328 = smul.addr %s325, 48
      %s329 = sadd.s32 %s327, %s328
      %s330 = smul.addr %s329, 4
      %s331 = scalar_lea.vmem %s2, %s330
      %s332 = smul.u32 16, %s23
      %s333 = smul.u32 16, %s22
      %p334 = scmp.lt.s32.totalorder %s21, 1
      %s335 = scalar_select %p334, %s21, 1
      %p336 = scmp.lt.s32.totalorder %s333, 47
      %s337 = scalar_select %p336, %s333, 47
      %s338 = smul.addr %s335, 48
      %s339 = sadd.s32 %s337, %s338
      %s340 = smul.addr %s339, 8
      %s341 = scalar_lea.vmem %s5, %s340
      %s342 = smul.u32 16, %s22
      %p344 = scmp.eq.s32.totalorder %s23, 0
      // Predicated region
      $region41: #{mass_attention_forward.3} parent=39 // pred_check
        %p345 = pneg %p344
      $region42: #{mass_attention_forward.3} parent=39 // pred_check_branch
        %347 = sbr.rel (%p345) target = $region44
      $region43: #{mass_attention_forward.3} parent=39 // pred_region
        %vm348 = vcmask 7168
        %349 = vst.msk [vmem:[#allocation2] sm:$0xff] %vm348, -1e+30
        %350 = vst.msk [vmem:[#allocation2 + $0x8] sm:$0xff] %vm348, -1e+30
        %351 = vst.msk [vmem:[#allocation2 + $0x10] sm:$0xff] %vm348, -1e+30
        %352 = vst.msk [vmem:[#allocation2 + $0x18] sm:$0xff] %vm348, -1e+30
        %353 = vst.msk [vmem:[#allocation2 + $0x20] sm:$0xff] %vm348, -1e+30
        %354 = vst.msk [vmem:[#allocation2 + $0x28] sm:$0xff] %vm348, -1e+30
        %355 = vst.msk [vmem:[#allocation2 + $0x30] sm:$0xff] %vm348, -1e+30
        %356 = vst.msk [vmem:[#allocation2 + $0x38] sm:$0xff] %vm348, -1e+30
        %357 = vst.msk [vmem:[#allocation2 + $0x40] sm:$0xff] %vm348, -1e+30
        %358 = vst.msk [vmem:[#allocation2 + $0x48] sm:$0xff] %vm348, -1e+30
        %359 = vst.msk [vmem:[#allocation2 + $0x50] sm:$0xff] %vm348, -1e+30
        %360 = vst.msk [vmem:[#allocation2 + $0x58] sm:$0xff] %vm348, -1e+30
        %361 = vst.msk [vmem:[#allocation2 + $0x60] sm:$0xff] %vm348, -1e+30
        %362 = vst.msk [vmem:[#allocation2 + $0x68] sm:$0xff] %vm348, -1e+30
        %363 = vst.msk [vmem:[#allocation2 + $0x70] sm:$0xff] %vm348, -1e+30
        %364 = vst.msk [vmem:[#allocation2 + $0x78] sm:$0xff] %vm348, -1e+30
        %365 = vst.msk [vmem:[#allocation2 + $0x80] sm:$0xff] %vm348, -1e+30
        %366 = vst.msk [vmem:[#allocation2 + $0x88] sm:$0xff] %vm348, -1e+30
        %367 = vst.msk [vmem:[#allocation2 + $0x90] sm:$0xff] %vm348, -1e+30
        %368 = vst.msk [vmem:[#allocation2 + $0x98] sm:$0xff] %vm348, -1e+30
        %369 = vst.msk [vmem:[#allocation2 + $0xa0] sm:$0xff] %vm348, -1e+30
        %370 = vst.msk [vmem:[#allocation2 + $0xa8] sm:$0xff] %vm348, -1e+30
        %371 = vst.msk [vmem:[#allocation2 + $0xb0] sm:$0xff] %vm348, -1e+30
        %372 = vst.msk [vmem:[#allocation2 + $0xb8] sm:$0xff] %vm348, -1e+30
        %373 = vst.msk [vmem:[#allocation2 + $0xc0] sm:$0xff] %vm348, -1e+30
        %374 = vst.msk [vmem:[#allocation2 + $0xc8] sm:$0xff] %vm348, -1e+30
        %375 = vst.msk [vmem:[#allocation2 + $0xd0] sm:$0xff] %vm348, -1e+30
        %376 = vst.msk [vmem:[#allocation2 + $0xd8] sm:$0xff] %vm348, -1e+30
        %377 = vst.msk [vmem:[#allocation2 + $0xe0] sm:$0xff] %vm348, -1e+30
        %378 = vst.msk [vmem:[#allocation2 + $0xe8] sm:$0xff] %vm348, -1e+30
        %379 = vst.msk [vmem:[#allocation2 + $0xf0] sm:$0xff] %vm348, -1e+30
        %380 = vst.msk [vmem:[#allocation2 + $0xf8] sm:$0xff] %vm348, -1e+30
        %381 = vst.msk [vmem:[#allocation2 + $0x100] sm:$0xff] %vm348, -1e+30
        %382 = vst.msk [vmem:[#allocation2 + $0x108] sm:$0xff] %vm348, -1e+30
        %383 = vst.msk [vmem:[#allocation2 + $0x110] sm:$0xff] %vm348, -1e+30
        %384 = vst.msk [vmem:[#allocation2 + $0x118] sm:$0xff] %vm348, -1e+30
        %385 = vst.msk [vmem:[#allocation2 + $0x120] sm:$0xff] %vm348, -1e+30
        %386 = vst.msk [vmem:[#allocation2 + $0x128] sm:$0xff] %vm348, -1e+30
        %387 = vst.msk [vmem:[#allocation2 + $0x130] sm:$0xff] %vm348, -1e+30
        %388 = vst.msk [vmem:[#allocation2 + $0x138] sm:$0xff] %vm348, -1e+30
        %389 = vst.msk [vmem:[#allocation2 + $0x140] sm:$0xff] %vm348, -1e+30
        %390 = vst.msk [vmem:[#allocation2 + $0x148] sm:$0xff] %vm348, -1e+30
        %391 = vst.msk [vmem:[#allocation2 + $0x150] sm:$0xff] %vm348, -1e+30
        %392 = vst.msk [vmem:[#allocation2 + $0x158] sm:$0xff] %vm348, -1e+30
        %393 = vst.msk [vmem:[#allocation2 + $0x160] sm:$0xff] %vm348, -1e+30
        %394 = vst.msk [vmem:[#allocation2 + $0x168] sm:$0xff] %vm348, -1e+30
        %395 = vst.msk [vmem:[#allocation2 + $0x170] sm:$0xff] %vm348, -1e+30
        %396 = vst.msk [vmem:[#allocation2 + $0x178] sm:$0xff] %vm348, -1e+30
        %397 = vst.msk [vmem:[#allocation2 + $0x180] sm:$0xff] %vm348, -1e+30
        %398 = vst.msk [vmem:[#allocation2 + $0x188] sm:$0xff] %vm348, -1e+30
        %399 = vst.msk [vmem:[#allocation2 + $0x190] sm:$0xff] %vm348, -1e+30
        %400 = vst.msk [vmem:[#allocation2 + $0x198] sm:$0xff] %vm348, -1e+30
        %401 = vst.msk [vmem:[#allocation2 + $0x1a0] sm:$0xff] %vm348, -1e+30
        %402 = vst.msk [vmem:[#allocation2 + $0x1a8] sm:$0xff] %vm348, -1e+30
        %403 = vst.msk [vmem:[#allocation2 + $0x1b0] sm:$0xff] %vm348, -1e+30
        %404 = vst.msk [vmem:[#allocation2 + $0x1b8] sm:$0xff] %vm348, -1e+30
        %405 = vst.msk [vmem:[#allocation2 + $0x1c0] sm:$0xff] %vm348, -1e+30
        %406 = vst.msk [vmem:[#allocation2 + $0x1c8] sm:$0xff] %vm348, -1e+30
        %407 = vst.msk [vmem:[#allocation2 + $0x1d0] sm:$0xff] %vm348, -1e+30
        %408 = vst.msk [vmem:[#allocation2 + $0x1d8] sm:$0xff] %vm348, -1e+30
        %409 = vst.msk [vmem:[#allocation2 + $0x1e0] sm:$0xff] %vm348, -1e+30
        %410 = vst.msk [vmem:[#allocation2 + $0x1e8] sm:$0xff] %vm348, -1e+30
        %411 = vst.msk [vmem:[#allocation2 + $0x1f0] sm:$0xff] %vm348, -1e+30
        %412 = vst.msk [vmem:[#allocation2 + $0x1f8] sm:$0xff] %vm348, -1e+30
        %413 = vst.msk [vmem:[#allocation3] sm:$0xff] %vm348, 0.0
        %414 = vst.msk [vmem:[#allocation3 + $0x8] sm:$0xff] %vm348, 0.0
        %415 = vst.msk [vmem:[#allocation3 + $0x10] sm:$0xff] %vm348, 0.0
        %416 = vst.msk [vmem:[#allocation3 + $0x18] sm:$0xff] %vm348, 0.0
        %417 = vst.msk [vmem:[#allocation3 + $0x20] sm:$0xff] %vm348, 0.0
        %418 = vst.msk [vmem:[#allocation3 + $0x28] sm:$0xff] %vm348, 0.0
        %419 = vst.msk [vmem:[#allocation3 + $0x30] sm:$0xff] %vm348, 0.0
        %420 = vst.msk [vmem:[#allocation3 + $0x38] sm:$0xff] %vm348, 0.0
        %421 = vst.msk [vmem:[#allocation3 + $0x40] sm:$0xff] %vm348, 0.0
        %422 = vst.msk [vmem:[#allocation3 + $0x48] sm:$0xff] %vm348, 0.0
        %423 = vst.msk [vmem:[#allocation3 + $0x50] sm:$0xff] %vm348, 0.0
        %424 = vst.msk [vmem:[#allocation3 + $0x58] sm:$0xff] %vm348, 0.0
        %425 = vst.msk [vmem:[#allocation3 + $0x60] sm:$0xff] %vm348, 0.0
        %426 = vst.msk [vmem:[#allocation3 + $0x68] sm:$0xff] %vm348, 0.0
        %427 = vst.msk [vmem:[#allocation3 + $0x70] sm:$0xff] %vm348, 0.0
        %428 = vst.msk [vmem:[#allocation3 + $0x78] sm:$0xff] %vm348, 0.0
        %429 = vst.msk [vmem:[#allocation3 + $0x80] sm:$0xff] %vm348, 0.0
        %430 = vst.msk [vmem:[#allocation3 + $0x88] sm:$0xff] %vm348, 0.0
        %431 = vst.msk [vmem:[#allocation3 + $0x90] sm:$0xff] %vm348, 0.0
        %432 = vst.msk [vmem:[#allocation3 + $0x98] sm:$0xff] %vm348, 0.0
        %433 = vst.msk [vmem:[#allocation3 + $0xa0] sm:$0xff] %vm348, 0.0
        %434 = vst.msk [vmem:[#allocation3 + $0xa8] sm:$0xff] %vm348, 0.0
        %435 = vst.msk [vmem:[#allocation3 + $0xb0] sm:$0xff] %vm348, 0.0
        %436 = vst.msk [vmem:[#allocation3 + $0xb8] sm:$0xff] %vm348, 0.0
        %437 = vst.msk [vmem:[#allocation3 + $0xc0] sm:$0xff] %vm348, 0.0
        %438 = vst.msk [vmem:[#allocation3 + $0xc8] sm:$0xff] %vm348, 0.0
        %439 = vst.msk [vmem:[#allocation3 + $0xd0] sm:$0xff] %vm348, 0.0
        %440 = vst.msk [vmem:[#allocation3 + $0xd8] sm:$0xff] %vm348, 0.0
        %441 = vst.msk [vmem:[#allocation3 + $0xe0] sm:$0xff] %vm348, 0.0
        %442 = vst.msk [vmem:[#allocation3 + $0xe8] sm:$0xff] %vm348, 0.0
        %443 = vst.msk [vmem:[#allocation3 + $0xf0] sm:$0xff] %vm348, 0.0
        %444 = vst.msk [vmem:[#allocation3 + $0xf8] sm:$0xff] %vm348, 0.0
        %445 = vst.msk [vmem:[#allocation3 + $0x100] sm:$0xff] %vm348, 0.0
        %446 = vst.msk [vmem:[#allocation3 + $0x108] sm:$0xff] %vm348, 0.0
        %447 = vst.msk [vmem:[#allocation3 + $0x110] sm:$0xff] %vm348, 0.0
        %448 = vst.msk [vmem:[#allocation3 + $0x118] sm:$0xff] %vm348, 0.0
        %449 = vst.msk [vmem:[#allocation3 + $0x120] sm:$0xff] %vm348, 0.0
        %450 = vst.msk [vmem:[#allocation3 + $0x128] sm:$0xff] %vm348, 0.0
        %451 = vst.msk [vmem:[#allocation3 + $0x130] sm:$0xff] %vm348, 0.0
        %452 = vst.msk [vmem:[#allocation3 + $0x138] sm:$0xff] %vm348, 0.0
        %453 = vst.msk [vmem:[#allocation3 + $0x140] sm:$0xff] %vm348, 0.0
        %454 = vst.msk [vmem:[#allocation3 + $0x148] sm:$0xff] %vm348, 0.0
        %455 = vst.msk [vmem:[#allocation3 + $0x150] sm:$0xff] %vm348, 0.0
        %456 = vst.msk [vmem:[#allocation3 + $0x158] sm:$0xff] %vm348, 0.0
        %457 = vst.msk [vmem:[#allocation3 + $0x160] sm:$0xff] %vm348, 0.0
        %458 = vst.msk [vmem:[#allocation3 + $0x168] sm:$0xff] %vm348, 0.0
        %459 = vst.msk [vmem:[#allocation3 + $0x170] sm:$0xff] %vm348, 0.0
        %460 = vst.msk [vmem:[#allocation3 + $0x178] sm:$0xff] %vm348, 0.0
        %461 = vst.msk [vmem:[#allocation3 + $0x180] sm:$0xff] %vm348, 0.0
        %462 = vst.msk [vmem:[#allocation3 + $0x188] sm:$0xff] %vm348, 0.0
        %463 = vst.msk [vmem:[#allocation3 + $0x190] sm:$0xff] %vm348, 0.0
        %464 = vst.msk [vmem:[#allocation3 + $0x198] sm:$0xff] %vm348, 0.0
        %465 = vst.msk [vmem:[#allocation3 + $0x1a0] sm:$0xff] %vm348, 0.0
        %466 = vst.msk [vmem:[#allocation3 + $0x1a8] sm:$0xff] %vm348, 0.0
        %467 = vst.msk [vmem:[#allocation3 + $0x1b0] sm:$0xff] %vm348, 0.0
        %468 = vst.msk [vmem:[#allocation3 + $0x1b8] sm:$0xff] %vm348, 0.0
        %469 = vst.msk [vmem:[#allocation3 + $0x1c0] sm:$0xff] %vm348, 0.0
        %470 = vst.msk [vmem:[#allocation3 + $0x1c8] sm:$0xff] %vm348, 0.0
        %471 = vst.msk [vmem:[#allocation3 + $0x1d0] sm:$0xff] %vm348, 0.0
        %472 = vst.msk [vmem:[#allocation3 + $0x1d8] sm:$0xff] %vm348, 0.0
        %473 = vst.msk [vmem:[#allocation3 + $0x1e0] sm:$0xff] %vm348, 0.0
        %474 = vst.msk [vmem:[#allocation3 + $0x1e8] sm:$0xff] %vm348, 0.0
        %475 = vst.msk [vmem:[#allocation3 + $0x1f0] sm:$0xff] %vm348, 0.0
        %476 = vst.msk [vmem:[#allocation3 + $0x1f8] sm:$0xff] %vm348, 0.0
        %vm477 = vcmask 130048
        %478 = vst.msk [vmem:[#allocation4] sm:$0xff] %vm477, 0.0
        %479 = vst.msk [vmem:[#allocation4 + $0x8] sm:$0xff] %vm477, 0.0
        %480 = vst.msk [vmem:[#allocation4 + $0x10] sm:$0xff] %vm477, 0.0
        %481 = vst.msk [vmem:[#allocation4 + $0x18] sm:$0xff] %vm477, 0.0
        %482 = vst.msk [vmem:[#allocation4 + $0x20] sm:$0xff] %vm477, 0.0
        %483 = vst.msk [vmem:[#allocation4 + $0x28] sm:$0xff] %vm477, 0.0
        %484 = vst.msk [vmem:[#allocation4 + $0x30] sm:$0xff] %vm477, 0.0
        %485 = vst.msk [vmem:[#allocation4 + $0x38] sm:$0xff] %vm477, 0.0
        %486 = vst.msk [vmem:[#allocation4 + $0x40] sm:$0xff] %vm477, 0.0
        %487 = vst.msk [vmem:[#allocation4 + $0x48] sm:$0xff] %vm477, 0.0
        %488 = vst.msk [vmem:[#allocation4 + $0x50] sm:$0xff] %vm477, 0.0
        %489 = vst.msk [vmem:[#allocation4 + $0x58] sm:$0xff] %vm477, 0.0
        %490 = vst.msk [vmem:[#allocation4 + $0x60] sm:$0xff] %vm477, 0.0
        %491 = vst.msk [vmem:[#allocation4 + $0x68] sm:$0xff] %vm477, 0.0
        %492 = vst.msk [vmem:[#allocation4 + $0x70] sm:$0xff] %vm477, 0.0
        %493 = vst.msk [vmem:[#allocation4 + $0x78] sm:$0xff] %vm477, 0.0
        %494 = vst.msk [vmem:[#allocation4 + $0x80] sm:$0xff] %vm477, 0.0
        %495 = vst.msk [vmem:[#allocation4 + $0x88] sm:$0xff] %vm477, 0.0
        %496 = vst.msk [vmem:[#allocation4 + $0x90] sm:$0xff] %vm477, 0.0
        %497 = vst.msk [vmem:[#allocation4 + $0x98] sm:$0xff] %vm477, 0.0
        %498 = vst.msk [vmem:[#allocation4 + $0xa0] sm:$0xff] %vm477, 0.0
        %499 = vst.msk [vmem:[#allocation4 + $0xa8] sm:$0xff] %vm477, 0.0
        %500 = vst.msk [vmem:[#allocation4 + $0xb0] sm:$0xff] %vm477, 0.0
        %501 = vst.msk [vmem:[#allocation4 + $0xb8] sm:$0xff] %vm477, 0.0
        %502 = vst.msk [vmem:[#allocation4 + $0xc0] sm:$0xff] %vm477, 0.0
        %503 = vst.msk [vmem:[#allocation4 + $0xc8] sm:$0xff] %vm477, 0.0
        %504 = vst.msk [vmem:[#allocation4 + $0xd0] sm:$0xff] %vm477, 0.0
        %505 = vst.msk [vmem:[#allocation4 + $0xd8] sm:$0xff] %vm477, 0.0
        %506 = vst.msk [vmem:[#allocation4 + $0xe0] sm:$0xff] %vm477, 0.0
        %507 = vst.msk [vmem:[#allocation4 + $0xe8] sm:$0xff] %vm477, 0.0
        %508 = vst.msk [vmem:[#allocation4 + $0xf0] sm:$0xff] %vm477, 0.0
        %509 = vst.msk [vmem:[#allocation4 + $0xf8] sm:$0xff] %vm477, 0.0
        %510 = vst.msk [vmem:[#allocation4 + $0x100] sm:$0xff] %vm477, 0.0
        %511 = vst.msk [vmem:[#allocation4 + $0x108] sm:$0xff] %vm477, 0.0
        %512 = vst.msk [vmem:[#allocation4 + $0x110] sm:$0xff] %vm477, 0.0
        %513 = vst.msk [vmem:[#allocation4 + $0x118] sm:$0xff] %vm477, 0.0
        %514 = vst.msk [vmem:[#allocation4 + $0x120] sm:$0xff] %vm477, 0.0
        %515 = vst.msk [vmem:[#allocation4 + $0x128] sm:$0xff] %vm477, 0.0
        %516 = vst.msk [vmem:[#allocation4 + $0x130] sm:$0xff] %vm477, 0.0
        %517 = vst.msk [vmem:[#allocation4 + $0x138] sm:$0xff] %vm477, 0.0
        %518 = vst.msk [vmem:[#allocation4 + $0x140] sm:$0xff] %vm477, 0.0
        %519 = vst.msk [vmem:[#allocation4 + $0x148] sm:$0xff] %vm477, 0.0
        %520 = vst.msk [vmem:[#allocation4 + $0x150] sm:$0xff] %vm477, 0.0
        %521 = vst.msk [vmem:[#allocation4 + $0x158] sm:$0xff] %vm477, 0.0
        %522 = vst.msk [vmem:[#allocation4 + $0x160] sm:$0xff] %vm477, 0.0
        %523 = vst.msk [vmem:[#allocation4 + $0x168] sm:$0xff] %vm477, 0.0
        %524 = vst.msk [vmem:[#allocation4 + $0x170] sm:$0xff] %vm477, 0.0
        %525 = vst.msk [vmem:[#allocation4 + $0x178] sm:$0xff] %vm477, 0.0
        %526 = vst.msk [vmem:[#allocation4 + $0x180] sm:$0xff] %vm477, 0.0
        %527 = vst.msk [vmem:[#allocation4 + $0x188] sm:$0xff] %vm477, 0.0
        %528 = vst.msk [vmem:[#allocation4 + $0x190] sm:$0xff] %vm477, 0.0
        %529 = vst.msk [vmem:[#allocation4 + $0x198] sm:$0xff] %vm477, 0.0
        %530 = vst.msk [vmem:[#allocation4 + $0x1a0] sm:$0xff] %vm477, 0.0
        %531 = vst.msk [vmem:[#allocation4 + $0x1a8] sm:$0xff] %vm477, 0.0
        %532 = vst.msk [vmem:[#allocation4 + $0x1b0] sm:$0xff] %vm477, 0.0
        %533 = vst.msk [vmem:[#allocation4 + $0x1b8] sm:$0xff] %vm477, 0.0
        %534 = vst.msk [vmem:[#allocation4 + $0x1c0] sm:$0xff] %vm477, 0.0
        %535 = vst.msk [vmem:[#allocation4 + $0x1c8] sm:$0xff] %vm477, 0.0
        %536 = vst.msk [vmem:[#allocation4 + $0x1d0] sm:$0xff] %vm477, 0.0
        %537 = vst.msk [vmem:[#allocation4 + $0x1d8] sm:$0xff] %vm477, 0.0
        %538 = vst.msk [vmem:[#allocation4 + $0x1e0] sm:$0xff] %vm477, 0.0
        %539 = vst.msk [vmem:[#allocation4 + $0x1e8] sm:$0xff] %vm477, 0.0
        %540 = vst.msk [vmem:[#allocation4 + $0x1f0] sm:$0xff] %vm477, 0.0
        %541 = vst.msk [vmem:[#allocation4 + $0x1f8] sm:$0xff] %vm477, 0.0
      $region44: #{mass_attention_forward.3} parent=39 // pred_fallthru
        _
      %s542 = smul.u32 %s23, 128
      %s543 = smul.u32 %s22, 128
      %s544 = sadd.s32 %s543, 127
      %p545 = scmp.le.s32.totalorder %s542, %s544
      // Predicated region
      $region45: #{mass_attention_forward.3} parent=39 // pred_check
        %p546 = pneg %p545
      $region46: #{mass_attention_forward.3} parent=39 // pred_check_branch
        %548 = sbr.rel (%p546) target = $region48
      $region47: #{mass_attention_forward.3} parent=39 // pred_region
        %v549 = vld [vmem:[%s311] sm:$0xf]
        %v550 = vld [vmem:[%s311 + $0x4] sm:$0xf]
        %v551 = vld [vmem:[%s311 + $0x8] sm:$0xf]
        %v552 = vld [vmem:[%s311 + $0xc] sm:$0xf]
        %v553 = vld [vmem:[%s311 + $0x10] sm:$0xf]
        %v554 = vld [vmem:[%s311 + $0x14] sm:$0xf]
        %v555 = vld [vmem:[%s311 + $0x18] sm:$0xf]
        %v556 = vld [vmem:[%s311 + $0x1c] sm:$0xf]
        %v557 = vld [vmem:[%s311 + $0x20] sm:$0xf]
        %v558 = vld [vmem:[%s311 + $0x24] sm:$0xf]
        %v559 = vld [vmem:[%s311 + $0x28] sm:$0xf]
        %v560 = vld [vmem:[%s311 + $0x2c] sm:$0xf]
        %v561 = vld [vmem:[%s311 + $0x30] sm:$0xf]
        %v562 = vld [vmem:[%s311 + $0x34] sm:$0xf]
        %v563 = vld [vmem:[%s311 + $0x38] sm:$0xf]
        %v564 = vld [vmem:[%s311 + $0x3c] sm:$0xf]
        %v565 = vld [vmem:[%s321] sm:$0xf]
        %v566 = vld [vmem:[%s321 + $0x4] sm:$0xf]
        %v567 = vld [vmem:[%s321 + $0x8] sm:$0xf]
        %v568 = vld [vmem:[%s321 + $0xc] sm:$0xf]
        %v569 = vld [vmem:[%s321 + $0x10] sm:$0xf]
        %v570 = vld [vmem:[%s321 + $0x14] sm:$0xf]
        %v571 = vld [vmem:[%s321 + $0x18] sm:$0xf]
        %v572 = vld [vmem:[%s321 + $0x1c] sm:$0xf]
        %v573 = vld [vmem:[%s321 + $0x20] sm:$0xf]
        %v574 = vld [vmem:[%s321 + $0x24] sm:$0xf]
        %v575 = vld [vmem:[%s321 + $0x28] sm:$0xf]
        %v576 = vld [vmem:[%s321 + $0x2c] sm:$0xf]
        %v577 = vld [vmem:[%s321 + $0x30] sm:$0xf]
        %v578 = vld [vmem:[%s321 + $0x34] sm:$0xf]
        %v579 = vld [vmem:[%s321 + $0x38] sm:$0xf]
        %v580 = vld [vmem:[%s321 + $0x3c] sm:$0xf]
        %v581 = vld [vmem:[%s331] sm:$0xf]
        %v582 = vld [vmem:[%s331 + $0x4] sm:$0xf]
        %v583 = vld [vmem:[%s331 + $0x8] sm:$0xf]
        %v584 = vld [vmem:[%s331 + $0xc] sm:$0xf]
        %v585 = vld [vmem:[%s331 + $0x10] sm:$0xf]
        %v586 = vld [vmem:[%s331 + $0x14] sm:$0xf]
        %v587 = vld [vmem:[%s331 + $0x18] sm:$0xf]
        %v588 = vld [vmem:[%s331 + $0x1c] sm:$0xf]
        %v589 = vld [vmem:[%s331 + $0x20] sm:$0xf]
        %v590 = vld [vmem:[%s331 + $0x24] sm:$0xf]
        %v591 = vld [vmem:[%s331 + $0x28] sm:$0xf]
        %v592 = vld [vmem:[%s331 + $0x2c] sm:$0xf]
        %v593 = vld [vmem:[%s331 + $0x30] sm:$0xf]
        %v594 = vld [vmem:[%s331 + $0x34] sm:$0xf]
        %v595 = vld [vmem:[%s331 + $0x38] sm:$0xf]
        %v596 = vld [vmem:[%s331 + $0x3c] sm:$0xf]
        %v597 = vlaneseq
        %v598 = vshrl.u32 %v597, 7
        %v599 = vadd.s32 %v598, 8
        %v600 = vadd.s32 %v598, 16
        %v601 = vadd.s32 %v598, 24
        %v602 = vadd.s32 %v598, 32
        %v603 = vadd.s32 %v598, 40
        %v604 = vadd.s32 %v598, 48
        %v605 = vadd.s32 %v598, 56
        %v606 = vadd.s32 %v598, 64
        %v607 = vadd.s32 %v598, 72
        %v608 = vadd.s32 %v598, 80
        %v609 = vadd.s32 %v598, 88
        %v610 = vadd.s32 %v598, 96
        %v611 = vadd.s32 %v598, 104
        %v612 = vadd.s32 %v598, 112
        %v613 = vadd.s32 %v598, 120
        %v614 = vstv %s543
        %v615 = vadd.s32 %v614, %v598
        %v616 = vadd.s32 %v614, %v599
        %v617 = vadd.s32 %v614, %v600
        %v618 = vadd.s32 %v614, %v601
        %v619 = vadd.s32 %v614, %v602
        %v620 = vadd.s32 %v614, %v603
        %v621 = vadd.s32 %v614, %v604
        %v622 = vadd.s32 %v614, %v605
        %v623 = vadd.s32 %v614, %v606
        %v624 = vadd.s32 %v614, %v607
        %v625 = vadd.s32 %v614, %v608
        %v626 = vadd.s32 %v614, %v609
        %v627 = vadd.s32 %v614, %v610
        %v628 = vadd.s32 %v614, %v611
        %v629 = vadd.s32 %v614, %v612
        %v630 = vadd.s32 %v614, %v613
        %v631 = vlaneseq
        %v632 = vand.u32 %v631, 127
        %v633 = vstv %s542
        %v634 = vadd.s32 %v633, %v632
        %vm635 = vcmp.lt.s32.totalorder %v634, 384
        %vm636 = vcmp.le.s32.totalorder %v634, %v615
        %vm637 = vcmp.le.s32.totalorder %v634, %v616
        %vm638 = vcmp.le.s32.totalorder %v634, %v617
        %vm639 = vcmp.le.s32.totalorder %v634, %v618
        %vm640 = vcmp.le.s32.totalorder %v634, %v619
        %vm641 = vcmp.le.s32.totalorder %v634, %v620
        %vm642 = vcmp.le.s32.totalorder %v634, %v621
        %vm643 = vcmp.le.s32.totalorder %v634, %v622
        %vm644 = vcmp.le.s32.totalorder %v634, %v623
        %vm645 = vcmp.le.s32.totalorder %v634, %v624
        %vm646 = vcmp.le.s32.totalorder %v634, %v625
        %vm647 = vcmp.le.s32.totalorder %v634, %v626
        %vm648 = vcmp.le.s32.totalorder %v634, %v627
        %vm649 = vcmp.le.s32.totalorder %v634, %v628
        %vm650 = vcmp.le.s32.totalorder %v634, %v629
        %vm651 = vcmp.le.s32.totalorder %v634, %v630
        %vm652 = vmand %vm635, %vm636
        %vm653 = vmand %vm635, %vm637
        %vm654 = vmand %vm635, %vm638
        %vm655 = vmand %vm635, %vm639
        %vm656 = vmand %vm635, %vm640
        %vm657 = vmand %vm635, %vm641
        %vm658 = vmand %vm635, %vm642
        %vm659 = vmand %vm635, %vm643
        %vm660 = vmand %vm635, %vm644
        %vm661 = vmand %vm635, %vm645
        %vm662 = vmand %vm635, %vm646
        %vm663 = vmand %vm635, %vm647
        %vm664 = vmand %vm635, %vm648
        %vm665 = vmand %vm635, %vm649
        %vm666 = vmand %vm635, %vm650
        %vm667 = vmand %vm635, %vm651
        %v668 = vsel %vm652, 0.0, -1e+09
        %v669 = vsel %vm653, 0.0, -1e+09
        %v670 = vsel %vm654, 0.0, -1e+09
        %v671 = vsel %vm655, 0.0, -1e+09
        %v672 = vsel %vm656, 0.0, -1e+09
        %v673 = vsel %vm657, 0.0, -1e+09
        %v674 = vsel %vm658, 0.0, -1e+09
        %v675 = vsel %vm659, 0.0, -1e+09
        %v676 = vsel %vm660, 0.0, -1e+09
        %v677 = vsel %vm661, 0.0, -1e+09
        %v678 = vsel %vm662, 0.0, -1e+09
        %v679 = vsel %vm663, 0.0, -1e+09
        %v680 = vsel %vm664, 0.0, -1e+09
        %v681 = vsel %vm665, 0.0, -1e+09
        %v682 = vsel %vm666, 0.0, -1e+09
        %v683 = vsel %vm667, 0.0, -1e+09
        %v700 = vunpack.c.l.b16 %v549
        %v701 = vunpack.c.l.b16 %v550
        %v702 = vunpack.c.l.b16 %v551
        %v703 = vunpack.c.l.b16 %v552
        %v704 = vunpack.c.l.b16 %v553
        %v705 = vunpack.c.l.b16 %v554
        %v706 = vunpack.c.l.b16 %v555
        %v707 = vunpack.c.l.b16 %v556
        %v708 = vunpack.c.l.b16 %v557
        %v709 = vunpack.c.l.b16 %v558
        %v710 = vunpack.c.l.b16 %v559
        %v711 = vunpack.c.l.b16 %v560
        %v712 = vunpack.c.l.b16 %v561
        %v713 = vunpack.c.l.b16 %v562
        %v714 = vunpack.c.l.b16 %v563
        %v715 = vunpack.c.l.b16 %v564
        %v716 = vpack.c.b16 %v701, %v700
        %v717 = vpack.c.b16 %v703, %v702
        %v718 = vpack.c.b16 %v705, %v704
        %v719 = vpack.c.b16 %v707, %v706
        %v720 = vpack.c.b16 %v709, %v708
        %v721 = vpack.c.b16 %v711, %v710
        %v722 = vpack.c.b16 %v713, %v712
        %v723 = vpack.c.b16 %v715, %v714
        %v740 = vunpack.c.l.b16 %v565
        %v741 = vunpack.c.l.b16 %v566
        %v742 = vunpack.c.l.b16 %v567
        %v743 = vunpack.c.l.b16 %v568
        %v744 = vunpack.c.l.b16 %v569
        %v745 = vunpack.c.l.b16 %v570
        %v746 = vunpack.c.l.b16 %v571
        %v747 = vunpack.c.l.b16 %v572
        %v748 = vunpack.c.l.b16 %v573
        %v749 = vunpack.c.l.b16 %v574
        %v750 = vunpack.c.l.b16 %v575
        %v751 = vunpack.c.l.b16 %v576
        %v752 = vunpack.c.l.b16 %v577
        %v753 = vunpack.c.l.b16 %v578
        %v754 = vunpack.c.l.b16 %v579
        %v755 = vunpack.c.l.b16 %v580
        %v756 = vpack.c.b16 %v741, %v740
        %v757 = vpack.c.b16 %v743, %v742
        %v758 = vpack.c.b16 %v745, %v744
        %v759 = vpack.c.b16 %v747, %v746
        %v760 = vpack.c.b16 %v749, %v748
        %v761 = vpack.c.b16 %v751, %v750
        %v762 = vpack.c.b16 %v753, %v752
        %v763 = vpack.c.b16 %v755, %v754
        %vm764 = vcmask 130048
        %v766 = vsel %vm764, %v716, 0
        %v769 = vsel %vm764, %v717, 0
        %v772 = vsel %vm764, %v718, 0
        %v775 = vsel %vm764, %v719, 0
        %v778 = vsel %vm764, %v720, 0
        %v781 = vsel %vm764, %v721, 0
        %v784 = vsel %vm764, %v722, 0
        %v787 = vsel %vm764, %v723, 0
        %v790 = vsel %vm764, %v756, 0
        %v793 = vsel %vm764, %v757, 0
        %v796 = vsel %vm764, %v758, 0
        %v799 = vsel %vm764, %v759, 0
        %v802 = vsel %vm764, %v760, 0
        %v805 = vsel %vm764, %v761, 0
        %v808 = vsel %vm764, %v762, 0
        %v811 = vsel %vm764, %v763, 0
        %813 = vmatprep.subr.bf16.mxu0 0
        %814 = vmatpush1.bf16.xpose.msra.mxu0 %v811
        %815 = vmatprep.subr.bf16.mxu0 0
        %816 = vmatpush1.bf16.xpose.msra.mxu0 %v808
        %817 = vmatprep.subr.bf16.mxu0 0
        %818 = vmatpush1.bf16.xpose.msra.mxu0 %v805
        %819 = vmatprep.subr.bf16.mxu0 0
        %820 = vmatpush1.bf16.xpose.msra.mxu0 %v802
        %821 = vmatprep.subr.bf16.mxu0 0
        %822 = vmatpush1.bf16.xpose.msra.mxu0 %v799
        %823 = vmatprep.subr.bf16.mxu0 0
        %824 = vmatpush1.bf16.xpose.msra.mxu0 %v796
        %825 = vmatprep.subr.bf16.mxu0 0
        %826 = vmatpush1.bf16.xpose.msra.mxu0 %v793
        %827 = vmatprep.subr.bf16.mxu0 0
        %828 = vmatpush1.bf16.xpose.msra.mxu0 %v790
        %829 = vmatprep.subr.bf16.mxu0 0
        %830 = vmatpush2.bf16.xpose.msra.mxu0 0
        %831 = vmatprep.subr.bf16.mxu0 0
        %832 = vmatpush2.bf16.xpose.msra.mxu0 0
        %833 = vmatprep.subr.bf16.mxu0 0
        %834 = vmatpush2.bf16.xpose.msra.mxu0 0
        %835 = vmatprep.subr.bf16.mxu0 0
        %836 = vmatpush2.bf16.xpose.msra.mxu0 0
        %837 = vmatprep.subr.bf16.mxu0 0
        %838 = vmatpush2.bf16.xpose.msra.mxu0 0
        %839 = vmatprep.subr.bf16.mxu0 0
        %840 = vmatpush2.bf16.xpose.msra.mxu0 0
        %841 = vmatprep.subr.bf16.mxu0 0
        %842 = vmatpush2.bf16.xpose.msra.mxu0 0
        %843 = vmatprep.subr.bf16.mxu0 0
        %844 = vmatpush2.bf16.xpose.msra.mxu0 0
        %845 = vmatprep.mubr.bf16.mxu0 0
        %846 = vmatmul.mubr.bf16.gmra.mxu0 %v766
        %v847 = vpop.f32.mrf.mxu0
        %v848 = vadd.f32 %v668, %v847
        %v849 = vpop.f32.mrf.mxu0
        %v850 = vpop.f32.mrf.mxu0
        %v851 = vadd.f32 %v669, %v850
        %v852 = vpop.f32.mrf.mxu0
        %853 = vmatprep.mubr.bf16.mxu0 0
        %854 = vmatmul.mubr.bf16.gmra.mxu0 %v769
        %v855 = vpop.f32.mrf.mxu0
        %v856 = vadd.f32 %v670, %v855
        %v857 = vpop.f32.mrf.mxu0
        %v858 = vpop.f32.mrf.mxu0
        %v859 = vadd.f32 %v671, %v858
        %v860 = vpop.f32.mrf.mxu0
        %861 = vmatprep.mubr.bf16.mxu0 0
        %862 = vmatmul.mubr.bf16.gmra.mxu0 %v772
        %v863 = vpop.f32.mrf.mxu0
        %v864 = vadd.f32 %v672, %v863
        %v865 = vpop.f32.mrf.mxu0
        %v866 = vpop.f32.mrf.mxu0
        %v867 = vadd.f32 %v673, %v866
        %v868 = vpop.f32.mrf.mxu0
        %869 = vmatprep.mubr.bf16.mxu0 0
        %870 = vmatmul.mubr.bf16.gmra.mxu0 %v775
        %v871 = vpop.f32.mrf.mxu0
        %v872 = vadd.f32 %v674, %v871
        %v873 = vpop.f32.mrf.mxu0
        %v874 = vpop.f32.mrf.mxu0
        %v875 = vadd.f32 %v675, %v874
        %v876 = vpop.f32.mrf.mxu0
        %877 = vmatprep.mubr.bf16.mxu0 0
        %878 = vmatmul.mubr.bf16.gmra.mxu0 %v778
        %v879 = vpop.f32.mrf.mxu0
        %v880 = vadd.f32 %v676, %v879
        %v881 = vpop.f32.mrf.mxu0
        %v882 = vpop.f32.mrf.mxu0
        %v883 = vadd.f32 %v677, %v882
        %v884 = vpop.f32.mrf.mxu0
        %885 = vmatprep.mubr.bf16.mxu0 0
        %886 = vmatmul.mubr.bf16.gmra.mxu0 %v781
        %v887 = vpop.f32.mrf.mxu0
        %v888 = vadd.f32 %v678, %v887
        %v889 = vpop.f32.mrf.mxu0
        %v890 = vpop.f32.mrf.mxu0
        %v891 = vadd.f32 %v679, %v890
        %v892 = vpop.f32.mrf.mxu0
        %893 = vmatprep.mubr.bf16.mxu0 0
        %894 = vmatmul.mubr.bf16.gmra.mxu0 %v784
        %v895 = vpop.f32.mrf.mxu0
        %v896 = vadd.f32 %v680, %v895
        %v897 = vpop.f32.mrf.mxu0
        %v898 = vpop.f32.mrf.mxu0
        %v899 = vadd.f32 %v681, %v898
        %v900 = vpop.f32.mrf.mxu0
        %901 = vmatprep.mubr.bf16.mxu0 0
        %902 = vmatmul.mubr.bf16.gmra.mxu0 %v787
        %v903 = vpop.f32.mrf.mxu0
        %v904 = vadd.f32 %v682, %v903
        %v905 = vpop.f32.mrf.mxu0
        %v906 = vpop.f32.mrf.mxu0
        %v907 = vadd.f32 %v683, %v906
        %v908 = vpop.f32.mrf.mxu0
        %909 = vdwg.mxu0
        %v910 = vld [vmem:[#allocation2] sm:$0xff]
        %v911 = vld [vmem:[#allocation2 + $0x8] sm:$0xff]
        %v912 = vld [vmem:[#allocation2 + $0x10] sm:$0xff]
        %v913 = vld [vmem:[#allocation2 + $0x18] sm:$0xff]
        %v914 = vld [vmem:[#allocation2 + $0x20] sm:$0xff]
        %v915 = vld [vmem:[#allocation2 + $0x28] sm:$0xff]
        %v916 = vld [vmem:[#allocation2 + $0x30] sm:$0xff]
        %v917 = vld [vmem:[#allocation2 + $0x38] sm:$0xff]
        %v918 = vld [vmem:[#allocation2 + $0x40] sm:$0xff]
        %v919 = vld [vmem:[#allocation2 + $0x48] sm:$0xff]
        %v920 = vld [vmem:[#allocation2 + $0x50] sm:$0xff]
        %v921 = vld [vmem:[#allocation2 + $0x58] sm:$0xff]
        %v922 = vld [vmem:[#allocation2 + $0x60] sm:$0xff]
        %v923 = vld [vmem:[#allocation2 + $0x68] sm:$0xff]
        %v924 = vld [vmem:[#allocation2 + $0x70] sm:$0xff]
        %v925 = vld [vmem:[#allocation2 + $0x78] sm:$0xff]
        %926 = vmax.xlane.f32.xlu0 %v848
        %v927 = vpop.xlane.xlu0 %926
        %928 = vmax.xlane.f32.xlu0 %v851
        %v929 = vpop.xlane.xlu0 %928
        %930 = vmax.xlane.f32.xlu0 %v856
        %v931 = vpop.xlane.xlu0 %930
        %932 = vmax.xlane.f32.xlu0 %v859
        %v933 = vpop.xlane.xlu0 %932
        %934 = vmax.xlane.f32.xlu0 %v864
        %v935 = vpop.xlane.xlu0 %934
        %936 = vmax.xlane.f32.xlu0 %v867
        %v937 = vpop.xlane.xlu0 %936
        %938 = vmax.xlane.f32.xlu0 %v872
        %v939 = vpop.xlane.xlu0 %938
        %940 = vmax.xlane.f32.xlu0 %v875
        %v941 = vpop.xlane.xlu0 %940
        %942 = vmax.xlane.f32.xlu0 %v880
        %v943 = vpop.xlane.xlu0 %942
        %944 = vmax.xlane.f32.xlu0 %v883
        %v945 = vpop.xlane.xlu0 %944
        %946 = vmax.xlane.f32.xlu0 %v888
        %v947 = vpop.xlane.xlu0 %946
        %948 = vmax.xlane.f32.xlu0 %v891
        %v949 = vpop.xlane.xlu0 %948
        %950 = vmax.xlane.f32.xlu0 %v896
        %v951 = vpop.xlane.xlu0 %950
        %952 = vmax.xlane.f32.xlu0 %v899
        %v953 = vpop.xlane.xlu0 %952
        %954 = vmax.xlane.f32.xlu0 %v904
        %v955 = vpop.xlane.xlu0 %954
        %956 = vmax.xlane.f32.xlu0 %v907
        %v957 = vpop.xlane.xlu0 %956
        %v958 = vmax.f32 %v910, %v927
        %v959 = vmax.f32 %v911, %v929
        %v960 = vmax.f32 %v912, %v931
        %v961 = vmax.f32 %v913, %v933
        %v962 = vmax.f32 %v914, %v935
        %v963 = vmax.f32 %v915, %v937
        %v964 = vmax.f32 %v916, %v939
        %v965 = vmax.f32 %v917, %v941
        %v966 = vmax.f32 %v918, %v943
        %v967 = vmax.f32 %v919, %v945
        %v968 = vmax.f32 %v920, %v947
        %v969 = vmax.f32 %v921, %v949
        %v970 = vmax.f32 %v922, %v951
        %v971 = vmax.f32 %v923, %v953
        %v972 = vmax.f32 %v924, %v955
        %v973 = vmax.f32 %v925, %v957
        %v974 = vsub.f32 %v910, %v958
        %v975 = vsub.f32 %v911, %v959
        %v976 = vsub.f32 %v912, %v960
        %v977 = vsub.f32 %v913, %v961
        %v978 = vsub.f32 %v914, %v962
        %v979 = vsub.f32 %v915, %v963
        %v980 = vsub.f32 %v916, %v964
        %v981 = vsub.f32 %v917, %v965
        %v982 = vsub.f32 %v918, %v966
        %v983 = vsub.f32 %v919, %v967
        %v984 = vsub.f32 %v920, %v968
        %v985 = vsub.f32 %v921, %v969
        %v986 = vsub.f32 %v922, %v970
        %v987 = vsub.f32 %v923, %v971
        %v988 = vsub.f32 %v924, %v972
        %v989 = vsub.f32 %v925, %v973
        %v990 = vmul.f32 %v974, 1.442695
        %v991 = vpow.pop %v990
        %v992 = vmul.f32 %v975, 1.442695
        %v993 = vpow.pop %v992
        %v994 = vmul.f32 %v976, 1.442695
        %v995 = vpow.pop %v994
        %v996 = vmul.f32 %v977, 1.442695
        %v997 = vpow.pop %v996
        %v998 = vmul.f32 %v978, 1.442695
        %v999 = vpow.pop %v998
        %v1000 = vmul.f32 %v979, 1.442695
        %v1001 = vpow.pop %v1000
        %v1002 = vmul.f32 %v980, 1.442695
        %v1003 = vpow.pop %v1002
        %v1004 = vmul.f32 %v981, 1.442695
        %v1005 = vpow.pop %v1004
        %v1006 = vmul.f32 %v982, 1.442695
        %v1007 = vpow.pop %v1006
        %v1008 = vmul.f32 %v983, 1.442695
        %v1009 = vpow.pop %v1008
        %v1010 = vmul.f32 %v984, 1.442695
        %v1011 = vpow.pop %v1010
        %v1012 = vmul.f32 %v985, 1.442695
        %v1013 = vpow.pop %v1012
        %v1014 = vmul.f32 %v986, 1.442695
        %v1015 = vpow.pop %v1014
        %v1016 = vmul.f32 %v987, 1.442695
        %v1017 = vpow.pop %v1016
        %v1018 = vmul.f32 %v988, 1.442695
        %v1019 = vpow.pop %v1018
        %v1020 = vmul.f32 %v989, 1.442695
        %v1021 = vpow.pop %v1020
        %1023 = vset.pattern.permute.xlu0 0
        %1024 = vperm.xlu0 %1023, %v958
        %v1025 = vpop.permute.xlu0 %1024
        %1028 = vset.pattern.permute.xlu0 0
        %1029 = vperm.xlu0 %1028, %v959
        %v1030 = vpop.permute.xlu0 %1029
        %1033 = vset.pattern.permute.xlu0 0
        %1034 = vperm.xlu0 %1033, %v960
        %v1035 = vpop.permute.xlu0 %1034
        %1038 = vset.pattern.permute.xlu0 0
        %1039 = vperm.xlu0 %1038, %v961
        %v1040 = vpop.permute.xlu0 %1039
        %1043 = vset.pattern.permute.xlu0 0
        %1044 = vperm.xlu0 %1043, %v962
        %v1045 = vpop.permute.xlu0 %1044
        %1048 = vset.pattern.permute.xlu0 0
        %1049 = vperm.xlu0 %1048, %v963
        %v1050 = vpop.permute.xlu0 %1049
        %1053 = vset.pattern.permute.xlu0 0
        %1054 = vperm.xlu0 %1053, %v964
        %v1055 = vpop.permute.xlu0 %1054
        %1058 = vset.pattern.permute.xlu0 0
        %1059 = vperm.xlu0 %1058, %v965
        %v1060 = vpop.permute.xlu0 %1059
        %1063 = vset.pattern.permute.xlu0 0
        %1064 = vperm.xlu0 %1063, %v966
        %v1065 = vpop.permute.xlu0 %1064
        %1068 = vset.pattern.permute.xlu0 0
        %1069 = vperm.xlu0 %1068, %v967
        %v1070 = vpop.permute.xlu0 %1069
        %1073 = vset.pattern.permute.xlu0 0
        %1074 = vperm.xlu0 %1073, %v968
        %v1075 = vpop.permute.xlu0 %1074
        %1078 = vset.pattern.permute.xlu0 0
        %1079 = vperm.xlu0 %1078, %v969
        %v1080 = vpop.permute.xlu0 %1079
        %1083 = vset.pattern.permute.xlu0 0
        %1084 = vperm.xlu0 %1083, %v970
        %v1085 = vpop.permute.xlu0 %1084
        %1088 = vset.pattern.permute.xlu0 0
        %1089 = vperm.xlu0 %1088, %v971
        %v1090 = vpop.permute.xlu0 %1089
        %1093 = vset.pattern.permute.xlu0 0
        %1094 = vperm.xlu0 %1093, %v972
        %v1095 = vpop.permute.xlu0 %1094
        %1098 = vset.pattern.permute.xlu0 0
        %1099 = vperm.xlu0 %1098, %v973
        %v1100 = vpop.permute.xlu0 %1099
        %v1102 = vsub.f32 %v848, %v1025
        %v1103 = vsub.f32 %v851, %v1030
        %v1104 = vsub.f32 %v856, %v1035
        %v1105 = vsub.f32 %v859, %v1040
        %v1106 = vsub.f32 %v864, %v1045
        %v1107 = vsub.f32 %v867, %v1050
        %v1108 = vsub.f32 %v872, %v1055
        %v1109 = vsub.f32 %v875, %v1060
        %v1110 = vsub.f32 %v880, %v1065
        %v1111 = vsub.f32 %v883, %v1070
        %v1112 = vsub.f32 %v888, %v1075
        %v1113 = vsub.f32 %v891, %v1080
        %v1114 = vsub.f32 %v896, %v1085
        %v1115 = vsub.f32 %v899, %v1090
        %v1116 = vsub.f32 %v904, %v1095
        %v1117 = vsub.f32 %v907, %v1100
        %v1118 = vmul.f32 %v1102, 1.442695
        %v1119 = vpow.pop %v1118
        %v1120 = vmul.f32 %v1103, 1.442695
        %v1121 = vpow.pop %v1120
        %v1122 = vmul.f32 %v1104, 1.442695
        %v1123 = vpow.pop %v1122
        %v1124 = vmul.f32 %v1105, 1.442695
        %v1125 = vpow.pop %v1124
        %v1126 = vmul.f32 %v1106, 1.442695
        %v1127 = vpow.pop %v1126
        %v1128 = vmul.f32 %v1107, 1.442695
        %v1129 = vpow.pop %v1128
        %v1130 = vmul.f32 %v1108, 1.442695
        %v1131 = vpow.pop %v1130
        %v1132 = vmul.f32 %v1109, 1.442695
        %v1133 = vpow.pop %v1132
        %v1134 = vmul.f32 %v1110, 1.442695
        %v1135 = vpow.pop %v1134
        %v1136 = vmul.f32 %v1111, 1.442695
        %v1137 = vpow.pop %v1136
        %v1138 = vmul.f32 %v1112, 1.442695
        %v1139 = vpow.pop %v1138
        %v1140 = vmul.f32 %v1113, 1.442695
        %v1141 = vpow.pop %v1140
        %v1142 = vmul.f32 %v1114, 1.442695
        %v1143 = vpow.pop %v1142
        %v1144 = vmul.f32 %v1115, 1.442695
        %v1145 = vpow.pop %v1144
        %v1146 = vmul.f32 %v1116, 1.442695
        %v1147 = vpow.pop %v1146
        %v1148 = vmul.f32 %v1117, 1.442695
        %v1149 = vpow.pop %v1148
        %v1150 = vld [vmem:[#allocation3] sm:$0xff]
        %v1151 = vld [vmem:[#allocation3 + $0x8] sm:$0xff]
        %v1152 = vld [vmem:[#allocation3 + $0x10] sm:$0xff]
        %v1153 = vld [vmem:[#allocation3 + $0x18] sm:$0xff]
        %v1154 = vld [vmem:[#allocation3 + $0x20] sm:$0xff]
        %v1155 = vld [vmem:[#allocation3 + $0x28] sm:$0xff]
        %v1156 = vld [vmem:[#allocation3 + $0x30] sm:$0xff]
        %v1157 = vld [vmem:[#allocation3 + $0x38] sm:$0xff]
        %v1158 = vld [vmem:[#allocation3 + $0x40] sm:$0xff]
        %v1159 = vld [vmem:[#allocation3 + $0x48] sm:$0xff]
        %v1160 = vld [vmem:[#allocation3 + $0x50] sm:$0xff]
        %v1161 = vld [vmem:[#allocation3 + $0x58] sm:$0xff]
        %v1162 = vld [vmem:[#allocation3 + $0x60] sm:$0xff]
        %v1163 = vld [vmem:[#allocation3 + $0x68] sm:$0xff]
        %v1164 = vld [vmem:[#allocation3 + $0x70] sm:$0xff]
        %v1165 = vld [vmem:[#allocation3 + $0x78] sm:$0xff]
        %v1166 = vmul.f32 %v991, %v1150
        %v1167 = vmul.f32 %v993, %v1151
        %v1168 = vmul.f32 %v995, %v1152
        %v1169 = vmul.f32 %v997, %v1153
        %v1170 = vmul.f32 %v999, %v1154
        %v1171 = vmul.f32 %v1001, %v1155
        %v1172 = vmul.f32 %v1003, %v1156
        %v1173 = vmul.f32 %v1005, %v1157
        %v1174 = vmul.f32 %v1007, %v1158
        %v1175 = vmul.f32 %v1009, %v1159
        %v1176 = vmul.f32 %v1011, %v1160
        %v1177 = vmul.f32 %v1013, %v1161
        %v1178 = vmul.f32 %v1015, %v1162
        %v1179 = vmul.f32 %v1017, %v1163
        %v1180 = vmul.f32 %v1019, %v1164
        %v1181 = vmul.f32 %v1021, %v1165
        %1182 = vadd.xlane.f32.xlu0 %v1119
        %v1183 = vpop.xlane.xlu0 %1182
        %1184 = vadd.xlane.f32.xlu0 %v1121
        %v1185 = vpop.xlane.xlu0 %1184
        %1186 = vadd.xlane.f32.xlu0 %v1123
        %v1187 = vpop.xlane.xlu0 %1186
        %1188 = vadd.xlane.f32.xlu0 %v1125
        %v1189 = vpop.xlane.xlu0 %1188
        %1190 = vadd.xlane.f32.xlu0 %v1127
        %v1191 = vpop.xlane.xlu0 %1190
        %1192 = vadd.xlane.f32.xlu0 %v1129
        %v1193 = vpop.xlane.xlu0 %1192
        %1194 = vadd.xlane.f32.xlu0 %v1131
        %v1195 = vpop.xlane.xlu0 %1194
        %1196 = vadd.xlane.f32.xlu0 %v1133
        %v1197 = vpop.xlane.xlu0 %1196
        %1198 = vadd.xlane.f32.xlu0 %v1135
        %v1199 = vpop.xlane.xlu0 %1198
        %1200 = vadd.xlane.f32.xlu0 %v1137
        %v1201 = vpop.xlane.xlu0 %1200
        %1202 = vadd.xlane.f32.xlu0 %v1139
        %v1203 = vpop.xlane.xlu0 %1202
        %1204 = vadd.xlane.f32.xlu0 %v1141
        %v1205 = vpop.xlane.xlu0 %1204
        %1206 = vadd.xlane.f32.xlu0 %v1143
        %v1207 = vpop.xlane.xlu0 %1206
        %1208 = vadd.xlane.f32.xlu0 %v1145
        %v1209 = vpop.xlane.xlu0 %1208
        %1210 = vadd.xlane.f32.xlu0 %v1147
        %v1211 = vpop.xlane.xlu0 %1210
        %1212 = vadd.xlane.f32.xlu0 %v1149
        %v1213 = vpop.xlane.xlu0 %1212
        %v1214 = vadd.f32 %v1166, %v1183
        %v1215 = vadd.f32 %v1167, %v1185
        %v1216 = vadd.f32 %v1168, %v1187
        %v1217 = vadd.f32 %v1169, %v1189
        %v1218 = vadd.f32 %v1170, %v1191
        %v1219 = vadd.f32 %v1171, %v1193
        %v1220 = vadd.f32 %v1172, %v1195
        %v1221 = vadd.f32 %v1173, %v1197
        %v1222 = vadd.f32 %v1174, %v1199
        %v1223 = vadd.f32 %v1175, %v1201
        %v1224 = vadd.f32 %v1176, %v1203
        %v1225 = vadd.f32 %v1177, %v1205
        %v1226 = vadd.f32 %v1178, %v1207
        %v1227 = vadd.f32 %v1179, %v1209
        %v1228 = vadd.f32 %v1180, %v1211
        %v1229 = vadd.f32 %v1181, %v1213
        %vm1230 = vcmask 7168
        %1231 = vst.msk [vmem:[#allocation3] sm:$0xff] %vm1230, %v1214
        %1232 = vst.msk [vmem:[#allocation3 + $0x8] sm:$0xff] %vm1230, %v1215
        %1233 = vst.msk [vmem:[#allocation3 + $0x10] sm:$0xff] %vm1230, %v1216
        %1234 = vst.msk [vmem:[#allocation3 + $0x18] sm:$0xff] %vm1230, %v1217
        %1235 = vst.msk [vmem:[#allocation3 + $0x20] sm:$0xff] %vm1230, %v1218
        %1236 = vst.msk [vmem:[#allocation3 + $0x28] sm:$0xff] %vm1230, %v1219
        %1237 = vst.msk [vmem:[#allocation3 + $0x30] sm:$0xff] %vm1230, %v1220
        %1238 = vst.msk [vmem:[#allocation3 + $0x38] sm:$0xff] %vm1230, %v1221
        %1239 = vst.msk [vmem:[#allocation3 + $0x40] sm:$0xff] %vm1230, %v1222
        %1240 = vst.msk [vmem:[#allocation3 + $0x48] sm:$0xff] %vm1230, %v1223
        %1241 = vst.msk [vmem:[#allocation3 + $0x50] sm:$0xff] %vm1230, %v1224
        %1242 = vst.msk [vmem:[#allocation3 + $0x58] sm:$0xff] %vm1230, %v1225
        %1243 = vst.msk [vmem:[#allocation3 + $0x60] sm:$0xff] %vm1230, %v1226
        %1244 = vst.msk [vmem:[#allocation3 + $0x68] sm:$0xff] %vm1230, %v1227
        %1245 = vst.msk [vmem:[#allocation3 + $0x70] sm:$0xff] %vm1230, %v1228
        %1246 = vst.msk [vmem:[#allocation3 + $0x78] sm:$0xff] %vm1230, %v1229
        %v1247 = vld [vmem:[#allocation4] sm:$0xff]
        %v1248 = vld [vmem:[#allocation4 + $0x8] sm:$0xff]
        %v1249 = vld [vmem:[#allocation4 + $0x10] sm:$0xff]
        %v1250 = vld [vmem:[#allocation4 + $0x18] sm:$0xff]
        %v1251 = vld [vmem:[#allocation4 + $0x20] sm:$0xff]
        %v1252 = vld [vmem:[#allocation4 + $0x28] sm:$0xff]
        %v1253 = vld [vmem:[#allocation4 + $0x30] sm:$0xff]
        %v1254 = vld [vmem:[#allocation4 + $0x38] sm:$0xff]
        %v1255 = vld [vmem:[#allocation4 + $0x40] sm:$0xff]
        %v1256 = vld [vmem:[#allocation4 + $0x48] sm:$0xff]
        %v1257 = vld [vmem:[#allocation4 + $0x50] sm:$0xff]
        %v1258 = vld [vmem:[#allocation4 + $0x58] sm:$0xff]
        %v1259 = vld [vmem:[#allocation4 + $0x60] sm:$0xff]
        %v1260 = vld [vmem:[#allocation4 + $0x68] sm:$0xff]
        %v1261 = vld [vmem:[#allocation4 + $0x70] sm:$0xff]
        %v1262 = vld [vmem:[#allocation4 + $0x78] sm:$0xff]
        %1264 = vset.pattern.permute.xlu0 0
        %1265 = vperm.xlu0 %1264, %v991
        %v1266 = vpop.permute.xlu0 %1265
        %1269 = vset.pattern.permute.xlu0 0
        %1270 = vperm.xlu0 %1269, %v993
        %v1271 = vpop.permute.xlu0 %1270
        %1274 = vset.pattern.permute.xlu0 0
        %1275 = vperm.xlu0 %1274, %v995
        %v1276 = vpop.permute.xlu0 %1275
        %1279 = vset.pattern.permute.xlu0 0
        %1280 = vperm.xlu0 %1279, %v997
        %v1281 = vpop.permute.xlu0 %1280
        %1284 = vset.pattern.permute.xlu0 0
        %1285 = vperm.xlu0 %1284, %v999
        %v1286 = vpop.permute.xlu0 %1285
        %1289 = vset.pattern.permute.xlu0 0
        %1290 = vperm.xlu0 %1289, %v1001
        %v1291 = vpop.permute.xlu0 %1290
        %1294 = vset.pattern.permute.xlu0 0
        %1295 = vperm.xlu0 %1294, %v1003
        %v1296 = vpop.permute.xlu0 %1295
        %1299 = vset.pattern.permute.xlu0 0
        %1300 = vperm.xlu0 %1299, %v1005
        %v1301 = vpop.permute.xlu0 %1300
        %1304 = vset.pattern.permute.xlu0 0
        %1305 = vperm.xlu0 %1304, %v1007
        %v1306 = vpop.permute.xlu0 %1305
        %1309 = vset.pattern.permute.xlu0 0
        %1310 = vperm.xlu0 %1309, %v1009
        %v1311 = vpop.permute.xlu0 %1310
        %1314 = vset.pattern.permute.xlu0 0
        %1315 = vperm.xlu0 %1314, %v1011
        %v1316 = vpop.permute.xlu0 %1315
        %1319 = vset.pattern.permute.xlu0 0
        %1320 = vperm.xlu0 %1319, %v1013
        %v1321 = vpop.permute.xlu0 %1320
        %1324 = vset.pattern.permute.xlu0 0
        %1325 = vperm.xlu0 %1324, %v1015
        %v1326 = vpop.permute.xlu0 %1325
        %1329 = vset.pattern.permute.xlu0 0
        %1330 = vperm.xlu0 %1329, %v1017
        %v1331 = vpop.permute.xlu0 %1330
        %1334 = vset.pattern.permute.xlu0 0
        %1335 = vperm.xlu0 %1334, %v1019
        %v1336 = vpop.permute.xlu0 %1335
        %1339 = vset.pattern.permute.xlu0 0
        %1340 = vperm.xlu0 %1339, %v1021
        %v1341 = vpop.permute.xlu0 %1340
        %v1343 = vmul.f32 %v1266, %v1247
        %v1344 = vmul.f32 %v1271, %v1248
        %v1345 = vmul.f32 %v1276, %v1249
        %v1346 = vmul.f32 %v1281, %v1250
        %v1347 = vmul.f32 %v1286, %v1251
        %v1348 = vmul.f32 %v1291, %v1252
        %v1349 = vmul.f32 %v1296, %v1253
        %v1350 = vmul.f32 %v1301, %v1254
        %v1351 = vmul.f32 %v1306, %v1255
        %v1352 = vmul.f32 %v1311, %v1256
        %v1353 = vmul.f32 %v1316, %v1257
        %v1354 = vmul.f32 %v1321, %v1258
        %v1355 = vmul.f32 %v1326, %v1259
        %v1356 = vmul.f32 %v1331, %v1260
        %v1357 = vmul.f32 %v1336, %v1261
        %v1358 = vmul.f32 %v1341, %v1262
        %v1359 = vpack.c.bf16 %v1121, %v1119
        %v1360 = vpack.c.bf16 %v1125, %v1123
        %v1361 = vpack.c.bf16 %v1129, %v1127
        %v1362 = vpack.c.bf16 %v1133, %v1131
        %v1363 = vpack.c.bf16 %v1137, %v1135
        %v1364 = vpack.c.bf16 %v1141, %v1139
        %v1365 = vpack.c.bf16 %v1145, %v1143
        %v1366 = vpack.c.bf16 %v1149, %v1147
        %v1383 = vunpack.c.l.b16 %v581
        %v1384 = vunpack.c.l.b16 %v582
        %v1385 = vunpack.c.l.b16 %v583
        %v1386 = vunpack.c.l.b16 %v584
        %v1387 = vunpack.c.l.b16 %v585
        %v1388 = vunpack.c.l.b16 %v586
        %v1389 = vunpack.c.l.b16 %v587
        %v1390 = vunpack.c.l.b16 %v588
        %v1391 = vunpack.c.l.b16 %v589
        %v1392 = vunpack.c.l.b16 %v590
        %v1393 = vunpack.c.l.b16 %v591
        %v1394 = vunpack.c.l.b16 %v592
        %v1395 = vunpack.c.l.b16 %v593
        %v1396 = vunpack.c.l.b16 %v594
        %v1397 = vunpack.c.l.b16 %v595
        %v1398 = vunpack.c.l.b16 %v596
        %v1399 = vpack.c.b16 %v1384, %v1383
        %v1400 = vpack.c.b16 %v1386, %v1385
        %v1401 = vpack.c.b16 %v1388, %v1387
        %v1402 = vpack.c.b16 %v1390, %v1389
        %v1403 = vpack.c.b16 %v1392, %v1391
        %v1404 = vpack.c.b16 %v1394, %v1393
        %v1405 = vpack.c.b16 %v1396, %v1395
        %v1406 = vpack.c.b16 %v1398, %v1397
        %1415 = vmatprep.subr.bf16.mxu0 0
        %1416 = vmatpush1.bf16.msra.mxu0 %v1406
        %1417 = vmatprep.subr.bf16.mxu0 0
        %1418 = vmatpush1.bf16.msra.mxu0 %v1405
        %1419 = vmatprep.subr.bf16.mxu0 0
        %1420 = vmatpush1.bf16.msra.mxu0 %v1404
        %1421 = vmatprep.subr.bf16.mxu0 0
        %1422 = vmatpush1.bf16.msra.mxu0 %v1403
        %1423 = vmatprep.subr.bf16.mxu0 0
        %1424 = vmatpush1.bf16.msra.mxu0 %v1402
        %1425 = vmatprep.subr.bf16.mxu0 0
        %1426 = vmatpush1.bf16.msra.mxu0 %v1401
        %1427 = vmatprep.subr.bf16.mxu0 0
        %1428 = vmatpush1.bf16.msra.mxu0 %v1400
        %1429 = vmatprep.subr.bf16.mxu0 0
        %1430 = vmatpush1.bf16.msra.mxu0 %v1399
        %1431 = vmatprep.subr.bf16.mxu0 0
        %1432 = vmatpush2.bf16.msra.mxu0 0
        %1433 = vmatprep.subr.bf16.mxu0 0
        %1434 = vmatpush2.bf16.msra.mxu0 0
        %1435 = vmatprep.subr.bf16.mxu0 0
        %1436 = vmatpush2.bf16.msra.mxu0 0
        %1437 = vmatprep.subr.bf16.mxu0 0
        %1438 = vmatpush2.bf16.msra.mxu0 0
        %1439 = vmatprep.subr.bf16.mxu0 0
        %1440 = vmatpush2.bf16.msra.mxu0 0
        %1441 = vmatprep.subr.bf16.mxu0 0
        %1442 = vmatpush2.bf16.msra.mxu0 0
        %1443 = vmatprep.subr.bf16.mxu0 0
        %1444 = vmatpush2.bf16.msra.mxu0 0
        %1445 = vmatprep.subr.bf16.mxu0 0
        %1446 = vmatpush2.bf16.msra.mxu0 0
        %1447 = vmatprep.mubr.bf16.mxu0 0
        %1448 = vmatmul.mubr.bf16.gmra.mxu0 %v1359
        %v1449 = vpop.f32.mrf.mxu0
        %v1450 = vadd.f32 0.0, %v1449
        %v1451 = vpop.f32.mrf.mxu0
        %v1452 = vpop.f32.mrf.mxu0
        %v1453 = vadd.f32 0.0, %v1452
        %v1454 = vpop.f32.mrf.mxu0
        %1455 = vmatprep.mubr.bf16.mxu0 0
        %1456 = vmatmul.mubr.bf16.gmra.mxu0 %v1360
        %v1457 = vpop.f32.mrf.mxu0
        %v1458 = vadd.f32 0.0, %v1457
        %v1459 = vpop.f32.mrf.mxu0
        %v1460 = vpop.f32.mrf.mxu0
        %v1461 = vadd.f32 0.0, %v1460
        %v1462 = vpop.f32.mrf.mxu0
        %1463 = vmatprep.mubr.bf16.mxu0 0
        %1464 = vmatmul.mubr.bf16.gmra.mxu0 %v1361
        %v1465 = vpop.f32.mrf.mxu0
        %v1466 = vadd.f32 0.0, %v1465
        %v1467 = vpop.f32.mrf.mxu0
        %v1468 = vpop.f32.mrf.mxu0
        %v1469 = vadd.f32 0.0, %v1468
        %v1470 = vpop.f32.mrf.mxu0
        %1471 = vmatprep.mubr.bf16.mxu0 0
        %1472 = vmatmul.mubr.bf16.gmra.mxu0 %v1362
        %v1473 = vpop.f32.mrf.mxu0
        %v1474 = vadd.f32 0.0, %v1473
        %v1475 = vpop.f32.mrf.mxu0
        %v1476 = vpop.f32.mrf.mxu0
        %v1477 = vadd.f32 0.0, %v1476
        %v1478 = vpop.f32.mrf.mxu0
        %1479 = vmatprep.mubr.bf16.mxu0 0
        %1480 = vmatmul.mubr.bf16.gmra.mxu0 %v1363
        %v1481 = vpop.f32.mrf.mxu0
        %v1482 = vadd.f32 0.0, %v1481
        %v1483 = vpop.f32.mrf.mxu0
        %v1484 = vpop.f32.mrf.mxu0
        %v1485 = vadd.f32 0.0, %v1484
        %v1486 = vpop.f32.mrf.mxu0
        %1487 = vmatprep.mubr.bf16.mxu0 0
        %1488 = vmatmul.mubr.bf16.gmra.mxu0 %v1364
        %v1489 = vpop.f32.mrf.mxu0
        %v1490 = vadd.f32 0.0, %v1489
        %v1491 = vpop.f32.mrf.mxu0
        %v1492 = vpop.f32.mrf.mxu0
        %v1493 = vadd.f32 0.0, %v1492
        %v1494 = vpop.f32.mrf.mxu0
        %1495 = vmatprep.mubr.bf16.mxu0 0
        %1496 = vmatmul.mubr.bf16.gmra.mxu0 %v1365
        %v1497 = vpop.f32.mrf.mxu0
        %v1498 = vadd.f32 0.0, %v1497
        %v1499 = vpop.f32.mrf.mxu0
        %v1500 = vpop.f32.mrf.mxu0
        %v1501 = vadd.f32 0.0, %v1500
        %v1502 = vpop.f32.mrf.mxu0
        %1503 = vmatprep.mubr.bf16.mxu0 0
        %1504 = vmatmul.mubr.bf16.gmra.mxu0 %v1366
        %v1505 = vpop.f32.mrf.mxu0
        %v1506 = vadd.f32 0.0, %v1505
        %v1507 = vpop.f32.mrf.mxu0
        %v1508 = vpop.f32.mrf.mxu0
        %v1509 = vadd.f32 0.0, %v1508
        %v1510 = vpop.f32.mrf.mxu0
        %1511 = vdwg.mxu0
        %v1512 = vadd.f32 %v1343, %v1450
        %v1513 = vadd.f32 %v1344, %v1453
        %v1514 = vadd.f32 %v1345, %v1458
        %v1515 = vadd.f32 %v1346, %v1461
        %v1516 = vadd.f32 %v1347, %v1466
        %v1517 = vadd.f32 %v1348, %v1469
        %v1518 = vadd.f32 %v1349, %v1474
        %v1519 = vadd.f32 %v1350, %v1477
        %v1520 = vadd.f32 %v1351, %v1482
        %v1521 = vadd.f32 %v1352, %v1485
        %v1522 = vadd.f32 %v1353, %v1490
        %v1523 = vadd.f32 %v1354, %v1493
        %v1524 = vadd.f32 %v1355, %v1498
        %v1525 = vadd.f32 %v1356, %v1501
        %v1526 = vadd.f32 %v1357, %v1506
        %v1527 = vadd.f32 %v1358, %v1509
        %1528 = vst.msk [vmem:[#allocation4] sm:$0xff] %vm764, %v1512
        %1529 = vst.msk [vmem:[#allocation4 + $0x8] sm:$0xff] %vm764, %v1513
        %1530 = vst.msk [vmem:[#allocation4 + $0x10] sm:$0xff] %vm764, %v1514
        %1531 = vst.msk [vmem:[#allocation4 + $0x18] sm:$0xff] %vm764, %v1515
        %1532 = vst.msk [vmem:[#allocation4 + $0x20] sm:$0xff] %vm764, %v1516
        %1533 = vst.msk [vmem:[#allocation4 + $0x28] sm:$0xff] %vm764, %v1517
        %1534 = vst.msk [vmem:[#allocation4 + $0x30] sm:$0xff] %vm764, %v1518
        %1535 = vst.msk [vmem:[#allocation4 + $0x38] sm:$0xff] %vm764, %v1519
        %1536 = vst.msk [vmem:[#allocation4 + $0x40] sm:$0xff] %vm764, %v1520
        %1537 = vst.msk [vmem:[#allocation4 + $0x48] sm:$0xff] %vm764, %v1521
        %1538 = vst.msk [vmem:[#allocation4 + $0x50] sm:$0xff] %vm764, %v1522
        %1539 = vst.msk [vmem:[#allocation4 + $0x58] sm:$0xff] %vm764, %v1523
        %1540 = vst.msk [vmem:[#allocation4 + $0x60] sm:$0xff] %vm764, %v1524
        %1541 = vst.msk [vmem:[#allocation4 + $0x68] sm:$0xff] %vm764, %v1525
        %1542 = vst.msk [vmem:[#allocation4 + $0x70] sm:$0xff] %vm764, %v1526
        %1543 = vst.msk [vmem:[#allocation4 + $0x78] sm:$0xff] %vm764, %v1527
        %1544 = vst.msk [vmem:[#allocation2] sm:$0xff] %vm1230, %v958
        %1545 = vst.msk [vmem:[#allocation2 + $0x8] sm:$0xff] %vm1230, %v959
        %1546 = vst.msk [vmem:[#allocation2 + $0x10] sm:$0xff] %vm1230, %v960
        %1547 = vst.msk [vmem:[#allocation2 + $0x18] sm:$0xff] %vm1230, %v961
        %1548 = vst.msk [vmem:[#allocation2 + $0x20] sm:$0xff] %vm1230, %v962
        %1549 = vst.msk [vmem:[#allocation2 + $0x28] sm:$0xff] %vm1230, %v963
        %1550 = vst.msk [vmem:[#allocation2 + $0x30] sm:$0xff] %vm1230, %v964
        %1551 = vst.msk [vmem:[#allocation2 + $0x38] sm:$0xff] %vm1230, %v965
        %1552 = vst.msk [vmem:[#allocation2 + $0x40] sm:$0xff] %vm1230, %v966
        %1553 = vst.msk [vmem:[#allocation2 + $0x48] sm:$0xff] %vm1230, %v967
        %1554 = vst.msk [vmem:[#allocation2 + $0x50] sm:$0xff] %vm1230, %v968
        %1555 = vst.msk [vmem:[#allocation2 + $0x58] sm:$0xff] %vm1230, %v969
        %1556 = vst.msk [vmem:[#allocation2 + $0x60] sm:$0xff] %vm1230, %v970
        %1557 = vst.msk [vmem:[#allocation2 + $0x68] sm:$0xff] %vm1230, %v971
        %1558 = vst.msk [vmem:[#allocation2 + $0x70] sm:$0xff] %vm1230, %v972
        %1559 = vst.msk [vmem:[#allocation2 + $0x78] sm:$0xff] %vm1230, %v973
        %1560 = vrot.lane.b32.xlu0 %v716, 112
        %v1561 = vpop.permute.xlu0 %1560
        %1562 = vrot.lane.b32.xlu0 %v717, 112
        %v1563 = vpop.permute.xlu0 %1562
        %1564 = vrot.lane.b32.xlu0 %v718, 112
        %v1565 = vpop.permute.xlu0 %1564
        %1566 = vrot.lane.b32.xlu0 %v719, 112
        %v1567 = vpop.permute.xlu0 %1566
        %1568 = vrot.lane.b32.xlu0 %v720, 112
        %v1569 = vpop.permute.xlu0 %1568
        %1570 = vrot.lane.b32.xlu0 %v721, 112
        %v1571 = vpop.permute.xlu0 %1570
        %1572 = vrot.lane.b32.xlu0 %v722, 112
        %v1573 = vpop.permute.xlu0 %1572
        %1574 = vrot.lane.b32.xlu0 %v723, 112
        %v1575 = vpop.permute.xlu0 %1574
        %1576 = vrot.lane.b32.xlu0 %v756, 112
        %v1577 = vpop.permute.xlu0 %1576
        %1578 = vrot.lane.b32.xlu0 %v757, 112
        %v1579 = vpop.permute.xlu0 %1578
        %1580 = vrot.lane.b32.xlu0 %v758, 112
        %v1581 = vpop.permute.xlu0 %1580
        %1582 = vrot.lane.b32.xlu0 %v759, 112
        %v1583 = vpop.permute.xlu0 %1582
        %1584 = vrot.lane.b32.xlu0 %v760, 112
        %v1585 = vpop.permute.xlu0 %1584
        %1586 = vrot.lane.b32.xlu0 %v761, 112
        %v1587 = vpop.permute.xlu0 %1586
        %1588 = vrot.lane.b32.xlu0 %v762, 112
        %v1589 = vpop.permute.xlu0 %1588
        %1590 = vrot.lane.b32.xlu0 %v763, 112
        %v1591 = vpop.permute.xlu0 %1590
        %v1593 = vsel %vm764, %v1561, 0
        %v1596 = vsel %vm764, %v1563, 0
        %v1599 = vsel %vm764, %v1565, 0
        %v1602 = vsel %vm764, %v1567, 0
        %v1605 = vsel %vm764, %v1569, 0
        %v1608 = vsel %vm764, %v1571, 0
        %v1611 = vsel %vm764, %v1573, 0
        %v1614 = vsel %vm764, %v1575, 0
        %v1617 = vsel %vm764, %v1577, 0
        %v1620 = vsel %vm764, %v1579, 0
        %v1623 = vsel %vm764, %v1581, 0
        %v1626 = vsel %vm764, %v1583, 0
        %v1629 = vsel %vm764, %v1585, 0
        %v1632 = vsel %vm764, %v1587, 0
        %v1635 = vsel %vm764, %v1589, 0
        %v1638 = vsel %vm764, %v1591, 0
        %1640 = vmatprep.subr.bf16.mxu0 0
        %1641 = vmatpush1.bf16.xpose.msra.mxu0 %v1638
        %1642 = vmatprep.subr.bf16.mxu0 0
        %1643 = vmatpush1.bf16.xpose.msra.mxu0 %v1635
        %1644 = vmatprep.subr.bf16.mxu0 0
        %1645 = vmatpush1.bf16.xpose.msra.mxu0 %v1632
        %1646 = vmatprep.subr.bf16.mxu0 0
        %1647 = vmatpush1.bf16.xpose.msra.mxu0 %v1629
        %1648 = vmatprep.subr.bf16.mxu0 0
        %1649 = vmatpush1.bf16.xpose.msra.mxu0 %v1626
        %1650 = vmatprep.subr.bf16.mxu0 0
        %1651 = vmatpush1.bf16.xpose.msra.mxu0 %v1623
        %1652 = vmatprep.subr.bf16.mxu0 0
        %1653 = vmatpush1.bf16.xpose.msra.mxu0 %v1620
        %1654 = vmatprep.subr.bf16.mxu0 0
        %1655 = vmatpush1.bf16.xpose.msra.mxu0 %v1617
        %1656 = vmatprep.subr.bf16.mxu0 0
        %1657 = vmatpush2.bf16.xpose.msra.mxu0 0
        %1658 = vmatprep.subr.bf16.mxu0 0
        %1659 = vmatpush2.bf16.xpose.msra.mxu0 0
        %1660 = vmatprep.subr.bf16.mxu0 0
        %1661 = vmatpush2.bf16.xpose.msra.mxu0 0
        %1662 = vmatprep.subr.bf16.mxu0 0
        %1663 = vmatpush2.bf16.xpose.msra.mxu0 0
        %1664 = vmatprep.subr.bf16.mxu0 0
        %1665 = vmatpush2.bf16.xpose.msra.mxu0 0
        %1666 = vmatprep.subr.bf16.mxu0 0
        %1667 = vmatpush2.bf16.xpose.msra.mxu0 0
        %1668 = vmatprep.subr.bf16.mxu0 0
        %1669 = vmatpush2.bf16.xpose.msra.mxu0 0
        %1670 = vmatprep.subr.bf16.mxu0 0
        %1671 = vmatpush2.bf16.xpose.msra.mxu0 0
        %1672 = vmatprep.mubr.bf16.mxu0 0
        %1673 = vmatmul.mubr.bf16.gmra.mxu0 %v1593
        %v1674 = vpop.f32.mrf.mxu0
        %v1675 = vadd.f32 %v668, %v1674
        %v1676 = vpop.f32.mrf.mxu0
        %v1677 = vpop.f32.mrf.mxu0
        %v1678 = vadd.f32 %v669, %v1677
        %v1679 = vpop.f32.mrf.mxu0
        %1680 = vmatprep.mubr.bf16.mxu0 0
        %1681 = vmatmul.mubr.bf16.gmra.mxu0 %v1596
        %v1682 = vpop.f32.mrf.mxu0
        %v1683 = vadd.f32 %v670, %v1682
        %v1684 = vpop.f32.mrf.mxu0
        %v1685 = vpop.f32.mrf.mxu0
        %v1686 = vadd.f32 %v671, %v1685
        %v1687 = vpop.f32.mrf.mxu0
        %1688 = vmatprep.mubr.bf16.mxu0 0
        %1689 = vmatmul.mubr.bf16.gmra.mxu0 %v1599
        %v1690 = vpop.f32.mrf.mxu0
        %v1691 = vadd.f32 %v672, %v1690
        %v1692 = vpop.f32.mrf.mxu0
        %v1693 = vpop.f32.mrf.mxu0
        %v1694 = vadd.f32 %v673, %v1693
        %v1695 = vpop.f32.mrf.mxu0
        %1696 = vmatprep.mubr.bf16.mxu0 0
        %1697 = vmatmul.mubr.bf16.gmra.mxu0 %v1602
        %v1698 = vpop.f32.mrf.mxu0
        %v1699 = vadd.f32 %v674, %v1698
        %v1700 = vpop.f32.mrf.mxu0
        %v1701 = vpop.f32.mrf.mxu0
        %v1702 = vadd.f32 %v675, %v1701
        %v1703 = vpop.f32.mrf.mxu0
        %1704 = vmatprep.mubr.bf16.mxu0 0
        %1705 = vmatmul.mubr.bf16.gmra.mxu0 %v1605
        %v1706 = vpop.f32.mrf.mxu0
        %v1707 = vadd.f32 %v676, %v1706
        %v1708 = vpop.f32.mrf.mxu0
        %v1709 = vpop.f32.mrf.mxu0
        %v1710 = vadd.f32 %v677, %v1709
        %v1711 = vpop.f32.mrf.mxu0
        %1712 = vmatprep.mubr.bf16.mxu0 0
        %1713 = vmatmul.mubr.bf16.gmra.mxu0 %v1608
        %v1714 = vpop.f32.mrf.mxu0
        %v1715 = vadd.f32 %v678, %v1714
        %v1716 = vpop.f32.mrf.mxu0
        %v1717 = vpop.f32.mrf.mxu0
        %v1718 = vadd.f32 %v679, %v1717
        %v1719 = vpop.f32.mrf.mxu0
        %1720 = vmatprep.mubr.bf16.mxu0 0
        %1721 = vmatmul.mubr.bf16.gmra.mxu0 %v1611
        %v1722 = vpop.f32.mrf.mxu0
        %v1723 = vadd.f32 %v680, %v1722
        %v1724 = vpop.f32.mrf.mxu0
        %v1725 = vpop.f32.mrf.mxu0
        %v1726 = vadd.f32 %v681, %v1725
        %v1727 = vpop.f32.mrf.mxu0
        %1728 = vmatprep.mubr.bf16.mxu0 0
        %1729 = vmatmul.mubr.bf16.gmra.mxu0 %v1614
        %v1730 = vpop.f32.mrf.mxu0
        %v1731 = vadd.f32 %v682, %v1730
        %v1732 = vpop.f32.mrf.mxu0
        %v1733 = vpop.f32.mrf.mxu0
        %v1734 = vadd.f32 %v683, %v1733
        %v1735 = vpop.f32.mrf.mxu0
        %1736 = vdwg.mxu0
        %s1737 = scalar_lea.vmem [#allocation2], 128
        %v1738 = vld [vmem:[%s1737] sm:$0xff]
        %v1739 = vld [vmem:[%s1737 + $0x8] sm:$0xff]
        %v1740 = vld [vmem:[%s1737 + $0x10] sm:$0xff]
        %v1741 = vld [vmem:[%s1737 + $0x18] sm:$0xff]
        %v1742 = vld [vmem:[%s1737 + $0x20] sm:$0xff]
        %v1743 = vld [vmem:[%s1737 + $0x28] sm:$0xff]
        %v1744 = vld [vmem:[%s1737 + $0x30] sm:$0xff]
        %v1745 = vld [vmem:[%s1737 + $0x38] sm:$0xff]
        %v1746 = vld [vmem:[%s1737 + $0x40] sm:$0xff]
        %v1747 = vld [vmem:[%s1737 + $0x48] sm:$0xff]
        %v1748 = vld [vmem:[%s1737 + $0x50] sm:$0xff]
        %v1749 = vld [vmem:[%s1737 + $0x58] sm:$0xff]
        %v1750 = vld [vmem:[%s1737 + $0x60] sm:$0xff]
        %v1751 = vld [vmem:[%s1737 + $0x68] sm:$0xff]
        %v1752 = vld [vmem:[%s1737 + $0x70] sm:$0xff]
        %v1753 = vld [vmem:[%s1737 + $0x78] sm:$0xff]
        %1754 = vmax.xlane.f32.xlu0 %v1675
        %v1755 = vpop.xlane.xlu0 %1754
        %1756 = vmax.xlane.f32.xlu0 %v1678
        %v1757 = vpop.xlane.xlu0 %1756
        %1758 = vmax.xlane.f32.xlu0 %v1683
        %v1759 = vpop.xlane.xlu0 %1758
        %1760 = vmax.xlane.f32.xlu0 %v1686
        %v1761 = vpop.xlane.xlu0 %1760
        %1762 = vmax.xlane.f32.xlu0 %v1691
        %v1763 = vpop.xlane.xlu0 %1762
        %1764 = vmax.xlane.f32.xlu0 %v1694
        %v1765 = vpop.xlane.xlu0 %1764
        %1766 = vmax.xlane.f32.xlu0 %v1699
        %v1767 = vpop.xlane.xlu0 %1766
        %1768 = vmax.xlane.f32.xlu0 %v1702
        %v1769 = vpop.xlane.xlu0 %1768
        %1770 = vmax.xlane.f32.xlu0 %v1707
        %v1771 = vpop.xlane.xlu0 %1770
        %1772 = vmax.xlane.f32.xlu0 %v1710
        %v1773 = vpop.xlane.xlu0 %1772
        %1774 = vmax.xlane.f32.xlu0 %v1715
        %v1775 = vpop.xlane.xlu0 %1774
        %1776 = vmax.xlane.f32.xlu0 %v1718
        %v1777 = vpop.xlane.xlu0 %1776
        %1778 = vmax.xlane.f32.xlu0 %v1723
        %v1779 = vpop.xlane.xlu0 %1778
        %1780 = vmax.xlane.f32.xlu0 %v1726
        %v1781 = vpop.xlane.xlu0 %1780
        %1782 = vmax.xlane.f32.xlu0 %v1731
        %v1783 = vpop.xlane.xlu0 %1782
        %1784 = vmax.xlane.f32.xlu0 %v1734
        %v1785 = vpop.xlane.xlu0 %1784
        %v1786 = vmax.f32 %v1738, %v1755
        %v1787 = vmax.f32 %v1739, %v1757
        %v1788 = vmax.f32 %v1740, %v1759
        %v1789 = vmax.f32 %v1741, %v1761
        %v1790 = vmax.f32 %v1742, %v1763
        %v1791 = vmax.f32 %v1743, %v1765
        %v1792 = vmax.f32 %v1744, %v1767
        %v1793 = vmax.f32 %v1745, %v1769
        %v1794 = vmax.f32 %v1746, %v1771
        %v1795 = vmax.f32 %v1747, %v1773
        %v1796 = vmax.f32 %v1748, %v1775
        %v1797 = vmax.f32 %v1749, %v1777
        %v1798 = vmax.f32 %v1750, %v1779
        %v1799 = vmax.f32 %v1751, %v1781
        %v1800 = vmax.f32 %v1752, %v1783
        %v1801 = vmax.f32 %v1753, %v1785
        %v1802 = vsub.f32 %v1738, %v1786
        %v1803 = vsub.f32 %v1739, %v1787
        %v1804 = vsub.f32 %v1740, %v1788
        %v1805 = vsub.f32 %v1741, %v1789
        %v1806 = vsub.f32 %v1742, %v1790
        %v1807 = vsub.f32 %v1743, %v1791
        %v1808 = vsub.f32 %v1744, %v1792
        %v1809 = vsub.f32 %v1745, %v1793
        %v1810 = vsub.f32 %v1746, %v1794
        %v1811 = vsub.f32 %v1747, %v1795
        %v1812 = vsub.f32 %v1748, %v1796
        %v1813 = vsub.f32 %v1749, %v1797
        %v1814 = vsub.f32 %v1750, %v1798
        %v1815 = vsub.f32 %v1751, %v1799
        %v1816 = vsub.f32 %v1752, %v1800
        %v1817 = vsub.f32 %v1753, %v1801
        %v1818 = vmul.f32 %v1802, 1.442695
        %v1819 = vpow.pop %v1818
        %v1820 = vmul.f32 %v1803, 1.442695
        %v1821 = vpow.pop %v1820
        %v1822 = vmul.f32 %v1804, 1.442695
        %v1823 = vpow.pop %v1822
        %v1824 = vmul.f32 %v1805, 1.442695
        %v1825 = vpow.pop %v1824
        %v1826 = vmul.f32 %v1806, 1.442695
        %v1827 = vpow.pop %v1826
        %v1828 = vmul.f32 %v1807, 1.442695
        %v1829 = vpow.pop %v1828
        %v1830 = vmul.f32 %v1808, 1.442695
        %v1831 = vpow.pop %v1830
        %v1832 = vmul.f32 %v1809, 1.442695
        %v1833 = vpow.pop %v1832
        %v1834 = vmul.f32 %v1810, 1.442695
        %v1835 = vpow.pop %v1834
        %v1836 = vmul.f32 %v1811, 1.442695
        %v1837 = vpow.pop %v1836
        %v1838 = vmul.f32 %v1812, 1.442695
        %v1839 = vpow.pop %v1838
        %v1840 = vmul.f32 %v1813, 1.442695
        %v1841 = vpow.pop %v1840
        %v1842 = vmul.f32 %v1814, 1.442695
        %v1843 = vpow.pop %v1842
        %v1844 = vmul.f32 %v1815, 1.442695
        %v1845 = vpow.pop %v1844
        %v1846 = vmul.f32 %v1816, 1.442695
        %v1847 = vpow.pop %v1846
        %v1848 = vmul.f32 %v1817, 1.442695
        %v1849 = vpow.pop %v1848
        %1851 = vset.pattern.permute.xlu0 0
        %1852 = vperm.xlu0 %1851, %v1786
        %v1853 = vpop.permute.xlu0 %1852
        %1856 = vset.pattern.permute.xlu0 0
        %1857 = vperm.xlu0 %1856, %v1787
        %v1858 = vpop.permute.xlu0 %1857
        %1861 = vset.pattern.permute.xlu0 0
        %1862 = vperm.xlu0 %1861, %v1788
        %v1863 = vpop.permute.xlu0 %1862
        %1866 = vset.pattern.permute.xlu0 0
        %1867 = vperm.xlu0 %1866, %v1789
        %v1868 = vpop.permute.xlu0 %1867
        %1871 = vset.pattern.permute.xlu0 0
        %1872 = vperm.xlu0 %1871, %v1790
        %v1873 = vpop.permute.xlu0 %1872
        %1876 = vset.pattern.permute.xlu0 0
        %1877 = vperm.xlu0 %1876, %v1791
        %v1878 = vpop.permute.xlu0 %1877
        %1881 = vset.pattern.permute.xlu0 0
        %1882 = vperm.xlu0 %1881, %v1792
        %v1883 = vpop.permute.xlu0 %1882
        %1886 = vset.pattern.permute.xlu0 0
        %1887 = vperm.xlu0 %1886, %v1793
        %v1888 = vpop.permute.xlu0 %1887
        %1891 = vset.pattern.permute.xlu0 0
        %1892 = vperm.xlu0 %1891, %v1794
        %v1893 = vpop.permute.xlu0 %1892
        %1896 = vset.pattern.permute.xlu0 0
        %1897 = vperm.xlu0 %1896, %v1795
        %v1898 = vpop.permute.xlu0 %1897
        %1901 = vset.pattern.permute.xlu0 0
        %1902 = vperm.xlu0 %1901, %v1796
        %v1903 = vpop.permute.xlu0 %1902
        %1906 = vset.pattern.permute.xlu0 0
        %1907 = vperm.xlu0 %1906, %v1797
        %v1908 = vpop.permute.xlu0 %1907
        %1911 = vset.pattern.permute.xlu0 0
        %1912 = vperm.xlu0 %1911, %v1798
        %v1913 = vpop.permute.xlu0 %1912
        %1916 = vset.pattern.permute.xlu0 0
        %1917 = vperm.xlu0 %1916, %v1799
        %v1918 = vpop.permute.xlu0 %1917
        %1921 = vset.pattern.permute.xlu0 0
        %1922 = vperm.xlu0 %1921, %v1800
        %v1923 = vpop.permute.xlu0 %1922
        %1926 = vset.pattern.permute.xlu0 0
        %1927 = vperm.xlu0 %1926, %v1801
        %v1928 = vpop.permute.xlu0 %1927
        %v1930 = vsub.f32 %v1675, %v1853
        %v1931 = vsub.f32 %v1678, %v1858
        %v1932 = vsub.f32 %v1683, %v1863
        %v1933 = vsub.f32 %v1686, %v1868
        %v1934 = vsub.f32 %v1691, %v1873
        %v1935 = vsub.f32 %v1694, %v1878
        %v1936 = vsub.f32 %v1699, %v1883
        %v1937 = vsub.f32 %v1702, %v1888
        %v1938 = vsub.f32 %v1707, %v1893
        %v1939 = vsub.f32 %v1710, %v1898
        %v1940 = vsub.f32 %v1715, %v1903
        %v1941 = vsub.f32 %v1718, %v1908
        %v1942 = vsub.f32 %v1723, %v1913
        %v1943 = vsub.f32 %v1726, %v1918
        %v1944 = vsub.f32 %v1731, %v1923
        %v1945 = vsub.f32 %v1734, %v1928
        %v1946 = vmul.f32 %v1930, 1.442695
        %v1947 = vpow.pop %v1946
        %v1948 = vmul.f32 %v1931, 1.442695
        %v1949 = vpow.pop %v1948
        %v1950 = vmul.f32 %v1932, 1.442695
        %v1951 = vpow.pop %v1950
        %v1952 = vmul.f32 %v1933, 1.442695
        %v1953 = vpow.pop %v1952
        %v1954 = vmul.f32 %v1934, 1.442695
        %v1955 = vpow.pop %v1954
        %v1956 = vmul.f32 %v1935, 1.442695
        %v1957 = vpow.pop %v1956
        %v1958 = vmul.f32 %v1936, 1.442695
        %v1959 = vpow.pop %v1958
        %v1960 = vmul.f32 %v1937, 1.442695
        %v1961 = vpow.pop %v1960
        %v1962 = vmul.f32 %v1938, 1.442695
        %v1963 = vpow.pop %v1962
        %v1964 = vmul.f32 %v1939, 1.442695
        %v1965 = vpow.pop %v1964
        %v1966 = vmul.f32 %v1940, 1.442695
        %v1967 = vpow.pop %v1966
        %v1968 = vmul.f32 %v1941, 1.442695
        %v1969 = vpow.pop %v1968
        %v1970 = vmul.f32 %v1942, 1.442695
        %v1971 = vpow.pop %v1970
        %v1972 = vmul.f32 %v1943, 1.442695
        %v1973 = vpow.pop %v1972
        %v1974 = vmul.f32 %v1944, 1.442695
        %v1975 = vpow.pop %v1974
        %v1976 = vmul.f32 %v1945, 1.442695
        %v1977 = vpow.pop %v1976
        %s1978 = scalar_lea.vmem [#allocation3], 128
        %v1979 = vld [vmem:[%s1978] sm:$0xff]
        %v1980 = vld [vmem:[%s1978 + $0x8] sm:$0xff]
        %v1981 = vld [vmem:[%s1978 + $0x10] sm:$0xff]
        %v1982 = vld [vmem:[%s1978 + $0x18] sm:$0xff]
        %v1983 = vld [vmem:[%s1978 + $0x20] sm:$0xff]
        %v1984 = vld [vmem:[%s1978 + $0x28] sm:$0xff]
        %v1985 = vld [vmem:[%s1978 + $0x30] sm:$0xff]
        %v1986 = vld [vmem:[%s1978 + $0x38] sm:$0xff]
        %v1987 = vld [vmem:[%s1978 + $0x40] sm:$0xff]
        %v1988 = vld [vmem:[%s1978 + $0x48] sm:$0xff]
        %v1989 = vld [vmem:[%s1978 + $0x50] sm:$0xff]
        %v1990 = vld [vmem:[%s1978 + $0x58] sm:$0xff]
        %v1991 = vld [vmem:[%s1978 + $0x60] sm:$0xff]
        %v1992 = vld [vmem:[%s1978 + $0x68] sm:$0xff]
        %v1993 = vld [vmem:[%s1978 + $0x70] sm:$0xff]
        %v1994 = vld [vmem:[%s1978 + $0x78] sm:$0xff]
        %v1995 = vmul.f32 %v1819, %v1979
        %v1996 = vmul.f32 %v1821, %v1980
        %v1997 = vmul.f32 %v1823, %v1981
        %v1998 = vmul.f32 %v1825, %v1982
        %v1999 = vmul.f32 %v1827, %v1983
        %v2000 = vmul.f32 %v1829, %v1984
        %v2001 = vmul.f32 %v1831, %v1985
        %v2002 = vmul.f32 %v1833, %v1986
        %v2003 = vmul.f32 %v1835, %v1987
        %v2004 = vmul.f32 %v1837, %v1988
        %v2005 = vmul.f32 %v1839, %v1989
        %v2006 = vmul.f32 %v1841, %v1990
        %v2007 = vmul.f32 %v1843, %v1991
        %v2008 = vmul.f32 %v1845, %v1992
        %v2009 = vmul.f32 %v1847, %v1993
        %v2010 = vmul.f32 %v1849, %v1994
        %2011 = vadd.xlane.f32.xlu0 %v1947
        %v2012 = vpop.xlane.xlu0 %2011
        %2013 = vadd.xlane.f32.xlu0 %v1949
        %v2014 = vpop.xlane.xlu0 %2013
        %2015 = vadd.xlane.f32.xlu0 %v1951
        %v2016 = vpop.xlane.xlu0 %2015
        %2017 = vadd.xlane.f32.xlu0 %v1953
        %v2018 = vpop.xlane.xlu0 %2017
        %2019 = vadd.xlane.f32.xlu0 %v1955
        %v2020 = vpop.xlane.xlu0 %2019
        %2021 = vadd.xlane.f32.xlu0 %v1957
        %v2022 = vpop.xlane.xlu0 %2021
        %2023 = vadd.xlane.f32.xlu0 %v1959
        %v2024 = vpop.xlane.xlu0 %2023
        %2025 = vadd.xlane.f32.xlu0 %v1961
        %v2026 = vpop.xlane.xlu0 %2025
        %2027 = vadd.xlane.f32.xlu0 %v1963
        %v2028 = vpop.xlane.xlu0 %2027
        %2029 = vadd.xlane.f32.xlu0 %v1965
        %v2030 = vpop.xlane.xlu0 %2029
        %2031 = vadd.xlane.f32.xlu0 %v1967
        %v2032 = vpop.xlane.xlu0 %2031
        %2033 = vadd.xlane.f32.xlu0 %v1969
        %v2034 = vpop.xlane.xlu0 %2033
        %2035 = vadd.xlane.f32.xlu0 %v1971
        %v2036 = vpop.xlane.xlu0 %2035
        %2037 = vadd.xlane.f32.xlu0 %v1973
        %v2038 = vpop.xlane.xlu0 %2037
        %2039 = vadd.xlane.f32.xlu0 %v1975
        %v2040 = vpop.xlane.xlu0 %2039
        %2041 = vadd.xlane.f32.xlu0 %v1977
        %v2042 = vpop.xlane.xlu0 %2041
        %v2043 = vadd.f32 %v1995, %v2012
        %v2044 = vadd.f32 %v1996, %v2014
        %v2045 = vadd.f32 %v1997, %v2016
        %v2046 = vadd.f32 %v1998, %v2018
        %v2047 = vadd.f32 %v1999, %v2020
        %v2048 = vadd.f32 %v2000, %v2022
        %v2049 = vadd.f32 %v2001, %v2024
        %v2050 = vadd.f32 %v2002, %v2026
        %v2051 = vadd.f32 %v2003, %v2028
        %v2052 = vadd.f32 %v2004, %v2030
        %v2053 = vadd.f32 %v2005, %v2032
        %v2054 = vadd.f32 %v2006, %v2034
        %v2055 = vadd.f32 %v2007, %v2036
        %v2056 = vadd.f32 %v2008, %v2038
        %v2057 = vadd.f32 %v2009, %v2040
        %v2058 = vadd.f32 %v2010, %v2042
        %2059 = vst.msk [vmem:[%s1978] sm:$0xff] %vm1230, %v2043
        %2060 = vst.msk [vmem:[%s1978 + $0x8] sm:$0xff] %vm1230, %v2044
        %2061 = vst.msk [vmem:[%s1978 + $0x10] sm:$0xff] %vm1230, %v2045
        %2062 = vst.msk [vmem:[%s1978 + $0x18] sm:$0xff] %vm1230, %v2046
        %2063 = vst.msk [vmem:[%s1978 + $0x20] sm:$0xff] %vm1230, %v2047
        %2064 = vst.msk [vmem:[%s1978 + $0x28] sm:$0xff] %vm1230, %v2048
        %2065 = vst.msk [vmem:[%s1978 + $0x30] sm:$0xff] %vm1230, %v2049
        %2066 = vst.msk [vmem:[%s1978 + $0x38] sm:$0xff] %vm1230, %v2050
        %2067 = vst.msk [vmem:[%s1978 + $0x40] sm:$0xff] %vm1230, %v2051
        %2068 = vst.msk [vmem:[%s1978 + $0x48] sm:$0xff] %vm1230, %v2052
        %2069 = vst.msk [vmem:[%s1978 + $0x50] sm:$0xff] %vm1230, %v2053
        %2070 = vst.msk [vmem:[%s1978 + $0x58] sm:$0xff] %vm1230, %v2054
        %2071 = vst.msk [vmem:[%s1978 + $0x60] sm:$0xff] %vm1230, %v2055
        %2072 = vst.msk [vmem:[%s1978 + $0x68] sm:$0xff] %vm1230, %v2056
        %2073 = vst.msk [vmem:[%s1978 + $0x70] sm:$0xff] %vm1230, %v2057
        %2074 = vst.msk [vmem:[%s1978 + $0x78] sm:$0xff] %vm1230, %v2058
        %s2075 = scalar_lea.vmem [#allocation4], 128
        %v2076 = vld [vmem:[%s2075] sm:$0xff]
        %v2077 = vld [vmem:[%s2075 + $0x8] sm:$0xff]
        %v2078 = vld [vmem:[%s2075 + $0x10] sm:$0xff]
        %v2079 = vld [vmem:[%s2075 + $0x18] sm:$0xff]
        %v2080 = vld [vmem:[%s2075 + $0x20] sm:$0xff]
        %v2081 = vld [vmem:[%s2075 + $0x28] sm:$0xff]
        %v2082 = vld [vmem:[%s2075 + $0x30] sm:$0xff]
        %v2083 = vld [vmem:[%s2075 + $0x38] sm:$0xff]
        %v2084 = vld [vmem:[%s2075 + $0x40] sm:$0xff]
        %v2085 = vld [vmem:[%s2075 + $0x48] sm:$0xff]
        %v2086 = vld [vmem:[%s2075 + $0x50] sm:$0xff]
        %v2087 = vld [vmem:[%s2075 + $0x58] sm:$0xff]
        %v2088 = vld [vmem:[%s2075 + $0x60] sm:$0xff]
        %v2089 = vld [vmem:[%s2075 + $0x68] sm:$0xff]
        %v2090 = vld [vmem:[%s2075 + $0x70] sm:$0xff]
        %v2091 = vld [vmem:[%s2075 + $0x78] sm:$0xff]
        %2093 = vset.pattern.permute.xlu0 0
        %2094 = vperm.xlu0 %2093, %v1819
        %v2095 = vpop.permute.xlu0 %2094
        %2098 = vset.pattern.permute.xlu0 0
        %2099 = vperm.xlu0 %2098, %v1821
        %v2100 = vpop.permute.xlu0 %2099
        %2103 = vset.pattern.permute.xlu0 0
        %2104 = vperm.xlu0 %2103, %v1823
        %v2105 = vpop.permute.xlu0 %2104
        %2108 = vset.pattern.permute.xlu0 0
        %2109 = vperm.xlu0 %2108, %v1825
        %v2110 = vpop.permute.xlu0 %2109
        %2113 = vset.pattern.permute.xlu0 0
        %2114 = vperm.xlu0 %2113, %v1827
        %v2115 = vpop.permute.xlu0 %2114
        %2118 = vset.pattern.permute.xlu0 0
        %2119 = vperm.xlu0 %2118, %v1829
        %v2120 = vpop.permute.xlu0 %2119
        %2123 = vset.pattern.permute.xlu0 0
        %2124 = vperm.xlu0 %2123, %v1831
        %v2125 = vpop.permute.xlu0 %2124
        %2128 = vset.pattern.permute.xlu0 0
        %2129 = vperm.xlu0 %2128, %v1833
        %v2130 = vpop.permute.xlu0 %2129
        %2133 = vset.pattern.permute.xlu0 0
        %2134 = vperm.xlu0 %2133, %v1835
        %v2135 = vpop.permute.xlu0 %2134
        %2138 = vset.pattern.permute.xlu0 0
        %2139 = vperm.xlu0 %2138, %v1837
        %v2140 = vpop.permute.xlu0 %2139
        %2143 = vset.pattern.permute.xlu0 0
        %2144 = vperm.xlu0 %2143, %v1839
        %v2145 = vpop.permute.xlu0 %2144
        %2148 = vset.pattern.permute.xlu0 0
        %2149 = vperm.xlu0 %2148, %v1841
        %v2150 = vpop.permute.xlu0 %2149
        %2153 = vset.pattern.permute.xlu0 0
        %2154 = vperm.xlu0 %2153, %v1843
        %v2155 = vpop.permute.xlu0 %2154
        %2158 = vset.pattern.permute.xlu0 0
        %2159 = vperm.xlu0 %2158, %v1845
        %v2160 = vpop.permute.xlu0 %2159
        %2163 = vset.pattern.permute.xlu0 0
        %2164 = vperm.xlu0 %2163, %v1847
        %v2165 = vpop.permute.xlu0 %2164
        %2168 = vset.pattern.permute.xlu0 0
        %2169 = vperm.xlu0 %2168, %v1849
        %v2170 = vpop.permute.xlu0 %2169
        %v2172 = vmul.f32 %v2095, %v2076
        %v2173 = vmul.f32 %v2100, %v2077
        %v2174 = vmul.f32 %v2105, %v2078
        %v2175 = vmul.f32 %v2110, %v2079
        %v2176 = vmul.f32 %v2115, %v2080
        %v2177 = vmul.f32 %v2120, %v2081
        %v2178 = vmul.f32 %v2125, %v2082
        %v2179 = vmul.f32 %v2130, %v2083
        %v2180 = vmul.f32 %v2135, %v2084
        %v2181 = vmul.f32 %v2140, %v2085
        %v2182 = vmul.f32 %v2145, %v2086
        %v2183 = vmul.f32 %v2150, %v2087
        %v2184 = vmul.f32 %v2155, %v2088
        %v2185 = vmul.f32 %v2160, %v2089
        %v2186 = vmul.f32 %v2165, %v2090
        %v2187 = vmul.f32 %v2170, %v2091
        %v2188 = vpack.c.bf16 %v1949, %v1947
        %v2189 = vpack.c.bf16 %v1953, %v1951
        %v2190 = vpack.c.bf16 %v1957, %v1955
        %v2191 = vpack.c.bf16 %v1961, %v1959
        %v2192 = vpack.c.bf16 %v1965, %v1963
        %v2193 = vpack.c.bf16 %v1969, %v1967
        %v2194 = vpack.c.bf16 %v1973, %v1971
        %v2195 = vpack.c.bf16 %v1977, %v1975
        %2196 = vrot.lane.b32.xlu0 %v1399, 112
        %v2197 = vpop.permute.xlu0 %2196
        %2198 = vrot.lane.b32.xlu0 %v1400, 112
        %v2199 = vpop.permute.xlu0 %2198
        %2200 = vrot.lane.b32.xlu0 %v1401, 112
        %v2201 = vpop.permute.xlu0 %2200
        %2202 = vrot.lane.b32.xlu0 %v1402, 112
        %v2203 = vpop.permute.xlu0 %2202
        %2204 = vrot.lane.b32.xlu0 %v1403, 112
        %v2205 = vpop.permute.xlu0 %2204
        %2206 = vrot.lane.b32.xlu0 %v1404, 112
        %v2207 = vpop.permute.xlu0 %2206
        %2208 = vrot.lane.b32.xlu0 %v1405, 112
        %v2209 = vpop.permute.xlu0 %2208
        %2210 = vrot.lane.b32.xlu0 %v1406, 112
        %v2211 = vpop.permute.xlu0 %2210
        %2220 = vmatprep.subr.bf16.mxu0 0
        %2221 = vmatpush1.bf16.msra.mxu0 %v2211
        %2222 = vmatprep.subr.bf16.mxu0 0
        %2223 = vmatpush1.bf16.msra.mxu0 %v2209
        %2224 = vmatprep.subr.bf16.mxu0 0
        %2225 = vmatpush1.bf16.msra.mxu0 %v2207
        %2226 = vmatprep.subr.bf16.mxu0 0
        %2227 = vmatpush1.bf16.msra.mxu0 %v2205
        %2228 = vmatprep.subr.bf16.mxu0 0
        %2229 = vmatpush1.bf16.msra.mxu0 %v2203
        %2230 = vmatprep.subr.bf16.mxu0 0
        %2231 = vmatpush1.bf16.msra.mxu0 %v2201
        %2232 = vmatprep.subr.bf16.mxu0 0
        %2233 = vmatpush1.bf16.msra.mxu0 %v2199
        %2234 = vmatprep.subr.bf16.mxu0 0
        %2235 = vmatpush1.bf16.msra.mxu0 %v2197
        %2236 = vmatprep.subr.bf16.mxu0 0
        %2237 = vmatpush2.bf16.msra.mxu0 0
        %2238 = vmatprep.subr.bf16.mxu0 0
        %2239 = vmatpush2.bf16.msra.mxu0 0
        %2240 = vmatprep.subr.bf16.mxu0 0
        %2241 = vmatpush2.bf16.msra.mxu0 0
        %2242 = vmatprep.subr.bf16.mxu0 0
        %2243 = vmatpush2.bf16.msra.mxu0 0
        %2244 = vmatprep.subr.bf16.mxu0 0
        %2245 = vmatpush2.bf16.msra.mxu0 0
        %2246 = vmatprep.subr.bf16.mxu0 0
        %2247 = vmatpush2.bf16.msra.mxu0 0
        %2248 = vmatprep.subr.bf16.mxu0 0
        %2249 = vmatpush2.bf16.msra.mxu0 0
        %2250 = vmatprep.subr.bf16.mxu0 0
        %2251 = vmatpush2.bf16.msra.mxu0 0
        %2252 = vmatprep.mubr.bf16.mxu0 0
        %2253 = vmatmul.mubr.bf16.gmra.mxu0 %v2188
        %v2254 = vpop.f32.mrf.mxu0
        %v2255 = vadd.f32 0.0, %v2254
        %v2256 = vpop.f32.mrf.mxu0
        %v2257 = vpop.f32.mrf.mxu0
        %v2258 = vadd.f32 0.0, %v2257
        %v2259 = vpop.f32.mrf.mxu0
        %2260 = vmatprep.mubr.bf16.mxu0 0
        %2261 = vmatmul.mubr.bf16.gmra.mxu0 %v2189
        %v2262 = vpop.f32.mrf.mxu0
        %v2263 = vadd.f32 0.0, %v2262
        %v2264 = vpop.f32.mrf.mxu0
        %v2265 = vpop.f32.mrf.mxu0
        %v2266 = vadd.f32 0.0, %v2265
        %v2267 = vpop.f32.mrf.mxu0
        %2268 = vmatprep.mubr.bf16.mxu0 0
        %2269 = vmatmul.mubr.bf16.gmra.mxu0 %v2190
        %v2270 = vpop.f32.mrf.mxu0
        %v2271 = vadd.f32 0.0, %v2270
        %v2272 = vpop.f32.mrf.mxu0
        %v2273 = vpop.f32.mrf.mxu0
        %v2274 = vadd.f32 0.0, %v2273
        %v2275 = vpop.f32.mrf.mxu0
        %2276 = vmatprep.mubr.bf16.mxu0 0
        %2277 = vmatmul.mubr.bf16.gmra.mxu0 %v2191
        %v2278 = vpop.f32.mrf.mxu0
        %v2279 = vadd.f32 0.0, %v2278
        %v2280 = vpop.f32.mrf.mxu0
        %v2281 = vpop.f32.mrf.mxu0
        %v2282 = vadd.f32 0.0, %v2281
        %v2283 = vpop.f32.mrf.mxu0
        %2284 = vmatprep.mubr.bf16.mxu0 0
        %2285 = vmatmul.mubr.bf16.gmra.mxu0 %v2192
        %v2286 = vpop.f32.mrf.mxu0
        %v2287 = vadd.f32 0.0, %v2286
        %v2288 = vpop.f32.mrf.mxu0
        %v2289 = vpop.f32.mrf.mxu0
        %v2290 = vadd.f32 0.0, %v2289
        %v2291 = vpop.f32.mrf.mxu0
        %2292 = vmatprep.mubr.bf16.mxu0 0
        %2293 = vmatmul.mubr.bf16.gmra.mxu0 %v2193
        %v2294 = vpop.f32.mrf.mxu0
        %v2295 = vadd.f32 0.0, %v2294
        %v2296 = vpop.f32.mrf.mxu0
        %v2297 = vpop.f32.mrf.mxu0
        %v2298 = vadd.f32 0.0, %v2297
        %v2299 = vpop.f32.mrf.mxu0
        %2300 = vmatprep.mubr.bf16.mxu0 0
        %2301 = vmatmul.mubr.bf16.gmra.mxu0 %v2194
        %v2302 = vpop.f32.mrf.mxu0
        %v2303 = vadd.f32 0.0, %v2302
        %v2304 = vpop.f32.mrf.mxu0
        %v2305 = vpop.f32.mrf.mxu0
        %v2306 = vadd.f32 0.0, %v2305
        %v2307 = vpop.f32.mrf.mxu0
        %2308 = vmatprep.mubr.bf16.mxu0 0
        %2309 = vmatmul.mubr.bf16.gmra.mxu0 %v2195
        %v2310 = vpop.f32.mrf.mxu0
        %v2311 = vadd.f32 0.0, %v2310
        %v2312 = vpop.f32.mrf.mxu0
        %v2313 = vpop.f32.mrf.mxu0
        %v2314 = vadd.f32 0.0, %v2313
        %v2315 = vpop.f32.mrf.mxu0
        %2316 = vdwg.mxu0
        %v2317 = vadd.f32 %v2172, %v2255
        %v2318 = vadd.f32 %v2173, %v2258
        %v2319 = vadd.f32 %v2174, %v2263
        %v2320 = vadd.f32 %v2175, %v2266
        %v2321 = vadd.f32 %v2176, %v2271
        %v2322 = vadd.f32 %v2177, %v2274
        %v2323 = vadd.f32 %v2178, %v2279
        %v2324 = vadd.f32 %v2179, %v2282
        %v2325 = vadd.f32 %v2180, %v2287
        %v2326 = vadd.f32 %v2181, %v2290
        %v2327 = vadd.f32 %v2182, %v2295
        %v2328 = vadd.f32 %v2183, %v2298
        %v2329 = vadd.f32 %v2184, %v2303
        %v2330 = vadd.f32 %v2185, %v2306
        %v2331 = vadd.f32 %v2186, %v2311
        %v2332 = vadd.f32 %v2187, %v2314
        %2333 = vst.msk [vmem:[%s2075] sm:$0xff] %vm764, %v2317
        %2334 = vst.msk [vmem:[%s2075 + $0x8] sm:$0xff] %vm764, %v2318
        %2335 = vst.msk [vmem:[%s2075 + $0x10] sm:$0xff] %vm764, %v2319
        %2336 = vst.msk [vmem:[%s2075 + $0x18] sm:$0xff] %vm764, %v2320
        %2337 = vst.msk [vmem:[%s2075 + $0x20] sm:$0xff] %vm764, %v2321
        %2338 = vst.msk [vmem:[%s2075 + $0x28] sm:$0xff] %vm764, %v2322
        %2339 = vst.msk [vmem:[%s2075 + $0x30] sm:$0xff] %vm764, %v2323
        %2340 = vst.msk [vmem:[%s2075 + $0x38] sm:$0xff] %vm764, %v2324
        %2341 = vst.msk [vmem:[%s2075 + $0x40] sm:$0xff] %vm764, %v2325
        %2342 = vst.msk [vmem:[%s2075 + $0x48] sm:$0xff] %vm764, %v2326
        %2343 = vst.msk [vmem:[%s2075 + $0x50] sm:$0xff] %vm764, %v2327
        %2344 = vst.msk [vmem:[%s2075 + $0x58] sm:$0xff] %vm764, %v2328
        %2345 = vst.msk [vmem:[%s2075 + $0x60] sm:$0xff] %vm764, %v2329
        %2346 = vst.msk [vmem:[%s2075 + $0x68] sm:$0xff] %vm764, %v2330
        %2347 = vst.msk [vmem:[%s2075 + $0x70] sm:$0xff] %vm764, %v2331
        %2348 = vst.msk [vmem:[%s2075 + $0x78] sm:$0xff] %vm764, %v2332
        %2349 = vst.msk [vmem:[%s1737] sm:$0xff] %vm1230, %v1786
        %2350 = vst.msk [vmem:[%s1737 + $0x8] sm:$0xff] %vm1230, %v1787
        %2351 = vst.msk [vmem:[%s1737 + $0x10] sm:$0xff] %vm1230, %v1788
        %2352 = vst.msk [vmem:[%s1737 + $0x18] sm:$0xff] %vm1230, %v1789
        %2353 = vst.msk [vmem:[%s1737 + $0x20] sm:$0xff] %vm1230, %v1790
        %2354 = vst.msk [vmem:[%s1737 + $0x28] sm:$0xff] %vm1230, %v1791
        %2355 = vst.msk [vmem:[%s1737 + $0x30] sm:$0xff] %vm1230, %v1792
        %2356 = vst.msk [vmem:[%s1737 + $0x38] sm:$0xff] %vm1230, %v1793
        %2357 = vst.msk [vmem:[%s1737 + $0x40] sm:$0xff] %vm1230, %v1794
        %2358 = vst.msk [vmem:[%s1737 + $0x48] sm:$0xff] %vm1230, %v1795
        %2359 = vst.msk [vmem:[%s1737 + $0x50] sm:$0xff] %vm1230, %v1796
        %2360 = vst.msk [vmem:[%s1737 + $0x58] sm:$0xff] %vm1230, %v1797
        %2361 = vst.msk [vmem:[%s1737 + $0x60] sm:$0xff] %vm1230, %v1798
        %2362 = vst.msk [vmem:[%s1737 + $0x68] sm:$0xff] %vm1230, %v1799
        %2363 = vst.msk [vmem:[%s1737 + $0x70] sm:$0xff] %vm1230, %v1800
        %2364 = vst.msk [vmem:[%s1737 + $0x78] sm:$0xff] %vm1230, %v1801
        %2365 = vrot.lane.b32.xlu0 %v716, 96
        %v2366 = vpop.permute.xlu0 %2365
        %2367 = vrot.lane.b32.xlu0 %v717, 96
        %v2368 = vpop.permute.xlu0 %2367
        %2369 = vrot.lane.b32.xlu0 %v718, 96
        %v2370 = vpop.permute.xlu0 %2369
        %2371 = vrot.lane.b32.xlu0 %v719, 96
        %v2372 = vpop.permute.xlu0 %2371
        %2373 = vrot.lane.b32.xlu0 %v720, 96
        %v2374 = vpop.permute.xlu0 %2373
        %2375 = vrot.lane.b32.xlu0 %v721, 96
        %v2376 = vpop.permute.xlu0 %2375
        %2377 = vrot.lane.b32.xlu0 %v722, 96
        %v2378 = vpop.permute.xlu0 %2377
        %2379 = vrot.lane.b32.xlu0 %v723, 96
        %v2380 = vpop.permute.xlu0 %2379
        %2381 = vrot.lane.b32.xlu0 %v756, 96
        %v2382 = vpop.permute.xlu0 %2381
        %2383 = vrot.lane.b32.xlu0 %v757, 96
        %v2384 = vpop.permute.xlu0 %2383
        %2385 = vrot.lane.b32.xlu0 %v758, 96
        %v2386 = vpop.permute.xlu0 %2385
        %2387 = vrot.lane.b32.xlu0 %v759, 96
        %v2388 = vpop.permute.xlu0 %2387
        %2389 = vrot.lane.b32.xlu0 %v760, 96
        %v2390 = vpop.permute.xlu0 %2389
        %2391 = vrot.lane.b32.xlu0 %v761, 96
        %v2392 = vpop.permute.xlu0 %2391
        %2393 = vrot.lane.b32.xlu0 %v762, 96
        %v2394 = vpop.permute.xlu0 %2393
        %2395 = vrot.lane.b32.xlu0 %v763, 96
        %v2396 = vpop.permute.xlu0 %2395
        %v2398 = vsel %vm764, %v2366, 0
        %v2401 = vsel %vm764, %v2368, 0
        %v2404 = vsel %vm764, %v2370, 0
        %v2407 = vsel %vm764, %v2372, 0
        %v2410 = vsel %vm764, %v2374, 0
        %v2413 = vsel %vm764, %v2376, 0
        %v2416 = vsel %vm764, %v2378, 0
        %v2419 = vsel %vm764, %v2380, 0
        %v2422 = vsel %vm764, %v2382, 0
        %v2425 = vsel %vm764, %v2384, 0
        %v2428 = vsel %vm764, %v2386, 0
        %v2431 = vsel %vm764, %v2388, 0
        %v2434 = vsel %vm764, %v2390, 0
        %v2437 = vsel %vm764, %v2392, 0
        %v2440 = vsel %vm764, %v2394, 0
        %v2443 = vsel %vm764, %v2396, 0
        %2445 = vmatprep.subr.bf16.mxu0 0
        %2446 = vmatpush1.bf16.xpose.msra.mxu0 %v2443
        %2447 = vmatprep.subr.bf16.mxu0 0
        %2448 = vmatpush1.bf16.xpose.msra.mxu0 %v2440
        %2449 = vmatprep.subr.bf16.mxu0 0
        %2450 = vmatpush1.bf16.xpose.msra.mxu0 %v2437
        %2451 = vmatprep.subr.bf16.mxu0 0
        %2452 = vmatpush1.bf16.xpose.msra.mxu0 %v2434
        %2453 = vmatprep.subr.bf16.mxu0 0
        %2454 = vmatpush1.bf16.xpose.msra.mxu0 %v2431
        %2455 = vmatprep.subr.bf16.mxu0 0
        %2456 = vmatpush1.bf16.xpose.msra.mxu0 %v2428
        %2457 = vmatprep.subr.bf16.mxu0 0
        %2458 = vmatpush1.bf16.xpose.msra.mxu0 %v2425
        %2459 = vmatprep.subr.bf16.mxu0 0
        %2460 = vmatpush1.bf16.xpose.msra.mxu0 %v2422
        %2461 = vmatprep.subr.bf16.mxu0 0
        %2462 = vmatpush2.bf16.xpose.msra.mxu0 0
        %2463 = vmatprep.subr.bf16.mxu0 0
        %2464 = vmatpush2.bf16.xpose.msra.mxu0 0
        %2465 = vmatprep.subr.bf16.mxu0 0
        %2466 = vmatpush2.bf16.xpose.msra.mxu0 0
        %2467 = vmatprep.subr.bf16.mxu0 0
        %2468 = vmatpush2.bf16.xpose.msra.mxu0 0
        %2469 = vmatprep.subr.bf16.mxu0 0
        %2470 = vmatpush2.bf16.xpose.msra.mxu0 0
        %2471 = vmatprep.subr.bf16.mxu0 0
        %2472 = vmatpush2.bf16.xpose.msra.mxu0 0
        %2473 = vmatprep.subr.bf16.mxu0 0
        %2474 = vmatpush2.bf16.xpose.msra.mxu0 0
        %2475 = vmatprep.subr.bf16.mxu0 0
        %2476 = vmatpush2.bf16.xpose.msra.mxu0 0
        %2477 = vmatprep.mubr.bf16.mxu0 0
        %2478 = vmatmul.mubr.bf16.gmra.mxu0 %v2398
        %v2479 = vpop.f32.mrf.mxu0
        %v2480 = vadd.f32 %v668, %v2479
        %v2481 = vpop.f32.mrf.mxu0
        %v2482 = vpop.f32.mrf.mxu0
        %v2483 = vadd.f32 %v669, %v2482
        %v2484 = vpop.f32.mrf.mxu0
        %2485 = vmatprep.mubr.bf16.mxu0 0
        %2486 = vmatmul.mubr.bf16.gmra.mxu0 %v2401
        %v2487 = vpop.f32.mrf.mxu0
        %v2488 = vadd.f32 %v670, %v2487
        %v2489 = vpop.f32.mrf.mxu0
        %v2490 = vpop.f32.mrf.mxu0
        %v2491 = vadd.f32 %v671, %v2490
        %v2492 = vpop.f32.mrf.mxu0
        %2493 = vmatprep.mubr.bf16.mxu0 0
        %2494 = vmatmul.mubr.bf16.gmra.mxu0 %v2404
        %v2495 = vpop.f32.mrf.mxu0
        %v2496 = vadd.f32 %v672, %v2495
        %v2497 = vpop.f32.mrf.mxu0
        %v2498 = vpop.f32.mrf.mxu0
        %v2499 = vadd.f32 %v673, %v2498
        %v2500 = vpop.f32.mrf.mxu0
        %2501 = vmatprep.mubr.bf16.mxu0 0
        %2502 = vmatmul.mubr.bf16.gmra.mxu0 %v2407
        %v2503 = vpop.f32.mrf.mxu0
        %v2504 = vadd.f32 %v674, %v2503
        %v2505 = vpop.f32.mrf.mxu0
        %v2506 = vpop.f32.mrf.mxu0
        %v2507 = vadd.f32 %v675, %v2506
        %v2508 = vpop.f32.mrf.mxu0
        %2509 = vmatprep.mubr.bf16.mxu0 0
        %2510 = vmatmul.mubr.bf16.gmra.mxu0 %v2410
        %v2511 = vpop.f32.mrf.mxu0
        %v2512 = vadd.f32 %v676, %v2511
        %v2513 = vpop.f32.mrf.mxu0
        %v2514 = vpop.f32.mrf.mxu0
        %v2515 = vadd.f32 %v677, %v2514
        %v2516 = vpop.f32.mrf.mxu0
        %2517 = vmatprep.mubr.bf16.mxu0 0
        %2518 = vmatmul.mubr.bf16.gmra.mxu0 %v2413
        %v2519 = vpop.f32.mrf.mxu0
        %v2520 = vadd.f32 %v678, %v2519
        %v2521 = vpop.f32.mrf.mxu0
        %v2522 = vpop.f32.mrf.mxu0
        %v2523 = vadd.f32 %v679, %v2522
        %v2524 = vpop.f32.mrf.mxu0
        %2525 = vmatprep.mubr.bf16.mxu0 0
        %2526 = vmatmul.mubr.bf16.gmra.mxu0 %v2416
        %v2527 = vpop.f32.mrf.mxu0
        %v2528 = vadd.f32 %v680, %v2527
        %v2529 = vpop.f32.mrf.mxu0
        %v2530 = vpop.f32.mrf.mxu0
        %v2531 = vadd.f32 %v681, %v2530
        %v2532 = vpop.f32.mrf.mxu0
        %2533 = vmatprep.mubr.bf16.mxu0 0
        %2534 = vmatmul.mubr.bf16.gmra.mxu0 %v2419
        %v2535 = vpop.f32.mrf.mxu0
        %v2536 = vadd.f32 %v682, %v2535
        %v2537 = vpop.f32.mrf.mxu0
        %v2538 = vpop.f32.mrf.mxu0
        %v2539 = vadd.f32 %v683, %v2538
        %v2540 = vpop.f32.mrf.mxu0
        %2541 = vdwg.mxu0
        %s2542 = scalar_lea.vmem [#allocation2], 256
        %v2543 = vld [vmem:[%s2542] sm:$0xff]
        %v2544 = vld [vmem:[%s2542 + $0x8] sm:$0xff]
        %v2545 = vld [vmem:[%s2542 + $0x10] sm:$0xff]
        %v2546 = vld [vmem:[%s2542 + $0x18] sm:$0xff]
        %v2547 = vld [vmem:[%s2542 + $0x20] sm:$0xff]
        %v2548 = vld [vmem:[%s2542 + $0x28] sm:$0xff]
        %v2549 = vld [vmem:[%s2542 + $0x30] sm:$0xff]
        %v2550 = vld [vmem:[%s2542 + $0x38] sm:$0xff]
        %v2551 = vld [vmem:[%s2542 + $0x40] sm:$0xff]
        %v2552 = vld [vmem:[%s2542 + $0x48] sm:$0xff]
        %v2553 = vld [vmem:[%s2542 + $0x50] sm:$0xff]
        %v2554 = vld [vmem:[%s2542 + $0x58] sm:$0xff]
        %v2555 = vld [vmem:[%s2542 + $0x60] sm:$0xff]
        %v2556 = vld [vmem:[%s2542 + $0x68] sm:$0xff]
        %v2557 = vld [vmem:[%s2542 + $0x70] sm:$0xff]
        %v2558 = vld [vmem:[%s2542 + $0x78] sm:$0xff]
        %2559 = vmax.xlane.f32.xlu0 %v2480
        %v2560 = vpop.xlane.xlu0 %2559
        %2561 = vmax.xlane.f32.xlu0 %v2483
        %v2562 = vpop.xlane.xlu0 %2561
        %2563 = vmax.xlane.f32.xlu0 %v2488
        %v2564 = vpop.xlane.xlu0 %2563
        %2565 = vmax.xlane.f32.xlu0 %v2491
        %v2566 = vpop.xlane.xlu0 %2565
        %2567 = vmax.xlane.f32.xlu0 %v2496
        %v2568 = vpop.xlane.xlu0 %2567
        %2569 = vmax.xlane.f32.xlu0 %v2499
        %v2570 = vpop.xlane.xlu0 %2569
        %2571 = vmax.xlane.f32.xlu0 %v2504
        %v2572 = vpop.xlane.xlu0 %2571
        %2573 = vmax.xlane.f32.xlu0 %v2507
        %v2574 = vpop.xlane.xlu0 %2573
        %2575 = vmax.xlane.f32.xlu0 %v2512
        %v2576 = vpop.xlane.xlu0 %2575
        %2577 = vmax.xlane.f32.xlu0 %v2515
        %v2578 = vpop.xlane.xlu0 %2577
        %2579 = vmax.xlane.f32.xlu0 %v2520
        %v2580 = vpop.xlane.xlu0 %2579
        %2581 = vmax.xlane.f32.xlu0 %v2523
        %v2582 = vpop.xlane.xlu0 %2581
        %2583 = vmax.xlane.f32.xlu0 %v2528
        %v2584 = vpop.xlane.xlu0 %2583
        %2585 = vmax.xlane.f32.xlu0 %v2531
        %v2586 = vpop.xlane.xlu0 %2585
        %2587 = vmax.xlane.f32.xlu0 %v2536
        %v2588 = vpop.xlane.xlu0 %2587
        %2589 = vmax.xlane.f32.xlu0 %v2539
        %v2590 = vpop.xlane.xlu0 %2589
        %v2591 = vmax.f32 %v2543, %v2560
        %v2592 = vmax.f32 %v2544, %v2562
        %v2593 = vmax.f32 %v2545, %v2564
        %v2594 = vmax.f32 %v2546, %v2566
        %v2595 = vmax.f32 %v2547, %v2568
        %v2596 = vmax.f32 %v2548, %v2570
        %v2597 = vmax.f32 %v2549, %v2572
        %v2598 = vmax.f32 %v2550, %v2574
        %v2599 = vmax.f32 %v2551, %v2576
        %v2600 = vmax.f32 %v2552, %v2578
        %v2601 = vmax.f32 %v2553, %v2580
        %v2602 = vmax.f32 %v2554, %v2582
        %v2603 = vmax.f32 %v2555, %v2584
        %v2604 = vmax.f32 %v2556, %v2586
        %v2605 = vmax.f32 %v2557, %v2588
        %v2606 = vmax.f32 %v2558, %v2590
        %v2607 = vsub.f32 %v2543, %v2591
        %v2608 = vsub.f32 %v2544, %v2592
        %v2609 = vsub.f32 %v2545, %v2593
        %v2610 = vsub.f32 %v2546, %v2594
        %v2611 = vsub.f32 %v2547, %v2595
        %v2612 = vsub.f32 %v2548, %v2596
        %v2613 = vsub.f32 %v2549, %v2597
        %v2614 = vsub.f32 %v2550, %v2598
        %v2615 = vsub.f32 %v2551, %v2599
        %v2616 = vsub.f32 %v2552, %v2600
        %v2617 = vsub.f32 %v2553, %v2601
        %v2618 = vsub.f32 %v2554, %v2602
        %v2619 = vsub.f32 %v2555, %v2603
        %v2620 = vsub.f32 %v2556, %v2604
        %v2621 = vsub.f32 %v2557, %v2605
        %v2622 = vsub.f32 %v2558, %v2606
        %v2623 = vmul.f32 %v2607, 1.442695
        %v2624 = vpow.pop %v2623
        %v2625 = vmul.f32 %v2608, 1.442695
        %v2626 = vpow.pop %v2625
        %v2627 = vmul.f32 %v2609, 1.442695
        %v2628 = vpow.pop %v2627
        %v2629 = vmul.f32 %v2610, 1.442695
        %v2630 = vpow.pop %v2629
        %v2631 = vmul.f32 %v2611, 1.442695
        %v2632 = vpow.pop %v2631
        %v2633 = vmul.f32 %v2612, 1.442695
        %v2634 = vpow.pop %v2633
        %v2635 = vmul.f32 %v2613, 1.442695
        %v2636 = vpow.pop %v2635
        %v2637 = vmul.f32 %v2614, 1.442695
        %v2638 = vpow.pop %v2637
        %v2639 = vmul.f32 %v2615, 1.442695
        %v2640 = vpow.pop %v2639
        %v2641 = vmul.f32 %v2616, 1.442695
        %v2642 = vpow.pop %v2641
        %v2643 = vmul.f32 %v2617, 1.442695
        %v2644 = vpow.pop %v2643
        %v2645 = vmul.f32 %v2618, 1.442695
        %v2646 = vpow.pop %v2645
        %v2647 = vmul.f32 %v2619, 1.442695
        %v2648 = vpow.pop %v2647
        %v2649 = vmul.f32 %v2620, 1.442695
        %v2650 = vpow.pop %v2649
        %v2651 = vmul.f32 %v2621, 1.442695
        %v2652 = vpow.pop %v2651
        %v2653 = vmul.f32 %v2622, 1.442695
        %v2654 = vpow.pop %v2653
        %2656 = vset.pattern.permute.xlu0 0
        %2657 = vperm.xlu0 %2656, %v2591
        %v2658 = vpop.permute.xlu0 %2657
        %2661 = vset.pattern.permute.xlu0 0
        %2662 = vperm.xlu0 %2661, %v2592
        %v2663 = vpop.permute.xlu0 %2662
        %2666 = vset.pattern.permute.xlu0 0
        %2667 = vperm.xlu0 %2666, %v2593
        %v2668 = vpop.permute.xlu0 %2667
        %2671 = vset.pattern.permute.xlu0 0
        %2672 = vperm.xlu0 %2671, %v2594
        %v2673 = vpop.permute.xlu0 %2672
        %2676 = vset.pattern.permute.xlu0 0
        %2677 = vperm.xlu0 %2676, %v2595
        %v2678 = vpop.permute.xlu0 %2677
        %2681 = vset.pattern.permute.xlu0 0
        %2682 = vperm.xlu0 %2681, %v2596
        %v2683 = vpop.permute.xlu0 %2682
        %2686 = vset.pattern.permute.xlu0 0
        %2687 = vperm.xlu0 %2686, %v2597
        %v2688 = vpop.permute.xlu0 %2687
        %2691 = vset.pattern.permute.xlu0 0
        %2692 = vperm.xlu0 %2691, %v2598
        %v2693 = vpop.permute.xlu0 %2692
        %2696 = vset.pattern.permute.xlu0 0
        %2697 = vperm.xlu0 %2696, %v2599
        %v2698 = vpop.permute.xlu0 %2697
        %2701 = vset.pattern.permute.xlu0 0
        %2702 = vperm.xlu0 %2701, %v2600
        %v2703 = vpop.permute.xlu0 %2702
        %2706 = vset.pattern.permute.xlu0 0
        %2707 = vperm.xlu0 %2706, %v2601
        %v2708 = vpop.permute.xlu0 %2707
        %2711 = vset.pattern.permute.xlu0 0
        %2712 = vperm.xlu0 %2711, %v2602
        %v2713 = vpop.permute.xlu0 %2712
        %2716 = vset.pattern.permute.xlu0 0
        %2717 = vperm.xlu0 %2716, %v2603
        %v2718 = vpop.permute.xlu0 %2717
        %2721 = vset.pattern.permute.xlu0 0
        %2722 = vperm.xlu0 %2721, %v2604
        %v2723 = vpop.permute.xlu0 %2722
        %2726 = vset.pattern.permute.xlu0 0
        %2727 = vperm.xlu0 %2726, %v2605
        %v2728 = vpop.permute.xlu0 %2727
        %2731 = vset.pattern.permute.xlu0 0
        %2732 = vperm.xlu0 %2731, %v2606
        %v2733 = vpop.permute.xlu0 %2732
        %v2735 = vsub.f32 %v2480, %v2658
        %v2736 = vsub.f32 %v2483, %v2663
        %v2737 = vsub.f32 %v2488, %v2668
        %v2738 = vsub.f32 %v2491, %v2673
        %v2739 = vsub.f32 %v2496, %v2678
        %v2740 = vsub.f32 %v2499, %v2683
        %v2741 = vsub.f32 %v2504, %v2688
        %v2742 = vsub.f32 %v2507, %v2693
        %v2743 = vsub.f32 %v2512, %v2698
        %v2744 = vsub.f32 %v2515, %v2703
        %v2745 = vsub.f32 %v2520, %v2708
        %v2746 = vsub.f32 %v2523, %v2713
        %v2747 = vsub.f32 %v2528, %v2718
        %v2748 = vsub.f32 %v2531, %v2723
        %v2749 = vsub.f32 %v2536, %v2728
        %v2750 = vsub.f32 %v2539, %v2733
        %v2751 = vmul.f32 %v2735, 1.442695
        %v2752 = vpow.pop %v2751
        %v2753 = vmul.f32 %v2736, 1.442695
        %v2754 = vpow.pop %v2753
        %v2755 = vmul.f32 %v2737, 1.442695
        %v2756 = vpow.pop %v2755
        %v2757 = vmul.f32 %v2738, 1.442695
        %v2758 = vpow.pop %v2757
        %v2759 = vmul.f32 %v2739, 1.442695
        %v2760 = vpow.pop %v2759
        %v2761 = vmul.f32 %v2740, 1.442695
        %v2762 = vpow.pop %v2761
        %v2763 = vmul.f32 %v2741, 1.442695
        %v2764 = vpow.pop %v2763
        %v2765 = vmul.f32 %v2742, 1.442695
        %v2766 = vpow.pop %v2765
        %v2767 = vmul.f32 %v2743, 1.442695
        %v2768 = vpow.pop %v2767
        %v2769 = vmul.f32 %v2744, 1.442695
        %v2770 = vpow.pop %v2769
        %v2771 = vmul.f32 %v2745, 1.442695
        %v2772 = vpow.pop %v2771
        %v2773 = vmul.f32 %v2746, 1.442695
        %v2774 = vpow.pop %v2773
        %v2775 = vmul.f32 %v2747, 1.442695
        %v2776 = vpow.pop %v2775
        %v2777 = vmul.f32 %v2748, 1.442695
        %v2778 = vpow.pop %v2777
        %v2779 = vmul.f32 %v2749, 1.442695
        %v2780 = vpow.pop %v2779
        %v2781 = vmul.f32 %v2750, 1.442695
        %v2782 = vpow.pop %v2781
        %s2783 = scalar_lea.vmem [#allocation3], 256
        %v2784 = vld [vmem:[%s2783] sm:$0xff]
        %v2785 = vld [vmem:[%s2783 + $0x8] sm:$0xff]
        %v2786 = vld [vmem:[%s2783 + $0x10] sm:$0xff]
        %v2787 = vld [vmem:[%s2783 + $0x18] sm:$0xff]
        %v2788 = vld [vmem:[%s2783 + $0x20] sm:$0xff]
        %v2789 = vld [vmem:[%s2783 + $0x28] sm:$0xff]
        %v2790 = vld [vmem:[%s2783 + $0x30] sm:$0xff]
        %v2791 = vld [vmem:[%s2783 + $0x38] sm:$0xff]
        %v2792 = vld [vmem:[%s2783 + $0x40] sm:$0xff]
        %v2793 = vld [vmem:[%s2783 + $0x48] sm:$0xff]
        %v2794 = vld [vmem:[%s2783 + $0x50] sm:$0xff]
        %v2795 = vld [vmem:[%s2783 + $0x58] sm:$0xff]
        %v2796 = vld [vmem:[%s2783 + $0x60] sm:$0xff]
        %v2797 = vld [vmem:[%s2783 + $0x68] sm:$0xff]
        %v2798 = vld [vmem:[%s2783 + $0x70] sm:$0xff]
        %v2799 = vld [vmem:[%s2783 + $0x78] sm:$0xff]
        %v2800 = vmul.f32 %v2624, %v2784
        %v2801 = vmul.f32 %v2626, %v2785
        %v2802 = vmul.f32 %v2628, %v2786
        %v2803 = vmul.f32 %v2630, %v2787
        %v2804 = vmul.f32 %v2632, %v2788
        %v2805 = vmul.f32 %v2634, %v2789
        %v2806 = vmul.f32 %v2636, %v2790
        %v2807 = vmul.f32 %v2638, %v2791
        %v2808 = vmul.f32 %v2640, %v2792
        %v2809 = vmul.f32 %v2642, %v2793
        %v2810 = vmul.f32 %v2644, %v2794
        %v2811 = vmul.f32 %v2646, %v2795
        %v2812 = vmul.f32 %v2648, %v2796
        %v2813 = vmul.f32 %v2650, %v2797
        %v2814 = vmul.f32 %v2652, %v2798
        %v2815 = vmul.f32 %v2654, %v2799
        %2816 = vadd.xlane.f32.xlu0 %v2752
        %v2817 = vpop.xlane.xlu0 %2816
        %2818 = vadd.xlane.f32.xlu0 %v2754
        %v2819 = vpop.xlane.xlu0 %2818
        %2820 = vadd.xlane.f32.xlu0 %v2756
        %v2821 = vpop.xlane.xlu0 %2820
        %2822 = vadd.xlane.f32.xlu0 %v2758
        %v2823 = vpop.xlane.xlu0 %2822
        %2824 = vadd.xlane.f32.xlu0 %v2760
        %v2825 = vpop.xlane.xlu0 %2824
        %2826 = vadd.xlane.f32.xlu0 %v2762
        %v2827 = vpop.xlane.xlu0 %2826
        %2828 = vadd.xlane.f32.xlu0 %v2764
        %v2829 = vpop.xlane.xlu0 %2828
        %2830 = vadd.xlane.f32.xlu0 %v2766
        %v2831 = vpop.xlane.xlu0 %2830
        %2832 = vadd.xlane.f32.xlu0 %v2768
        %v2833 = vpop.xlane.xlu0 %2832
        %2834 = vadd.xlane.f32.xlu0 %v2770
        %v2835 = vpop.xlane.xlu0 %2834
        %2836 = vadd.xlane.f32.xlu0 %v2772
        %v2837 = vpop.xlane.xlu0 %2836
        %2838 = vadd.xlane.f32.xlu0 %v2774
        %v2839 = vpop.xlane.xlu0 %2838
        %2840 = vadd.xlane.f32.xlu0 %v2776
        %v2841 = vpop.xlane.xlu0 %2840
        %2842 = vadd.xlane.f32.xlu0 %v2778
        %v2843 = vpop.xlane.xlu0 %2842
        %2844 = vadd.xlane.f32.xlu0 %v2780
        %v2845 = vpop.xlane.xlu0 %2844
        %2846 = vadd.xlane.f32.xlu0 %v2782
        %v2847 = vpop.xlane.xlu0 %2846
        %v2848 = vadd.f32 %v2800, %v2817
        %v2849 = vadd.f32 %v2801, %v2819
        %v2850 = vadd.f32 %v2802, %v2821
        %v2851 = vadd.f32 %v2803, %v2823
        %v2852 = vadd.f32 %v2804, %v2825
        %v2853 = vadd.f32 %v2805, %v2827
        %v2854 = vadd.f32 %v2806, %v2829
        %v2855 = vadd.f32 %v2807, %v2831
        %v2856 = vadd.f32 %v2808, %v2833
        %v2857 = vadd.f32 %v2809, %v2835
        %v2858 = vadd.f32 %v2810, %v2837
        %v2859 = vadd.f32 %v2811, %v2839
        %v2860 = vadd.f32 %v2812, %v2841
        %v2861 = vadd.f32 %v2813, %v2843
        %v2862 = vadd.f32 %v2814, %v2845
        %v2863 = vadd.f32 %v2815, %v2847
        %2864 = vst.msk [vmem:[%s2783] sm:$0xff] %vm1230, %v2848
        %2865 = vst.msk [vmem:[%s2783 + $0x8] sm:$0xff] %vm1230, %v2849
        %2866 = vst.msk [vmem:[%s2783 + $0x10] sm:$0xff] %vm1230, %v2850
        %2867 = vst.msk [vmem:[%s2783 + $0x18] sm:$0xff] %vm1230, %v2851
        %2868 = vst.msk [vmem:[%s2783 + $0x20] sm:$0xff] %vm1230, %v2852
        %2869 = vst.msk [vmem:[%s2783 + $0x28] sm:$0xff] %vm1230, %v2853
        %2870 = vst.msk [vmem:[%s2783 + $0x30] sm:$0xff] %vm1230, %v2854
        %2871 = vst.msk [vmem:[%s2783 + $0x38] sm:$0xff] %vm1230, %v2855
        %2872 = vst.msk [vmem:[%s2783 + $0x40] sm:$0xff] %vm1230, %v2856
        %2873 = vst.msk [vmem:[%s2783 + $0x48] sm:$0xff] %vm1230, %v2857
        %2874 = vst.msk [vmem:[%s2783 + $0x50] sm:$0xff] %vm1230, %v2858
        %2875 = vst.msk [vmem:[%s2783 + $0x58] sm:$0xff] %vm1230, %v2859
        %2876 = vst.msk [vmem:[%s2783 + $0x60] sm:$0xff] %vm1230, %v2860
        %2877 = vst.msk [vmem:[%s2783 + $0x68] sm:$0xff] %vm1230, %v2861
        %2878 = vst.msk [vmem:[%s2783 + $0x70] sm:$0xff] %vm1230, %v2862
        %2879 = vst.msk [vmem:[%s2783 + $0x78] sm:$0xff] %vm1230, %v2863
        %s2880 = scalar_lea.vmem [#allocation4], 256
        %v2881 = vld [vmem:[%s2880] sm:$0xff]
        %v2882 = vld [vmem:[%s2880 + $0x8] sm:$0xff]
        %v2883 = vld [vmem:[%s2880 + $0x10] sm:$0xff]
        %v2884 = vld [vmem:[%s2880 + $0x18] sm:$0xff]
        %v2885 = vld [vmem:[%s2880 + $0x20] sm:$0xff]
        %v2886 = vld [vmem:[%s2880 + $0x28] sm:$0xff]
        %v2887 = vld [vmem:[%s2880 + $0x30] sm:$0xff]
        %v2888 = vld [vmem:[%s2880 + $0x38] sm:$0xff]
        %v2889 = vld [vmem:[%s2880 + $0x40] sm:$0xff]
        %v2890 = vld [vmem:[%s2880 + $0x48] sm:$0xff]
        %v2891 = vld [vmem:[%s2880 + $0x50] sm:$0xff]
        %v2892 = vld [vmem:[%s2880 + $0x58] sm:$0xff]
        %v2893 = vld [vmem:[%s2880 + $0x60] sm:$0xff]
        %v2894 = vld [vmem:[%s2880 + $0x68] sm:$0xff]
        %v2895 = vld [vmem:[%s2880 + $0x70] sm:$0xff]
        %v2896 = vld [vmem:[%s2880 + $0x78] sm:$0xff]
        %2898 = vset.pattern.permute.xlu0 0
        %2899 = vperm.xlu0 %2898, %v2624
        %v2900 = vpop.permute.xlu0 %2899
        %2903 = vset.pattern.permute.xlu0 0
        %2904 = vperm.xlu0 %2903, %v2626
        %v2905 = vpop.permute.xlu0 %2904
        %2908 = vset.pattern.permute.xlu0 0
        %2909 = vperm.xlu0 %2908, %v2628
        %v2910 = vpop.permute.xlu0 %2909
        %2913 = vset.pattern.permute.xlu0 0
        %2914 = vperm.xlu0 %2913, %v2630
        %v2915 = vpop.permute.xlu0 %2914
        %2918 = vset.pattern.permute.xlu0 0
        %2919 = vperm.xlu0 %2918, %v2632
        %v2920 = vpop.permute.xlu0 %2919
        %2923 = vset.pattern.permute.xlu0 0
        %2924 = vperm.xlu0 %2923, %v2634
        %v2925 = vpop.permute.xlu0 %2924
        %2928 = vset.pattern.permute.xlu0 0
        %2929 = vperm.xlu0 %2928, %v2636
        %v2930 = vpop.permute.xlu0 %2929
        %2933 = vset.pattern.permute.xlu0 0
        %2934 = vperm.xlu0 %2933, %v2638
        %v2935 = vpop.permute.xlu0 %2934
        %2938 = vset.pattern.permute.xlu0 0
        %2939 = vperm.xlu0 %2938, %v2640
        %v2940 = vpop.permute.xlu0 %2939
        %2943 = vset.pattern.permute.xlu0 0
        %2944 = vperm.xlu0 %2943, %v2642
        %v2945 = vpop.permute.xlu0 %2944
        %2948 = vset.pattern.permute.xlu0 0
        %2949 = vperm.xlu0 %2948, %v2644
        %v2950 = vpop.permute.xlu0 %2949
        %2953 = vset.pattern.permute.xlu0 0
        %2954 = vperm.xlu0 %2953, %v2646
        %v2955 = vpop.permute.xlu0 %2954
        %2958 = vset.pattern.permute.xlu0 0
        %2959 = vperm.xlu0 %2958, %v2648
        %v2960 = vpop.permute.xlu0 %2959
        %2963 = vset.pattern.permute.xlu0 0
        %2964 = vperm.xlu0 %2963, %v2650
        %v2965 = vpop.permute.xlu0 %2964
        %2968 = vset.pattern.permute.xlu0 0
        %2969 = vperm.xlu0 %2968, %v2652
        %v2970 = vpop.permute.xlu0 %2969
        %2973 = vset.pattern.permute.xlu0 0
        %2974 = vperm.xlu0 %2973, %v2654
        %v2975 = vpop.permute.xlu0 %2974
        %v2977 = vmul.f32 %v2900, %v2881
        %v2978 = vmul.f32 %v2905, %v2882
        %v2979 = vmul.f32 %v2910, %v2883
        %v2980 = vmul.f32 %v2915, %v2884
        %v2981 = vmul.f32 %v2920, %v2885
        %v2982 = vmul.f32 %v2925, %v2886
        %v2983 = vmul.f32 %v2930, %v2887
        %v2984 = vmul.f32 %v2935, %v2888
        %v2985 = vmul.f32 %v2940, %v2889
        %v2986 = vmul.f32 %v2945, %v2890
        %v2987 = vmul.f32 %v2950, %v2891
        %v2988 = vmul.f32 %v2955, %v2892
        %v2989 = vmul.f32 %v2960, %v2893
        %v2990 = vmul.f32 %v2965, %v2894
        %v2991 = vmul.f32 %v2970, %v2895
        %v2992 = vmul.f32 %v2975, %v2896
        %v2993 = vpack.c.bf16 %v2754, %v2752
        %v2994 = vpack.c.bf16 %v2758, %v2756
        %v2995 = vpack.c.bf16 %v2762, %v2760
        %v2996 = vpack.c.bf16 %v2766, %v2764
        %v2997 = vpack.c.bf16 %v2770, %v2768
        %v2998 = vpack.c.bf16 %v2774, %v2772
        %v2999 = vpack.c.bf16 %v2778, %v2776
        %v3000 = vpack.c.bf16 %v2782, %v2780
        %3001 = vrot.lane.b32.xlu0 %v1399, 96
        %v3002 = vpop.permute.xlu0 %3001
        %3003 = vrot.lane.b32.xlu0 %v1400, 96
        %v3004 = vpop.permute.xlu0 %3003
        %3005 = vrot.lane.b32.xlu0 %v1401, 96
        %v3006 = vpop.permute.xlu0 %3005
        %3007 = vrot.lane.b32.xlu0 %v1402, 96
        %v3008 = vpop.permute.xlu0 %3007
        %3009 = vrot.lane.b32.xlu0 %v1403, 96
        %v3010 = vpop.permute.xlu0 %3009
        %3011 = vrot.lane.b32.xlu0 %v1404, 96
        %v3012 = vpop.permute.xlu0 %3011
        %3013 = vrot.lane.b32.xlu0 %v1405, 96
        %v3014 = vpop.permute.xlu0 %3013
        %3015 = vrot.lane.b32.xlu0 %v1406, 96
        %v3016 = vpop.permute.xlu0 %3015
        %3025 = vmatprep.subr.bf16.mxu0 0
        %3026 = vmatpush1.bf16.msra.mxu0 %v3016
        %3027 = vmatprep.subr.bf16.mxu0 0
        %3028 = vmatpush1.bf16.msra.mxu0 %v3014
        %3029 = vmatprep.subr.bf16.mxu0 0
        %3030 = vmatpush1.bf16.msra.mxu0 %v3012
        %3031 = vmatprep.subr.bf16.mxu0 0
        %3032 = vmatpush1.bf16.msra.mxu0 %v3010
        %3033 = vmatprep.subr.bf16.mxu0 0
        %3034 = vmatpush1.bf16.msra.mxu0 %v3008
        %3035 = vmatprep.subr.bf16.mxu0 0
        %3036 = vmatpush1.bf16.msra.mxu0 %v3006
        %3037 = vmatprep.subr.bf16.mxu0 0
        %3038 = vmatpush1.bf16.msra.mxu0 %v3004
        %3039 = vmatprep.subr.bf16.mxu0 0
        %3040 = vmatpush1.bf16.msra.mxu0 %v3002
        %3041 = vmatprep.subr.bf16.mxu0 0
        %3042 = vmatpush2.bf16.msra.mxu0 0
        %3043 = vmatprep.subr.bf16.mxu0 0
        %3044 = vmatpush2.bf16.msra.mxu0 0
        %3045 = vmatprep.subr.bf16.mxu0 0
        %3046 = vmatpush2.bf16.msra.mxu0 0
        %3047 = vmatprep.subr.bf16.mxu0 0
        %3048 = vmatpush2.bf16.msra.mxu0 0
        %3049 = vmatprep.subr.bf16.mxu0 0
        %3050 = vmatpush2.bf16.msra.mxu0 0
        %3051 = vmatprep.subr.bf16.mxu0 0
        %3052 = vmatpush2.bf16.msra.mxu0 0
        %3053 = vmatprep.subr.bf16.mxu0 0
        %3054 = vmatpush2.bf16.msra.mxu0 0
        %3055 = vmatprep.subr.bf16.mxu0 0
        %3056 = vmatpush2.bf16.msra.mxu0 0
        %3057 = vmatprep.mubr.bf16.mxu0 0
        %3058 = vmatmul.mubr.bf16.gmra.mxu0 %v2993
        %v3059 = vpop.f32.mrf.mxu0
        %v3060 = vadd.f32 0.0, %v3059
        %v3061 = vpop.f32.mrf.mxu0
        %v3062 = vpop.f32.mrf.mxu0
        %v3063 = vadd.f32 0.0, %v3062
        %v3064 = vpop.f32.mrf.mxu0
        %3065 = vmatprep.mubr.bf16.mxu0 0
        %3066 = vmatmul.mubr.bf16.gmra.mxu0 %v2994
        %v3067 = vpop.f32.mrf.mxu0
        %v3068 = vadd.f32 0.0, %v3067
        %v3069 = vpop.f32.mrf.mxu0
        %v3070 = vpop.f32.mrf.mxu0
        %v3071 = vadd.f32 0.0, %v3070
        %v3072 = vpop.f32.mrf.mxu0
        %3073 = vmatprep.mubr.bf16.mxu0 0
        %3074 = vmatmul.mubr.bf16.gmra.mxu0 %v2995
        %v3075 = vpop.f32.mrf.mxu0
        %v3076 = vadd.f32 0.0, %v3075
        %v3077 = vpop.f32.mrf.mxu0
        %v3078 = vpop.f32.mrf.mxu0
        %v3079 = vadd.f32 0.0, %v3078
        %v3080 = vpop.f32.mrf.mxu0
        %3081 = vmatprep.mubr.bf16.mxu0 0
        %3082 = vmatmul.mubr.bf16.gmra.mxu0 %v2996
        %v3083 = vpop.f32.mrf.mxu0
        %v3084 = vadd.f32 0.0, %v3083
        %v3085 = vpop.f32.mrf.mxu0
        %v3086 = vpop.f32.mrf.mxu0
        %v3087 = vadd.f32 0.0, %v3086
        %v3088 = vpop.f32.mrf.mxu0
        %3089 = vmatprep.mubr.bf16.mxu0 0
        %3090 = vmatmul.mubr.bf16.gmra.mxu0 %v2997
        %v3091 = vpop.f32.mrf.mxu0
        %v3092 = vadd.f32 0.0, %v3091
        %v3093 = vpop.f32.mrf.mxu0
        %v3094 = vpop.f32.mrf.mxu0
        %v3095 = vadd.f32 0.0, %v3094
        %v3096 = vpop.f32.mrf.mxu0
        %3097 = vmatprep.mubr.bf16.mxu0 0
        %3098 = vmatmul.mubr.bf16.gmra.mxu0 %v2998
        %v3099 = vpop.f32.mrf.mxu0
        %v3100 = vadd.f32 0.0, %v3099
        %v3101 = vpop.f32.mrf.mxu0
        %v3102 = vpop.f32.mrf.mxu0
        %v3103 = vadd.f32 0.0, %v3102
        %v3104 = vpop.f32.mrf.mxu0
        %3105 = vmatprep.mubr.bf16.mxu0 0
        %3106 = vmatmul.mubr.bf16.gmra.mxu0 %v2999
        %v3107 = vpop.f32.mrf.mxu0
        %v3108 = vadd.f32 0.0, %v3107
        %v3109 = vpop.f32.mrf.mxu0
        %v3110 = vpop.f32.mrf.mxu0
        %v3111 = vadd.f32 0.0, %v3110
        %v3112 = vpop.f32.mrf.mxu0
        %3113 = vmatprep.mubr.bf16.mxu0 0
        %3114 = vmatmul.mubr.bf16.gmra.mxu0 %v3000
        %v3115 = vpop.f32.mrf.mxu0
        %v3116 = vadd.f32 0.0, %v3115
        %v3117 = vpop.f32.mrf.mxu0
        %v3118 = vpop.f32.mrf.mxu0
        %v3119 = vadd.f32 0.0, %v3118
        %v3120 = vpop.f32.mrf.mxu0
        %3121 = vdwg.mxu0
        %v3122 = vadd.f32 %v2977, %v3060
        %v3123 = vadd.f32 %v2978, %v3063
        %v3124 = vadd.f32 %v2979, %v3068
        %v3125 = vadd.f32 %v2980, %v3071
        %v3126 = vadd.f32 %v2981, %v3076
        %v3127 = vadd.f32 %v2982, %v3079
        %v3128 = vadd.f32 %v2983, %v3084
        %v3129 = vadd.f32 %v2984, %v3087
        %v3130 = vadd.f32 %v2985, %v3092
        %v3131 = vadd.f32 %v2986, %v3095
        %v3132 = vadd.f32 %v2987, %v3100
        %v3133 = vadd.f32 %v2988, %v3103
        %v3134 = vadd.f32 %v2989, %v3108
        %v3135 = vadd.f32 %v2990, %v3111
        %v3136 = vadd.f32 %v2991, %v3116
        %v3137 = vadd.f32 %v2992, %v3119
        %3138 = vst.msk [vmem:[%s2880] sm:$0xff] %vm764, %v3122
        %3139 = vst.msk [vmem:[%s2880 + $0x8] sm:$0xff] %vm764, %v3123
        %3140 = vst.msk [vmem:[%s2880 + $0x10] sm:$0xff] %vm764, %v3124
        %3141 = vst.msk [vmem:[%s2880 + $0x18] sm:$0xff] %vm764, %v3125
        %3142 = vst.msk [vmem:[%s2880 + $0x20] sm:$0xff] %vm764, %v3126
        %3143 = vst.msk [vmem:[%s2880 + $0x28] sm:$0xff] %vm764, %v3127
        %3144 = vst.msk [vmem:[%s2880 + $0x30] sm:$0xff] %vm764, %v3128
        %3145 = vst.msk [vmem:[%s2880 + $0x38] sm:$0xff] %vm764, %v3129
        %3146 = vst.msk [vmem:[%s2880 + $0x40] sm:$0xff] %vm764, %v3130
        %3147 = vst.msk [vmem:[%s2880 + $0x48] sm:$0xff] %vm764, %v3131
        %3148 = vst.msk [vmem:[%s2880 + $0x50] sm:$0xff] %vm764, %v3132
        %3149 = vst.msk [vmem:[%s2880 + $0x58] sm:$0xff] %vm764, %v3133
        %3150 = vst.msk [vmem:[%s2880 + $0x60] sm:$0xff] %vm764, %v3134
        %3151 = vst.msk [vmem:[%s2880 + $0x68] sm:$0xff] %vm764, %v3135
        %3152 = vst.msk [vmem:[%s2880 + $0x70] sm:$0xff] %vm764, %v3136
        %3153 = vst.msk [vmem:[%s2880 + $0x78] sm:$0xff] %vm764, %v3137
        %3154 = vst.msk [vmem:[%s2542] sm:$0xff] %vm1230, %v2591
        %3155 = vst.msk [vmem:[%s2542 + $0x8] sm:$0xff] %vm1230, %v2592
        %3156 = vst.msk [vmem:[%s2542 + $0x10] sm:$0xff] %vm1230, %v2593
        %3157 = vst.msk [vmem:[%s2542 + $0x18] sm:$0xff] %vm1230, %v2594
        %3158 = vst.msk [vmem:[%s2542 + $0x20] sm:$0xff] %vm1230, %v2595
        %3159 = vst.msk [vmem:[%s2542 + $0x28] sm:$0xff] %vm1230, %v2596
        %3160 = vst.msk [vmem:[%s2542 + $0x30] sm:$0xff] %vm1230, %v2597
        %3161 = vst.msk [vmem:[%s2542 + $0x38] sm:$0xff] %vm1230, %v2598
        %3162 = vst.msk [vmem:[%s2542 + $0x40] sm:$0xff] %vm1230, %v2599
        %3163 = vst.msk [vmem:[%s2542 + $0x48] sm:$0xff] %vm1230, %v2600
        %3164 = vst.msk [vmem:[%s2542 + $0x50] sm:$0xff] %vm1230, %v2601
        %3165 = vst.msk [vmem:[%s2542 + $0x58] sm:$0xff] %vm1230, %v2602
        %3166 = vst.msk [vmem:[%s2542 + $0x60] sm:$0xff] %vm1230, %v2603
        %3167 = vst.msk [vmem:[%s2542 + $0x68] sm:$0xff] %vm1230, %v2604
        %3168 = vst.msk [vmem:[%s2542 + $0x70] sm:$0xff] %vm1230, %v2605
        %3169 = vst.msk [vmem:[%s2542 + $0x78] sm:$0xff] %vm1230, %v2606
        %3170 = vrot.lane.b32.xlu0 %v716, 80
        %v3171 = vpop.permute.xlu0 %3170
        %3172 = vrot.lane.b32.xlu0 %v717, 80
        %v3173 = vpop.permute.xlu0 %3172
        %3174 = vrot.lane.b32.xlu0 %v718, 80
        %v3175 = vpop.permute.xlu0 %3174
        %3176 = vrot.lane.b32.xlu0 %v719, 80
        %v3177 = vpop.permute.xlu0 %3176
        %3178 = vrot.lane.b32.xlu0 %v720, 80
        %v3179 = vpop.permute.xlu0 %3178
        %3180 = vrot.lane.b32.xlu0 %v721, 80
        %v3181 = vpop.permute.xlu0 %3180
        %3182 = vrot.lane.b32.xlu0 %v722, 80
        %v3183 = vpop.permute.xlu0 %3182
        %3184 = vrot.lane.b32.xlu0 %v723, 80
        %v3185 = vpop.permute.xlu0 %3184
        %3186 = vrot.lane.b32.xlu0 %v756, 80
        %v3187 = vpop.permute.xlu0 %3186
        %3188 = vrot.lane.b32.xlu0 %v757, 80
        %v3189 = vpop.permute.xlu0 %3188
        %3190 = vrot.lane.b32.xlu0 %v758, 80
        %v3191 = vpop.permute.xlu0 %3190
        %3192 = vrot.lane.b32.xlu0 %v759, 80
        %v3193 = vpop.permute.xlu0 %3192
        %3194 = vrot.lane.b32.xlu0 %v760, 80
        %v3195 = vpop.permute.xlu0 %3194
        %3196 = vrot.lane.b32.xlu0 %v761, 80
        %v3197 = vpop.permute.xlu0 %3196
        %3198 = vrot.lane.b32.xlu0 %v762, 80
        %v3199 = vpop.permute.xlu0 %3198
        %3200 = vrot.lane.b32.xlu0 %v763, 80
        %v3201 = vpop.permute.xlu0 %3200
        %v3203 = vsel %vm764, %v3171, 0
        %v3206 = vsel %vm764, %v3173, 0
        %v3209 = vsel %vm764, %v3175, 0
        %v3212 = vsel %vm764, %v3177, 0
        %v3215 = vsel %vm764, %v3179, 0
        %v3218 = vsel %vm764, %v3181, 0
        %v3221 = vsel %vm764, %v3183, 0
        %v3224 = vsel %vm764, %v3185, 0
        %v3227 = vsel %vm764, %v3187, 0
        %v3230 = vsel %vm764, %v3189, 0
        %v3233 = vsel %vm764, %v3191, 0
        %v3236 = vsel %vm764, %v3193, 0
        %v3239 = vsel %vm764, %v3195, 0
        %v3242 = vsel %vm764, %v3197, 0
        %v3245 = vsel %vm764, %v3199, 0
        %v3248 = vsel %vm764, %v3201, 0
        %3250 = vmatprep.subr.bf16.mxu0 0
        %3251 = vmatpush1.bf16.xpose.msra.mxu0 %v3248
        %3252 = vmatprep.subr.bf16.mxu0 0
        %3253 = vmatpush1.bf16.xpose.msra.mxu0 %v3245
        %3254 = vmatprep.subr.bf16.mxu0 0
        %3255 = vmatpush1.bf16.xpose.msra.mxu0 %v3242
        %3256 = vmatprep.subr.bf16.mxu0 0
        %3257 = vmatpush1.bf16.xpose.msra.mxu0 %v3239
        %3258 = vmatprep.subr.bf16.mxu0 0
        %3259 = vmatpush1.bf16.xpose.msra.mxu0 %v3236
        %3260 = vmatprep.subr.bf16.mxu0 0
        %3261 = vmatpush1.bf16.xpose.msra.mxu0 %v3233
        %3262 = vmatprep.subr.bf16.mxu0 0
        %3263 = vmatpush1.bf16.xpose.msra.mxu0 %v3230
        %3264 = vmatprep.subr.bf16.mxu0 0
        %3265 = vmatpush1.bf16.xpose.msra.mxu0 %v3227
        %3266 = vmatprep.subr.bf16.mxu0 0
        %3267 = vmatpush2.bf16.xpose.msra.mxu0 0
        %3268 = vmatprep.subr.bf16.mxu0 0
        %3269 = vmatpush2.bf16.xpose.msra.mxu0 0
        %3270 = vmatprep.subr.bf16.mxu0 0
        %3271 = vmatpush2.bf16.xpose.msra.mxu0 0
        %3272 = vmatprep.subr.bf16.mxu0 0
        %3273 = vmatpush2.bf16.xpose.msra.mxu0 0
        %3274 = vmatprep.subr.bf16.mxu0 0
        %3275 = vmatpush2.bf16.xpose.msra.mxu0 0
        %3276 = vmatprep.subr.bf16.mxu0 0
        %3277 = vmatpush2.bf16.xpose.msra.mxu0 0
        %3278 = vmatprep.subr.bf16.mxu0 0
        %3279 = vmatpush2.bf16.xpose.msra.mxu0 0
        %3280 = vmatprep.subr.bf16.mxu0 0
        %3281 = vmatpush2.bf16.xpose.msra.mxu0 0
        %3282 = vmatprep.mubr.bf16.mxu0 0
        %3283 = vmatmul.mubr.bf16.gmra.mxu0 %v3203
        %v3284 = vpop.f32.mrf.mxu0
        %v3285 = vadd.f32 %v668, %v3284
        %v3286 = vpop.f32.mrf.mxu0
        %v3287 = vpop.f32.mrf.mxu0
        %v3288 = vadd.f32 %v669, %v3287
        %v3289 = vpop.f32.mrf.mxu0
        %3290 = vmatprep.mubr.bf16.mxu0 0
        %3291 = vmatmul.mubr.bf16.gmra.mxu0 %v3206
        %v3292 = vpop.f32.mrf.mxu0
        %v3293 = vadd.f32 %v670, %v3292
        %v3294 = vpop.f32.mrf.mxu0
        %v3295 = vpop.f32.mrf.mxu0
        %v3296 = vadd.f32 %v671, %v3295
        %v3297 = vpop.f32.mrf.mxu0
        %3298 = vmatprep.mubr.bf16.mxu0 0
        %3299 = vmatmul.mubr.bf16.gmra.mxu0 %v3209
        %v3300 = vpop.f32.mrf.mxu0
        %v3301 = vadd.f32 %v672, %v3300
        %v3302 = vpop.f32.mrf.mxu0
        %v3303 = vpop.f32.mrf.mxu0
        %v3304 = vadd.f32 %v673, %v3303
        %v3305 = vpop.f32.mrf.mxu0
        %3306 = vmatprep.mubr.bf16.mxu0 0
        %3307 = vmatmul.mubr.bf16.gmra.mxu0 %v3212
        %v3308 = vpop.f32.mrf.mxu0
        %v3309 = vadd.f32 %v674, %v3308
        %v3310 = vpop.f32.mrf.mxu0
        %v3311 = vpop.f32.mrf.mxu0
        %v3312 = vadd.f32 %v675, %v3311
        %v3313 = vpop.f32.mrf.mxu0
        %3314 = vmatprep.mubr.bf16.mxu0 0
        %3315 = vmatmul.mubr.bf16.gmra.mxu0 %v3215
        %v3316 = vpop.f32.mrf.mxu0
        %v3317 = vadd.f32 %v676, %v3316
        %v3318 = vpop.f32.mrf.mxu0
        %v3319 = vpop.f32.mrf.mxu0
        %v3320 = vadd.f32 %v677, %v3319
        %v3321 = vpop.f32.mrf.mxu0
        %3322 = vmatprep.mubr.bf16.mxu0 0
        %3323 = vmatmul.mubr.bf16.gmra.mxu0 %v3218
        %v3324 = vpop.f32.mrf.mxu0
        %v3325 = vadd.f32 %v678, %v3324
        %v3326 = vpop.f32.mrf.mxu0
        %v3327 = vpop.f32.mrf.mxu0
        %v3328 = vadd.f32 %v679, %v3327
        %v3329 = vpop.f32.mrf.mxu0
        %3330 = vmatprep.mubr.bf16.mxu0 0
        %3331 = vmatmul.mubr.bf16.gmra.mxu0 %v3221
        %v3332 = vpop.f32.mrf.mxu0
        %v3333 = vadd.f32 %v680, %v3332
        %v3334 = vpop.f32.mrf.mxu0
        %v3335 = vpop.f32.mrf.mxu0
        %v3336 = vadd.f32 %v681, %v3335
        %v3337 = vpop.f32.mrf.mxu0
        %3338 = vmatprep.mubr.bf16.mxu0 0
        %3339 = vmatmul.mubr.bf16.gmra.mxu0 %v3224
        %v3340 = vpop.f32.mrf.mxu0
        %v3341 = vadd.f32 %v682, %v3340
        %v3342 = vpop.f32.mrf.mxu0
        %v3343 = vpop.f32.mrf.mxu0
        %v3344 = vadd.f32 %v683, %v3343
        %v3345 = vpop.f32.mrf.mxu0
        %3346 = vdwg.mxu0
        %s3347 = scalar_lea.vmem [#allocation2], 384
        %v3348 = vld [vmem:[%s3347] sm:$0xff]
        %v3349 = vld [vmem:[%s3347 + $0x8] sm:$0xff]
        %v3350 = vld [vmem:[%s3347 + $0x10] sm:$0xff]
        %v3351 = vld [vmem:[%s3347 + $0x18] sm:$0xff]
        %v3352 = vld [vmem:[%s3347 + $0x20] sm:$0xff]
        %v3353 = vld [vmem:[%s3347 + $0x28] sm:$0xff]
        %v3354 = vld [vmem:[%s3347 + $0x30] sm:$0xff]
        %v3355 = vld [vmem:[%s3347 + $0x38] sm:$0xff]
        %v3356 = vld [vmem:[%s3347 + $0x40] sm:$0xff]
        %v3357 = vld [vmem:[%s3347 + $0x48] sm:$0xff]
        %v3358 = vld [vmem:[%s3347 + $0x50] sm:$0xff]
        %v3359 = vld [vmem:[%s3347 + $0x58] sm:$0xff]
        %v3360 = vld [vmem:[%s3347 + $0x60] sm:$0xff]
        %v3361 = vld [vmem:[%s3347 + $0x68] sm:$0xff]
        %v3362 = vld [vmem:[%s3347 + $0x70] sm:$0xff]
        %v3363 = vld [vmem:[%s3347 + $0x78] sm:$0xff]
        %3364 = vmax.xlane.f32.xlu0 %v3285
        %v3365 = vpop.xlane.xlu0 %3364
        %3366 = vmax.xlane.f32.xlu0 %v3288
        %v3367 = vpop.xlane.xlu0 %3366
        %3368 = vmax.xlane.f32.xlu0 %v3293
        %v3369 = vpop.xlane.xlu0 %3368
        %3370 = vmax.xlane.f32.xlu0 %v3296
        %v3371 = vpop.xlane.xlu0 %3370
        %3372 = vmax.xlane.f32.xlu0 %v3301
        %v3373 = vpop.xlane.xlu0 %3372
        %3374 = vmax.xlane.f32.xlu0 %v3304
        %v3375 = vpop.xlane.xlu0 %3374
        %3376 = vmax.xlane.f32.xlu0 %v3309
        %v3377 = vpop.xlane.xlu0 %3376
        %3378 = vmax.xlane.f32.xlu0 %v3312
        %v3379 = vpop.xlane.xlu0 %3378
        %3380 = vmax.xlane.f32.xlu0 %v3317
        %v3381 = vpop.xlane.xlu0 %3380
        %3382 = vmax.xlane.f32.xlu0 %v3320
        %v3383 = vpop.xlane.xlu0 %3382
        %3384 = vmax.xlane.f32.xlu0 %v3325
        %v3385 = vpop.xlane.xlu0 %3384
        %3386 = vmax.xlane.f32.xlu0 %v3328
        %v3387 = vpop.xlane.xlu0 %3386
        %3388 = vmax.xlane.f32.xlu0 %v3333
        %v3389 = vpop.xlane.xlu0 %3388
        %3390 = vmax.xlane.f32.xlu0 %v3336
        %v3391 = vpop.xlane.xlu0 %3390
        %3392 = vmax.xlane.f32.xlu0 %v3341
        %v3393 = vpop.xlane.xlu0 %3392
        %3394 = vmax.xlane.f32.xlu0 %v3344
        %v3395 = vpop.xlane.xlu0 %3394
        %v3396 = vmax.f32 %v3348, %v3365
        %v3397 = vmax.f32 %v3349, %v3367
        %v3398 = vmax.f32 %v3350, %v3369
        %v3399 = vmax.f32 %v3351, %v3371
        %v3400 = vmax.f32 %v3352, %v3373
        %v3401 = vmax.f32 %v3353, %v3375
        %v3402 = vmax.f32 %v3354, %v3377
        %v3403 = vmax.f32 %v3355, %v3379
        %v3404 = vmax.f32 %v3356, %v3381
        %v3405 = vmax.f32 %v3357, %v3383
        %v3406 = vmax.f32 %v3358, %v3385
        %v3407 = vmax.f32 %v3359, %v3387
        %v3408 = vmax.f32 %v3360, %v3389
        %v3409 = vmax.f32 %v3361, %v3391
        %v3410 = vmax.f32 %v3362, %v3393
        %v3411 = vmax.f32 %v3363, %v3395
        %v3412 = vsub.f32 %v3348, %v3396
        %v3413 = vsub.f32 %v3349, %v3397
        %v3414 = vsub.f32 %v3350, %v3398
        %v3415 = vsub.f32 %v3351, %v3399
        %v3416 = vsub.f32 %v3352, %v3400
        %v3417 = vsub.f32 %v3353, %v3401
        %v3418 = vsub.f32 %v3354, %v3402
        %v3419 = vsub.f32 %v3355, %v3403
        %v3420 = vsub.f32 %v3356, %v3404
        %v3421 = vsub.f32 %v3357, %v3405
        %v3422 = vsub.f32 %v3358, %v3406
        %v3423 = vsub.f32 %v3359, %v3407
        %v3424 = vsub.f32 %v3360, %v3408
        %v3425 = vsub.f32 %v3361, %v3409
        %v3426 = vsub.f32 %v3362, %v3410
        %v3427 = vsub.f32 %v3363, %v3411
        %v3428 = vmul.f32 %v3412, 1.442695
        %v3429 = vpow.pop %v3428
        %v3430 = vmul.f32 %v3413, 1.442695
        %v3431 = vpow.pop %v3430
        %v3432 = vmul.f32 %v3414, 1.442695
        %v3433 = vpow.pop %v3432
        %v3434 = vmul.f32 %v3415, 1.442695
        %v3435 = vpow.pop %v3434
        %v3436 = vmul.f32 %v3416, 1.442695
        %v3437 = vpow.pop %v3436
        %v3438 = vmul.f32 %v3417, 1.442695
        %v3439 = vpow.pop %v3438
        %v3440 = vmul.f32 %v3418, 1.442695
        %v3441 = vpow.pop %v3440
        %v3442 = vmul.f32 %v3419, 1.442695
        %v3443 = vpow.pop %v3442
        %v3444 = vmul.f32 %v3420, 1.442695
        %v3445 = vpow.pop %v3444
        %v3446 = vmul.f32 %v3421, 1.442695
        %v3447 = vpow.pop %v3446
        %v3448 = vmul.f32 %v3422, 1.442695
        %v3449 = vpow.pop %v3448
        %v3450 = vmul.f32 %v3423, 1.442695
        %v3451 = vpow.pop %v3450
        %v3452 = vmul.f32 %v3424, 1.442695
        %v3453 = vpow.pop %v3452
        %v3454 = vmul.f32 %v3425, 1.442695
        %v3455 = vpow.pop %v3454
        %v3456 = vmul.f32 %v3426, 1.442695
        %v3457 = vpow.pop %v3456
        %v3458 = vmul.f32 %v3427, 1.442695
        %v3459 = vpow.pop %v3458
        %3461 = vset.pattern.permute.xlu0 0
        %3462 = vperm.xlu0 %3461, %v3396
        %v3463 = vpop.permute.xlu0 %3462
        %3466 = vset.pattern.permute.xlu0 0
        %3467 = vperm.xlu0 %3466, %v3397
        %v3468 = vpop.permute.xlu0 %3467
        %3471 = vset.pattern.permute.xlu0 0
        %3472 = vperm.xlu0 %3471, %v3398
        %v3473 = vpop.permute.xlu0 %3472
        %3476 = vset.pattern.permute.xlu0 0
        %3477 = vperm.xlu0 %3476, %v3399
        %v3478 = vpop.permute.xlu0 %3477
        %3481 = vset.pattern.permute.xlu0 0
        %3482 = vperm.xlu0 %3481, %v3400
        %v3483 = vpop.permute.xlu0 %3482
        %3486 = vset.pattern.permute.xlu0 0
        %3487 = vperm.xlu0 %3486, %v3401
        %v3488 = vpop.permute.xlu0 %3487
        %3491 = vset.pattern.permute.xlu0 0
        %3492 = vperm.xlu0 %3491, %v3402
        %v3493 = vpop.permute.xlu0 %3492
        %3496 = vset.pattern.permute.xlu0 0
        %3497 = vperm.xlu0 %3496, %v3403
        %v3498 = vpop.permute.xlu0 %3497
        %3501 = vset.pattern.permute.xlu0 0
        %3502 = vperm.xlu0 %3501, %v3404
        %v3503 = vpop.permute.xlu0 %3502
        %3506 = vset.pattern.permute.xlu0 0
        %3507 = vperm.xlu0 %3506, %v3405
        %v3508 = vpop.permute.xlu0 %3507
        %3511 = vset.pattern.permute.xlu0 0
        %3512 = vperm.xlu0 %3511, %v3406
        %v3513 = vpop.permute.xlu0 %3512
        %3516 = vset.pattern.permute.xlu0 0
        %3517 = vperm.xlu0 %3516, %v3407
        %v3518 = vpop.permute.xlu0 %3517
        %3521 = vset.pattern.permute.xlu0 0
        %3522 = vperm.xlu0 %3521, %v3408
        %v3523 = vpop.permute.xlu0 %3522
        %3526 = vset.pattern.permute.xlu0 0
        %3527 = vperm.xlu0 %3526, %v3409
        %v3528 = vpop.permute.xlu0 %3527
        %3531 = vset.pattern.permute.xlu0 0
        %3532 = vperm.xlu0 %3531, %v3410
        %v3533 = vpop.permute.xlu0 %3532
        %3536 = vset.pattern.permute.xlu0 0
        %3537 = vperm.xlu0 %3536, %v3411
        %v3538 = vpop.permute.xlu0 %3537
        %v3540 = vsub.f32 %v3285, %v3463
        %v3541 = vsub.f32 %v3288, %v3468
        %v3542 = vsub.f32 %v3293, %v3473
        %v3543 = vsub.f32 %v3296, %v3478
        %v3544 = vsub.f32 %v3301, %v3483
        %v3545 = vsub.f32 %v3304, %v3488
        %v3546 = vsub.f32 %v3309, %v3493
        %v3547 = vsub.f32 %v3312, %v3498
        %v3548 = vsub.f32 %v3317, %v3503
        %v3549 = vsub.f32 %v3320, %v3508
        %v3550 = vsub.f32 %v3325, %v3513
        %v3551 = vsub.f32 %v3328, %v3518
        %v3552 = vsub.f32 %v3333, %v3523
        %v3553 = vsub.f32 %v3336, %v3528
        %v3554 = vsub.f32 %v3341, %v3533
        %v3555 = vsub.f32 %v3344, %v3538
        %v3556 = vmul.f32 %v3540, 1.442695
        %v3557 = vpow.pop %v3556
        %v3558 = vmul.f32 %v3541, 1.442695
        %v3559 = vpow.pop %v3558
        %v3560 = vmul.f32 %v3542, 1.442695
        %v3561 = vpow.pop %v3560
        %v3562 = vmul.f32 %v3543, 1.442695
        %v3563 = vpow.pop %v3562
        %v3564 = vmul.f32 %v3544, 1.442695
        %v3565 = vpow.pop %v3564
        %v3566 = vmul.f32 %v3545, 1.442695
        %v3567 = vpow.pop %v3566
        %v3568 = vmul.f32 %v3546, 1.442695
        %v3569 = vpow.pop %v3568
        %v3570 = vmul.f32 %v3547, 1.442695
        %v3571 = vpow.pop %v3570
        %v3572 = vmul.f32 %v3548, 1.442695
        %v3573 = vpow.pop %v3572
        %v3574 = vmul.f32 %v3549, 1.442695
        %v3575 = vpow.pop %v3574
        %v3576 = vmul.f32 %v3550, 1.442695
        %v3577 = vpow.pop %v3576
        %v3578 = vmul.f32 %v3551, 1.442695
        %v3579 = vpow.pop %v3578
        %v3580 = vmul.f32 %v3552, 1.442695
        %v3581 = vpow.pop %v3580
        %v3582 = vmul.f32 %v3553, 1.442695
        %v3583 = vpow.pop %v3582
        %v3584 = vmul.f32 %v3554, 1.442695
        %v3585 = vpow.pop %v3584
        %v3586 = vmul.f32 %v3555, 1.442695
        %v3587 = vpow.pop %v3586
        %s3588 = scalar_lea.vmem [#allocation3], 384
        %v3589 = vld [vmem:[%s3588] sm:$0xff]
        %v3590 = vld [vmem:[%s3588 + $0x8] sm:$0xff]
        %v3591 = vld [vmem:[%s3588 + $0x10] sm:$0xff]
        %v3592 = vld [vmem:[%s3588 + $0x18] sm:$0xff]
        %v3593 = vld [vmem:[%s3588 + $0x20] sm:$0xff]
        %v3594 = vld [vmem:[%s3588 + $0x28] sm:$0xff]
        %v3595 = vld [vmem:[%s3588 + $0x30] sm:$0xff]
        %v3596 = vld [vmem:[%s3588 + $0x38] sm:$0xff]
        %v3597 = vld [vmem:[%s3588 + $0x40] sm:$0xff]
        %v3598 = vld [vmem:[%s3588 + $0x48] sm:$0xff]
        %v3599 = vld [vmem:[%s3588 + $0x50] sm:$0xff]
        %v3600 = vld [vmem:[%s3588 + $0x58] sm:$0xff]
        %v3601 = vld [vmem:[%s3588 + $0x60] sm:$0xff]
        %v3602 = vld [vmem:[%s3588 + $0x68] sm:$0xff]
        %v3603 = vld [vmem:[%s3588 + $0x70] sm:$0xff]
        %v3604 = vld [vmem:[%s3588 + $0x78] sm:$0xff]
        %v3605 = vmul.f32 %v3429, %v3589
        %v3606 = vmul.f32 %v3431, %v3590
        %v3607 = vmul.f32 %v3433, %v3591
        %v3608 = vmul.f32 %v3435, %v3592
        %v3609 = vmul.f32 %v3437, %v3593
        %v3610 = vmul.f32 %v3439, %v3594
        %v3611 = vmul.f32 %v3441, %v3595
        %v3612 = vmul.f32 %v3443, %v3596
        %v3613 = vmul.f32 %v3445, %v3597
        %v3614 = vmul.f32 %v3447, %v3598
        %v3615 = vmul.f32 %v3449, %v3599
        %v3616 = vmul.f32 %v3451, %v3600
        %v3617 = vmul.f32 %v3453, %v3601
        %v3618 = vmul.f32 %v3455, %v3602
        %v3619 = vmul.f32 %v3457, %v3603
        %v3620 = vmul.f32 %v3459, %v3604
        %3621 = vadd.xlane.f32.xlu0 %v3557
        %v3622 = vpop.xlane.xlu0 %3621
        %3623 = vadd.xlane.f32.xlu0 %v3559
        %v3624 = vpop.xlane.xlu0 %3623
        %3625 = vadd.xlane.f32.xlu0 %v3561
        %v3626 = vpop.xlane.xlu0 %3625
        %3627 = vadd.xlane.f32.xlu0 %v3563
        %v3628 = vpop.xlane.xlu0 %3627
        %3629 = vadd.xlane.f32.xlu0 %v3565
        %v3630 = vpop.xlane.xlu0 %3629
        %3631 = vadd.xlane.f32.xlu0 %v3567
        %v3632 = vpop.xlane.xlu0 %3631
        %3633 = vadd.xlane.f32.xlu0 %v3569
        %v3634 = vpop.xlane.xlu0 %3633
        %3635 = vadd.xlane.f32.xlu0 %v3571
        %v3636 = vpop.xlane.xlu0 %3635
        %3637 = vadd.xlane.f32.xlu0 %v3573
        %v3638 = vpop.xlane.xlu0 %3637
        %3639 = vadd.xlane.f32.xlu0 %v3575
        %v3640 = vpop.xlane.xlu0 %3639
        %3641 = vadd.xlane.f32.xlu0 %v3577
        %v3642 = vpop.xlane.xlu0 %3641
        %3643 = vadd.xlane.f32.xlu0 %v3579
        %v3644 = vpop.xlane.xlu0 %3643
        %3645 = vadd.xlane.f32.xlu0 %v3581
        %v3646 = vpop.xlane.xlu0 %3645
        %3647 = vadd.xlane.f32.xlu0 %v3583
        %v3648 = vpop.xlane.xlu0 %3647
        %3649 = vadd.xlane.f32.xlu0 %v3585
        %v3650 = vpop.xlane.xlu0 %3649
        %3651 = vadd.xlane.f32.xlu0 %v3587
        %v3652 = vpop.xlane.xlu0 %3651
        %v3653 = vadd.f32 %v3605, %v3622
        %v3654 = vadd.f32 %v3606, %v3624
        %v3655 = vadd.f32 %v3607, %v3626
        %v3656 = vadd.f32 %v3608, %v3628
        %v3657 = vadd.f32 %v3609, %v3630
        %v3658 = vadd.f32 %v3610, %v3632
        %v3659 = vadd.f32 %v3611, %v3634
        %v3660 = vadd.f32 %v3612, %v3636
        %v3661 = vadd.f32 %v3613, %v3638
        %v3662 = vadd.f32 %v3614, %v3640
        %v3663 = vadd.f32 %v3615, %v3642
        %v3664 = vadd.f32 %v3616, %v3644
        %v3665 = vadd.f32 %v3617, %v3646
        %v3666 = vadd.f32 %v3618, %v3648
        %v3667 = vadd.f32 %v3619, %v3650
        %v3668 = vadd.f32 %v3620, %v3652
        %3669 = vst.msk [vmem:[%s3588] sm:$0xff] %vm1230, %v3653
        %3670 = vst.msk [vmem:[%s3588 + $0x8] sm:$0xff] %vm1230, %v3654
        %3671 = vst.msk [vmem:[%s3588 + $0x10] sm:$0xff] %vm1230, %v3655
        %3672 = vst.msk [vmem:[%s3588 + $0x18] sm:$0xff] %vm1230, %v3656
        %3673 = vst.msk [vmem:[%s3588 + $0x20] sm:$0xff] %vm1230, %v3657
        %3674 = vst.msk [vmem:[%s3588 + $0x28] sm:$0xff] %vm1230, %v3658
        %3675 = vst.msk [vmem:[%s3588 + $0x30] sm:$0xff] %vm1230, %v3659
        %3676 = vst.msk [vmem:[%s3588 + $0x38] sm:$0xff] %vm1230, %v3660
        %3677 = vst.msk [vmem:[%s3588 + $0x40] sm:$0xff] %vm1230, %v3661
        %3678 = vst.msk [vmem:[%s3588 + $0x48] sm:$0xff] %vm1230, %v3662
        %3679 = vst.msk [vmem:[%s3588 + $0x50] sm:$0xff] %vm1230, %v3663
        %3680 = vst.msk [vmem:[%s3588 + $0x58] sm:$0xff] %vm1230, %v3664
        %3681 = vst.msk [vmem:[%s3588 + $0x60] sm:$0xff] %vm1230, %v3665
        %3682 = vst.msk [vmem:[%s3588 + $0x68] sm:$0xff] %vm1230, %v3666
        %3683 = vst.msk [vmem:[%s3588 + $0x70] sm:$0xff] %vm1230, %v3667
        %3684 = vst.msk [vmem:[%s3588 + $0x78] sm:$0xff] %vm1230, %v3668
        %s3685 = scalar_lea.vmem [#allocation4], 384
        %v3686 = vld [vmem:[%s3685] sm:$0xff]
        %v3687 = vld [vmem:[%s3685 + $0x8] sm:$0xff]
        %v3688 = vld [vmem:[%s3685 + $0x10] sm:$0xff]
        %v3689 = vld [vmem:[%s3685 + $0x18] sm:$0xff]
        %v3690 = vld [vmem:[%s3685 + $0x20] sm:$0xff]
        %v3691 = vld [vmem:[%s3685 + $0x28] sm:$0xff]
        %v3692 = vld [vmem:[%s3685 + $0x30] sm:$0xff]
        %v3693 = vld [vmem:[%s3685 + $0x38] sm:$0xff]
        %v3694 = vld [vmem:[%s3685 + $0x40] sm:$0xff]
        %v3695 = vld [vmem:[%s3685 + $0x48] sm:$0xff]
        %v3696 = vld [vmem:[%s3685 + $0x50] sm:$0xff]
        %v3697 = vld [vmem:[%s3685 + $0x58] sm:$0xff]
        %v3698 = vld [vmem:[%s3685 + $0x60] sm:$0xff]
        %v3699 = vld [vmem:[%s3685 + $0x68] sm:$0xff]
        %v3700 = vld [vmem:[%s3685 + $0x70] sm:$0xff]
        %v3701 = vld [vmem:[%s3685 + $0x78] sm:$0xff]
        %3703 = vset.pattern.permute.xlu0 0
        %3704 = vperm.xlu0 %3703, %v3429
        %v3705 = vpop.permute.xlu0 %3704
        %3708 = vset.pattern.permute.xlu0 0
        %3709 = vperm.xlu0 %3708, %v3431
        %v3710 = vpop.permute.xlu0 %3709
        %3713 = vset.pattern.permute.xlu0 0
        %3714 = vperm.xlu0 %3713, %v3433
        %v3715 = vpop.permute.xlu0 %3714
        %3718 = vset.pattern.permute.xlu0 0
        %3719 = vperm.xlu0 %3718, %v3435
        %v3720 = vpop.permute.xlu0 %3719
        %3723 = vset.pattern.permute.xlu0 0
        %3724 = vperm.xlu0 %3723, %v3437
        %v3725 = vpop.permute.xlu0 %3724
        %3728 = vset.pattern.permute.xlu0 0
        %3729 = vperm.xlu0 %3728, %v3439
        %v3730 = vpop.permute.xlu0 %3729
        %3733 = vset.pattern.permute.xlu0 0
        %3734 = vperm.xlu0 %3733, %v3441
        %v3735 = vpop.permute.xlu0 %3734
        %3738 = vset.pattern.permute.xlu0 0
        %3739 = vperm.xlu0 %3738, %v3443
        %v3740 = vpop.permute.xlu0 %3739
        %3743 = vset.pattern.permute.xlu0 0
        %3744 = vperm.xlu0 %3743, %v3445
        %v3745 = vpop.permute.xlu0 %3744
        %3748 = vset.pattern.permute.xlu0 0
        %3749 = vperm.xlu0 %3748, %v3447
        %v3750 = vpop.permute.xlu0 %3749
        %3753 = vset.pattern.permute.xlu0 0
        %3754 = vperm.xlu0 %3753, %v3449
        %v3755 = vpop.permute.xlu0 %3754
        %3758 = vset.pattern.permute.xlu0 0
        %3759 = vperm.xlu0 %3758, %v3451
        %v3760 = vpop.permute.xlu0 %3759
        %3763 = vset.pattern.permute.xlu0 0
        %3764 = vperm.xlu0 %3763, %v3453
        %v3765 = vpop.permute.xlu0 %3764
        %3768 = vset.pattern.permute.xlu0 0
        %3769 = vperm.xlu0 %3768, %v3455
        %v3770 = vpop.permute.xlu0 %3769
        %3773 = vset.pattern.permute.xlu0 0
        %3774 = vperm.xlu0 %3773, %v3457
        %v3775 = vpop.permute.xlu0 %3774
        %3778 = vset.pattern.permute.xlu0 0
        %3779 = vperm.xlu0 %3778, %v3459
        %v3780 = vpop.permute.xlu0 %3779
        %v3782 = vmul.f32 %v3705, %v3686
        %v3783 = vmul.f32 %v3710, %v3687
        %v3784 = vmul.f32 %v3715, %v3688
        %v3785 = vmul.f32 %v3720, %v3689
        %v3786 = vmul.f32 %v3725, %v3690
        %v3787 = vmul.f32 %v3730, %v3691
        %v3788 = vmul.f32 %v3735, %v3692
        %v3789 = vmul.f32 %v3740, %v3693
        %v3790 = vmul.f32 %v3745, %v3694
        %v3791 = vmul.f32 %v3750, %v3695
        %v3792 = vmul.f32 %v3755, %v3696
        %v3793 = vmul.f32 %v3760, %v3697
        %v3794 = vmul.f32 %v3765, %v3698
        %v3795 = vmul.f32 %v3770, %v3699
        %v3796 = vmul.f32 %v3775, %v3700
        %v3797 = vmul.f32 %v3780, %v3701
        %v3798 = vpack.c.bf16 %v3559, %v3557
        %v3799 = vpack.c.bf16 %v3563, %v3561
        %v3800 = vpack.c.bf16 %v3567, %v3565
        %v3801 = vpack.c.bf16 %v3571, %v3569
        %v3802 = vpack.c.bf16 %v3575, %v3573
        %v3803 = vpack.c.bf16 %v3579, %v3577
        %v3804 = vpack.c.bf16 %v3583, %v3581
        %v3805 = vpack.c.bf16 %v3587, %v3585
        %3806 = vrot.lane.b32.xlu0 %v1399, 80
        %v3807 = vpop.permute.xlu0 %3806
        %3808 = vrot.lane.b32.xlu0 %v1400, 80
        %v3809 = vpop.permute.xlu0 %3808
        %3810 = vrot.lane.b32.xlu0 %v1401, 80
        %v3811 = vpop.permute.xlu0 %3810
        %3812 = vrot.lane.b32.xlu0 %v1402, 80
        %v3813 = vpop.permute.xlu0 %3812
        %3814 = vrot.lane.b32.xlu0 %v1403, 80
        %v3815 = vpop.permute.xlu0 %3814
        %3816 = vrot.lane.b32.xlu0 %v1404, 80
        %v3817 = vpop.permute.xlu0 %3816
        %3818 = vrot.lane.b32.xlu0 %v1405, 80
        %v3819 = vpop.permute.xlu0 %3818
        %3820 = vrot.lane.b32.xlu0 %v1406, 80
        %v3821 = vpop.permute.xlu0 %3820
        %3830 = vmatprep.subr.bf16.mxu0 0
        %3831 = vmatpush1.bf16.msra.mxu0 %v3821
        %3832 = vmatprep.subr.bf16.mxu0 0
        %3833 = vmatpush1.bf16.msra.mxu0 %v3819
        %3834 = vmatprep.subr.bf16.mxu0 0
        %3835 = vmatpush1.bf16.msra.mxu0 %v3817
        %3836 = vmatprep.subr.bf16.mxu0 0
        %3837 = vmatpush1.bf16.msra.mxu0 %v3815
        %3838 = vmatprep.subr.bf16.mxu0 0
        %3839 = vmatpush1.bf16.msra.mxu0 %v3813
        %3840 = vmatprep.subr.bf16.mxu0 0
        %3841 = vmatpush1.bf16.msra.mxu0 %v3811
        %3842 = vmatprep.subr.bf16.mxu0 0
        %3843 = vmatpush1.bf16.msra.mxu0 %v3809
        %3844 = vmatprep.subr.bf16.mxu0 0
        %3845 = vmatpush1.bf16.msra.mxu0 %v3807
        %3846 = vmatprep.subr.bf16.mxu0 0
        %3847 = vmatpush2.bf16.msra.mxu0 0
        %3848 = vmatprep.subr.bf16.mxu0 0
        %3849 = vmatpush2.bf16.msra.mxu0 0
        %3850 = vmatprep.subr.bf16.mxu0 0
        %3851 = vmatpush2.bf16.msra.mxu0 0
        %3852 = vmatprep.subr.bf16.mxu0 0
        %3853 = vmatpush2.bf16.msra.mxu0 0
        %3854 = vmatprep.subr.bf16.mxu0 0
        %3855 = vmatpush2.bf16.msra.mxu0 0
        %3856 = vmatprep.subr.bf16.mxu0 0
        %3857 = vmatpush2.bf16.msra.mxu0 0
        %3858 = vmatprep.subr.bf16.mxu0 0
        %3859 = vmatpush2.bf16.msra.mxu0 0
        %3860 = vmatprep.subr.bf16.mxu0 0
        %3861 = vmatpush2.bf16.msra.mxu0 0
        %3862 = vmatprep.mubr.bf16.mxu0 0
        %3863 = vmatmul.mubr.bf16.gmra.mxu0 %v3798
        %v3864 = vpop.f32.mrf.mxu0
        %v3865 = vadd.f32 0.0, %v3864
        %v3866 = vpop.f32.mrf.mxu0
        %v3867 = vpop.f32.mrf.mxu0
        %v3868 = vadd.f32 0.0, %v3867
        %v3869 = vpop.f32.mrf.mxu0
        %3870 = vmatprep.mubr.bf16.mxu0 0
        %3871 = vmatmul.mubr.bf16.gmra.mxu0 %v3799
        %v3872 = vpop.f32.mrf.mxu0
        %v3873 = vadd.f32 0.0, %v3872
        %v3874 = vpop.f32.mrf.mxu0
        %v3875 = vpop.f32.mrf.mxu0
        %v3876 = vadd.f32 0.0, %v3875
        %v3877 = vpop.f32.mrf.mxu0
        %3878 = vmatprep.mubr.bf16.mxu0 0
        %3879 = vmatmul.mubr.bf16.gmra.mxu0 %v3800
        %v3880 = vpop.f32.mrf.mxu0
        %v3881 = vadd.f32 0.0, %v3880
        %v3882 = vpop.f32.mrf.mxu0
        %v3883 = vpop.f32.mrf.mxu0
        %v3884 = vadd.f32 0.0, %v3883
        %v3885 = vpop.f32.mrf.mxu0
        %3886 = vmatprep.mubr.bf16.mxu0 0
        %3887 = vmatmul.mubr.bf16.gmra.mxu0 %v3801
        %v3888 = vpop.f32.mrf.mxu0
        %v3889 = vadd.f32 0.0, %v3888
        %v3890 = vpop.f32.mrf.mxu0
        %v3891 = vpop.f32.mrf.mxu0
        %v3892 = vadd.f32 0.0, %v3891
        %v3893 = vpop.f32.mrf.mxu0
        %3894 = vmatprep.mubr.bf16.mxu0 0
        %3895 = vmatmul.mubr.bf16.gmra.mxu0 %v3802
        %v3896 = vpop.f32.mrf.mxu0
        %v3897 = vadd.f32 0.0, %v3896
        %v3898 = vpop.f32.mrf.mxu0
        %v3899 = vpop.f32.mrf.mxu0
        %v3900 = vadd.f32 0.0, %v3899
        %v3901 = vpop.f32.mrf.mxu0
        %3902 = vmatprep.mubr.bf16.mxu0 0
        %3903 = vmatmul.mubr.bf16.gmra.mxu0 %v3803
        %v3904 = vpop.f32.mrf.mxu0
        %v3905 = vadd.f32 0.0, %v3904
        %v3906 = vpop.f32.mrf.mxu0
        %v3907 = vpop.f32.mrf.mxu0
        %v3908 = vadd.f32 0.0, %v3907
        %v3909 = vpop.f32.mrf.mxu0
        %3910 = vmatprep.mubr.bf16.mxu0 0
        %3911 = vmatmul.mubr.bf16.gmra.mxu0 %v3804
        %v3912 = vpop.f32.mrf.mxu0
        %v3913 = vadd.f32 0.0, %v3912
        %v3914 = vpop.f32.mrf.mxu0
        %v3915 = vpop.f32.mrf.mxu0
        %v3916 = vadd.f32 0.0, %v3915
        %v3917 = vpop.f32.mrf.mxu0
        %3918 = vmatprep.mubr.bf16.mxu0 0
        %3919 = vmatmul.mubr.bf16.gmra.mxu0 %v3805
        %v3920 = vpop.f32.mrf.mxu0
        %v3921 = vadd.f32 0.0, %v3920
        %v3922 = vpop.f32.mrf.mxu0
        %v3923 = vpop.f32.mrf.mxu0
        %v3924 = vadd.f32 0.0, %v3923
        %v3925 = vpop.f32.mrf.mxu0
        %3926 = vdwg.mxu0
        %v3927 = vadd.f32 %v3782, %v3865
        %v3928 = vadd.f32 %v3783, %v3868
        %v3929 = vadd.f32 %v3784, %v3873
        %v3930 = vadd.f32 %v3785, %v3876
        %v3931 = vadd.f32 %v3786, %v3881
        %v3932 = vadd.f32 %v3787, %v3884
        %v3933 = vadd.f32 %v3788, %v3889
        %v3934 = vadd.f32 %v3789, %v3892
        %v3935 = vadd.f32 %v3790, %v3897
        %v3936 = vadd.f32 %v3791, %v3900
        %v3937 = vadd.f32 %v3792, %v3905
        %v3938 = vadd.f32 %v3793, %v3908
        %v3939 = vadd.f32 %v3794, %v3913
        %v3940 = vadd.f32 %v3795, %v3916
        %v3941 = vadd.f32 %v3796, %v3921
        %v3942 = vadd.f32 %v3797, %v3924
        %3943 = vst.msk [vmem:[%s3685] sm:$0xff] %vm764, %v3927
        %3944 = vst.msk [vmem:[%s3685 + $0x8] sm:$0xff] %vm764, %v3928
        %3945 = vst.msk [vmem:[%s3685 + $0x10] sm:$0xff] %vm764, %v3929
        %3946 = vst.msk [vmem:[%s3685 + $0x18] sm:$0xff] %vm764, %v3930
        %3947 = vst.msk [vmem:[%s3685 + $0x20] sm:$0xff] %vm764, %v3931
        %3948 = vst.msk [vmem:[%s3685 + $0x28] sm:$0xff] %vm764, %v3932
        %3949 = vst.msk [vmem:[%s3685 + $0x30] sm:$0xff] %vm764, %v3933
        %3950 = vst.msk [vmem:[%s3685 + $0x38] sm:$0xff] %vm764, %v3934
        %3951 = vst.msk [vmem:[%s3685 + $0x40] sm:$0xff] %vm764, %v3935
        %3952 = vst.msk [vmem:[%s3685 + $0x48] sm:$0xff] %vm764, %v3936
        %3953 = vst.msk [vmem:[%s3685 + $0x50] sm:$0xff] %vm764, %v3937
        %3954 = vst.msk [vmem:[%s3685 + $0x58] sm:$0xff] %vm764, %v3938
        %3955 = vst.msk [vmem:[%s3685 + $0x60] sm:$0xff] %vm764, %v3939
        %3956 = vst.msk [vmem:[%s3685 + $0x68] sm:$0xff] %vm764, %v3940
        %3957 = vst.msk [vmem:[%s3685 + $0x70] sm:$0xff] %vm764, %v3941
        %3958 = vst.msk [vmem:[%s3685 + $0x78] sm:$0xff] %vm764, %v3942
        %3959 = vst.msk [vmem:[%s3347] sm:$0xff] %vm1230, %v3396
        %3960 = vst.msk [vmem:[%s3347 + $0x8] sm:$0xff] %vm1230, %v3397
        %3961 = vst.msk [vmem:[%s3347 + $0x10] sm:$0xff] %vm1230, %v3398
        %3962 = vst.msk [vmem:[%s3347 + $0x18] sm:$0xff] %vm1230, %v3399
        %3963 = vst.msk [vmem:[%s3347 + $0x20] sm:$0xff] %vm1230, %v3400
        %3964 = vst.msk [vmem:[%s3347 + $0x28] sm:$0xff] %vm1230, %v3401
        %3965 = vst.msk [vmem:[%s3347 + $0x30] sm:$0xff] %vm1230, %v3402
        %3966 = vst.msk [vmem:[%s3347 + $0x38] sm:$0xff] %vm1230, %v3403
        %3967 = vst.msk [vmem:[%s3347 + $0x40] sm:$0xff] %vm1230, %v3404
        %3968 = vst.msk [vmem:[%s3347 + $0x48] sm:$0xff] %vm1230, %v3405
        %3969 = vst.msk [vmem:[%s3347 + $0x50] sm:$0xff] %vm1230, %v3406
        %3970 = vst.msk [vmem:[%s3347 + $0x58] sm:$0xff] %vm1230, %v3407
        %3971 = vst.msk [vmem:[%s3347 + $0x60] sm:$0xff] %vm1230, %v3408
        %3972 = vst.msk [vmem:[%s3347 + $0x68] sm:$0xff] %vm1230, %v3409
        %3973 = vst.msk [vmem:[%s3347 + $0x70] sm:$0xff] %vm1230, %v3410
        %3974 = vst.msk [vmem:[%s3347 + $0x78] sm:$0xff] %vm1230, %v3411
      $region48: #{mass_attention_forward.3} parent=39 // pred_fallthru
        _
      %p3975 = scmp.eq.s32.totalorder %s23, 2
      // Predicated region
      $region49: #{mass_attention_forward.3} parent=39 // pred_check
        %p3976 = pneg %p3975
      $region50: #{mass_attention_forward.3} parent=39 // pred_check_branch
        %3978 = sbr.rel (%p3976) target = $region52
      $region51: #{mass_attention_forward.3} parent=39 // pred_region
        %v3979 = vld [vmem:[%s3] sm:$0xf]
        %v3980 = vld [vmem:[%s3 + $0x4] sm:$0xf]
        %v3981 = vld [vmem:[%s3 + $0x8] sm:$0xf]
        %v3982 = vld [vmem:[%s3 + $0xc] sm:$0xf]
        %v3983 = vld [vmem:[%s3 + $0x10] sm:$0xf]
        %v3984 = vld [vmem:[%s3 + $0x14] sm:$0xf]
        %v3985 = vld [vmem:[%s3 + $0x18] sm:$0xf]
        %v3986 = vld [vmem:[%s3 + $0x1c] sm:$0xf]
        %v3987 = vld [vmem:[%s4] sm:$0x1]
        %v3988 = vld [vmem:[#allocation4] sm:$0xff]
        %v3989 = vld [vmem:[#allocation4 + $0x8] sm:$0xff]
        %v3990 = vld [vmem:[#allocation4 + $0x10] sm:$0xff]
        %v3991 = vld [vmem:[#allocation4 + $0x18] sm:$0xff]
        %v3992 = vld [vmem:[#allocation4 + $0x20] sm:$0xff]
        %v3993 = vld [vmem:[#allocation4 + $0x28] sm:$0xff]
        %v3994 = vld [vmem:[#allocation4 + $0x30] sm:$0xff]
        %v3995 = vld [vmem:[#allocation4 + $0x38] sm:$0xff]
        %v3996 = vld [vmem:[#allocation4 + $0x40] sm:$0xff]
        %v3997 = vld [vmem:[#allocation4 + $0x48] sm:$0xff]
        %v3998 = vld [vmem:[#allocation4 + $0x50] sm:$0xff]
        %v3999 = vld [vmem:[#allocation4 + $0x58] sm:$0xff]
        %v4000 = vld [vmem:[#allocation4 + $0x60] sm:$0xff]
        %v4001 = vld [vmem:[#allocation4 + $0x68] sm:$0xff]
        %v4002 = vld [vmem:[#allocation4 + $0x70] sm:$0xff]
        %v4003 = vld [vmem:[#allocation4 + $0x78] sm:$0xff]
        %v4004 = vld [vmem:[#allocation3] sm:$0xff]
        %v4005 = vld [vmem:[#allocation3 + $0x8] sm:$0xff]
        %v4006 = vld [vmem:[#allocation3 + $0x10] sm:$0xff]
        %v4007 = vld [vmem:[#allocation3 + $0x18] sm:$0xff]
        %v4008 = vld [vmem:[#allocation3 + $0x20] sm:$0xff]
        %v4009 = vld [vmem:[#allocation3 + $0x28] sm:$0xff]
        %v4010 = vld [vmem:[#allocation3 + $0x30] sm:$0xff]
        %v4011 = vld [vmem:[#allocation3 + $0x38] sm:$0xff]
        %v4012 = vld [vmem:[#allocation3 + $0x40] sm:$0xff]
        %v4013 = vld [vmem:[#allocation3 + $0x48] sm:$0xff]
        %v4014 = vld [vmem:[#allocation3 + $0x50] sm:$0xff]
        %v4015 = vld [vmem:[#allocation3 + $0x58] sm:$0xff]
        %v4016 = vld [vmem:[#allocation3 + $0x60] sm:$0xff]
        %v4017 = vld [vmem:[#allocation3 + $0x68] sm:$0xff]
        %v4018 = vld [vmem:[#allocation3 + $0x70] sm:$0xff]
        %v4019 = vld [vmem:[#allocation3 + $0x78] sm:$0xff]
        %v4020 = vrcp.pop %v4004
        %v4021 = vrcp.pop %v4005
        %v4022 = vrcp.pop %v4006
        %v4023 = vrcp.pop %v4007
        %v4024 = vrcp.pop %v4008
        %v4025 = vrcp.pop %v4009
        %v4026 = vrcp.pop %v4010
        %v4027 = vrcp.pop %v4011
        %v4028 = vrcp.pop %v4012
        %v4029 = vrcp.pop %v4013
        %v4030 = vrcp.pop %v4014
        %v4031 = vrcp.pop %v4015
        %v4032 = vrcp.pop %v4016
        %v4033 = vrcp.pop %v4017
        %v4034 = vrcp.pop %v4018
        %v4035 = vrcp.pop %v4019
        %4037 = vset.pattern.permute.xlu0 0
        %4038 = vperm.xlu0 %4037, %v4020
        %v4039 = vpop.permute.xlu0 %4038
        %4042 = vset.pattern.permute.xlu0 0
        %4043 = vperm.xlu0 %4042, %v4021
        %v4044 = vpop.permute.xlu0 %4043
        %4047 = vset.pattern.permute.xlu0 0
        %4048 = vperm.xlu0 %4047, %v4022
        %v4049 = vpop.permute.xlu0 %4048
        %4052 = vset.pattern.permute.xlu0 0
        %4053 = vperm.xlu0 %4052, %v4023
        %v4054 = vpop.permute.xlu0 %4053
        %4057 = vset.pattern.permute.xlu0 0
        %4058 = vperm.xlu0 %4057, %v4024
        %v4059 = vpop.permute.xlu0 %4058
        %4062 = vset.pattern.permute.xlu0 0
        %4063 = vperm.xlu0 %4062, %v4025
        %v4064 = vpop.permute.xlu0 %4063
        %4067 = vset.pattern.permute.xlu0 0
        %4068 = vperm.xlu0 %4067, %v4026
        %v4069 = vpop.permute.xlu0 %4068
        %4072 = vset.pattern.permute.xlu0 0
        %4073 = vperm.xlu0 %4072, %v4027
        %v4074 = vpop.permute.xlu0 %4073
        %4077 = vset.pattern.permute.xlu0 0
        %4078 = vperm.xlu0 %4077, %v4028
        %v4079 = vpop.permute.xlu0 %4078
        %4082 = vset.pattern.permute.xlu0 0
        %4083 = vperm.xlu0 %4082, %v4029
        %v4084 = vpop.permute.xlu0 %4083
        %4087 = vset.pattern.permute.xlu0 0
        %4088 = vperm.xlu0 %4087, %v4030
        %v4089 = vpop.permute.xlu0 %4088
        %4092 = vset.pattern.permute.xlu0 0
        %4093 = vperm.xlu0 %4092, %v4031
        %v4094 = vpop.permute.xlu0 %4093
        %4097 = vset.pattern.permute.xlu0 0
        %4098 = vperm.xlu0 %4097, %v4032
        %v4099 = vpop.permute.xlu0 %4098
        %4102 = vset.pattern.permute.xlu0 0
        %4103 = vperm.xlu0 %4102, %v4033
        %v4104 = vpop.permute.xlu0 %4103
        %4107 = vset.pattern.permute.xlu0 0
        %4108 = vperm.xlu0 %4107, %v4034
        %v4109 = vpop.permute.xlu0 %4108
        %4112 = vset.pattern.permute.xlu0 0
        %4113 = vperm.xlu0 %4112, %v4035
        %v4114 = vpop.permute.xlu0 %4113
        %v4116 = vmul.f32 %v3988, %v4039
        %v4117 = vmul.f32 %v3989, %v4044
        %v4118 = vmul.f32 %v3990, %v4049
        %v4119 = vmul.f32 %v3991, %v4054
        %v4120 = vmul.f32 %v3992, %v4059
        %v4121 = vmul.f32 %v3993, %v4064
        %v4122 = vmul.f32 %v3994, %v4069
        %v4123 = vmul.f32 %v3995, %v4074
        %v4124 = vmul.f32 %v3996, %v4079
        %v4125 = vmul.f32 %v3997, %v4084
        %v4126 = vmul.f32 %v3998, %v4089
        %v4127 = vmul.f32 %v3999, %v4094
        %v4128 = vmul.f32 %v4000, %v4099
        %v4129 = vmul.f32 %v4001, %v4104
        %v4130 = vmul.f32 %v4002, %v4109
        %v4131 = vmul.f32 %v4003, %v4114
        %v4132 = vpack.c.bf16 %v4117, %v4116
        %v4133 = vpack.c.bf16 %v4119, %v4118
        %v4134 = vpack.c.bf16 %v4121, %v4120
        %v4135 = vpack.c.bf16 %v4123, %v4122
        %v4136 = vpack.c.bf16 %v4125, %v4124
        %v4137 = vpack.c.bf16 %v4127, %v4126
        %v4138 = vpack.c.bf16 %v4129, %v4128
        %v4139 = vpack.c.bf16 %v4131, %v4130
        %v4142 = vunpack.c.l.b16 %v3979
        %v4143 = vunpack.c.l.b16 %v3980
        %v4144 = vpack.c.b16 %v4143, %v4142
        %vm4146 = vcmask 130048
        %v4148 = vsel %vm4146, %v4132, 0
        %v4151 = vsel %vm4146, %v4133, 0
        %v4154 = vsel %vm4146, %v4134, 0
        %v4157 = vsel %vm4146, %v4135, 0
        %v4160 = vsel %vm4146, %v4136, 0
        %v4163 = vsel %vm4146, %v4137, 0
        %v4166 = vsel %vm4146, %v4138, 0
        %v4169 = vsel %vm4146, %v4139, 0
        %4171 = vmatprep.subr.bf16.mxu0 0
        %4172 = vmatpush1.bf16.msra.mxu0 0
        %4173 = vmatprep.subr.bf16.mxu0 0
        %4174 = vmatpush1.bf16.msra.mxu0 0
        %4175 = vmatprep.subr.bf16.mxu0 0
        %4176 = vmatpush1.bf16.msra.mxu0 0
        %4177 = vmatprep.subr.bf16.mxu0 0
        %4178 = vmatpush1.bf16.msra.mxu0 0
        %4179 = vmatprep.subr.bf16.mxu0 0
        %4180 = vmatpush1.bf16.msra.mxu0 0
        %4181 = vmatprep.subr.bf16.mxu0 0
        %4182 = vmatpush1.bf16.msra.mxu0 0
        %4183 = vmatprep.subr.bf16.mxu0 0
        %4184 = vmatpush1.bf16.msra.mxu0 0
        %4185 = vmatprep.subr.bf16.mxu0 0
        %4186 = vmatpush1.bf16.msra.mxu0 %v4144
        %4187 = vmatprep.subr.bf16.mxu0 0
        %4188 = vmatpush2.bf16.msra.mxu0 0
        %4189 = vmatprep.subr.bf16.mxu0 0
        %4190 = vmatpush2.bf16.msra.mxu0 0
        %4191 = vmatprep.subr.bf16.mxu0 0
        %4192 = vmatpush2.bf16.msra.mxu0 0
        %4193 = vmatprep.subr.bf16.mxu0 0
        %4194 = vmatpush2.bf16.msra.mxu0 0
        %4195 = vmatprep.subr.bf16.mxu0 0
        %4196 = vmatpush2.bf16.msra.mxu0 0
        %4197 = vmatprep.subr.bf16.mxu0 0
        %4198 = vmatpush2.bf16.msra.mxu0 0
        %4199 = vmatprep.subr.bf16.mxu0 0
        %4200 = vmatpush2.bf16.msra.mxu0 0
        %4201 = vmatprep.subr.bf16.mxu0 0
        %4202 = vmatpush2.bf16.msra.mxu0 0
        %4203 = vmatprep.mubr.bf16.mxu0 0
        %4204 = vmatmul.mubr.bf16.gmra.mxu0 %v4148
        %v4205 = vpop.f32.mrf.mxu0
        %v4206 = vadd.f32 0.0, %v4205
        %v4207 = vpop.f32.mrf.mxu0
        %v4208 = vpop.f32.mrf.mxu0
        %v4209 = vadd.f32 0.0, %v4208
        %v4210 = vpop.f32.mrf.mxu0
        %4211 = vmatprep.mubr.bf16.mxu0 0
        %4212 = vmatmul.mubr.bf16.gmra.mxu0 %v4151
        %v4213 = vpop.f32.mrf.mxu0
        %v4214 = vadd.f32 0.0, %v4213
        %v4215 = vpop.f32.mrf.mxu0
        %v4216 = vpop.f32.mrf.mxu0
        %v4217 = vadd.f32 0.0, %v4216
        %v4218 = vpop.f32.mrf.mxu0
        %4219 = vmatprep.mubr.bf16.mxu0 0
        %4220 = vmatmul.mubr.bf16.gmra.mxu0 %v4154
        %v4221 = vpop.f32.mrf.mxu0
        %v4222 = vadd.f32 0.0, %v4221
        %v4223 = vpop.f32.mrf.mxu0
        %v4224 = vpop.f32.mrf.mxu0
        %v4225 = vadd.f32 0.0, %v4224
        %v4226 = vpop.f32.mrf.mxu0
        %4227 = vmatprep.mubr.bf16.mxu0 0
        %4228 = vmatmul.mubr.bf16.gmra.mxu0 %v4157
        %v4229 = vpop.f32.mrf.mxu0
        %v4230 = vadd.f32 0.0, %v4229
        %v4231 = vpop.f32.mrf.mxu0
        %v4232 = vpop.f32.mrf.mxu0
        %v4233 = vadd.f32 0.0, %v4232
        %v4234 = vpop.f32.mrf.mxu0
        %4235 = vmatprep.mubr.bf16.mxu0 0
        %4236 = vmatmul.mubr.bf16.gmra.mxu0 %v4160
        %v4237 = vpop.f32.mrf.mxu0
        %v4238 = vadd.f32 0.0, %v4237
        %v4239 = vpop.f32.mrf.mxu0
        %v4240 = vpop.f32.mrf.mxu0
        %v4241 = vadd.f32 0.0, %v4240
        %v4242 = vpop.f32.mrf.mxu0
        %4243 = vmatprep.mubr.bf16.mxu0 0
        %4244 = vmatmul.mubr.bf16.gmra.mxu0 %v4163
        %v4245 = vpop.f32.mrf.mxu0
        %v4246 = vadd.f32 0.0, %v4245
        %v4247 = vpop.f32.mrf.mxu0
        %v4248 = vpop.f32.mrf.mxu0
        %v4249 = vadd.f32 0.0, %v4248
        %v4250 = vpop.f32.mrf.mxu0
        %4251 = vmatprep.mubr.bf16.mxu0 0
        %4252 = vmatmul.mubr.bf16.gmra.mxu0 %v4166
        %v4253 = vpop.f32.mrf.mxu0
        %v4254 = vadd.f32 0.0, %v4253
        %v4255 = vpop.f32.mrf.mxu0
        %v4256 = vpop.f32.mrf.mxu0
        %v4257 = vadd.f32 0.0, %v4256
        %v4258 = vpop.f32.mrf.mxu0
        %4259 = vmatprep.mubr.bf16.mxu0 0
        %4260 = vmatmul.mubr.bf16.gmra.mxu0 %v4169
        %v4261 = vpop.f32.mrf.mxu0
        %v4262 = vadd.f32 0.0, %v4261
        %v4263 = vpop.f32.mrf.mxu0
        %v4264 = vpop.f32.mrf.mxu0
        %v4265 = vadd.f32 0.0, %v4264
        %v4266 = vpop.f32.mrf.mxu0
        %4267 = vdwg.mxu0
        %v4269 = vlaneseq
        %v4270 = vshrl.u32 %v4269, 7
        %v4271 = vsub.s32 0, %v4270
        %v4272 = vrot.slane %v3987, %v4271
        %v4274 = vadd.f32 %v4272, %v4206
        %v4275 = vadd.f32 %v4272, %v4209
        %v4276 = vadd.f32 %v4272, %v4214
        %v4277 = vadd.f32 %v4272, %v4217
        %v4278 = vadd.f32 %v4272, %v4222
        %v4279 = vadd.f32 %v4272, %v4225
        %v4280 = vadd.f32 %v4272, %v4230
        %v4281 = vadd.f32 %v4272, %v4233
        %v4282 = vadd.f32 %v4272, %v4238
        %v4283 = vadd.f32 %v4272, %v4241
        %v4284 = vadd.f32 %v4272, %v4246
        %v4285 = vadd.f32 %v4272, %v4249
        %v4286 = vadd.f32 %v4272, %v4254
        %v4287 = vadd.f32 %v4272, %v4257
        %v4288 = vadd.f32 %v4272, %v4262
        %v4289 = vadd.f32 %v4272, %v4265
        %s4290 = scalar_lea.vmem [#allocation4], 128
        %v4291 = vld [vmem:[%s4290] sm:$0xff]
        %v4292 = vld [vmem:[%s4290 + $0x8] sm:$0xff]
        %v4293 = vld [vmem:[%s4290 + $0x10] sm:$0xff]
        %v4294 = vld [vmem:[%s4290 + $0x18] sm:$0xff]
        %v4295 = vld [vmem:[%s4290 + $0x20] sm:$0xff]
        %v4296 = vld [vmem:[%s4290 + $0x28] sm:$0xff]
        %v4297 = vld [vmem:[%s4290 + $0x30] sm:$0xff]
        %v4298 = vld [vmem:[%s4290 + $0x38] sm:$0xff]
        %v4299 = vld [vmem:[%s4290 + $0x40] sm:$0xff]
        %v4300 = vld [vmem:[%s4290 + $0x48] sm:$0xff]
        %v4301 = vld [vmem:[%s4290 + $0x50] sm:$0xff]
        %v4302 = vld [vmem:[%s4290 + $0x58] sm:$0xff]
        %v4303 = vld [vmem:[%s4290 + $0x60] sm:$0xff]
        %v4304 = vld [vmem:[%s4290 + $0x68] sm:$0xff]
        %v4305 = vld [vmem:[%s4290 + $0x70] sm:$0xff]
        %v4306 = vld [vmem:[%s4290 + $0x78] sm:$0xff]
        %s4307 = scalar_lea.vmem [#allocation3], 128
        %v4308 = vld [vmem:[%s4307] sm:$0xff]
        %v4309 = vld [vmem:[%s4307 + $0x8] sm:$0xff]
        %v4310 = vld [vmem:[%s4307 + $0x10] sm:$0xff]
        %v4311 = vld [vmem:[%s4307 + $0x18] sm:$0xff]
        %v4312 = vld [vmem:[%s4307 + $0x20] sm:$0xff]
        %v4313 = vld [vmem:[%s4307 + $0x28] sm:$0xff]
        %v4314 = vld [vmem:[%s4307 + $0x30] sm:$0xff]
        %v4315 = vld [vmem:[%s4307 + $0x38] sm:$0xff]
        %v4316 = vld [vmem:[%s4307 + $0x40] sm:$0xff]
        %v4317 = vld [vmem:[%s4307 + $0x48] sm:$0xff]
        %v4318 = vld [vmem:[%s4307 + $0x50] sm:$0xff]
        %v4319 = vld [vmem:[%s4307 + $0x58] sm:$0xff]
        %v4320 = vld [vmem:[%s4307 + $0x60] sm:$0xff]
        %v4321 = vld [vmem:[%s4307 + $0x68] sm:$0xff]
        %v4322 = vld [vmem:[%s4307 + $0x70] sm:$0xff]
        %v4323 = vld [vmem:[%s4307 + $0x78] sm:$0xff]
        %v4324 = vrcp.pop %v4308
        %v4325 = vrcp.pop %v4309
        %v4326 = vrcp.pop %v4310
        %v4327 = vrcp.pop %v4311
        %v4328 = vrcp.pop %v4312
        %v4329 = vrcp.pop %v4313
        %v4330 = vrcp.pop %v4314
        %v4331 = vrcp.pop %v4315
        %v4332 = vrcp.pop %v4316
        %v4333 = vrcp.pop %v4317
        %v4334 = vrcp.pop %v4318
        %v4335 = vrcp.pop %v4319
        %v4336 = vrcp.pop %v4320
        %v4337 = vrcp.pop %v4321
        %v4338 = vrcp.pop %v4322
        %v4339 = vrcp.pop %v4323
        %4341 = vset.pattern.permute.xlu0 0
        %4342 = vperm.xlu0 %4341, %v4324
        %v4343 = vpop.permute.xlu0 %4342
        %4346 = vset.pattern.permute.xlu0 0
        %4347 = vperm.xlu0 %4346, %v4325
        %v4348 = vpop.permute.xlu0 %4347
        %4351 = vset.pattern.permute.xlu0 0
        %4352 = vperm.xlu0 %4351, %v4326
        %v4353 = vpop.permute.xlu0 %4352
        %4356 = vset.pattern.permute.xlu0 0
        %4357 = vperm.xlu0 %4356, %v4327
        %v4358 = vpop.permute.xlu0 %4357
        %4361 = vset.pattern.permute.xlu0 0
        %4362 = vperm.xlu0 %4361, %v4328
        %v4363 = vpop.permute.xlu0 %4362
        %4366 = vset.pattern.permute.xlu0 0
        %4367 = vperm.xlu0 %4366, %v4329
        %v4368 = vpop.permute.xlu0 %4367
        %4371 = vset.pattern.permute.xlu0 0
        %4372 = vperm.xlu0 %4371, %v4330
        %v4373 = vpop.permute.xlu0 %4372
        %4376 = vset.pattern.permute.xlu0 0
        %4377 = vperm.xlu0 %4376, %v4331
        %v4378 = vpop.permute.xlu0 %4377
        %4381 = vset.pattern.permute.xlu0 0
        %4382 = vperm.xlu0 %4381, %v4332
        %v4383 = vpop.permute.xlu0 %4382
        %4386 = vset.pattern.permute.xlu0 0
        %4387 = vperm.xlu0 %4386, %v4333
        %v4388 = vpop.permute.xlu0 %4387
        %4391 = vset.pattern.permute.xlu0 0
        %4392 = vperm.xlu0 %4391, %v4334
        %v4393 = vpop.permute.xlu0 %4392
        %4396 = vset.pattern.permute.xlu0 0
        %4397 = vperm.xlu0 %4396, %v4335
        %v4398 = vpop.permute.xlu0 %4397
        %4401 = vset.pattern.permute.xlu0 0
        %4402 = vperm.xlu0 %4401, %v4336
        %v4403 = vpop.permute.xlu0 %4402
        %4406 = vset.pattern.permute.xlu0 0
        %4407 = vperm.xlu0 %4406, %v4337
        %v4408 = vpop.permute.xlu0 %4407
        %4411 = vset.pattern.permute.xlu0 0
        %4412 = vperm.xlu0 %4411, %v4338
        %v4413 = vpop.permute.xlu0 %4412
        %4416 = vset.pattern.permute.xlu0 0
        %4417 = vperm.xlu0 %4416, %v4339
        %v4418 = vpop.permute.xlu0 %4417
        %v4420 = vmul.f32 %v4291, %v4343
        %v4421 = vmul.f32 %v4292, %v4348
        %v4422 = vmul.f32 %v4293, %v4353
        %v4423 = vmul.f32 %v4294, %v4358
        %v4424 = vmul.f32 %v4295, %v4363
        %v4425 = vmul.f32 %v4296, %v4368
        %v4426 = vmul.f32 %v4297, %v4373
        %v4427 = vmul.f32 %v4298, %v4378
        %v4428 = vmul.f32 %v4299, %v4383
        %v4429 = vmul.f32 %v4300, %v4388
        %v4430 = vmul.f32 %v4301, %v4393
        %v4431 = vmul.f32 %v4302, %v4398
        %v4432 = vmul.f32 %v4303, %v4403
        %v4433 = vmul.f32 %v4304, %v4408
        %v4434 = vmul.f32 %v4305, %v4413
        %v4435 = vmul.f32 %v4306, %v4418
        %v4436 = vpack.c.bf16 %v4421, %v4420
        %v4437 = vpack.c.bf16 %v4423, %v4422
        %v4438 = vpack.c.bf16 %v4425, %v4424
        %v4439 = vpack.c.bf16 %v4427, %v4426
        %v4440 = vpack.c.bf16 %v4429, %v4428
        %v4441 = vpack.c.bf16 %v4431, %v4430
        %v4442 = vpack.c.bf16 %v4433, %v4432
        %v4443 = vpack.c.bf16 %v4435, %v4434
        %v4446 = vunpack.c.l.b16 %v3981
        %v4447 = vunpack.c.l.b16 %v3982
        %v4448 = vpack.c.b16 %v4447, %v4446
        %v4451 = vsel %vm4146, %v4436, 0
        %v4454 = vsel %vm4146, %v4437, 0
        %v4457 = vsel %vm4146, %v4438, 0
        %v4460 = vsel %vm4146, %v4439, 0
        %v4463 = vsel %vm4146, %v4440, 0
        %v4466 = vsel %vm4146, %v4441, 0
        %v4469 = vsel %vm4146, %v4442, 0
        %v4472 = vsel %vm4146, %v4443, 0
        %4474 = vmatprep.subr.bf16.mxu0 0
        %4475 = vmatpush1.bf16.msra.mxu0 0
        %4476 = vmatprep.subr.bf16.mxu0 0
        %4477 = vmatpush1.bf16.msra.mxu0 0
        %4478 = vmatprep.subr.bf16.mxu0 0
        %4479 = vmatpush1.bf16.msra.mxu0 0
        %4480 = vmatprep.subr.bf16.mxu0 0
        %4481 = vmatpush1.bf16.msra.mxu0 0
        %4482 = vmatprep.subr.bf16.mxu0 0
        %4483 = vmatpush1.bf16.msra.mxu0 0
        %4484 = vmatprep.subr.bf16.mxu0 0
        %4485 = vmatpush1.bf16.msra.mxu0 0
        %4486 = vmatprep.subr.bf16.mxu0 0
        %4487 = vmatpush1.bf16.msra.mxu0 0
        %4488 = vmatprep.subr.bf16.mxu0 0
        %4489 = vmatpush1.bf16.msra.mxu0 %v4448
        %4490 = vmatprep.subr.bf16.mxu0 0
        %4491 = vmatpush2.bf16.msra.mxu0 0
        %4492 = vmatprep.subr.bf16.mxu0 0
        %4493 = vmatpush2.bf16.msra.mxu0 0
        %4494 = vmatprep.subr.bf16.mxu0 0
        %4495 = vmatpush2.bf16.msra.mxu0 0
        %4496 = vmatprep.subr.bf16.mxu0 0
        %4497 = vmatpush2.bf16.msra.mxu0 0
        %4498 = vmatprep.subr.bf16.mxu0 0
        %4499 = vmatpush2.bf16.msra.mxu0 0
        %4500 = vmatprep.subr.bf16.mxu0 0
        %4501 = vmatpush2.bf16.msra.mxu0 0
        %4502 = vmatprep.subr.bf16.mxu0 0
        %4503 = vmatpush2.bf16.msra.mxu0 0
        %4504 = vmatprep.subr.bf16.mxu0 0
        %4505 = vmatpush2.bf16.msra.mxu0 0
        %4506 = vmatprep.mubr.bf16.mxu0 0
        %4507 = vmatmul.mubr.bf16.gmra.mxu0 %v4451
        %v4508 = vpop.f32.mrf.mxu0
        %v4509 = vadd.f32 0.0, %v4508
        %v4510 = vpop.f32.mrf.mxu0
        %v4511 = vpop.f32.mrf.mxu0
        %v4512 = vadd.f32 0.0, %v4511
        %v4513 = vpop.f32.mrf.mxu0
        %4514 = vmatprep.mubr.bf16.mxu0 0
        %4515 = vmatmul.mubr.bf16.gmra.mxu0 %v4454
        %v4516 = vpop.f32.mrf.mxu0
        %v4517 = vadd.f32 0.0, %v4516
        %v4518 = vpop.f32.mrf.mxu0
        %v4519 = vpop.f32.mrf.mxu0
        %v4520 = vadd.f32 0.0, %v4519
        %v4521 = vpop.f32.mrf.mxu0
        %4522 = vmatprep.mubr.bf16.mxu0 0
        %4523 = vmatmul.mubr.bf16.gmra.mxu0 %v4457
        %v4524 = vpop.f32.mrf.mxu0
        %v4525 = vadd.f32 0.0, %v4524
        %v4526 = vpop.f32.mrf.mxu0
        %v4527 = vpop.f32.mrf.mxu0
        %v4528 = vadd.f32 0.0, %v4527
        %v4529 = vpop.f32.mrf.mxu0
        %4530 = vmatprep.mubr.bf16.mxu0 0
        %4531 = vmatmul.mubr.bf16.gmra.mxu0 %v4460
        %v4532 = vpop.f32.mrf.mxu0
        %v4533 = vadd.f32 0.0, %v4532
        %v4534 = vpop.f32.mrf.mxu0
        %v4535 = vpop.f32.mrf.mxu0
        %v4536 = vadd.f32 0.0, %v4535
        %v4537 = vpop.f32.mrf.mxu0
        %4538 = vmatprep.mubr.bf16.mxu0 0
        %4539 = vmatmul.mubr.bf16.gmra.mxu0 %v4463
        %v4540 = vpop.f32.mrf.mxu0
        %v4541 = vadd.f32 0.0, %v4540
        %v4542 = vpop.f32.mrf.mxu0
        %v4543 = vpop.f32.mrf.mxu0
        %v4544 = vadd.f32 0.0, %v4543
        %v4545 = vpop.f32.mrf.mxu0
        %4546 = vmatprep.mubr.bf16.mxu0 0
        %4547 = vmatmul.mubr.bf16.gmra.mxu0 %v4466
        %v4548 = vpop.f32.mrf.mxu0
        %v4549 = vadd.f32 0.0, %v4548
        %v4550 = vpop.f32.mrf.mxu0
        %v4551 = vpop.f32.mrf.mxu0
        %v4552 = vadd.f32 0.0, %v4551
        %v4553 = vpop.f32.mrf.mxu0
        %4554 = vmatprep.mubr.bf16.mxu0 0
        %4555 = vmatmul.mubr.bf16.gmra.mxu0 %v4469
        %v4556 = vpop.f32.mrf.mxu0
        %v4557 = vadd.f32 0.0, %v4556
        %v4558 = vpop.f32.mrf.mxu0
        %v4559 = vpop.f32.mrf.mxu0
        %v4560 = vadd.f32 0.0, %v4559
        %v4561 = vpop.f32.mrf.mxu0
        %4562 = vmatprep.mubr.bf16.mxu0 0
        %4563 = vmatmul.mubr.bf16.gmra.mxu0 %v4472
        %v4564 = vpop.f32.mrf.mxu0
        %v4565 = vadd.f32 0.0, %v4564
        %v4566 = vpop.f32.mrf.mxu0
        %v4567 = vpop.f32.mrf.mxu0
        %v4568 = vadd.f32 0.0, %v4567
        %v4569 = vpop.f32.mrf.mxu0
        %4570 = vdwg.mxu0
        %v4571 = vadd.f32 %v4274, %v4509
        %v4572 = vadd.f32 %v4275, %v4512
        %v4573 = vadd.f32 %v4276, %v4517
        %v4574 = vadd.f32 %v4277, %v4520
        %v4575 = vadd.f32 %v4278, %v4525
        %v4576 = vadd.f32 %v4279, %v4528
        %v4577 = vadd.f32 %v4280, %v4533
        %v4578 = vadd.f32 %v4281, %v4536
        %v4579 = vadd.f32 %v4282, %v4541
        %v4580 = vadd.f32 %v4283, %v4544
        %v4581 = vadd.f32 %v4284, %v4549
        %v4582 = vadd.f32 %v4285, %v4552
        %v4583 = vadd.f32 %v4286, %v4557
        %v4584 = vadd.f32 %v4287, %v4560
        %v4585 = vadd.f32 %v4288, %v4565
        %v4586 = vadd.f32 %v4289, %v4568
        %s4587 = scalar_lea.vmem [#allocation4], 256
        %v4588 = vld [vmem:[%s4587] sm:$0xff]
        %v4589 = vld [vmem:[%s4587 + $0x8] sm:$0xff]
        %v4590 = vld [vmem:[%s4587 + $0x10] sm:$0xff]
        %v4591 = vld [vmem:[%s4587 + $0x18] sm:$0xff]
        %v4592 = vld [vmem:[%s4587 + $0x20] sm:$0xff]
        %v4593 = vld [vmem:[%s4587 + $0x28] sm:$0xff]
        %v4594 = vld [vmem:[%s4587 + $0x30] sm:$0xff]
        %v4595 = vld [vmem:[%s4587 + $0x38] sm:$0xff]
        %v4596 = vld [vmem:[%s4587 + $0x40] sm:$0xff]
        %v4597 = vld [vmem:[%s4587 + $0x48] sm:$0xff]
        %v4598 = vld [vmem:[%s4587 + $0x50] sm:$0xff]
        %v4599 = vld [vmem:[%s4587 + $0x58] sm:$0xff]
        %v4600 = vld [vmem:[%s4587 + $0x60] sm:$0xff]
        %v4601 = vld [vmem:[%s4587 + $0x68] sm:$0xff]
        %v4602 = vld [vmem:[%s4587 + $0x70] sm:$0xff]
        %v4603 = vld [vmem:[%s4587 + $0x78] sm:$0xff]
        %s4604 = scalar_lea.vmem [#allocation3], 256
        %v4605 = vld [vmem:[%s4604] sm:$0xff]
        %v4606 = vld [vmem:[%s4604 + $0x8] sm:$0xff]
        %v4607 = vld [vmem:[%s4604 + $0x10] sm:$0xff]
        %v4608 = vld [vmem:[%s4604 + $0x18] sm:$0xff]
        %v4609 = vld [vmem:[%s4604 + $0x20] sm:$0xff]
        %v4610 = vld [vmem:[%s4604 + $0x28] sm:$0xff]
        %v4611 = vld [vmem:[%s4604 + $0x30] sm:$0xff]
        %v4612 = vld [vmem:[%s4604 + $0x38] sm:$0xff]
        %v4613 = vld [vmem:[%s4604 + $0x40] sm:$0xff]
        %v4614 = vld [vmem:[%s4604 + $0x48] sm:$0xff]
        %v4615 = vld [vmem:[%s4604 + $0x50] sm:$0xff]
        %v4616 = vld [vmem:[%s4604 + $0x58] sm:$0xff]
        %v4617 = vld [vmem:[%s4604 + $0x60] sm:$0xff]
        %v4618 = vld [vmem:[%s4604 + $0x68] sm:$0xff]
        %v4619 = vld [vmem:[%s4604 + $0x70] sm:$0xff]
        %v4620 = vld [vmem:[%s4604 + $0x78] sm:$0xff]
        %v4621 = vrcp.pop %v4605
        %v4622 = vrcp.pop %v4606
        %v4623 = vrcp.pop %v4607
        %v4624 = vrcp.pop %v4608
        %v4625 = vrcp.pop %v4609
        %v4626 = vrcp.pop %v4610
        %v4627 = vrcp.pop %v4611
        %v4628 = vrcp.pop %v4612
        %v4629 = vrcp.pop %v4613
        %v4630 = vrcp.pop %v4614
        %v4631 = vrcp.pop %v4615
        %v4632 = vrcp.pop %v4616
        %v4633 = vrcp.pop %v4617
        %v4634 = vrcp.pop %v4618
        %v4635 = vrcp.pop %v4619
        %v4636 = vrcp.pop %v4620
        %4638 = vset.pattern.permute.xlu0 0
        %4639 = vperm.xlu0 %4638, %v4621
        %v4640 = vpop.permute.xlu0 %4639
        %4643 = vset.pattern.permute.xlu0 0
        %4644 = vperm.xlu0 %4643, %v4622
        %v4645 = vpop.permute.xlu0 %4644
        %4648 = vset.pattern.permute.xlu0 0
        %4649 = vperm.xlu0 %4648, %v4623
        %v4650 = vpop.permute.xlu0 %4649
        %4653 = vset.pattern.permute.xlu0 0
        %4654 = vperm.xlu0 %4653, %v4624
        %v4655 = vpop.permute.xlu0 %4654
        %4658 = vset.pattern.permute.xlu0 0
        %4659 = vperm.xlu0 %4658, %v4625
        %v4660 = vpop.permute.xlu0 %4659
        %4663 = vset.pattern.permute.xlu0 0
        %4664 = vperm.xlu0 %4663, %v4626
        %v4665 = vpop.permute.xlu0 %4664
        %4668 = vset.pattern.permute.xlu0 0
        %4669 = vperm.xlu0 %4668, %v4627
        %v4670 = vpop.permute.xlu0 %4669
        %4673 = vset.pattern.permute.xlu0 0
        %4674 = vperm.xlu0 %4673, %v4628
        %v4675 = vpop.permute.xlu0 %4674
        %4678 = vset.pattern.permute.xlu0 0
        %4679 = vperm.xlu0 %4678, %v4629
        %v4680 = vpop.permute.xlu0 %4679
        %4683 = vset.pattern.permute.xlu0 0
        %4684 = vperm.xlu0 %4683, %v4630
        %v4685 = vpop.permute.xlu0 %4684
        %4688 = vset.pattern.permute.xlu0 0
        %4689 = vperm.xlu0 %4688, %v4631
        %v4690 = vpop.permute.xlu0 %4689
        %4693 = vset.pattern.permute.xlu0 0
        %4694 = vperm.xlu0 %4693, %v4632
        %v4695 = vpop.permute.xlu0 %4694
        %4698 = vset.pattern.permute.xlu0 0
        %4699 = vperm.xlu0 %4698, %v4633
        %v4700 = vpop.permute.xlu0 %4699
        %4703 = vset.pattern.permute.xlu0 0
        %4704 = vperm.xlu0 %4703, %v4634
        %v4705 = vpop.permute.xlu0 %4704
        %4708 = vset.pattern.permute.xlu0 0
        %4709 = vperm.xlu0 %4708, %v4635
        %v4710 = vpop.permute.xlu0 %4709
        %4713 = vset.pattern.permute.xlu0 0
        %4714 = vperm.xlu0 %4713, %v4636
        %v4715 = vpop.permute.xlu0 %4714
        %v4717 = vmul.f32 %v4588, %v4640
        %v4718 = vmul.f32 %v4589, %v4645
        %v4719 = vmul.f32 %v4590, %v4650
        %v4720 = vmul.f32 %v4591, %v4655
        %v4721 = vmul.f32 %v4592, %v4660
        %v4722 = vmul.f32 %v4593, %v4665
        %v4723 = vmul.f32 %v4594, %v4670
        %v4724 = vmul.f32 %v4595, %v4675
        %v4725 = vmul.f32 %v4596, %v4680
        %v4726 = vmul.f32 %v4597, %v4685
        %v4727 = vmul.f32 %v4598, %v4690
        %v4728 = vmul.f32 %v4599, %v4695
        %v4729 = vmul.f32 %v4600, %v4700
        %v4730 = vmul.f32 %v4601, %v4705
        %v4731 = vmul.f32 %v4602, %v4710
        %v4732 = vmul.f32 %v4603, %v4715
        %v4733 = vpack.c.bf16 %v4718, %v4717
        %v4734 = vpack.c.bf16 %v4720, %v4719
        %v4735 = vpack.c.bf16 %v4722, %v4721
        %v4736 = vpack.c.bf16 %v4724, %v4723
        %v4737 = vpack.c.bf16 %v4726, %v4725
        %v4738 = vpack.c.bf16 %v4728, %v4727
        %v4739 = vpack.c.bf16 %v4730, %v4729
        %v4740 = vpack.c.bf16 %v4732, %v4731
        %v4743 = vunpack.c.l.b16 %v3983
        %v4744 = vunpack.c.l.b16 %v3984
        %v4745 = vpack.c.b16 %v4744, %v4743
        %v4748 = vsel %vm4146, %v4733, 0
        %v4751 = vsel %vm4146, %v4734, 0
        %v4754 = vsel %vm4146, %v4735, 0
        %v4757 = vsel %vm4146, %v4736, 0
        %v4760 = vsel %vm4146, %v4737, 0
        %v4763 = vsel %vm4146, %v4738, 0
        %v4766 = vsel %vm4146, %v4739, 0
        %v4769 = vsel %vm4146, %v4740, 0
        %4771 = vmatprep.subr.bf16.mxu0 0
        %4772 = vmatpush1.bf16.msra.mxu0 0
        %4773 = vmatprep.subr.bf16.mxu0 0
        %4774 = vmatpush1.bf16.msra.mxu0 0
        %4775 = vmatprep.subr.bf16.mxu0 0
        %4776 = vmatpush1.bf16.msra.mxu0 0
        %4777 = vmatprep.subr.bf16.mxu0 0
        %4778 = vmatpush1.bf16.msra.mxu0 0
        %4779 = vmatprep.subr.bf16.mxu0 0
        %4780 = vmatpush1.bf16.msra.mxu0 0
        %4781 = vmatprep.subr.bf16.mxu0 0
        %4782 = vmatpush1.bf16.msra.mxu0 0
        %4783 = vmatprep.subr.bf16.mxu0 0
        %4784 = vmatpush1.bf16.msra.mxu0 0
        %4785 = vmatprep.subr.bf16.mxu0 0
        %4786 = vmatpush1.bf16.msra.mxu0 %v4745
        %4787 = vmatprep.subr.bf16.mxu0 0
        %4788 = vmatpush2.bf16.msra.mxu0 0
        %4789 = vmatprep.subr.bf16.mxu0 0
        %4790 = vmatpush2.bf16.msra.mxu0 0
        %4791 = vmatprep.subr.bf16.mxu0 0
        %4792 = vmatpush2.bf16.msra.mxu0 0
        %4793 = vmatprep.subr.bf16.mxu0 0
        %4794 = vmatpush2.bf16.msra.mxu0 0
        %4795 = vmatprep.subr.bf16.mxu0 0
        %4796 = vmatpush2.bf16.msra.mxu0 0
        %4797 = vmatprep.subr.bf16.mxu0 0
        %4798 = vmatpush2.bf16.msra.mxu0 0
        %4799 = vmatprep.subr.bf16.mxu0 0
        %4800 = vmatpush2.bf16.msra.mxu0 0
        %4801 = vmatprep.subr.bf16.mxu0 0
        %4802 = vmatpush2.bf16.msra.mxu0 0
        %4803 = vmatprep.mubr.bf16.mxu0 0
        %4804 = vmatmul.mubr.bf16.gmra.mxu0 %v4748
        %v4805 = vpop.f32.mrf.mxu0
        %v4806 = vadd.f32 0.0, %v4805
        %v4807 = vpop.f32.mrf.mxu0
        %v4808 = vpop.f32.mrf.mxu0
        %v4809 = vadd.f32 0.0, %v4808
        %v4810 = vpop.f32.mrf.mxu0
        %4811 = vmatprep.mubr.bf16.mxu0 0
        %4812 = vmatmul.mubr.bf16.gmra.mxu0 %v4751
        %v4813 = vpop.f32.mrf.mxu0
        %v4814 = vadd.f32 0.0, %v4813
        %v4815 = vpop.f32.mrf.mxu0
        %v4816 = vpop.f32.mrf.mxu0
        %v4817 = vadd.f32 0.0, %v4816
        %v4818 = vpop.f32.mrf.mxu0
        %4819 = vmatprep.mubr.bf16.mxu0 0
        %4820 = vmatmul.mubr.bf16.gmra.mxu0 %v4754
        %v4821 = vpop.f32.mrf.mxu0
        %v4822 = vadd.f32 0.0, %v4821
        %v4823 = vpop.f32.mrf.mxu0
        %v4824 = vpop.f32.mrf.mxu0
        %v4825 = vadd.f32 0.0, %v4824
        %v4826 = vpop.f32.mrf.mxu0
        %4827 = vmatprep.mubr.bf16.mxu0 0
        %4828 = vmatmul.mubr.bf16.gmra.mxu0 %v4757
        %v4829 = vpop.f32.mrf.mxu0
        %v4830 = vadd.f32 0.0, %v4829
        %v4831 = vpop.f32.mrf.mxu0
        %v4832 = vpop.f32.mrf.mxu0
        %v4833 = vadd.f32 0.0, %v4832
        %v4834 = vpop.f32.mrf.mxu0
        %4835 = vmatprep.mubr.bf16.mxu0 0
        %4836 = vmatmul.mubr.bf16.gmra.mxu0 %v4760
        %v4837 = vpop.f32.mrf.mxu0
        %v4838 = vadd.f32 0.0, %v4837
        %v4839 = vpop.f32.mrf.mxu0
        %v4840 = vpop.f32.mrf.mxu0
        %v4841 = vadd.f32 0.0, %v4840
        %v4842 = vpop.f32.mrf.mxu0
        %4843 = vmatprep.mubr.bf16.mxu0 0
        %4844 = vmatmul.mubr.bf16.gmra.mxu0 %v4763
        %v4845 = vpop.f32.mrf.mxu0
        %v4846 = vadd.f32 0.0, %v4845
        %v4847 = vpop.f32.mrf.mxu0
        %v4848 = vpop.f32.mrf.mxu0
        %v4849 = vadd.f32 0.0, %v4848
        %v4850 = vpop.f32.mrf.mxu0
        %4851 = vmatprep.mubr.bf16.mxu0 0
        %4852 = vmatmul.mubr.bf16.gmra.mxu0 %v4766
        %v4853 = vpop.f32.mrf.mxu0
        %v4854 = vadd.f32 0.0, %v4853
        %v4855 = vpop.f32.mrf.mxu0
        %v4856 = vpop.f32.mrf.mxu0
        %v4857 = vadd.f32 0.0, %v4856
        %v4858 = vpop.f32.mrf.mxu0
        %4859 = vmatprep.mubr.bf16.mxu0 0
        %4860 = vmatmul.mubr.bf16.gmra.mxu0 %v4769
        %v4861 = vpop.f32.mrf.mxu0
        %v4862 = vadd.f32 0.0, %v4861
        %v4863 = vpop.f32.mrf.mxu0
        %v4864 = vpop.f32.mrf.mxu0
        %v4865 = vadd.f32 0.0, %v4864
        %v4866 = vpop.f32.mrf.mxu0
        %4867 = vdwg.mxu0
        %v4868 = vadd.f32 %v4571, %v4806
        %v4869 = vadd.f32 %v4572, %v4809
        %v4870 = vadd.f32 %v4573, %v4814
        %v4871 = vadd.f32 %v4574, %v4817
        %v4872 = vadd.f32 %v4575, %v4822
        %v4873 = vadd.f32 %v4576, %v4825
        %v4874 = vadd.f32 %v4577, %v4830
        %v4875 = vadd.f32 %v4578, %v4833
        %v4876 = vadd.f32 %v4579, %v4838
        %v4877 = vadd.f32 %v4580, %v4841
        %v4878 = vadd.f32 %v4581, %v4846
        %v4879 = vadd.f32 %v4582, %v4849
        %v4880 = vadd.f32 %v4583, %v4854
        %v4881 = vadd.f32 %v4584, %v4857
        %v4882 = vadd.f32 %v4585, %v4862
        %v4883 = vadd.f32 %v4586, %v4865
        %s4884 = scalar_lea.vmem [#allocation4], 384
        %v4885 = vld [vmem:[%s4884] sm:$0xff]
        %v4886 = vld [vmem:[%s4884 + $0x8] sm:$0xff]
        %v4887 = vld [vmem:[%s4884 + $0x10] sm:$0xff]
        %v4888 = vld [vmem:[%s4884 + $0x18] sm:$0xff]
        %v4889 = vld [vmem:[%s4884 + $0x20] sm:$0xff]
        %v4890 = vld [vmem:[%s4884 + $0x28] sm:$0xff]
        %v4891 = vld [vmem:[%s4884 + $0x30] sm:$0xff]
        %v4892 = vld [vmem:[%s4884 + $0x38] sm:$0xff]
        %v4893 = vld [vmem:[%s4884 + $0x40] sm:$0xff]
        %v4894 = vld [vmem:[%s4884 + $0x48] sm:$0xff]
        %v4895 = vld [vmem:[%s4884 + $0x50] sm:$0xff]
        %v4896 = vld [vmem:[%s4884 + $0x58] sm:$0xff]
        %v4897 = vld [vmem:[%s4884 + $0x60] sm:$0xff]
        %v4898 = vld [vmem:[%s4884 + $0x68] sm:$0xff]
        %v4899 = vld [vmem:[%s4884 + $0x70] sm:$0xff]
        %v4900 = vld [vmem:[%s4884 + $0x78] sm:$0xff]
        %s4901 = scalar_lea.vmem [#allocation3], 384
        %v4902 = vld [vmem:[%s4901] sm:$0xff]
        %v4903 = vld [vmem:[%s4901 + $0x8] sm:$0xff]
        %v4904 = vld [vmem:[%s4901 + $0x10] sm:$0xff]
        %v4905 = vld [vmem:[%s4901 + $0x18] sm:$0xff]
        %v4906 = vld [vmem:[%s4901 + $0x20] sm:$0xff]
        %v4907 = vld [vmem:[%s4901 + $0x28] sm:$0xff]
        %v4908 = vld [vmem:[%s4901 + $0x30] sm:$0xff]
        %v4909 = vld [vmem:[%s4901 + $0x38] sm:$0xff]
        %v4910 = vld [vmem:[%s4901 + $0x40] sm:$0xff]
        %v4911 = vld [vmem:[%s4901 + $0x48] sm:$0xff]
        %v4912 = vld [vmem:[%s4901 + $0x50] sm:$0xff]
        %v4913 = vld [vmem:[%s4901 + $0x58] sm:$0xff]
        %v4914 = vld [vmem:[%s4901 + $0x60] sm:$0xff]
        %v4915 = vld [vmem:[%s4901 + $0x68] sm:$0xff]
        %v4916 = vld [vmem:[%s4901 + $0x70] sm:$0xff]
        %v4917 = vld [vmem:[%s4901 + $0x78] sm:$0xff]
        %v4918 = vrcp.pop %v4902
        %v4919 = vrcp.pop %v4903
        %v4920 = vrcp.pop %v4904
        %v4921 = vrcp.pop %v4905
        %v4922 = vrcp.pop %v4906
        %v4923 = vrcp.pop %v4907
        %v4924 = vrcp.pop %v4908
        %v4925 = vrcp.pop %v4909
        %v4926 = vrcp.pop %v4910
        %v4927 = vrcp.pop %v4911
        %v4928 = vrcp.pop %v4912
        %v4929 = vrcp.pop %v4913
        %v4930 = vrcp.pop %v4914
        %v4931 = vrcp.pop %v4915
        %v4932 = vrcp.pop %v4916
        %v4933 = vrcp.pop %v4917
        %4935 = vset.pattern.permute.xlu0 0
        %4936 = vperm.xlu0 %4935, %v4918
        %v4937 = vpop.permute.xlu0 %4936
        %4940 = vset.pattern.permute.xlu0 0
        %4941 = vperm.xlu0 %4940, %v4919
        %v4942 = vpop.permute.xlu0 %4941
        %4945 = vset.pattern.permute.xlu0 0
        %4946 = vperm.xlu0 %4945, %v4920
        %v4947 = vpop.permute.xlu0 %4946
        %4950 = vset.pattern.permute.xlu0 0
        %4951 = vperm.xlu0 %4950, %v4921
        %v4952 = vpop.permute.xlu0 %4951
        %4955 = vset.pattern.permute.xlu0 0
        %4956 = vperm.xlu0 %4955, %v4922
        %v4957 = vpop.permute.xlu0 %4956
        %4960 = vset.pattern.permute.xlu0 0
        %4961 = vperm.xlu0 %4960, %v4923
        %v4962 = vpop.permute.xlu0 %4961
        %4965 = vset.pattern.permute.xlu0 0
        %4966 = vperm.xlu0 %4965, %v4924
        %v4967 = vpop.permute.xlu0 %4966
        %4970 = vset.pattern.permute.xlu0 0
        %4971 = vperm.xlu0 %4970, %v4925
        %v4972 = vpop.permute.xlu0 %4971
        %4975 = vset.pattern.permute.xlu0 0
        %4976 = vperm.xlu0 %4975, %v4926
        %v4977 = vpop.permute.xlu0 %4976
        %4980 = vset.pattern.permute.xlu0 0
        %4981 = vperm.xlu0 %4980, %v4927
        %v4982 = vpop.permute.xlu0 %4981
        %4985 = vset.pattern.permute.xlu0 0
        %4986 = vperm.xlu0 %4985, %v4928
        %v4987 = vpop.permute.xlu0 %4986
        %4990 = vset.pattern.permute.xlu0 0
        %4991 = vperm.xlu0 %4990, %v4929
        %v4992 = vpop.permute.xlu0 %4991
        %4995 = vset.pattern.permute.xlu0 0
        %4996 = vperm.xlu0 %4995, %v4930
        %v4997 = vpop.permute.xlu0 %4996
        %5000 = vset.pattern.permute.xlu0 0
        %5001 = vperm.xlu0 %5000, %v4931
        %v5002 = vpop.permute.xlu0 %5001
        %5005 = vset.pattern.permute.xlu0 0
        %5006 = vperm.xlu0 %5005, %v4932
        %v5007 = vpop.permute.xlu0 %5006
        %5010 = vset.pattern.permute.xlu0 0
        %5011 = vperm.xlu0 %5010, %v4933
        %v5012 = vpop.permute.xlu0 %5011
        %v5014 = vmul.f32 %v4885, %v4937
        %v5015 = vmul.f32 %v4886, %v4942
        %v5016 = vmul.f32 %v4887, %v4947
        %v5017 = vmul.f32 %v4888, %v4952
        %v5018 = vmul.f32 %v4889, %v4957
        %v5019 = vmul.f32 %v4890, %v4962
        %v5020 = vmul.f32 %v4891, %v4967
        %v5021 = vmul.f32 %v4892, %v4972
        %v5022 = vmul.f32 %v4893, %v4977
        %v5023 = vmul.f32 %v4894, %v4982
        %v5024 = vmul.f32 %v4895, %v4987
        %v5025 = vmul.f32 %v4896, %v4992
        %v5026 = vmul.f32 %v4897, %v4997
        %v5027 = vmul.f32 %v4898, %v5002
        %v5028 = vmul.f32 %v4899, %v5007
        %v5029 = vmul.f32 %v4900, %v5012
        %v5030 = vpack.c.bf16 %v5015, %v5014
        %v5031 = vpack.c.bf16 %v5017, %v5016
        %v5032 = vpack.c.bf16 %v5019, %v5018
        %v5033 = vpack.c.bf16 %v5021, %v5020
        %v5034 = vpack.c.bf16 %v5023, %v5022
        %v5035 = vpack.c.bf16 %v5025, %v5024
        %v5036 = vpack.c.bf16 %v5027, %v5026
        %v5037 = vpack.c.bf16 %v5029, %v5028
        %v5040 = vunpack.c.l.b16 %v3985
        %v5041 = vunpack.c.l.b16 %v3986
        %v5042 = vpack.c.b16 %v5041, %v5040
        %v5045 = vsel %vm4146, %v5030, 0
        %v5048 = vsel %vm4146, %v5031, 0
        %v5051 = vsel %vm4146, %v5032, 0
        %v5054 = vsel %vm4146, %v5033, 0
        %v5057 = vsel %vm4146, %v5034, 0
        %v5060 = vsel %vm4146, %v5035, 0
        %v5063 = vsel %vm4146, %v5036, 0
        %v5066 = vsel %vm4146, %v5037, 0
        %5068 = vmatprep.subr.bf16.mxu0 0
        %5069 = vmatpush1.bf16.msra.mxu0 0
        %5070 = vmatprep.subr.bf16.mxu0 0
        %5071 = vmatpush1.bf16.msra.mxu0 0
        %5072 = vmatprep.subr.bf16.mxu0 0
        %5073 = vmatpush1.bf16.msra.mxu0 0
        %5074 = vmatprep.subr.bf16.mxu0 0
        %5075 = vmatpush1.bf16.msra.mxu0 0
        %5076 = vmatprep.subr.bf16.mxu0 0
        %5077 = vmatpush1.bf16.msra.mxu0 0
        %5078 = vmatprep.subr.bf16.mxu0 0
        %5079 = vmatpush1.bf16.msra.mxu0 0
        %5080 = vmatprep.subr.bf16.mxu0 0
        %5081 = vmatpush1.bf16.msra.mxu0 0
        %5082 = vmatprep.subr.bf16.mxu0 0
        %5083 = vmatpush1.bf16.msra.mxu0 %v5042
        %5084 = vmatprep.subr.bf16.mxu0 0
        %5085 = vmatpush2.bf16.msra.mxu0 0
        %5086 = vmatprep.subr.bf16.mxu0 0
        %5087 = vmatpush2.bf16.msra.mxu0 0
        %5088 = vmatprep.subr.bf16.mxu0 0
        %5089 = vmatpush2.bf16.msra.mxu0 0
        %5090 = vmatprep.subr.bf16.mxu0 0
        %5091 = vmatpush2.bf16.msra.mxu0 0
        %5092 = vmatprep.subr.bf16.mxu0 0
        %5093 = vmatpush2.bf16.msra.mxu0 0
        %5094 = vmatprep.subr.bf16.mxu0 0
        %5095 = vmatpush2.bf16.msra.mxu0 0
        %5096 = vmatprep.subr.bf16.mxu0 0
        %5097 = vmatpush2.bf16.msra.mxu0 0
        %5098 = vmatprep.subr.bf16.mxu0 0
        %5099 = vmatpush2.bf16.msra.mxu0 0
        %5100 = vmatprep.mubr.bf16.mxu0 0
        %5101 = vmatmul.mubr.bf16.gmra.mxu0 %v5045
        %v5102 = vpop.f32.mrf.mxu0
        %v5103 = vadd.f32 0.0, %v5102
        %v5104 = vpop.f32.mrf.mxu0
        %v5105 = vpop.f32.mrf.mxu0
        %v5106 = vadd.f32 0.0, %v5105
        %v5107 = vpop.f32.mrf.mxu0
        %5108 = vmatprep.mubr.bf16.mxu0 0
        %5109 = vmatmul.mubr.bf16.gmra.mxu0 %v5048
        %v5110 = vpop.f32.mrf.mxu0
        %v5111 = vadd.f32 0.0, %v5110
        %v5112 = vpop.f32.mrf.mxu0
        %v5113 = vpop.f32.mrf.mxu0
        %v5114 = vadd.f32 0.0, %v5113
        %v5115 = vpop.f32.mrf.mxu0
        %5116 = vmatprep.mubr.bf16.mxu0 0
        %5117 = vmatmul.mubr.bf16.gmra.mxu0 %v5051
        %v5118 = vpop.f32.mrf.mxu0
        %v5119 = vadd.f32 0.0, %v5118
        %v5120 = vpop.f32.mrf.mxu0
        %v5121 = vpop.f32.mrf.mxu0
        %v5122 = vadd.f32 0.0, %v5121
        %v5123 = vpop.f32.mrf.mxu0
        %5124 = vmatprep.mubr.bf16.mxu0 0
        %5125 = vmatmul.mubr.bf16.gmra.mxu0 %v5054
        %v5126 = vpop.f32.mrf.mxu0
        %v5127 = vadd.f32 0.0, %v5126
        %v5128 = vpop.f32.mrf.mxu0
        %v5129 = vpop.f32.mrf.mxu0
        %v5130 = vadd.f32 0.0, %v5129
        %v5131 = vpop.f32.mrf.mxu0
        %5132 = vmatprep.mubr.bf16.mxu0 0
        %5133 = vmatmul.mubr.bf16.gmra.mxu0 %v5057
        %v5134 = vpop.f32.mrf.mxu0
        %v5135 = vadd.f32 0.0, %v5134
        %v5136 = vpop.f32.mrf.mxu0
        %v5137 = vpop.f32.mrf.mxu0
        %v5138 = vadd.f32 0.0, %v5137
        %v5139 = vpop.f32.mrf.mxu0
        %5140 = vmatprep.mubr.bf16.mxu0 0
        %5141 = vmatmul.mubr.bf16.gmra.mxu0 %v5060
        %v5142 = vpop.f32.mrf.mxu0
        %v5143 = vadd.f32 0.0, %v5142
        %v5144 = vpop.f32.mrf.mxu0
        %v5145 = vpop.f32.mrf.mxu0
        %v5146 = vadd.f32 0.0, %v5145
        %v5147 = vpop.f32.mrf.mxu0
        %5148 = vmatprep.mubr.bf16.mxu0 0
        %5149 = vmatmul.mubr.bf16.gmra.mxu0 %v5063
        %v5150 = vpop.f32.mrf.mxu0
        %v5151 = vadd.f32 0.0, %v5150
        %v5152 = vpop.f32.mrf.mxu0
        %v5153 = vpop.f32.mrf.mxu0
        %v5154 = vadd.f32 0.0, %v5153
        %v5155 = vpop.f32.mrf.mxu0
        %5156 = vmatprep.mubr.bf16.mxu0 0
        %5157 = vmatmul.mubr.bf16.gmra.mxu0 %v5066
        %v5158 = vpop.f32.mrf.mxu0
        %v5159 = vadd.f32 0.0, %v5158
        %v5160 = vpop.f32.mrf.mxu0
        %v5161 = vpop.f32.mrf.mxu0
        %v5162 = vadd.f32 0.0, %v5161
        %v5163 = vpop.f32.mrf.mxu0
        %5164 = vdwg.mxu0
        %v5165 = vadd.f32 %v4868, %v5103
        %v5166 = vadd.f32 %v4869, %v5106
        %v5167 = vadd.f32 %v4870, %v5111
        %v5168 = vadd.f32 %v4871, %v5114
        %v5169 = vadd.f32 %v4872, %v5119
        %v5170 = vadd.f32 %v4873, %v5122
        %v5171 = vadd.f32 %v4874, %v5127
        %v5172 = vadd.f32 %v4875, %v5130
        %v5173 = vadd.f32 %v4876, %v5135
        %v5174 = vadd.f32 %v4877, %v5138
        %v5175 = vadd.f32 %v4878, %v5143
        %v5176 = vadd.f32 %v4879, %v5146
        %v5177 = vadd.f32 %v4880, %v5151
        %v5178 = vadd.f32 %v4881, %v5154
        %v5179 = vadd.f32 %v4882, %v5159
        %v5180 = vadd.f32 %v4883, %v5162
        %vm5181 = vcmask 523264
        %5182 = vst.msk [vmem:[%s341] sm:$0xff] %vm5181, %v5165
        %5183 = vst.msk [vmem:[%s341 + $0x8] sm:$0xff] %vm5181, %v5166
        %5184 = vst.msk [vmem:[%s341 + $0x10] sm:$0xff] %vm5181, %v5167
        %5185 = vst.msk [vmem:[%s341 + $0x18] sm:$0xff] %vm5181, %v5168
        %5186 = vst.msk [vmem:[%s341 + $0x20] sm:$0xff] %vm5181, %v5169
        %5187 = vst.msk [vmem:[%s341 + $0x28] sm:$0xff] %vm5181, %v5170
        %5188 = vst.msk [vmem:[%s341 + $0x30] sm:$0xff] %vm5181, %v5171
        %5189 = vst.msk [vmem:[%s341 + $0x38] sm:$0xff] %vm5181, %v5172
        %5190 = vst.msk [vmem:[%s341 + $0x40] sm:$0xff] %vm5181, %v5173
        %5191 = vst.msk [vmem:[%s341 + $0x48] sm:$0xff] %vm5181, %v5174
        %5192 = vst.msk [vmem:[%s341 + $0x50] sm:$0xff] %vm5181, %v5175
        %5193 = vst.msk [vmem:[%s341 + $0x58] sm:$0xff] %vm5181, %v5176
        %5194 = vst.msk [vmem:[%s341 + $0x60] sm:$0xff] %vm5181, %v5177
        %5195 = vst.msk [vmem:[%s341 + $0x68] sm:$0xff] %vm5181, %v5178
        %5196 = vst.msk [vmem:[%s341 + $0x70] sm:$0xff] %vm5181, %v5179
        %5197 = vst.msk [vmem:[%s341 + $0x78] sm:$0xff] %vm5181, %v5180
      $region52: #{mass_attention_forward.3} parent=39 // pred_fallthru
        _
      %s5198 = smul.u32 16, %s22
      %p5199 = scmp.lt.s32.totalorder %s21, 1
      %s5200 = scalar_select %p5199, %s21, 1
      %p5201 = scmp.lt.s32.totalorder %s5198, 47
      %s5202 = scalar_select %p5201, %s5198, 47
      %s5203 = smul.addr %s5200, 48
      %s5204 = sadd.s32 %s5202, %s5203
      %s5205 = smul.addr %s5204, 8
      %s5206 = scalar_lea.vmem %s5, %s5205
      // Predicated region
      $region53: #{mass_attention_forward.3} parent=39 // pred_check
        %p5207 = pneg %p181
      $region54: #{mass_attention_forward.3} parent=39 // pred_check_branch
        %5209 = sbr.rel (%p5207) target = $region56
      $region55: #{mass_attention_forward.3} parent=39 // pred_region
        %s5210 = smul.u32 16, %s22
      $region56: #{mass_attention_forward.3} parent=39 // pred_fallthru
        _
    $region40: #{mass_attention_forward.3} parent=5 // pred_fallthru
      _
    %p5211 = scmp.le.s32.totalorder 2, %s11
    // Predicated region
    $region57: #{mass_attention_forward.3} parent=5 // pred_check
      %p5212 = pneg %p5211
    $region58: #{mass_attention_forward.3} parent=5 // pred_check_branch
      %5214 = sbr.rel (%p5212) target = $region60
    $region59: #{mass_attention_forward.3} parent=5 // pred_region
      %s5215 = ssub.s32 %s11, 2
      // Predicated region
      $region61: #{mass_attention_forward.3} parent=59 // pred_check
        %p5216 = pneg %p187
      $region62: #{mass_attention_forward.3} parent=59 // pred_check_branch
        %5218 = sbr.rel (%p5216) target = $region64
      $region63: #{mass_attention_forward.3} parent=59 // pred_region
        %s5219 = smul.u32 16, %s25
        %p5220 = scmp.lt.s32.totalorder %s24, 1
        %s5221 = scalar_select %p5220, %s24, 1
        %p5222 = scmp.lt.s32.totalorder %s5219, 47
        %s5223 = scalar_select %p5222, %s5219, 47
        %s5224 = smul.addr %s5221, 48
        %s5225 = sadd.s32 %s5223, %s5224
        %s5226 = smul.addr %s5225, 8
        %s5227 = scalar_lea.vmem %s5, %s5226
      $region64: #{mass_attention_forward.3} parent=59 // pred_fallthru
        _
    $region60: #{mass_attention_forward.3} parent=5 // pred_fallthru
      _
  $region6: #{mass_attention_forward.3} parent=0 // loop_footer
    %s15 = sadd.s32 1, %s11
  $region7: #{mass_attention_forward.3} parent=0 // loop_footer_branch
    %10 = sbr.rel target = $region3
  $region8: #{mass_attention_forward.3} parent=0 // loop_exit
    _

</llo_original>
